<compile_context>
chip_gen: v6e
topology: v6e:2x2x1
jax: 0.10.0
libtpu: 0.0.40
codegen_flags: <defaults>
</compile_context>

<pallas_src>
import functools
import math

import jax
import jax.numpy as jnp
from jax import lax
from jax.experimental import pallas as pl
from jax.experimental.pallas import tpu as pltpu

SOS_TOKEN = 1


def _round_up(x, m):
    return ((x + m - 1) // m) * m


# ---------------------------------------------------------------------------
# In-kernel building blocks
# ---------------------------------------------------------------------------
def _attn_gru_step(h, gi, uk, keys, wa_t, ba, va, wih_ctx_t, whh_t, bhh, Hp):
    """One decoder step: Bahdanau attention + GRU cell.

    h    : (B, Hp)    f32 hidden state h_{t-1}
    gi   : (B, 3Hp)   f32 embedded-token half of the GRU gates
                      (emb @ W_ih[:, :H]^T + b_ih), gate blocks [r | z | n]
    uk   : (B, T, Hp) f32 precomputed Ua(keys) + b_ua
    keys : (B, T, Hp) f32 encoder outputs
    Weights are bf16 (transposed, gate-per-128-lane block); biases are f32.
    Returns (h_new (B, Hp) f32, attention weights (B, T) f32).
    """
    f32 = jnp.float32
    bf16 = jnp.bfloat16

    # --- Bahdanau attention -------------------------------------------------
    q = jnp.dot(h.astype(bf16), wa_t, preferred_element_type=f32) + ba      # (B, Hp)
    e = jnp.tanh(q[:, None, :] + uk)                                        # (B, T, Hp)
    # Va(...): Va's bias shifts every score equally and cancels in the softmax,
    # so it is omitted (attention weights are unchanged).
    scores = jnp.sum(e * va, axis=-1)                                       # (B, T)
    m = jnp.max(scores, axis=-1, keepdims=True)
    p = jnp.exp(scores - m)
    w = p / jnp.sum(p, axis=-1, keepdims=True)                              # (B, T)
    ctx = jnp.sum(w[:, :, None] * keys, axis=1)                             # (B, Hp)

    # --- GRU cell (PyTorch gate order r, z, n) ------------------------------
    gi_full = gi + jnp.dot(ctx.astype(bf16), wih_ctx_t, preferred_element_type=f32)
    gh = jnp.dot(h.astype(bf16), whh_t, preferred_element_type=f32) + bhh
    r = jax.nn.sigmoid(gi_full[:, 0:Hp] + gh[:, 0:Hp])
    z = jax.nn.sigmoid(gi_full[:, Hp:2 * Hp] + gh[:, Hp:2 * Hp])
    n = jnp.tanh(gi_full[:, 2 * Hp:] + r * gh[:, 2 * Hp:])
    h_new = (1.0 - z) * n + z * h
    return h_new, w


def _log_softmax(logits):
    m = jnp.max(logits, axis=-1, keepdims=True)
    lse = jnp.log(jnp.sum(jnp.exp(logits - m), axis=-1, keepdims=True)) + m
    return logits - lse


# ---------------------------------------------------------------------------
# Kernels (whole decode loop per invocation)
# ---------------------------------------------------------------------------
def _decoder_tf_kernel(gi_pre_ref, uk_ref, keys_ref,
                       wa_t_ref, ba_ref, va_ref,
                       wih_ctx_t_ref, whh_t_ref, bhh_ref,
                       wout_t_ref, bout_ref, h0_ref,
                       logp_ref, attn_ref, hn_ref,
                       *, hidden_pad, num_steps):
    """Teacher-forcing decode: embedded-token gate contribution is precomputed."""
    Hp = hidden_pad
    uk = uk_ref[...]
    keys = keys_ref[...]
    wa_t = wa_t_ref[...]
    ba = ba_ref[...]
    va = va_ref[...]
    wih_ctx_t = wih_ctx_t_ref[...]
    whh_t = whh_t_ref[...]
    bhh = bhh_ref[...]
    wout_t = wout_t_ref[...]
    bout = bout_ref[...]

    def body(t, h):
        h_new, w = _attn_gru_step(h, gi_pre_ref[t], uk, keys, wa_t, ba, va,
                                  wih_ctx_t, whh_t, bhh, Hp)
        logits = jnp.dot(h_new.astype(jnp.bfloat16), wout_t,
                         preferred_element_type=jnp.float32) + bout
        logp_ref[t] = _log_softmax(logits)
        attn_ref[t] = w
        return h_new

    h_final = lax.fori_loop(0, num_steps, body, h0_ref[...], unroll=True)
    hn_ref[...] = h_final


def _decoder_greedy_kernel(emb_tbl_ref, uk_ref, keys_ref,
                           wa_t_ref, ba_ref, va_ref,
                           wih_emb_t_ref, bih_ref, wih_ctx_t_ref,
                           whh_t_ref, bhh_ref,
                           wout_t_ref, bout_ref, h0_ref,
                           logp_ref, attn_ref, hn_ref,
                           *, hidden_pad, num_steps, sos_token):
    """Greedy decode: each step feeds the argmax token's embedding back in."""
    Hp = hidden_pad
    f32 = jnp.float32
    bf16 = jnp.bfloat16

    table = emb_tbl_ref[...]                                  # (Vp, Hp) f32
    Vp = table.shape[0]
    uk = uk_ref[...]
    keys = keys_ref[...]
    wa_t = wa_t_ref[...]
    ba = ba_ref[...]
    va = va_ref[...]
    wih_emb_t = wih_emb_t_ref[...]
    bih = bih_ref[...]
    wih_ctx_t = wih_ctx_t_ref[...]
    whh_t = whh_t_ref[...]
    bhh = bhh_ref[...]
    wout_t = wout_t_ref[...]
    bout = bout_ref[...]
    h0 = h0_ref[...]
    B = h0.shape[0]

    # step-0 input is the SOS token for every batch row
    emb0 = jnp.broadcast_to(table[sos_token:sos_token + 1, :], (B, Hp))

    def body(t, carry):
        h, emb = carry
        gi = jnp.dot(emb.astype(bf16), wih_emb_t, preferred_element_type=f32) + bih
        h_new, w = _attn_gru_step(h, gi, uk, keys, wa_t, ba, va,
                                  wih_ctx_t, whh_t, bhh, Hp)
        logits = jnp.dot(h_new.astype(bf16), wout_t, preferred_element_type=f32) + bout
        logp_ref[t] = _log_softmax(logits)
        attn_ref[t] = w
        # Greedy next token: first index attaining the row max, as a one-hot
        # (padded vocab columns carry a -1e30 bias so they are never picked);
        # the embedding lookup is a one-hot @ table matmul (no gather needed).
        mx = jnp.max(logits, axis=-1, keepdims=True)
        vidx = lax.broadcasted_iota(jnp.int32, logits.shape, 1).astype(f32)
        idx = jnp.min(jnp.where(logits >= mx, vidx, float(Vp)),
                      axis=-1, keepdims=True)
        onehot = (vidx == idx).astype(f32)                                   # (B, Vp)
        emb_next = jnp.dot(onehot, table, preferred_element_type=f32)        # (B, Hp)
        return (h_new, emb_next)

    h_final, _ = lax.fori_loop(0, num_steps, body, (h0, emb0), unroll=True)
    hn_ref[...] = h_final


# ---------------------------------------------------------------------------
# Padding / parameter layout helpers (wrapper side)
# ---------------------------------------------------------------------------
def _pad2(x, rows, cols, dtype):
    out = jnp.zeros((rows, cols), dtype=dtype)
    return out.at[:x.shape[0], :x.shape[1]].set(x.astype(dtype))


def _gru_w_t_padded(w, H, Hp, dtype):
    """w: (3H, K) PyTorch-layout GRU weight (rows stacked r, z, n).  Returns
    w.T zero-padded to (Hp, 3*Hp) with each gate in its own 128-aligned
    column block so in-kernel gate slicing is vreg-aligned."""
    K = w.shape[1]
    out = jnp.zeros((Hp, 3 * Hp), dtype=dtype)
    for g in range(3):
        out = out.at[:K, g * Hp:g * Hp + H].set(
            w[g * H:(g + 1) * H, :].T.astype(dtype))
    return out


def _gru_b_padded(b, H, Hp):
    out = jnp.zeros((1, 3 * Hp), dtype=jnp.float32)
    for g in range(3):
        out = out.at[0, g * Hp:g * Hp + H].set(b[g * H:(g + 1) * H])
    return out


def _prepare_padded(params, encoder_outputs, encoder_hidden):
    B, T, H = encoder_outputs.shape
    V = params["out_w"].shape[0]
    Hp = _round_up(H, 128)
    Bp = _round_up(B, 8)
    Vp = _round_up(V, 128)
    f32, bf16 = jnp.float32, jnp.bfloat16

    w_ih = params["w_ih"]                 # (3H, 2H): [embedded | context] input
    w_ih_emb = w_ih[:, :H]
    w_ih_ctx = w_ih[:, H:]

    prep = dict(
        Hp=Hp, Bp=Bp, Vp=Vp,
        emb_tbl=_pad2(params["embedding"], Vp, Hp, f32),
        wa_t=_pad2(params["wa_w"].T, Hp, Hp, bf16),
        ba=_pad2(params["wa_b"][None, :], 1, Hp, f32),
        ua_t=_pad2(params["ua_w"].T, Hp, Hp, f32),     # wrapper-side precompute only
        ua_b=_pad2(params["ua_b"][None, :], 1, Hp, f32),
        va=_pad2(params["va_w"], 1, Hp, f32),          # Va bias cancels in softmax
        wih_emb_t_f32=_gru_w_t_padded(w_ih_emb, H, Hp, f32),
        wih_emb_t=_gru_w_t_padded(w_ih_emb, H, Hp, bf16),
        wih_ctx_t=_gru_w_t_padded(w_ih_ctx, H, Hp, bf16),
        whh_t=_gru_w_t_padded(params["w_hh"], H, Hp, bf16),
        b_ih=_gru_b_padded(params["b_ih"], H, Hp),
        b_hh=_gru_b_padded(params["b_hh"], H, Hp),
        wout_t=_pad2(params["out_w"].T, Hp, Vp, bf16),
        bout=jnp.full((1, Vp), -1e30, f32).at[0, :V].set(params["out_b"]),
    )
    keys = jnp.zeros((Bp, T, Hp), f32).at[:B, :, :H].set(encoder_outputs)
    prep["keys"] = keys
    # hoisted out of the recurrence: Ua(keys) + b_ua is decode-step invariant
    prep["uk"] = jnp.einsum("bth,hk->btk", keys, prep["ua_t"]) + prep["ua_b"]
    prep["h0"] = jnp.zeros((Bp, Hp), f32).at[:B, :H].set(encoder_hidden[0])
    return prep


# ---------------------------------------------------------------------------
# Forward pass (AttnDecoderRNN.forward)
# ---------------------------------------------------------------------------
@functools.partial(jax.jit, static_argnames=("max_length",))
def attn_decoder_forward(params, encoder_outputs, encoder_hidden,
                         target_tensor=None, *, max_length):
    """encoder_outputs: (B, T, H) f32; encoder_hidden: (1, B, H) f32;
    target_tensor: optional (B, >=1) int32 (teacher forcing when given).
    Returns (log_probs (B, L, V), hidden (1, B, H), attentions (B, L, T))."""
    B, T, H = encoder_outputs.shape
    V = params["out_w"].shape[0]
    prep = _prepare_padded(params, encoder_outputs, encoder_hidden)
    Hp, Bp, Vp = prep["Hp"], prep["Bp"], prep["Vp"]

    if target_tensor is not None:
        L = min(max_length, target_tensor.shape[1])
        # decode-step input tokens: SOS, then target[:, :L-1] (teacher forcing)
        tok = jnp.concatenate(
            [jnp.full((B, 1), SOS_TOKEN, jnp.int32),
             target_tensor[:, :L - 1].astype(jnp.int32)], axis=1)           # (B, L)
        # gather embeddings directly in time-major layout (no activation transpose)
        emb = jnp.take(prep["emb_tbl"], tok.T, axis=0)                      # (L, B, Hp)
        emb = jnp.pad(emb, ((0, 0), (0, Bp - B), (0, 0)))                   # (L, Bp, Hp)
        # hoisted input projection: one big matmul for every decode step at once
        gi_pre = (jnp.einsum("lbh,hk->lbk", emb, prep["wih_emb_t_f32"])
                  + prep["b_ih"])                                           # (L, Bp, 3Hp)

        kernel = functools.partial(_decoder_tf_kernel, hidden_pad=Hp, num_steps=L)
        args = (gi_pre, prep["uk"], prep["keys"], prep["wa_t"], prep["ba"],
                prep["va"], prep["wih_ctx_t"], prep["whh_t"], prep["b_hh"],
                prep["wout_t"], prep["bout"], prep["h0"])
        flops = 2 * L * Bp * Hp * (Hp + 3 * Hp + 3 * Hp + Vp) + 6 * L * Bp * T * Hp
    else:
        L = max_length
        kernel = functools.partial(_decoder_greedy_kernel, hidden_pad=Hp,
                                   num_steps=L, sos_token=SOS_TOKEN)
        args = (prep["emb_tbl"], prep["uk"], prep["keys"], prep["wa_t"],
                prep["ba"], prep["va"], prep["wih_emb_t"], prep["b_ih"],
                prep["wih_ctx_t"], prep["whh_t"], prep["b_hh"],
                prep["wout_t"], prep["bout"], prep["h0"])
        flops = 2 * L * Bp * Hp * (Hp + 6 * Hp + 2 * Vp) + 6 * L * Bp * T * Hp

    out_shapes = (
        jax.ShapeDtypeStruct((L, Bp, Vp), jnp.float32),   # per-step log-probs
        jax.ShapeDtypeStruct((L, Bp, T), jnp.float32),    # attention weights
        jax.ShapeDtypeStruct((Bp, Hp), jnp.float32),      # final hidden
    )
    transcendentals = L * Bp * (T * Hp + T + 3 * Hp + Vp)
    bytes_accessed = int(sum(a.size * a.dtype.itemsize for a in args)
                         + sum(math.prod(s.shape) * 4 for s in out_shapes))

    logp, attn, hn = pl.pallas_call(
        kernel,
        out_shape=out_shapes,
        cost_estimate=pl.CostEstimate(flops=int(flops),
                                      transcendentals=int(transcendentals),
                                      bytes_accessed=bytes_accessed),
        compiler_params=pltpu.CompilerParams(vmem_limit_bytes=32 * 1024 * 1024),
    )(*args)

    # trim the padding; present the PyTorch module's batch-first layout
    decoder_outputs = jnp.transpose(logp[:, :B, :V], (1, 0, 2))   # (B, L, V)
    attentions = jnp.transpose(attn[:, :B, :], (1, 0, 2))         # (B, L, T)
    decoder_hidden = hn[:B, :H][None]                             # (1, B, H)
    return decoder_outputs, decoder_hidden, attentions


# ---------------------------------------------------------------------------
# Parameter init (mimics PyTorch defaults) and pure-JAX reference
# ---------------------------------------------------------------------------
def init_params(key, hidden_size, output_size):
    H, V = hidden_size, output_size
    ks = jax.random.split(key, 13)
    b = 1.0 / float(jnp.sqrt(H))

    def u(k, shape):
        return jax.random.uniform(k, shape, jnp.float32, -b, b)

    return {
        "embedding": jax.random.normal(ks[0], (V, H), jnp.float32),
        "wa_w": u(ks[1], (H, H)), "wa_b": u(ks[2], (H,)),
        "ua_w": u(ks[3], (H, H)), "ua_b": u(ks[4], (H,)),
        "va_w": u(ks[5], (1, H)), "va_b": u(ks[6], (1,)),
        "w_ih": u(ks[7], (3 * H, 2 * H)), "w_hh": u(ks[8], (3 * H, H)),
        "b_ih": u(ks[9], (3 * H,)), "b_hh": u(ks[10], (3 * H,)),
        "out_w": u(ks[11], (V, H)), "out_b": u(ks[12], (V,)),
    }


def reference_forward(params, encoder_outputs, encoder_hidden,
                      target_tensor=None, *, max_length):
    """Pure-JAX float32 reference mirroring the PyTorch module (eval dropout)."""
    B, T, H = encoder_outputs.shape
    h = encoder_hidden[0].astype(jnp.float32)
    dec_in = jnp.full((B,), SOS_TOKEN, jnp.int32)
    L = (min(max_length, target_tensor.shape[1])
         if target_tensor is not None else max_length)
    uk = encoder_outputs @ params["ua_w"].T + params["ua_b"]
    outs, attns = [], []
    for i in range(L):
        emb = params["embedding"][dec_in]                                   # (B, H)
        q = h @ params["wa_w"].T + params["wa_b"]                           # (B, H)
        e = jnp.tanh(q[:, None, :] + uk)                                    # (B, T, H)
        scores = jnp.einsum("bth,h->bt", e, params["va_w"][0]) + params["va_b"][0]
        w = jax.nn.softmax(scores, axis=-1)                                 # (B, T)
        ctx = jnp.einsum("bt,bth->bh", w, encoder_outputs)                  # (B, H)
        x = jnp.concatenate([emb, ctx], axis=-1)                            # (B, 2H)
        gi = x @ params["w_ih"].T + params["b_ih"]
        gh = h @ params["w_hh"].T + params["b_hh"]
        r = jax.nn.sigmoid(gi[:, :H] + gh[:, :H])
        z = jax.nn.sigmoid(gi[:, H:2 * H] + gh[:, H:2 * H])
        n = jnp.tanh(gi[:, 2 * H:] + r * gh[:, 2 * H:])
        h = (1.0 - z) * n + z * h
        logits = h @ params["out_w"].T + params["out_b"]
        outs.append(logits)
        attns.append(w)
        if target_tensor is not None:
            dec_in = target_tensor[:, i].astype(jnp.int32)
        else:
            dec_in = jnp.argmax(logits, axis=-1).astype(jnp.int32)
    dec_outputs = jax.nn.log_softmax(jnp.stack(outs, axis=1), axis=-1)
    return dec_outputs, h[None], jnp.stack(attns, axis=1)


if __name__ == "__main__":
    HIDDEN = 32
    VOCAB = 16         # output_size
    BATCH = 2
    T_ENC = 8          # encoder sequence length
    MAX_LENGTH = 7

    key = jax.random.PRNGKey(0)
    k_par, k_enc, k_hid, k_tgt = jax.random.split(key, 4)
    params = init_params(k_par, HIDDEN, VOCAB)
    encoder_outputs = jax.random.normal(k_enc, (BATCH, T_ENC, HIDDEN), jnp.float32)
    encoder_hidden = jnp.tanh(jax.random.normal(k_hid, (1, BATCH, HIDDEN), jnp.float32))
    target = jax.random.randint(k_tgt, (BATCH, 10), 0, VOCAB, dtype=jnp.int32)

    # --- teacher-forcing path (target_tensor given) --------------------------
    out_tf, hid_tf, attn_tf = attn_decoder_forward(
        params, encoder_outputs, encoder_hidden, target, max_length=MAX_LENGTH)
    jax.block_until_ready((out_tf, hid_tf, attn_tf))

    L = min(MAX_LENGTH, target.shape[1])
    assert out_tf.shape == (BATCH, L, VOCAB), out_tf.shape
    assert hid_tf.shape == (1, BATCH, HIDDEN), hid_tf.shape
    assert attn_tf.shape == (BATCH, L, T_ENC), attn_tf.shape

    ref_out, ref_hid, ref_attn = reference_forward(
        params, encoder_outputs, encoder_hidden, target, max_length=MAX_LENGTH)
    assert jnp.allclose(out_tf, ref_out, atol=1e-1, rtol=5e-2), \
        float(jnp.max(jnp.abs(out_tf - ref_out)))
    assert jnp.allclose(attn_tf, ref_attn, atol=5e-2, rtol=5e-2), \
        float(jnp.max(jnp.abs(attn_tf - ref_attn)))
    assert jnp.allclose(hid_tf, ref_hid, atol=1e-1, rtol=5e-2), \
        float(jnp.max(jnp.abs(hid_tf - ref_hid)))

    # --- greedy decode path (no target) --------------------------------------
    out_g, hid_g, attn_g = attn_decoder_forward(
        params, encoder_outputs, encoder_hidden, None, max_length=MAX_LENGTH)
    jax.block_until_ready((out_g, hid_g, attn_g))
    assert out_g.shape == (BATCH, MAX_LENGTH, VOCAB), out_g.shape
    assert hid_g.shape == (1, BATCH, HIDDEN), hid_g.shape
    assert attn_g.shape == (BATCH, MAX_LENGTH, T_ENC), attn_g.shape
    # rows are valid log-prob / attention distributions
    assert jnp.allclose(jnp.sum(jnp.exp(out_g), axis=-1), 1.0, atol=1e-3)
    assert jnp.allclose(jnp.sum(attn_g, axis=-1), 1.0, atol=1e-3)

    print("KERNEL_OK")
</pallas_src>

<mosaic_0001>
module attributes {stable_mosaic.version = 11 : i64} {
  func.func @_decoder_tf_kernel(%arg0: memref<7x8x384xf32, #tpu.memory_space<vmem>>, %arg1: memref<8x8x128xf32, #tpu.memory_space<vmem>>, %arg2: memref<8x8x128xf32, #tpu.memory_space<vmem>>, %arg3: memref<128x128xbf16, #tpu.memory_space<vmem>>, %arg4: memref<1x128xf32, #tpu.memory_space<vmem>>, %arg5: memref<1x128xf32, #tpu.memory_space<vmem>>, %arg6: memref<128x384xbf16, #tpu.memory_space<vmem>>, %arg7: memref<128x384xbf16, #tpu.memory_space<vmem>>, %arg8: memref<1x384xf32, #tpu.memory_space<vmem>>, %arg9: memref<128x128xbf16, #tpu.memory_space<vmem>>, %arg10: memref<1x128xf32, #tpu.memory_space<vmem>>, %arg11: memref<8x128xf32, #tpu.memory_space<vmem>>, %arg12: memref<7x8x128xf32, #tpu.memory_space<vmem>>, %arg13: memref<7x8x8xf32, #tpu.memory_space<vmem>>, %arg14: memref<8x128xf32, #tpu.memory_space<vmem>>) attributes {dimension_semantics = [], scalar_prefetch = 0 : i64, scratch_operands = 0 : i64, tpu.core_type = #tpu.core_type<tc>} {
    %c0 = arith.constant 0 : index
    %c0_0 = arith.constant 0 : index
    %c0_1 = arith.constant 0 : index
    %0 = vector.load %arg1[%c0, %c0_0, %c0_1] : memref<8x8x128xf32, #tpu.memory_space<vmem>>, vector<8x8x128xf32>
    %c0_2 = arith.constant 0 : index
    %c0_3 = arith.constant 0 : index
    %c0_4 = arith.constant 0 : index
    %1 = vector.load %arg2[%c0_2, %c0_3, %c0_4] : memref<8x8x128xf32, #tpu.memory_space<vmem>>, vector<8x8x128xf32>
    %c0_5 = arith.constant 0 : index
    %c0_6 = arith.constant 0 : index
    %2 = vector.load %arg3[%c0_5, %c0_6] : memref<128x128xbf16, #tpu.memory_space<vmem>>, vector<128x128xbf16>
    %c0_7 = arith.constant 0 : index
    %c0_8 = arith.constant 0 : index
    %3 = vector.load %arg4[%c0_7, %c0_8] : memref<1x128xf32, #tpu.memory_space<vmem>>, vector<1x128xf32>
    %c0_9 = arith.constant 0 : index
    %c0_10 = arith.constant 0 : index
    %4 = vector.load %arg5[%c0_9, %c0_10] : memref<1x128xf32, #tpu.memory_space<vmem>>, vector<1x128xf32>
    %c0_11 = arith.constant 0 : index
    %c0_12 = arith.constant 0 : index
    %5 = vector.load %arg6[%c0_11, %c0_12] : memref<128x384xbf16, #tpu.memory_space<vmem>>, vector<128x384xbf16>
    %c0_13 = arith.constant 0 : index
    %c0_14 = arith.constant 0 : index
    %6 = vector.load %arg7[%c0_13, %c0_14] : memref<128x384xbf16, #tpu.memory_space<vmem>>, vector<128x384xbf16>
    %c0_15 = arith.constant 0 : index
    %c0_16 = arith.constant 0 : index
    %7 = vector.load %arg8[%c0_15, %c0_16] : memref<1x384xf32, #tpu.memory_space<vmem>>, vector<1x384xf32>
    %c0_17 = arith.constant 0 : index
    %c0_18 = arith.constant 0 : index
    %8 = vector.load %arg9[%c0_17, %c0_18] : memref<128x128xbf16, #tpu.memory_space<vmem>>, vector<128x128xbf16>
    %c0_19 = arith.constant 0 : index
    %c0_20 = arith.constant 0 : index
    %9 = vector.load %arg10[%c0_19, %c0_20] : memref<1x128xf32, #tpu.memory_space<vmem>>, vector<1x128xf32>
    %c0_21 = arith.constant 0 : index
    %c0_22 = arith.constant 0 : index
    %10 = vector.load %arg11[%c0_21, %c0_22] : memref<8x128xf32, #tpu.memory_space<vmem>>, vector<8x128xf32>
    %c0_i32 = arith.constant 0 : i32
    %11 = arith.index_cast %c0_i32 : i32 to index
    %c0_23 = arith.constant 0 : index
    %c0_24 = arith.constant 0 : index
    %12 = vector.load %arg0[%11, %c0_23, %c0_24] : memref<7x8x384xf32, #tpu.memory_space<vmem>>, vector<1x8x384xf32>
    %13 = vector.shape_cast %12 : vector<1x8x384xf32> to vector<8x384xf32>
    %14 = arith.truncf %10 : vector<8x128xf32> to vector<8x128xbf16>
    %cst = arith.constant dense<0.000000e+00> : vector<8x128xf32>
    %15 = tpu.matmul %14, %2, %cst {dimension_numbers = #tpu.dot_dimension_numbers<[1], [0], [0], [1], [0, 0, 1, 1], [], []>} : vector<8x128xbf16>, vector<128x128xbf16>, vector<8x128xf32> -> vector<8x128xf32>
    %16 = vector.broadcast %3 : vector<1x128xf32> to vector<8x128xf32>
    %17 = arith.addf %15, %16 : vector<8x128xf32>
    %18 = vector.shape_cast %17 : vector<8x128xf32> to vector<8x1x128xf32>
    %19 = vector.broadcast %18 : vector<8x1x128xf32> to vector<8x8x128xf32>
    %20 = arith.addf %19, %0 : vector<8x8x128xf32>
    %21 = math.tanh %20 : vector<8x8x128xf32>
    %22 = vector.shape_cast %4 : vector<1x128xf32> to vector<1x1x128xf32>
    %23 = vector.broadcast %22 : vector<1x1x128xf32> to vector<8x8x128xf32>
    %24 = arith.mulf %21, %23 : vector<8x8x128xf32>
    %cst_25 = arith.constant dense<0.000000e+00> : vector<8x8xf32>
    %25 = vector.multi_reduction <add>, %24, %cst_25 [2] : vector<8x8x128xf32> to vector<8x8xf32>
    %cst_26 = arith.constant dense<0xFF800000> : vector<8xf32>
    %26 = vector.multi_reduction <maximumf>, %25, %cst_26 [1] : vector<8x8xf32> to vector<8xf32>
    %27 = vector.shape_cast %26 : vector<8xf32> to vector<8x1xf32>
    %28 = vector.broadcast %27 : vector<8x1xf32> to vector<8x8xf32>
    %29 = arith.subf %25, %28 : vector<8x8xf32>
    %30 = math.exp %29 : vector<8x8xf32>
    %cst_27 = arith.constant dense<0.000000e+00> : vector<8xf32>
    %31 = vector.multi_reduction <add>, %30, %cst_27 [1] : vector<8x8xf32> to vector<8xf32>
    %32 = vector.shape_cast %31 : vector<8xf32> to vector<8x1xf32>
    %33 = vector.broadcast %32 : vector<8x1xf32> to vector<8x8xf32>
    %34 = arith.divf %30, %33 : vector<8x8xf32>
    %35 = vector.shape_cast %34 : vector<8x8xf32> to vector<8x8x1xf32>
    %36 = vector.broadcast %35 : vector<8x8x1xf32> to vector<8x8x128xf32>
    %37 = arith.mulf %36, %1 : vector<8x8x128xf32>
    %cst_28 = arith.constant dense<0.000000e+00> : vector<8x128xf32>
    %38 = vector.multi_reduction <add>, %37, %cst_28 [1] : vector<8x8x128xf32> to vector<8x128xf32>
    %39 = arith.truncf %38 : vector<8x128xf32> to vector<8x128xbf16>
    %cst_29 = arith.constant dense<0.000000e+00> : vector<8x384xf32>
    %40 = tpu.matmul %39, %5, %cst_29 {dimension_numbers = #tpu.dot_dimension_numbers<[1], [0], [0], [1], [0, 0, 1, 1], [], []>} : vector<8x128xbf16>, vector<128x384xbf16>, vector<8x384xf32> -> vector<8x384xf32>
    %41 = arith.addf %13, %40 : vector<8x384xf32>
    %42 = arith.truncf %10 : vector<8x128xf32> to vector<8x128xbf16>
    %cst_30 = arith.constant dense<0.000000e+00> : vector<8x384xf32>
    %43 = tpu.matmul %42, %6, %cst_30 {dimension_numbers = #tpu.dot_dimension_numbers<[1], [0], [0], [1], [0, 0, 1, 1], [], []>} : vector<8x128xbf16>, vector<128x384xbf16>, vector<8x384xf32> -> vector<8x384xf32>
    %44 = vector.broadcast %7 : vector<1x384xf32> to vector<8x384xf32>
    %45 = arith.addf %43, %44 : vector<8x384xf32>
    %46 = vector.extract_strided_slice %41 {offsets = [0, 0], sizes = [8, 128], strides = [1, 1]} : vector<8x384xf32> to vector<8x128xf32>
    %47 = vector.extract_strided_slice %45 {offsets = [0, 0], sizes = [8, 128], strides = [1, 1]} : vector<8x384xf32> to vector<8x128xf32>
    %48 = arith.addf %46, %47 : vector<8x128xf32>
    %49 = arith.negf %48 : vector<8x128xf32>
    %50 = math.exp %49 : vector<8x128xf32>
    %cst_31 = arith.constant 1.000000e+00 : f32
    %51 = vector.broadcast %cst_31 : f32 to vector<8x128xf32>
    %52 = arith.addf %51, %50 : vector<8x128xf32>
    %53 = arith.divf %51, %52 : vector<8x128xf32>
    %54 = vector.extract_strided_slice %41 {offsets = [0, 128], sizes = [8, 128], strides = [1, 1]} : vector<8x384xf32> to vector<8x128xf32>
    %55 = vector.extract_strided_slice %45 {offsets = [0, 128], sizes = [8, 128], strides = [1, 1]} : vector<8x384xf32> to vector<8x128xf32>
    %56 = arith.addf %54, %55 : vector<8x128xf32>
    %57 = arith.negf %56 : vector<8x128xf32>
    %58 = math.exp %57 : vector<8x128xf32>
    %cst_32 = arith.constant 1.000000e+00 : f32
    %59 = vector.broadcast %cst_32 : f32 to vector<8x128xf32>
    %60 = arith.addf %59, %58 : vector<8x128xf32>
    %61 = arith.divf %59, %60 : vector<8x128xf32>
    %62 = vector.extract_strided_slice %41 {offsets = [0, 256], sizes = [8, 128], strides = [1, 1]} : vector<8x384xf32> to vector<8x128xf32>
    %63 = vector.extract_strided_slice %45 {offsets = [0, 256], sizes = [8, 128], strides = [1, 1]} : vector<8x384xf32> to vector<8x128xf32>
    %64 = arith.mulf %53, %63 : vector<8x128xf32>
    %65 = arith.addf %62, %64 : vector<8x128xf32>
    %66 = math.tanh %65 : vector<8x128xf32>
    %cst_33 = arith.constant 1.000000e+00 : f32
    %67 = vector.broadcast %cst_33 : f32 to vector<8x128xf32>
    %68 = arith.subf %67, %61 : vector<8x128xf32>
    %69 = arith.mulf %68, %66 : vector<8x128xf32>
    %70 = arith.mulf %61, %10 : vector<8x128xf32>
    %71 = arith.addf %69, %70 : vector<8x128xf32>
    %72 = arith.truncf %71 : vector<8x128xf32> to vector<8x128xbf16>
    %cst_34 = arith.constant dense<0.000000e+00> : vector<8x128xf32>
    %73 = tpu.matmul %72, %8, %cst_34 {dimension_numbers = #tpu.dot_dimension_numbers<[1], [0], [0], [1], [0, 0, 1, 1], [], []>} : vector<8x128xbf16>, vector<128x128xbf16>, vector<8x128xf32> -> vector<8x128xf32>
    %74 = vector.broadcast %9 : vector<1x128xf32> to vector<8x128xf32>
    %75 = arith.addf %73, %74 : vector<8x128xf32>
    %cst_35 = arith.constant dense<0xFF800000> : vector<8xf32>
    %76 = vector.multi_reduction <maximumf>, %75, %cst_35 [1] : vector<8x128xf32> to vector<8xf32>
    %77 = vector.shape_cast %76 : vector<8xf32> to vector<8x1xf32>
    %78 = vector.broadcast %77 : vector<8x1xf32> to vector<8x128xf32>
    %79 = arith.subf %75, %78 : vector<8x128xf32>
    %80 = math.exp %79 : vector<8x128xf32>
    %cst_36 = arith.constant dense<0.000000e+00> : vector<8xf32>
    %81 = vector.multi_reduction <add>, %80, %cst_36 [1] : vector<8x128xf32> to vector<8xf32>
    %82 = vector.shape_cast %81 : vector<8xf32> to vector<8x1xf32>
    %83 = math.log %82 : vector<8x1xf32>
    %84 = arith.addf %83, %77 : vector<8x1xf32>
    %85 = vector.broadcast %84 : vector<8x1xf32> to vector<8x128xf32>
    %86 = arith.subf %75, %85 : vector<8x128xf32>
    %87 = arith.index_cast %c0_i32 : i32 to index
    %c0_37 = arith.constant 0 : index
    %c0_38 = arith.constant 0 : index
    %88 = vector.load %arg12[%87, %c0_37, %c0_38] : memref<7x8x128xf32, #tpu.memory_space<vmem>>, vector<1x8x128xf32>
    %89 = vector.shape_cast %88 : vector<1x8x128xf32> to vector<8x128xf32>
    %90 = vector.shape_cast %86 : vector<8x128xf32> to vector<1x8x128xf32>
    tpu.vector_store %arg12[%87, %c0_37, %c0_38], %90 {strides = array<i32>} : memref<7x8x128xf32, #tpu.memory_space<vmem>>, vector<1x8x128xf32>,
    %91 = arith.index_cast %c0_i32 : i32 to index
    %c0_39 = arith.constant 0 : index
    %c0_40 = arith.constant 0 : index
    %92 = vector.load %arg13[%91, %c0_39, %c0_40] : memref<7x8x8xf32, #tpu.memory_space<vmem>>, vector<1x8x8xf32>
    %93 = vector.shape_cast %92 : vector<1x8x8xf32> to vector<8x8xf32>
    %94 = vector.shape_cast %34 : vector<8x8xf32> to vector<1x8x8xf32>
    tpu.vector_store %arg13[%91, %c0_39, %c0_40], %94 {strides = array<i32>} : memref<7x8x8xf32, #tpu.memory_space<vmem>>, vector<1x8x8xf32>,
    %c1_i32 = arith.constant 1 : i32
    %95 = arith.index_cast %c1_i32 : i32 to index
    %c0_41 = arith.constant 0 : index
    %c0_42 = arith.constant 0 : index
    %96 = vector.load %arg0[%95, %c0_41, %c0_42] : memref<7x8x384xf32, #tpu.memory_space<vmem>>, vector<1x8x384xf32>
    %97 = vector.shape_cast %96 : vector<1x8x384xf32> to vector<8x384xf32>
    %98 = arith.truncf %71 : vector<8x128xf32> to vector<8x128xbf16>
    %cst_43 = arith.constant dense<0.000000e+00> : vector<8x128xf32>
    %99 = tpu.matmul %98, %2, %cst_43 {dimension_numbers = #tpu.dot_dimension_numbers<[1], [0], [0], [1], [0, 0, 1, 1], [], []>} : vector<8x128xbf16>, vector<128x128xbf16>, vector<8x128xf32> -> vector<8x128xf32>
    %100 = vector.broadcast %3 : vector<1x128xf32> to vector<8x128xf32>
    %101 = arith.addf %99, %100 : vector<8x128xf32>
    %102 = vector.shape_cast %101 : vector<8x128xf32> to vector<8x1x128xf32>
    %103 = vector.broadcast %102 : vector<8x1x128xf32> to vector<8x8x128xf32>
    %104 = arith.addf %103, %0 : vector<8x8x128xf32>
    %105 = math.tanh %104 : vector<8x8x128xf32>
    %106 = vector.shape_cast %4 : vector<1x128xf32> to vector<1x1x128xf32>
    %107 = vector.broadcast %106 : vector<1x1x128xf32> to vector<8x8x128xf32>
    %108 = arith.mulf %105, %107 : vector<8x8x128xf32>
    %cst_44 = arith.constant dense<0.000000e+00> : vector<8x8xf32>
    %109 = vector.multi_reduction <add>, %108, %cst_44 [2] : vector<8x8x128xf32> to vector<8x8xf32>
    %cst_45 = arith.constant dense<0xFF800000> : vector<8xf32>
    %110 = vector.multi_reduction <maximumf>, %109, %cst_45 [1] : vector<8x8xf32> to vector<8xf32>
    %111 = vector.shape_cast %110 : vector<8xf32> to vector<8x1xf32>
    %112 = vector.broadcast %111 : vector<8x1xf32> to vector<8x8xf32>
    %113 = arith.subf %109, %112 : vector<8x8xf32>
    %114 = math.exp %113 : vector<8x8xf32>
    %cst_46 = arith.constant dense<0.000000e+00> : vector<8xf32>
    %115 = vector.multi_reduction <add>, %114, %cst_46 [1] : vector<8x8xf32> to vector<8xf32>
    %116 = vector.shape_cast %115 : vector<8xf32> to vector<8x1xf32>
    %117 = vector.broadcast %116 : vector<8x1xf32> to vector<8x8xf32>
    %118 = arith.divf %114, %117 : vector<8x8xf32>
    %119 = vector.shape_cast %118 : vector<8x8xf32> to vector<8x8x1xf32>
    %120 = vector.broadcast %119 : vector<8x8x1xf32> to vector<8x8x128xf32>
    %121 = arith.mulf %120, %1 : vector<8x8x128xf32>
    %cst_47 = arith.constant dense<0.000000e+00> : vector<8x128xf32>
    %122 = vector.multi_reduction <add>, %121, %cst_47 [1] : vector<8x8x128xf32> to vector<8x128xf32>
    %123 = arith.truncf %122 : vector<8x128xf32> to vector<8x128xbf16>
    %cst_48 = arith.constant dense<0.000000e+00> : vector<8x384xf32>
    %124 = tpu.matmul %123, %5, %cst_48 {dimension_numbers = #tpu.dot_dimension_numbers<[1], [0], [0], [1], [0, 0, 1, 1], [], []>} : vector<8x128xbf16>, vector<128x384xbf16>, vector<8x384xf32> -> vector<8x384xf32>
    %125 = arith.addf %97, %124 : vector<8x384xf32>
    %126 = arith.truncf %71 : vector<8x128xf32> to vector<8x128xbf16>
    %cst_49 = arith.constant dense<0.000000e+00> : vector<8x384xf32>
    %127 = tpu.matmul %126, %6, %cst_49 {dimension_numbers = #tpu.dot_dimension_numbers<[1], [0], [0], [1], [0, 0, 1, 1], [], []>} : vector<8x128xbf16>, vector<128x384xbf16>, vector<8x384xf32> -> vector<8x384xf32>
    %128 = vector.broadcast %7 : vector<1x384xf32> to vector<8x384xf32>
    %129 = arith.addf %127, %128 : vector<8x384xf32>
    %130 = vector.extract_strided_slice %125 {offsets = [0, 0], sizes = [8, 128], strides = [1, 1]} : vector<8x384xf32> to vector<8x128xf32>
    %131 = vector.extract_strided_slice %129 {offsets = [0, 0], sizes = [8, 128], strides = [1, 1]} : vector<8x384xf32> to vector<8x128xf32>
    %132 = arith.addf %130, %131 : vector<8x128xf32>
    %133 = arith.negf %132 : vector<8x128xf32>
    %134 = math.exp %133 : vector<8x128xf32>
    %cst_50 = arith.constant 1.000000e+00 : f32
    %135 = vector.broadcast %cst_50 : f32 to vector<8x128xf32>
    %136 = arith.addf %135, %134 : vector<8x128xf32>
    %137 = arith.divf %135, %136 : vector<8x128xf32>
    %138 = vector.extract_strided_slice %125 {offsets = [0, 128], sizes = [8, 128], strides = [1, 1]} : vector<8x384xf32> to vector<8x128xf32>
    %139 = vector.extract_strided_slice %129 {offsets = [0, 128], sizes = [8, 128], strides = [1, 1]} : vector<8x384xf32> to vector<8x128xf32>
    %140 = arith.addf %138, %139 : vector<8x128xf32>
    %141 = arith.negf %140 : vector<8x128xf32>
    %142 = math.exp %141 : vector<8x128xf32>
    %cst_51 = arith.constant 1.000000e+00 : f32
    %143 = vector.broadcast %cst_51 : f32 to vector<8x128xf32>
    %144 = arith.addf %143, %142 : vector<8x128xf32>
    %145 = arith.divf %143, %144 : vector<8x128xf32>
    %146 = vector.extract_strided_slice %125 {offsets = [0, 256], sizes = [8, 128], strides = [1, 1]} : vector<8x384xf32> to vector<8x128xf32>
    %147 = vector.extract_strided_slice %129 {offsets = [0, 256], sizes = [8, 128], strides = [1, 1]} : vector<8x384xf32> to vector<8x128xf32>
    %148 = arith.mulf %137, %147 : vector<8x128xf32>
    %149 = arith.addf %146, %148 : vector<8x128xf32>
    %150 = math.tanh %149 : vector<8x128xf32>
    %cst_52 = arith.constant 1.000000e+00 : f32
    %151 = vector.broadcast %cst_52 : f32 to vector<8x128xf32>
    %152 = arith.subf %151, %145 : vector<8x128xf32>
    %153 = arith.mulf %152, %150 : vector<8x128xf32>
    %154 = arith.mulf %145, %71 : vector<8x128xf32>
    %155 = arith.addf %153, %154 : vector<8x128xf32>
    %156 = arith.truncf %155 : vector<8x128xf32> to vector<8x128xbf16>
    %cst_53 = arith.constant dense<0.000000e+00> : vector<8x128xf32>
    %157 = tpu.matmul %156, %8, %cst_53 {dimension_numbers = #tpu.dot_dimension_numbers<[1], [0], [0], [1], [0, 0, 1, 1], [], []>} : vector<8x128xbf16>, vector<128x128xbf16>, vector<8x128xf32> -> vector<8x128xf32>
    %158 = vector.broadcast %9 : vector<1x128xf32> to vector<8x128xf32>
    %159 = arith.addf %157, %158 : vector<8x128xf32>
    %cst_54 = arith.constant dense<0xFF800000> : vector<8xf32>
    %160 = vector.multi_reduction <maximumf>, %159, %cst_54 [1] : vector<8x128xf32> to vector<8xf32>
    %161 = vector.shape_cast %160 : vector<8xf32> to vector<8x1xf32>
    %162 = vector.broadcast %161 : vector<8x1xf32> to vector<8x128xf32>
    %163 = arith.subf %159, %162 : vector<8x128xf32>
    %164 = math.exp %163 : vector<8x128xf32>
    %cst_55 = arith.constant dense<0.000000e+00> : vector<8xf32>
    %165 = vector.multi_reduction <add>, %164, %cst_55 [1] : vector<8x128xf32> to vector<8xf32>
    %166 = vector.shape_cast %165 : vector<8xf32> to vector<8x1xf32>
    %167 = math.log %166 : vector<8x1xf32>
    %168 = arith.addf %167, %161 : vector<8x1xf32>
    %169 = vector.broadcast %168 : vector<8x1xf32> to vector<8x128xf32>
    %170 = arith.subf %159, %169 : vector<8x128xf32>
    %171 = arith.index_cast %c1_i32 : i32 to index
    %c0_56 = arith.constant 0 : index
    %c0_57 = arith.constant 0 : index
    %172 = vector.load %arg12[%171, %c0_56, %c0_57] : memref<7x8x128xf32, #tpu.memory_space<vmem>>, vector<1x8x128xf32>
    %173 = vector.shape_cast %172 : vector<1x8x128xf32> to vector<8x128xf32>
    %174 = vector.shape_cast %170 : vector<8x128xf32> to vector<1x8x128xf32>
    tpu.vector_store %arg12[%171, %c0_56, %c0_57], %174 {strides = array<i32>} : memref<7x8x128xf32, #tpu.memory_space<vmem>>, vector<1x8x128xf32>,
    %175 = arith.index_cast %c1_i32 : i32 to index
    %c0_58 = arith.constant 0 : index
    %c0_59 = arith.constant 0 : index
    %176 = vector.load %arg13[%175, %c0_58, %c0_59] : memref<7x8x8xf32, #tpu.memory_space<vmem>>, vector<1x8x8xf32>
    %177 = vector.shape_cast %176 : vector<1x8x8xf32> to vector<8x8xf32>
    %178 = vector.shape_cast %118 : vector<8x8xf32> to vector<1x8x8xf32>
    tpu.vector_store %arg13[%175, %c0_58, %c0_59], %178 {strides = array<i32>} : memref<7x8x8xf32, #tpu.memory_space<vmem>>, vector<1x8x8xf32>,
    %c2_i32 = arith.constant 2 : i32
    %179 = arith.index_cast %c2_i32 : i32 to index
    %c0_60 = arith.constant 0 : index
    %c0_61 = arith.constant 0 : index
    %180 = vector.load %arg0[%179, %c0_60, %c0_61] : memref<7x8x384xf32, #tpu.memory_space<vmem>>, vector<1x8x384xf32>
    %181 = vector.shape_cast %180 : vector<1x8x384xf32> to vector<8x384xf32>
    %182 = arith.truncf %155 : vector<8x128xf32> to vector<8x128xbf16>
    %cst_62 = arith.constant dense<0.000000e+00> : vector<8x128xf32>
    %183 = tpu.matmul %182, %2, %cst_62 {dimension_numbers = #tpu.dot_dimension_numbers<[1], [0], [0], [1], [0, 0, 1, 1], [], []>} : vector<8x128xbf16>, vector<128x128xbf16>, vector<8x128xf32> -> vector<8x128xf32>
    %184 = vector.broadcast %3 : vector<1x128xf32> to vector<8x128xf32>
    %185 = arith.addf %183, %184 : vector<8x128xf32>
    %186 = vector.shape_cast %185 : vector<8x128xf32> to vector<8x1x128xf32>
    %187 = vector.broadcast %186 : vector<8x1x128xf32> to vector<8x8x128xf32>
    %188 = arith.addf %187, %0 : vector<8x8x128xf32>
    %189 = math.tanh %188 : vector<8x8x128xf32>
    %190 = vector.shape_cast %4 : vector<1x128xf32> to vector<1x1x128xf32>
    %191 = vector.broadcast %190 : vector<1x1x128xf32> to vector<8x8x128xf32>
    %192 = arith.mulf %189, %191 : vector<8x8x128xf32>
    %cst_63 = arith.constant dense<0.000000e+00> : vector<8x8xf32>
    %193 = vector.multi_reduction <add>, %192, %cst_63 [2] : vector<8x8x128xf32> to vector<8x8xf32>
    %cst_64 = arith.constant dense<0xFF800000> : vector<8xf32>
    %194 = vector.multi_reduction <maximumf>, %193, %cst_64 [1] : vector<8x8xf32> to vector<8xf32>
    %195 = vector.shape_cast %194 : vector<8xf32> to vector<8x1xf32>
    %196 = vector.broadcast %195 : vector<8x1xf32> to vector<8x8xf32>
    %197 = arith.subf %193, %196 : vector<8x8xf32>
    %198 = math.exp %197 : vector<8x8xf32>
    %cst_65 = arith.constant dense<0.000000e+00> : vector<8xf32>
    %199 = vector.multi_reduction <add>, %198, %cst_65 [1] : vector<8x8xf32> to vector<8xf32>
    %200 = vector.shape_cast %199 : vector<8xf32> to vector<8x1xf32>
    %201 = vector.broadcast %200 : vector<8x1xf32> to vector<8x8xf32>
    %202 = arith.divf %198, %201 : vector<8x8xf32>
    %203 = vector.shape_cast %202 : vector<8x8xf32> to vector<8x8x1xf32>
    %204 = vector.broadcast %203 : vector<8x8x1xf32> to vector<8x8x128xf32>
    %205 = arith.mulf %204, %1 : vector<8x8x128xf32>
    %cst_66 = arith.constant dense<0.000000e+00> : vector<8x128xf32>
    %206 = vector.multi_reduction <add>, %205, %cst_66 [1] : vector<8x8x128xf32> to vector<8x128xf32>
    %207 = arith.truncf %206 : vector<8x128xf32> to vector<8x128xbf16>
    %cst_67 = arith.constant dense<0.000000e+00> : vector<8x384xf32>
    %208 = tpu.matmul %207, %5, %cst_67 {dimension_numbers = #tpu.dot_dimension_numbers<[1], [0], [0], [1], [0, 0, 1, 1], [], []>} : vector<8x128xbf16>, vector<128x384xbf16>, vector<8x384xf32> -> vector<8x384xf32>
    %209 = arith.addf %181, %208 : vector<8x384xf32>
    %210 = arith.truncf %155 : vector<8x128xf32> to vector<8x128xbf16>
    %cst_68 = arith.constant dense<0.000000e+00> : vector<8x384xf32>
    %211 = tpu.matmul %210, %6, %cst_68 {dimension_numbers = #tpu.dot_dimension_numbers<[1], [0], [0], [1], [0, 0, 1, 1], [], []>} : vector<8x128xbf16>, vector<128x384xbf16>, vector<8x384xf32> -> vector<8x384xf32>
    %212 = vector.broadcast %7 : vector<1x384xf32> to vector<8x384xf32>
    %213 = arith.addf %211, %212 : vector<8x384xf32>
    %214 = vector.extract_strided_slice %209 {offsets = [0, 0], sizes = [8, 128], strides = [1, 1]} : vector<8x384xf32> to vector<8x128xf32>
    %215 = vector.extract_strided_slice %213 {offsets = [0, 0], sizes = [8, 128], strides = [1, 1]} : vector<8x384xf32> to vector<8x128xf32>
    %216 = arith.addf %214, %215 : vector<8x128xf32>
    %217 = arith.negf %216 : vector<8x128xf32>
    %218 = math.exp %217 : vector<8x128xf32>
    %cst_69 = arith.constant 1.000000e+00 : f32
    %219 = vector.broadcast %cst_69 : f32 to vector<8x128xf32>
    %220 = arith.addf %219, %218 : vector<8x128xf32>
    %221 = arith.divf %219, %220 : vector<8x128xf32>
    %222 = vector.extract_strided_slice %209 {offsets = [0, 128], sizes = [8, 128], strides = [1, 1]} : vector<8x384xf32> to vector<8x128xf32>
    %223 = vector.extract_strided_slice %213 {offsets = [0, 128], sizes = [8, 128], strides = [1, 1]} : vector<8x384xf32> to vector<8x128xf32>
    %224 = arith.addf %222, %223 : vector<8x128xf32>
    %225 = arith.negf %224 : vector<8x128xf32>
    %226 = math.exp %225 : vector<8x128xf32>
    %cst_70 = arith.constant 1.000000e+00 : f32
    %227 = vector.broadcast %cst_70 : f32 to vector<8x128xf32>
    %228 = arith.addf %227, %226 : vector<8x128xf32>
    %229 = arith.divf %227, %228 : vector<8x128xf32>
    %230 = vector.extract_strided_slice %209 {offsets = [0, 256], sizes = [8, 128], strides = [1, 1]} : vector<8x384xf32> to vector<8x128xf32>
    %231 = vector.extract_strided_slice %213 {offsets = [0, 256], sizes = [8, 128], strides = [1, 1]} : vector<8x384xf32> to vector<8x128xf32>
    %232 = arith.mulf %221, %231 : vector<8x128xf32>
    %233 = arith.addf %230, %232 : vector<8x128xf32>
    %234 = math.tanh %233 : vector<8x128xf32>
    %cst_71 = arith.constant 1.000000e+00 : f32
    %235 = vector.broadcast %cst_71 : f32 to vector<8x128xf32>
    %236 = arith.subf %235, %229 : vector<8x128xf32>
    %237 = arith.mulf %236, %234 : vector<8x128xf32>
    %238 = arith.mulf %229, %155 : vector<8x128xf32>
    %239 = arith.addf %237, %238 : vector<8x128xf32>
    %240 = arith.truncf %239 : vector<8x128xf32> to vector<8x128xbf16>
    %cst_72 = arith.constant dense<0.000000e+00> : vector<8x128xf32>
    %241 = tpu.matmul %240, %8, %cst_72 {dimension_numbers = #tpu.dot_dimension_numbers<[1], [0], [0], [1], [0, 0, 1, 1], [], []>} : vector<8x128xbf16>, vector<128x128xbf16>, vector<8x128xf32> -> vector<8x128xf32>
    %242 = vector.broadcast %9 : vector<1x128xf32> to vector<8x128xf32>
    %243 = arith.addf %241, %242 : vector<8x128xf32>
    %cst_73 = arith.constant dense<0xFF800000> : vector<8xf32>
    %244 = vector.multi_reduction <maximumf>, %243, %cst_73 [1] : vector<8x128xf32> to vector<8xf32>
    %245 = vector.shape_cast %244 : vector<8xf32> to vector<8x1xf32>
    %246 = vector.broadcast %245 : vector<8x1xf32> to vector<8x128xf32>
    %247 = arith.subf %243, %246 : vector<8x128xf32>
    %248 = math.exp %247 : vector<8x128xf32>
    %cst_74 = arith.constant dense<0.000000e+00> : vector<8xf32>
    %249 = vector.multi_reduction <add>, %248, %cst_74 [1] : vector<8x128xf32> to vector<8xf32>
    %250 = vector.shape_cast %249 : vector<8xf32> to vector<8x1xf32>
    %251 = math.log %250 : vector<8x1xf32>
    %252 = arith.addf %251, %245 : vector<8x1xf32>
    %253 = vector.broadcast %252 : vector<8x1xf32> to vector<8x128xf32>
    %254 = arith.subf %243, %253 : vector<8x128xf32>
    %255 = arith.index_cast %c2_i32 : i32 to index
    %c0_75 = arith.constant 0 : index
    %c0_76 = arith.constant 0 : index
    %256 = vector.load %arg12[%255, %c0_75, %c0_76] : memref<7x8x128xf32, #tpu.memory_space<vmem>>, vector<1x8x128xf32>
    %257 = vector.shape_cast %256 : vector<1x8x128xf32> to vector<8x128xf32>
    %258 = vector.shape_cast %254 : vector<8x128xf32> to vector<1x8x128xf32>
    tpu.vector_store %arg12[%255, %c0_75, %c0_76], %258 {strides = array<i32>} : memref<7x8x128xf32, #tpu.memory_space<vmem>>, vector<1x8x128xf32>,
    %259 = arith.index_cast %c2_i32 : i32 to index
    %c0_77 = arith.constant 0 : index
    %c0_78 = arith.constant 0 : index
    %260 = vector.load %arg13[%259, %c0_77, %c0_78] : memref<7x8x8xf32, #tpu.memory_space<vmem>>, vector<1x8x8xf32>
    %261 = vector.shape_cast %260 : vector<1x8x8xf32> to vector<8x8xf32>
    %262 = vector.shape_cast %202 : vector<8x8xf32> to vector<1x8x8xf32>
    tpu.vector_store %arg13[%259, %c0_77, %c0_78], %262 {strides = array<i32>} : memref<7x8x8xf32, #tpu.memory_space<vmem>>, vector<1x8x8xf32>,
    %c3_i32 = arith.constant 3 : i32
    %263 = arith.index_cast %c3_i32 : i32 to index
    %c0_79 = arith.constant 0 : index
    %c0_80 = arith.constant 0 : index
    %264 = vector.load %arg0[%263, %c0_79, %c0_80] : memref<7x8x384xf32, #tpu.memory_space<vmem>>, vector<1x8x384xf32>
    %265 = vector.shape_cast %264 : vector<1x8x384xf32> to vector<8x384xf32>
    %266 = arith.truncf %239 : vector<8x128xf32> to vector<8x128xbf16>
    %cst_81 = arith.constant dense<0.000000e+00> : vector<8x128xf32>
    %267 = tpu.matmul %266, %2, %cst_81 {dimension_numbers = #tpu.dot_dimension_numbers<[1], [0], [0], [1], [0, 0, 1, 1], [], []>} : vector<8x128xbf16>, vector<128x128xbf16>, vector<8x128xf32> -> vector<8x128xf32>
    %268 = vector.broadcast %3 : vector<1x128xf32> to vector<8x128xf32>
    %269 = arith.addf %267, %268 : vector<8x128xf32>
    %270 = vector.shape_cast %269 : vector<8x128xf32> to vector<8x1x128xf32>
    %271 = vector.broadcast %270 : vector<8x1x128xf32> to vector<8x8x128xf32>
    %272 = arith.addf %271, %0 : vector<8x8x128xf32>
    %273 = math.tanh %272 : vector<8x8x128xf32>
    %274 = vector.shape_cast %4 : vector<1x128xf32> to vector<1x1x128xf32>
    %275 = vector.broadcast %274 : vector<1x1x128xf32> to vector<8x8x128xf32>
    %276 = arith.mulf %273, %275 : vector<8x8x128xf32>
    %cst_82 = arith.constant dense<0.000000e+00> : vector<8x8xf32>
    %277 = vector.multi_reduction <add>, %276, %cst_82 [2] : vector<8x8x128xf32> to vector<8x8xf32>
    %cst_83 = arith.constant dense<0xFF800000> : vector<8xf32>
    %278 = vector.multi_reduction <maximumf>, %277, %cst_83 [1] : vector<8x8xf32> to vector<8xf32>
    %279 = vector.shape_cast %278 : vector<8xf32> to vector<8x1xf32>
    %280 = vector.broadcast %279 : vector<8x1xf32> to vector<8x8xf32>
    %281 = arith.subf %277, %280 : vector<8x8xf32>
    %282 = math.exp %281 : vector<8x8xf32>
    %cst_84 = arith.constant dense<0.000000e+00> : vector<8xf32>
    %283 = vector.multi_reduction <add>, %282, %cst_84 [1] : vector<8x8xf32> to vector<8xf32>
    %284 = vector.shape_cast %283 : vector<8xf32> to vector<8x1xf32>
    %285 = vector.broadcast %284 : vector<8x1xf32> to vector<8x8xf32>
    %286 = arith.divf %282, %285 : vector<8x8xf32>
    %287 = vector.shape_cast %286 : vector<8x8xf32> to vector<8x8x1xf32>
    %288 = vector.broadcast %287 : vector<8x8x1xf32> to vector<8x8x128xf32>
    %289 = arith.mulf %288, %1 : vector<8x8x128xf32>
    %cst_85 = arith.constant dense<0.000000e+00> : vector<8x128xf32>
    %290 = vector.multi_reduction <add>, %289, %cst_85 [1] : vector<8x8x128xf32> to vector<8x128xf32>
    %291 = arith.truncf %290 : vector<8x128xf32> to vector<8x128xbf16>
    %cst_86 = arith.constant dense<0.000000e+00> : vector<8x384xf32>
    %292 = tpu.matmul %291, %5, %cst_86 {dimension_numbers = #tpu.dot_dimension_numbers<[1], [0], [0], [1], [0, 0, 1, 1], [], []>} : vector<8x128xbf16>, vector<128x384xbf16>, vector<8x384xf32> -> vector<8x384xf32>
    %293 = arith.addf %265, %292 : vector<8x384xf32>
    %294 = arith.truncf %239 : vector<8x128xf32> to vector<8x128xbf16>
    %cst_87 = arith.constant dense<0.000000e+00> : vector<8x384xf32>
    %295 = tpu.matmul %294, %6, %cst_87 {dimension_numbers = #tpu.dot_dimension_numbers<[1], [0], [0], [1], [0, 0, 1, 1], [], []>} : vector<8x128xbf16>, vector<128x384xbf16>, vector<8x384xf32> -> vector<8x384xf32>
    %296 = vector.broadcast %7 : vector<1x384xf32> to vector<8x384xf32>
    %297 = arith.addf %295, %296 : vector<8x384xf32>
    %298 = vector.extract_strided_slice %293 {offsets = [0, 0], sizes = [8, 128], strides = [1, 1]} : vector<8x384xf32> to vector<8x128xf32>
    %299 = vector.extract_strided_slice %297 {offsets = [0, 0], sizes = [8, 128], strides = [1, 1]} : vector<8x384xf32> to vector<8x128xf32>
    %300 = arith.addf %298, %299 : vector<8x128xf32>
    %301 = arith.negf %300 : vector<8x128xf32>
    %302 = math.exp %301 : vector<8x128xf32>
    %cst_88 = arith.constant 1.000000e+00 : f32
    %303 = vector.broadcast %cst_88 : f32 to vector<8x128xf32>
    %304 = arith.addf %303, %302 : vector<8x128xf32>
    %305 = arith.divf %303, %304 : vector<8x128xf32>
    %306 = vector.extract_strided_slice %293 {offsets = [0, 128], sizes = [8, 128], strides = [1, 1]} : vector<8x384xf32> to vector<8x128xf32>
    %307 = vector.extract_strided_slice %297 {offsets = [0, 128], sizes = [8, 128], strides = [1, 1]} : vector<8x384xf32> to vector<8x128xf32>
    %308 = arith.addf %306, %307 : vector<8x128xf32>
    %309 = arith.negf %308 : vector<8x128xf32>
    %310 = math.exp %309 : vector<8x128xf32>
    %cst_89 = arith.constant 1.000000e+00 : f32
    %311 = vector.broadcast %cst_89 : f32 to vector<8x128xf32>
    %312 = arith.addf %311, %310 : vector<8x128xf32>
    %313 = arith.divf %311, %312 : vector<8x128xf32>
    %314 = vector.extract_strided_slice %293 {offsets = [0, 256], sizes = [8, 128], strides = [1, 1]} : vector<8x384xf32> to vector<8x128xf32>
    %315 = vector.extract_strided_slice %297 {offsets = [0, 256], sizes = [8, 128], strides = [1, 1]} : vector<8x384xf32> to vector<8x128xf32>
    %316 = arith.mulf %305, %315 : vector<8x128xf32>
    %317 = arith.addf %314, %316 : vector<8x128xf32>
    %318 = math.tanh %317 : vector<8x128xf32>
    %cst_90 = arith.constant 1.000000e+00 : f32
    %319 = vector.broadcast %cst_90 : f32 to vector<8x128xf32>
    %320 = arith.subf %319, %313 : vector<8x128xf32>
    %321 = arith.mulf %320, %318 : vector<8x128xf32>
    %322 = arith.mulf %313, %239 : vector<8x128xf32>
    %323 = arith.addf %321, %322 : vector<8x128xf32>
    %324 = arith.truncf %323 : vector<8x128xf32> to vector<8x128xbf16>
    %cst_91 = arith.constant dense<0.000000e+00> : vector<8x128xf32>
    %325 = tpu.matmul %324, %8, %cst_91 {dimension_numbers = #tpu.dot_dimension_numbers<[1], [0], [0], [1], [0, 0, 1, 1], [], []>} : vector<8x128xbf16>, vector<128x128xbf16>, vector<8x128xf32> -> vector<8x128xf32>
    %326 = vector.broadcast %9 : vector<1x128xf32> to vector<8x128xf32>
    %327 = arith.addf %325, %326 : vector<8x128xf32>
    %cst_92 = arith.constant dense<0xFF800000> : vector<8xf32>
    %328 = vector.multi_reduction <maximumf>, %327, %cst_92 [1] : vector<8x128xf32> to vector<8xf32>
    %329 = vector.shape_cast %328 : vector<8xf32> to vector<8x1xf32>
    %330 = vector.broadcast %329 : vector<8x1xf32> to vector<8x128xf32>
    %331 = arith.subf %327, %330 : vector<8x128xf32>
    %332 = math.exp %331 : vector<8x128xf32>
    %cst_93 = arith.constant dense<0.000000e+00> : vector<8xf32>
    %333 = vector.multi_reduction <add>, %332, %cst_93 [1] : vector<8x128xf32> to vector<8xf32>
    %334 = vector.shape_cast %333 : vector<8xf32> to vector<8x1xf32>
    %335 = math.log %334 : vector<8x1xf32>
    %336 = arith.addf %335, %329 : vector<8x1xf32>
    %337 = vector.broadcast %336 : vector<8x1xf32> to vector<8x128xf32>
    %338 = arith.subf %327, %337 : vector<8x128xf32>
    %339 = arith.index_cast %c3_i32 : i32 to index
    %c0_94 = arith.constant 0 : index
    %c0_95 = arith.constant 0 : index
    %340 = vector.load %arg12[%339, %c0_94, %c0_95] : memref<7x8x128xf32, #tpu.memory_space<vmem>>, vector<1x8x128xf32>
    %341 = vector.shape_cast %340 : vector<1x8x128xf32> to vector<8x128xf32>
    %342 = vector.shape_cast %338 : vector<8x128xf32> to vector<1x8x128xf32>
    tpu.vector_store %arg12[%339, %c0_94, %c0_95], %342 {strides = array<i32>} : memref<7x8x128xf32, #tpu.memory_space<vmem>>, vector<1x8x128xf32>,
    %343 = arith.index_cast %c3_i32 : i32 to index
    %c0_96 = arith.constant 0 : index
    %c0_97 = arith.constant 0 : index
    %344 = vector.load %arg13[%343, %c0_96, %c0_97] : memref<7x8x8xf32, #tpu.memory_space<vmem>>, vector<1x8x8xf32>
    %345 = vector.shape_cast %344 : vector<1x8x8xf32> to vector<8x8xf32>
    %346 = vector.shape_cast %286 : vector<8x8xf32> to vector<1x8x8xf32>
    tpu.vector_store %arg13[%343, %c0_96, %c0_97], %346 {strides = array<i32>} : memref<7x8x8xf32, #tpu.memory_space<vmem>>, vector<1x8x8xf32>,
    %c4_i32 = arith.constant 4 : i32
    %347 = arith.index_cast %c4_i32 : i32 to index
    %c0_98 = arith.constant 0 : index
    %c0_99 = arith.constant 0 : index
    %348 = vector.load %arg0[%347, %c0_98, %c0_99] : memref<7x8x384xf32, #tpu.memory_space<vmem>>, vector<1x8x384xf32>
    %349 = vector.shape_cast %348 : vector<1x8x384xf32> to vector<8x384xf32>
    %350 = arith.truncf %323 : vector<8x128xf32> to vector<8x128xbf16>
    %cst_100 = arith.constant dense<0.000000e+00> : vector<8x128xf32>
    %351 = tpu.matmul %350, %2, %cst_100 {dimension_numbers = #tpu.dot_dimension_numbers<[1], [0], [0], [1], [0, 0, 1, 1], [], []>} : vector<8x128xbf16>, vector<128x128xbf16>, vector<8x128xf32> -> vector<8x128xf32>
    %352 = vector.broadcast %3 : vector<1x128xf32> to vector<8x128xf32>
    %353 = arith.addf %351, %352 : vector<8x128xf32>
    %354 = vector.shape_cast %353 : vector<8x128xf32> to vector<8x1x128xf32>
    %355 = vector.broadcast %354 : vector<8x1x128xf32> to vector<8x8x128xf32>
    %356 = arith.addf %355, %0 : vector<8x8x128xf32>
    %357 = math.tanh %356 : vector<8x8x128xf32>
    %358 = vector.shape_cast %4 : vector<1x128xf32> to vector<1x1x128xf32>
    %359 = vector.broadcast %358 : vector<1x1x128xf32> to vector<8x8x128xf32>
    %360 = arith.mulf %357, %359 : vector<8x8x128xf32>
    %cst_101 = arith.constant dense<0.000000e+00> : vector<8x8xf32>
    %361 = vector.multi_reduction <add>, %360, %cst_101 [2] : vector<8x8x128xf32> to vector<8x8xf32>
    %cst_102 = arith.constant dense<0xFF800000> : vector<8xf32>
    %362 = vector.multi_reduction <maximumf>, %361, %cst_102 [1] : vector<8x8xf32> to vector<8xf32>
    %363 = vector.shape_cast %362 : vector<8xf32> to vector<8x1xf32>
    %364 = vector.broadcast %363 : vector<8x1xf32> to vector<8x8xf32>
    %365 = arith.subf %361, %364 : vector<8x8xf32>
    %366 = math.exp %365 : vector<8x8xf32>
    %cst_103 = arith.constant dense<0.000000e+00> : vector<8xf32>
    %367 = vector.multi_reduction <add>, %366, %cst_103 [1] : vector<8x8xf32> to vector<8xf32>
    %368 = vector.shape_cast %367 : vector<8xf32> to vector<8x1xf32>
    %369 = vector.broadcast %368 : vector<8x1xf32> to vector<8x8xf32>
    %370 = arith.divf %366, %369 : vector<8x8xf32>
    %371 = vector.shape_cast %370 : vector<8x8xf32> to vector<8x8x1xf32>
    %372 = vector.broadcast %371 : vector<8x8x1xf32> to vector<8x8x128xf32>
    %373 = arith.mulf %372, %1 : vector<8x8x128xf32>
    %cst_104 = arith.constant dense<0.000000e+00> : vector<8x128xf32>
    %374 = vector.multi_reduction <add>, %373, %cst_104 [1] : vector<8x8x128xf32> to vector<8x128xf32>
    %375 = arith.truncf %374 : vector<8x128xf32> to vector<8x128xbf16>
    %cst_105 = arith.constant dense<0.000000e+00> : vector<8x384xf32>
    %376 = tpu.matmul %375, %5, %cst_105 {dimension_numbers = #tpu.dot_dimension_numbers<[1], [0], [0], [1], [0, 0, 1, 1], [], []>} : vector<8x128xbf16>, vector<128x384xbf16>, vector<8x384xf32> -> vector<8x384xf32>
    %377 = arith.addf %349, %376 : vector<8x384xf32>
    %378 = arith.truncf %323 : vector<8x128xf32> to vector<8x128xbf16>
    %cst_106 = arith.constant dense<0.000000e+00> : vector<8x384xf32>
    %379 = tpu.matmul %378, %6, %cst_106 {dimension_numbers = #tpu.dot_dimension_numbers<[1], [0], [0], [1], [0, 0, 1, 1], [], []>} : vector<8x128xbf16>, vector<128x384xbf16>, vector<8x384xf32> -> vector<8x384xf32>
    %380 = vector.broadcast %7 : vector<1x384xf32> to vector<8x384xf32>
    %381 = arith.addf %379, %380 : vector<8x384xf32>
    %382 = vector.extract_strided_slice %377 {offsets = [0, 0], sizes = [8, 128], strides = [1, 1]} : vector<8x384xf32> to vector<8x128xf32>
    %383 = vector.extract_strided_slice %381 {offsets = [0, 0], sizes = [8, 128], strides = [1, 1]} : vector<8x384xf32> to vector<8x128xf32>
    %384 = arith.addf %382, %383 : vector<8x128xf32>
    %385 = arith.negf %384 : vector<8x128xf32>
    %386 = math.exp %385 : vector<8x128xf32>
    %cst_107 = arith.constant 1.000000e+00 : f32
    %387 = vector.broadcast %cst_107 : f32 to vector<8x128xf32>
    %388 = arith.addf %387, %386 : vector<8x128xf32>
    %389 = arith.divf %387, %388 : vector<8x128xf32>
    %390 = vector.extract_strided_slice %377 {offsets = [0, 128], sizes = [8, 128], strides = [1, 1]} : vector<8x384xf32> to vector<8x128xf32>
    %391 = vector.extract_strided_slice %381 {offsets = [0, 128], sizes = [8, 128], strides = [1, 1]} : vector<8x384xf32> to vector<8x128xf32>
    %392 = arith.addf %390, %391 : vector<8x128xf32>
    %393 = arith.negf %392 : vector<8x128xf32>
    %394 = math.exp %393 : vector<8x128xf32>
    %cst_108 = arith.constant 1.000000e+00 : f32
    %395 = vector.broadcast %cst_108 : f32 to vector<8x128xf32>
    %396 = arith.addf %395, %394 : vector<8x128xf32>
    %397 = arith.divf %395, %396 : vector<8x128xf32>
    %398 = vector.extract_strided_slice %377 {offsets = [0, 256], sizes = [8, 128], strides = [1, 1]} : vector<8x384xf32> to vector<8x128xf32>
    %399 = vector.extract_strided_slice %381 {offsets = [0, 256], sizes = [8, 128], strides = [1, 1]} : vector<8x384xf32> to vector<8x128xf32>
    %400 = arith.mulf %389, %399 : vector<8x128xf32>
    %401 = arith.addf %398, %400 : vector<8x128xf32>
    %402 = math.tanh %401 : vector<8x128xf32>
    %cst_109 = arith.constant 1.000000e+00 : f32
    %403 = vector.broadcast %cst_109 : f32 to vector<8x128xf32>
    %404 = arith.subf %403, %397 : vector<8x128xf32>
    %405 = arith.mulf %404, %402 : vector<8x128xf32>
    %406 = arith.mulf %397, %323 : vector<8x128xf32>
    %407 = arith.addf %405, %406 : vector<8x128xf32>
    %408 = arith.truncf %407 : vector<8x128xf32> to vector<8x128xbf16>
    %cst_110 = arith.constant dense<0.000000e+00> : vector<8x128xf32>
    %409 = tpu.matmul %408, %8, %cst_110 {dimension_numbers = #tpu.dot_dimension_numbers<[1], [0], [0], [1], [0, 0, 1, 1], [], []>} : vector<8x128xbf16>, vector<128x128xbf16>, vector<8x128xf32> -> vector<8x128xf32>
    %410 = vector.broadcast %9 : vector<1x128xf32> to vector<8x128xf32>
    %411 = arith.addf %409, %410 : vector<8x128xf32>
    %cst_111 = arith.constant dense<0xFF800000> : vector<8xf32>
    %412 = vector.multi_reduction <maximumf>, %411, %cst_111 [1] : vector<8x128xf32> to vector<8xf32>
    %413 = vector.shape_cast %412 : vector<8xf32> to vector<8x1xf32>
    %414 = vector.broadcast %413 : vector<8x1xf32> to vector<8x128xf32>
    %415 = arith.subf %411, %414 : vector<8x128xf32>
    %416 = math.exp %415 : vector<8x128xf32>
    %cst_112 = arith.constant dense<0.000000e+00> : vector<8xf32>
    %417 = vector.multi_reduction <add>, %416, %cst_112 [1] : vector<8x128xf32> to vector<8xf32>
    %418 = vector.shape_cast %417 : vector<8xf32> to vector<8x1xf32>
    %419 = math.log %418 : vector<8x1xf32>
    %420 = arith.addf %419, %413 : vector<8x1xf32>
    %421 = vector.broadcast %420 : vector<8x1xf32> to vector<8x128xf32>
    %422 = arith.subf %411, %421 : vector<8x128xf32>
    %423 = arith.index_cast %c4_i32 : i32 to index
    %c0_113 = arith.constant 0 : index
    %c0_114 = arith.constant 0 : index
    %424 = vector.load %arg12[%423, %c0_113, %c0_114] : memref<7x8x128xf32, #tpu.memory_space<vmem>>, vector<1x8x128xf32>
    %425 = vector.shape_cast %424 : vector<1x8x128xf32> to vector<8x128xf32>
    %426 = vector.shape_cast %422 : vector<8x128xf32> to vector<1x8x128xf32>
    tpu.vector_store %arg12[%423, %c0_113, %c0_114], %426 {strides = array<i32>} : memref<7x8x128xf32, #tpu.memory_space<vmem>>, vector<1x8x128xf32>,
    %427 = arith.index_cast %c4_i32 : i32 to index
    %c0_115 = arith.constant 0 : index
    %c0_116 = arith.constant 0 : index
    %428 = vector.load %arg13[%427, %c0_115, %c0_116] : memref<7x8x8xf32, #tpu.memory_space<vmem>>, vector<1x8x8xf32>
    %429 = vector.shape_cast %428 : vector<1x8x8xf32> to vector<8x8xf32>
    %430 = vector.shape_cast %370 : vector<8x8xf32> to vector<1x8x8xf32>
    tpu.vector_store %arg13[%427, %c0_115, %c0_116], %430 {strides = array<i32>} : memref<7x8x8xf32, #tpu.memory_space<vmem>>, vector<1x8x8xf32>,
    %c5_i32 = arith.constant 5 : i32
    %431 = arith.index_cast %c5_i32 : i32 to index
    %c0_117 = arith.constant 0 : index
    %c0_118 = arith.constant 0 : index
    %432 = vector.load %arg0[%431, %c0_117, %c0_118] : memref<7x8x384xf32, #tpu.memory_space<vmem>>, vector<1x8x384xf32>
    %433 = vector.shape_cast %432 : vector<1x8x384xf32> to vector<8x384xf32>
    %434 = arith.truncf %407 : vector<8x128xf32> to vector<8x128xbf16>
    %cst_119 = arith.constant dense<0.000000e+00> : vector<8x128xf32>
    %435 = tpu.matmul %434, %2, %cst_119 {dimension_numbers = #tpu.dot_dimension_numbers<[1], [0], [0], [1], [0, 0, 1, 1], [], []>} : vector<8x128xbf16>, vector<128x128xbf16>, vector<8x128xf32> -> vector<8x128xf32>
    %436 = vector.broadcast %3 : vector<1x128xf32> to vector<8x128xf32>
    %437 = arith.addf %435, %436 : vector<8x128xf32>
    %438 = vector.shape_cast %437 : vector<8x128xf32> to vector<8x1x128xf32>
    %439 = vector.broadcast %438 : vector<8x1x128xf32> to vector<8x8x128xf32>
    %440 = arith.addf %439, %0 : vector<8x8x128xf32>
    %441 = math.tanh %440 : vector<8x8x128xf32>
    %442 = vector.shape_cast %4 : vector<1x128xf32> to vector<1x1x128xf32>
    %443 = vector.broadcast %442 : vector<1x1x128xf32> to vector<8x8x128xf32>
    %444 = arith.mulf %441, %443 : vector<8x8x128xf32>
    %cst_120 = arith.constant dense<0.000000e+00> : vector<8x8xf32>
    %445 = vector.multi_reduction <add>, %444, %cst_120 [2] : vector<8x8x128xf32> to vector<8x8xf32>
    %cst_121 = arith.constant dense<0xFF800000> : vector<8xf32>
    %446 = vector.multi_reduction <maximumf>, %445, %cst_121 [1] : vector<8x8xf32> to vector<8xf32>
    %447 = vector.shape_cast %446 : vector<8xf32> to vector<8x1xf32>
    %448 = vector.broadcast %447 : vector<8x1xf32> to vector<8x8xf32>
    %449 = arith.subf %445, %448 : vector<8x8xf32>
    %450 = math.exp %449 : vector<8x8xf32>
    %cst_122 = arith.constant dense<0.000000e+00> : vector<8xf32>
    %451 = vector.multi_reduction <add>, %450, %cst_122 [1] : vector<8x8xf32> to vector<8xf32>
    %452 = vector.shape_cast %451 : vector<8xf32> to vector<8x1xf32>
    %453 = vector.broadcast %452 : vector<8x1xf32> to vector<8x8xf32>
    %454 = arith.divf %450, %453 : vector<8x8xf32>
    %455 = vector.shape_cast %454 : vector<8x8xf32> to vector<8x8x1xf32>
    %456 = vector.broadcast %455 : vector<8x8x1xf32> to vector<8x8x128xf32>
    %457 = arith.mulf %456, %1 : vector<8x8x128xf32>
    %cst_123 = arith.constant dense<0.000000e+00> : vector<8x128xf32>
    %458 = vector.multi_reduction <add>, %457, %cst_123 [1] : vector<8x8x128xf32> to vector<8x128xf32>
    %459 = arith.truncf %458 : vector<8x128xf32> to vector<8x128xbf16>
    %cst_124 = arith.constant dense<0.000000e+00> : vector<8x384xf32>
    %460 = tpu.matmul %459, %5, %cst_124 {dimension_numbers = #tpu.dot_dimension_numbers<[1], [0], [0], [1], [0, 0, 1, 1], [], []>} : vector<8x128xbf16>, vector<128x384xbf16>, vector<8x384xf32> -> vector<8x384xf32>
    %461 = arith.addf %433, %460 : vector<8x384xf32>
    %462 = arith.truncf %407 : vector<8x128xf32> to vector<8x128xbf16>
    %cst_125 = arith.constant dense<0.000000e+00> : vector<8x384xf32>
    %463 = tpu.matmul %462, %6, %cst_125 {dimension_numbers = #tpu.dot_dimension_numbers<[1], [0], [0], [1], [0, 0, 1, 1], [], []>} : vector<8x128xbf16>, vector<128x384xbf16>, vector<8x384xf32> -> vector<8x384xf32>
    %464 = vector.broadcast %7 : vector<1x384xf32> to vector<8x384xf32>
    %465 = arith.addf %463, %464 : vector<8x384xf32>
    %466 = vector.extract_strided_slice %461 {offsets = [0, 0], sizes = [8, 128], strides = [1, 1]} : vector<8x384xf32> to vector<8x128xf32>
    %467 = vector.extract_strided_slice %465 {offsets = [0, 0], sizes = [8, 128], strides = [1, 1]} : vector<8x384xf32> to vector<8x128xf32>
    %468 = arith.addf %466, %467 : vector<8x128xf32>
    %469 = arith.negf %468 : vector<8x128xf32>
    %470 = math.exp %469 : vector<8x128xf32>
    %cst_126 = arith.constant 1.000000e+00 : f32
    %471 = vector.broadcast %cst_126 : f32 to vector<8x128xf32>
    %472 = arith.addf %471, %470 : vector<8x128xf32>
    %473 = arith.divf %471, %472 : vector<8x128xf32>
    %474 = vector.extract_strided_slice %461 {offsets = [0, 128], sizes = [8, 128], strides = [1, 1]} : vector<8x384xf32> to vector<8x128xf32>
    %475 = vector.extract_strided_slice %465 {offsets = [0, 128], sizes = [8, 128], strides = [1, 1]} : vector<8x384xf32> to vector<8x128xf32>
    %476 = arith.addf %474, %475 : vector<8x128xf32>
    %477 = arith.negf %476 : vector<8x128xf32>
    %478 = math.exp %477 : vector<8x128xf32>
    %cst_127 = arith.constant 1.000000e+00 : f32
    %479 = vector.broadcast %cst_127 : f32 to vector<8x128xf32>
    %480 = arith.addf %479, %478 : vector<8x128xf32>
    %481 = arith.divf %479, %480 : vector<8x128xf32>
    %482 = vector.extract_strided_slice %461 {offsets = [0, 256], sizes = [8, 128], strides = [1, 1]} : vector<8x384xf32> to vector<8x128xf32>
    %483 = vector.extract_strided_slice %465 {offsets = [0, 256], sizes = [8, 128], strides = [1, 1]} : vector<8x384xf32> to vector<8x128xf32>
    %484 = arith.mulf %473, %483 : vector<8x128xf32>
    %485 = arith.addf %482, %484 : vector<8x128xf32>
    %486 = math.tanh %485 : vector<8x128xf32>
    %cst_128 = arith.constant 1.000000e+00 : f32
    %487 = vector.broadcast %cst_128 : f32 to vector<8x128xf32>
    %488 = arith.subf %487, %481 : vector<8x128xf32>
    %489 = arith.mulf %488, %486 : vector<8x128xf32>
    %490 = arith.mulf %481, %407 : vector<8x128xf32>
    %491 = arith.addf %489, %490 : vector<8x128xf32>
    %492 = arith.truncf %491 : vector<8x128xf32> to vector<8x128xbf16>
    %cst_129 = arith.constant dense<0.000000e+00> : vector<8x128xf32>
    %493 = tpu.matmul %492, %8, %cst_129 {dimension_numbers = #tpu.dot_dimension_numbers<[1], [0], [0], [1], [0, 0, 1, 1], [], []>} : vector<8x128xbf16>, vector<128x128xbf16>, vector<8x128xf32> -> vector<8x128xf32>
    %494 = vector.broadcast %9 : vector<1x128xf32> to vector<8x128xf32>
    %495 = arith.addf %493, %494 : vector<8x128xf32>
    %cst_130 = arith.constant dense<0xFF800000> : vector<8xf32>
    %496 = vector.multi_reduction <maximumf>, %495, %cst_130 [1] : vector<8x128xf32> to vector<8xf32>
    %497 = vector.shape_cast %496 : vector<8xf32> to vector<8x1xf32>
    %498 = vector.broadcast %497 : vector<8x1xf32> to vector<8x128xf32>
    %499 = arith.subf %495, %498 : vector<8x128xf32>
    %500 = math.exp %499 : vector<8x128xf32>
    %cst_131 = arith.constant dense<0.000000e+00> : vector<8xf32>
    %501 = vector.multi_reduction <add>, %500, %cst_131 [1] : vector<8x128xf32> to vector<8xf32>
    %502 = vector.shape_cast %501 : vector<8xf32> to vector<8x1xf32>
    %503 = math.log %502 : vector<8x1xf32>
    %504 = arith.addf %503, %497 : vector<8x1xf32>
    %505 = vector.broadcast %504 : vector<8x1xf32> to vector<8x128xf32>
    %506 = arith.subf %495, %505 : vector<8x128xf32>
    %507 = arith.index_cast %c5_i32 : i32 to index
    %c0_132 = arith.constant 0 : index
    %c0_133 = arith.constant 0 : index
    %508 = vector.load %arg12[%507, %c0_132, %c0_133] : memref<7x8x128xf32, #tpu.memory_space<vmem>>, vector<1x8x128xf32>
    %509 = vector.shape_cast %508 : vector<1x8x128xf32> to vector<8x128xf32>
    %510 = vector.shape_cast %506 : vector<8x128xf32> to vector<1x8x128xf32>
    tpu.vector_store %arg12[%507, %c0_132, %c0_133], %510 {strides = array<i32>} : memref<7x8x128xf32, #tpu.memory_space<vmem>>, vector<1x8x128xf32>,
    %511 = arith.index_cast %c5_i32 : i32 to index
    %c0_134 = arith.constant 0 : index
    %c0_135 = arith.constant 0 : index
    %512 = vector.load %arg13[%511, %c0_134, %c0_135] : memref<7x8x8xf32, #tpu.memory_space<vmem>>, vector<1x8x8xf32>
    %513 = vector.shape_cast %512 : vector<1x8x8xf32> to vector<8x8xf32>
    %514 = vector.shape_cast %454 : vector<8x8xf32> to vector<1x8x8xf32>
    tpu.vector_store %arg13[%511, %c0_134, %c0_135], %514 {strides = array<i32>} : memref<7x8x8xf32, #tpu.memory_space<vmem>>, vector<1x8x8xf32>,
    %c6_i32 = arith.constant 6 : i32
    %515 = arith.index_cast %c6_i32 : i32 to index
    %c0_136 = arith.constant 0 : index
    %c0_137 = arith.constant 0 : index
    %516 = vector.load %arg0[%515, %c0_136, %c0_137] : memref<7x8x384xf32, #tpu.memory_space<vmem>>, vector<1x8x384xf32>
    %517 = vector.shape_cast %516 : vector<1x8x384xf32> to vector<8x384xf32>
    %518 = arith.truncf %491 : vector<8x128xf32> to vector<8x128xbf16>
    %cst_138 = arith.constant dense<0.000000e+00> : vector<8x128xf32>
    %519 = tpu.matmul %518, %2, %cst_138 {dimension_numbers = #tpu.dot_dimension_numbers<[1], [0], [0], [1], [0, 0, 1, 1], [], []>} : vector<8x128xbf16>, vector<128x128xbf16>, vector<8x128xf32> -> vector<8x128xf32>
    %520 = vector.broadcast %3 : vector<1x128xf32> to vector<8x128xf32>
    %521 = arith.addf %519, %520 : vector<8x128xf32>
    %522 = vector.shape_cast %521 : vector<8x128xf32> to vector<8x1x128xf32>
    %523 = vector.broadcast %522 : vector<8x1x128xf32> to vector<8x8x128xf32>
    %524 = arith.addf %523, %0 : vector<8x8x128xf32>
    %525 = math.tanh %524 : vector<8x8x128xf32>
    %526 = vector.shape_cast %4 : vector<1x128xf32> to vector<1x1x128xf32>
    %527 = vector.broadcast %526 : vector<1x1x128xf32> to vector<8x8x128xf32>
    %528 = arith.mulf %525, %527 : vector<8x8x128xf32>
    %cst_139 = arith.constant dense<0.000000e+00> : vector<8x8xf32>
    %529 = vector.multi_reduction <add>, %528, %cst_139 [2] : vector<8x8x128xf32> to vector<8x8xf32>
    %cst_140 = arith.constant dense<0xFF800000> : vector<8xf32>
    %530 = vector.multi_reduction <maximumf>, %529, %cst_140 [1] : vector<8x8xf32> to vector<8xf32>
    %531 = vector.shape_cast %530 : vector<8xf32> to vector<8x1xf32>
    %532 = vector.broadcast %531 : vector<8x1xf32> to vector<8x8xf32>
    %533 = arith.subf %529, %532 : vector<8x8xf32>
    %534 = math.exp %533 : vector<8x8xf32>
    %cst_141 = arith.constant dense<0.000000e+00> : vector<8xf32>
    %535 = vector.multi_reduction <add>, %534, %cst_141 [1] : vector<8x8xf32> to vector<8xf32>
    %536 = vector.shape_cast %535 : vector<8xf32> to vector<8x1xf32>
    %537 = vector.broadcast %536 : vector<8x1xf32> to vector<8x8xf32>
    %538 = arith.divf %534, %537 : vector<8x8xf32>
    %539 = vector.shape_cast %538 : vector<8x8xf32> to vector<8x8x1xf32>
    %540 = vector.broadcast %539 : vector<8x8x1xf32> to vector<8x8x128xf32>
    %541 = arith.mulf %540, %1 : vector<8x8x128xf32>
    %cst_142 = arith.constant dense<0.000000e+00> : vector<8x128xf32>
    %542 = vector.multi_reduction <add>, %541, %cst_142 [1] : vector<8x8x128xf32> to vector<8x128xf32>
    %543 = arith.truncf %542 : vector<8x128xf32> to vector<8x128xbf16>
    %cst_143 = arith.constant dense<0.000000e+00> : vector<8x384xf32>
    %544 = tpu.matmul %543, %5, %cst_143 {dimension_numbers = #tpu.dot_dimension_numbers<[1], [0], [0], [1], [0, 0, 1, 1], [], []>} : vector<8x128xbf16>, vector<128x384xbf16>, vector<8x384xf32> -> vector<8x384xf32>
    %545 = arith.addf %517, %544 : vector<8x384xf32>
    %546 = arith.truncf %491 : vector<8x128xf32> to vector<8x128xbf16>
    %cst_144 = arith.constant dense<0.000000e+00> : vector<8x384xf32>
    %547 = tpu.matmul %546, %6, %cst_144 {dimension_numbers = #tpu.dot_dimension_numbers<[1], [0], [0], [1], [0, 0, 1, 1], [], []>} : vector<8x128xbf16>, vector<128x384xbf16>, vector<8x384xf32> -> vector<8x384xf32>
    %548 = vector.broadcast %7 : vector<1x384xf32> to vector<8x384xf32>
    %549 = arith.addf %547, %548 : vector<8x384xf32>
    %550 = vector.extract_strided_slice %545 {offsets = [0, 0], sizes = [8, 128], strides = [1, 1]} : vector<8x384xf32> to vector<8x128xf32>
    %551 = vector.extract_strided_slice %549 {offsets = [0, 0], sizes = [8, 128], strides = [1, 1]} : vector<8x384xf32> to vector<8x128xf32>
    %552 = arith.addf %550, %551 : vector<8x128xf32>
    %553 = arith.negf %552 : vector<8x128xf32>
    %554 = math.exp %553 : vector<8x128xf32>
    %cst_145 = arith.constant 1.000000e+00 : f32
    %555 = vector.broadcast %cst_145 : f32 to vector<8x128xf32>
    %556 = arith.addf %555, %554 : vector<8x128xf32>
    %557 = arith.divf %555, %556 : vector<8x128xf32>
    %558 = vector.extract_strided_slice %545 {offsets = [0, 128], sizes = [8, 128], strides = [1, 1]} : vector<8x384xf32> to vector<8x128xf32>
    %559 = vector.extract_strided_slice %549 {offsets = [0, 128], sizes = [8, 128], strides = [1, 1]} : vector<8x384xf32> to vector<8x128xf32>
    %560 = arith.addf %558, %559 : vector<8x128xf32>
    %561 = arith.negf %560 : vector<8x128xf32>
    %562 = math.exp %561 : vector<8x128xf32>
    %cst_146 = arith.constant 1.000000e+00 : f32
    %563 = vector.broadcast %cst_146 : f32 to vector<8x128xf32>
    %564 = arith.addf %563, %562 : vector<8x128xf32>
    %565 = arith.divf %563, %564 : vector<8x128xf32>
    %566 = vector.extract_strided_slice %545 {offsets = [0, 256], sizes = [8, 128], strides = [1, 1]} : vector<8x384xf32> to vector<8x128xf32>
    %567 = vector.extract_strided_slice %549 {offsets = [0, 256], sizes = [8, 128], strides = [1, 1]} : vector<8x384xf32> to vector<8x128xf32>
    %568 = arith.mulf %557, %567 : vector<8x128xf32>
    %569 = arith.addf %566, %568 : vector<8x128xf32>
    %570 = math.tanh %569 : vector<8x128xf32>
    %cst_147 = arith.constant 1.000000e+00 : f32
    %571 = vector.broadcast %cst_147 : f32 to vector<8x128xf32>
    %572 = arith.subf %571, %565 : vector<8x128xf32>
    %573 = arith.mulf %572, %570 : vector<8x128xf32>
    %574 = arith.mulf %565, %491 : vector<8x128xf32>
    %575 = arith.addf %573, %574 : vector<8x128xf32>
    %576 = arith.truncf %575 : vector<8x128xf32> to vector<8x128xbf16>
    %cst_148 = arith.constant dense<0.000000e+00> : vector<8x128xf32>
    %577 = tpu.matmul %576, %8, %cst_148 {dimension_numbers = #tpu.dot_dimension_numbers<[1], [0], [0], [1], [0, 0, 1, 1], [], []>} : vector<8x128xbf16>, vector<128x128xbf16>, vector<8x128xf32> -> vector<8x128xf32>
    %578 = vector.broadcast %9 : vector<1x128xf32> to vector<8x128xf32>
    %579 = arith.addf %577, %578 : vector<8x128xf32>
    %cst_149 = arith.constant dense<0xFF800000> : vector<8xf32>
    %580 = vector.multi_reduction <maximumf>, %579, %cst_149 [1] : vector<8x128xf32> to vector<8xf32>
    %581 = vector.shape_cast %580 : vector<8xf32> to vector<8x1xf32>
    %582 = vector.broadcast %581 : vector<8x1xf32> to vector<8x128xf32>
    %583 = arith.subf %579, %582 : vector<8x128xf32>
    %584 = math.exp %583 : vector<8x128xf32>
    %cst_150 = arith.constant dense<0.000000e+00> : vector<8xf32>
    %585 = vector.multi_reduction <add>, %584, %cst_150 [1] : vector<8x128xf32> to vector<8xf32>
    %586 = vector.shape_cast %585 : vector<8xf32> to vector<8x1xf32>
    %587 = math.log %586 : vector<8x1xf32>
    %588 = arith.addf %587, %581 : vector<8x1xf32>
    %589 = vector.broadcast %588 : vector<8x1xf32> to vector<8x128xf32>
    %590 = arith.subf %579, %589 : vector<8x128xf32>
    %591 = arith.index_cast %c6_i32 : i32 to index
    %c0_151 = arith.constant 0 : index
    %c0_152 = arith.constant 0 : index
    %592 = vector.load %arg12[%591, %c0_151, %c0_152] : memref<7x8x128xf32, #tpu.memory_space<vmem>>, vector<1x8x128xf32>
    %593 = vector.shape_cast %592 : vector<1x8x128xf32> to vector<8x128xf32>
    %594 = vector.shape_cast %590 : vector<8x128xf32> to vector<1x8x128xf32>
    tpu.vector_store %arg12[%591, %c0_151, %c0_152], %594 {strides = array<i32>} : memref<7x8x128xf32, #tpu.memory_space<vmem>>, vector<1x8x128xf32>,
    %595 = arith.index_cast %c6_i32 : i32 to index
    %c0_153 = arith.constant 0 : index
    %c0_154 = arith.constant 0 : index
    %596 = vector.load %arg13[%595, %c0_153, %c0_154] : memref<7x8x8xf32, #tpu.memory_space<vmem>>, vector<1x8x8xf32>
    %597 = vector.shape_cast %596 : vector<1x8x8xf32> to vector<8x8xf32>
    %598 = vector.shape_cast %538 : vector<8x8xf32> to vector<1x8x8xf32>
    tpu.vector_store %arg13[%595, %c0_153, %c0_154], %598 {strides = array<i32>} : memref<7x8x8xf32, #tpu.memory_space<vmem>>, vector<1x8x8xf32>,
    %c7_i32 = arith.constant 7 : i32
    %c0_155 = arith.constant 0 : index
    %c0_156 = arith.constant 0 : index
    %599 = vector.load %arg14[%c0_155, %c0_156] : memref<8x128xf32, #tpu.memory_space<vmem>>, vector<8x128xf32>
    tpu.vector_store %arg14[%c0_155, %c0_156], %575 {strides = array<i32>} : memref<8x128xf32, #tpu.memory_space<vmem>>, vector<8x128xf32>,
    return
  }
}

</mosaic_0001>

<llo_original>
// kernel: attn_decoder_forward.1
$region0: #{attn_decoder_forward.1}
  #allocation0 [shape = 'u32[]', space=smem, size = 0x4, offset = 0x4, fixed_abs, tag = 'smem constant byte address 0x4 - core index']
  #allocation1 [shape = 'u32[144,128]{1,0:T(1,128)}', space=vmem, size = 0x12000, scoped, tag = 'internal scratch']
  %s0 = inlined_call_operand.vmem [shape: f32[7,8,384], index: 0, kind: input, shape index: {}]
  %s1 = inlined_call_operand.vmem [shape: f32[8,8,128], index: 1, kind: input, shape index: {}]
  %s2 = inlined_call_operand.vmem [shape: f32[8,8,128], index: 2, kind: input, shape index: {}]
  %s3 = inlined_call_operand.vmem [shape: bf16[128,128], index: 3, kind: input, shape index: {}]
  %s4 = inlined_call_operand.vmem [shape: f32[1,128], index: 4, kind: input, shape index: {}]
  %s5 = inlined_call_operand.vmem [shape: f32[1,128], index: 5, kind: input, shape index: {}]
  %s6 = inlined_call_operand.vmem [shape: bf16[128,384], index: 6, kind: input, shape index: {}]
  %s7 = inlined_call_operand.vmem [shape: bf16[128,384], index: 7, kind: input, shape index: {}]
  %s8 = inlined_call_operand.vmem [shape: f32[1,384], index: 8, kind: input, shape index: {}]
  %s9 = inlined_call_operand.vmem [shape: bf16[128,128], index: 9, kind: input, shape index: {}]
  %s10 = inlined_call_operand.vmem [shape: f32[1,128], index: 10, kind: input, shape index: {}]
  %s11 = inlined_call_operand.vmem [shape: f32[8,128], index: 11, kind: input, shape index: {}]
  %s12 = inlined_call_operand.vmem [shape: f32[7,8,128], index: 12, kind: output, shape index: {0}]
  %s13 = inlined_call_operand.vmem [shape: f32[7,8,8], index: 13, kind: output, shape index: {1}]
  %s14 = inlined_call_operand.vmem [shape: f32[8,128], index: 14, kind: output, shape index: {2}]
  %15 = xla_tuple %s12, %s13, %s14
  %s16 = sld [smem:[#allocation0]]
  $region74: #{attn_decoder_forward.1} parent=0
    _
  %s18 = ssub.s32 1, %s16
  %s19 = scalar_select 0, %s18, %s16
  // Predicated region
  $region2: #{attn_decoder_forward.1} parent=0 // pred_check
    _
  $region3: #{attn_decoder_forward.1} parent=0 // pred_check_branch
    %21 = sbr.rel (0) target = $region5
  $region4: #{attn_decoder_forward.1} parent=0 // pred_region
    _
  $region5: #{attn_decoder_forward.1} parent=0 // pred_fallthru
    _
  // Predicated region
  $region6: #{attn_decoder_forward.1} parent=0 // pred_check
    _
  $region7: #{attn_decoder_forward.1} parent=0 // pred_check_branch
    %23 = sbr.rel (0) target = $region9
  $region8: #{attn_decoder_forward.1} parent=0 // pred_region
    _
  $region9: #{attn_decoder_forward.1} parent=0 // pred_fallthru
    _
  // Predicated region
  $region10: #{attn_decoder_forward.1} parent=0 // pred_check
    _
  $region11: #{attn_decoder_forward.1} parent=0 // pred_check_branch
    %25 = sbr.rel (0) target = $region13
  $region12: #{attn_decoder_forward.1} parent=0 // pred_region
    _
  $region13: #{attn_decoder_forward.1} parent=0 // pred_fallthru
    _
  // Predicated region
  $region14: #{attn_decoder_forward.1} parent=0 // pred_check
    _
  $region15: #{attn_decoder_forward.1} parent=0 // pred_check_branch
    %27 = sbr.rel (0) target = $region17
  $region16: #{attn_decoder_forward.1} parent=0 // pred_region
    _
  $region17: #{attn_decoder_forward.1} parent=0 // pred_fallthru
    _
  // Predicated region
  $region18: #{attn_decoder_forward.1} parent=0 // pred_check
    _
  $region19: #{attn_decoder_forward.1} parent=0 // pred_check_branch
    %29 = sbr.rel (0) target = $region21
  $region20: #{attn_decoder_forward.1} parent=0 // pred_region
    _
  $region21: #{attn_decoder_forward.1} parent=0 // pred_fallthru
    _
  // Predicated region
  $region22: #{attn_decoder_forward.1} parent=0 // pred_check
    _
  $region23: #{attn_decoder_forward.1} parent=0 // pred_check_branch
    %31 = sbr.rel (0) target = $region25
  $region24: #{attn_decoder_forward.1} parent=0 // pred_region
    _
  $region25: #{attn_decoder_forward.1} parent=0 // pred_fallthru
    _
  // Predicated region
  $region26: #{attn_decoder_forward.1} parent=0 // pred_check
    _
  $region27: #{attn_decoder_forward.1} parent=0 // pred_check_branch
    %33 = sbr.rel (0) target = $region29
  $region28: #{attn_decoder_forward.1} parent=0 // pred_region
    _
  $region29: #{attn_decoder_forward.1} parent=0 // pred_fallthru
    _
  // Predicated region
  $region30: #{attn_decoder_forward.1} parent=0 // pred_check
    _
  $region31: #{attn_decoder_forward.1} parent=0 // pred_check_branch
    %35 = sbr.rel (0) target = $region33
  $region32: #{attn_decoder_forward.1} parent=0 // pred_region
    _
  $region33: #{attn_decoder_forward.1} parent=0 // pred_fallthru
    _
  // Predicated region
  $region34: #{attn_decoder_forward.1} parent=0 // pred_check
    _
  $region35: #{attn_decoder_forward.1} parent=0 // pred_check_branch
    %37 = sbr.rel (0) target = $region37
  $region36: #{attn_decoder_forward.1} parent=0 // pred_region
    _
  $region37: #{attn_decoder_forward.1} parent=0 // pred_fallthru
    _
  // Predicated region
  $region38: #{attn_decoder_forward.1} parent=0 // pred_check
    _
  $region39: #{attn_decoder_forward.1} parent=0 // pred_check_branch
    %39 = sbr.rel (0) target = $region41
  $region40: #{attn_decoder_forward.1} parent=0 // pred_region
    _
  $region41: #{attn_decoder_forward.1} parent=0 // pred_fallthru
    _
  // Predicated region
  $region42: #{attn_decoder_forward.1} parent=0 // pred_check
    _
  $region43: #{attn_decoder_forward.1} parent=0 // pred_check_branch
    %41 = sbr.rel (0) target = $region45
  $region44: #{attn_decoder_forward.1} parent=0 // pred_region
    _
  $region45: #{attn_decoder_forward.1} parent=0 // pred_fallthru
    _
  // Predicated region
  $region46: #{attn_decoder_forward.1} parent=0 // pred_check
    _
  $region47: #{attn_decoder_forward.1} parent=0 // pred_check_branch
    %43 = sbr.rel (0) target = $region49
  $region48: #{attn_decoder_forward.1} parent=0 // pred_region
    _
  $region49: #{attn_decoder_forward.1} parent=0 // pred_fallthru
    _
  %v45 = vld [vmem:[%s1] sm:$0xff]
  %v46 = vld [vmem:[%s1 + $0x8] sm:$0xff]
  %v47 = vld [vmem:[%s1 + $0x10] sm:$0xff]
  %v48 = vld [vmem:[%s1 + $0x18] sm:$0xff]
  %v49 = vld [vmem:[%s1 + $0x20] sm:$0xff]
  %v50 = vld [vmem:[%s1 + $0x28] sm:$0xff]
  %v51 = vld [vmem:[%s1 + $0x30] sm:$0xff]
  %v52 = vld [vmem:[%s1 + $0x38] sm:$0xff]
  %v53 = vld [vmem:[%s2] sm:$0xff]
  %v54 = vld [vmem:[%s2 + $0x8] sm:$0xff]
  %v55 = vld [vmem:[%s2 + $0x10] sm:$0xff]
  %v56 = vld [vmem:[%s2 + $0x18] sm:$0xff]
  %v57 = vld [vmem:[%s2 + $0x20] sm:$0xff]
  %v58 = vld [vmem:[%s2 + $0x28] sm:$0xff]
  %v59 = vld [vmem:[%s2 + $0x30] sm:$0xff]
  %v60 = vld [vmem:[%s2 + $0x38] sm:$0xff]
  %v61 = vld [vmem:[%s3] sm:$0xf]
  %v62 = vld [vmem:[%s3 + $0x4] sm:$0xf]
  %v63 = vld [vmem:[%s3 + $0x8] sm:$0xf]
  %v64 = vld [vmem:[%s3 + $0xc] sm:$0xf]
  %v65 = vld [vmem:[%s3 + $0x10] sm:$0xf]
  %v66 = vld [vmem:[%s3 + $0x14] sm:$0xf]
  %v67 = vld [vmem:[%s3 + $0x18] sm:$0xf]
  %v68 = vld [vmem:[%s3 + $0x1c] sm:$0xf]
  %v69 = vld [vmem:[%s3 + $0x20] sm:$0xf]
  %v70 = vld [vmem:[%s3 + $0x24] sm:$0xf]
  %v71 = vld [vmem:[%s3 + $0x28] sm:$0xf]
  %v72 = vld [vmem:[%s3 + $0x2c] sm:$0xf]
  %v73 = vld [vmem:[%s3 + $0x30] sm:$0xf]
  %v74 = vld [vmem:[%s3 + $0x34] sm:$0xf]
  %v75 = vld [vmem:[%s3 + $0x38] sm:$0xf]
  %v76 = vld [vmem:[%s3 + $0x3c] sm:$0xf]
  %v77 = vld [vmem:[%s4] sm:$0x1]
  %v78 = vld [vmem:[%s5] sm:$0x1]
  %v79 = vld [vmem:[%s6] sm:$0xff]
  %v80 = vld [vmem:[%s6 + $0x8] sm:$0xf]
  %v81 = vld [vmem:[%s6 + $0xc] sm:$0xff]
  %v82 = vld [vmem:[%s6 + $0x14] sm:$0xf]
  %v83 = vld [vmem:[%s6 + $0x18] sm:$0xff]
  %v84 = vld [vmem:[%s6 + $0x20] sm:$0xf]
  %v85 = vld [vmem:[%s6 + $0x24] sm:$0xff]
  %v86 = vld [vmem:[%s6 + $0x2c] sm:$0xf]
  %v87 = vld [vmem:[%s6 + $0x30] sm:$0xff]
  %v88 = vld [vmem:[%s6 + $0x38] sm:$0xf]
  %v89 = vld [vmem:[%s6 + $0x3c] sm:$0xff]
  %v90 = vld [vmem:[%s6 + $0x44] sm:$0xf]
  %v91 = vld [vmem:[%s6 + $0x48] sm:$0xff]
  %v92 = vld [vmem:[%s6 + $0x50] sm:$0xf]
  %v93 = vld [vmem:[%s6 + $0x54] sm:$0xff]
  %v94 = vld [vmem:[%s6 + $0x5c] sm:$0xf]
  %v95 = vld [vmem:[%s6 + $0x60] sm:$0xff]
  %v96 = vld [vmem:[%s6 + $0x68] sm:$0xf]
  %v97 = vld [vmem:[%s6 + $0x6c] sm:$0xff]
  %v98 = vld [vmem:[%s6 + $0x74] sm:$0xf]
  %v99 = vld [vmem:[%s6 + $0x78] sm:$0xff]
  %v100 = vld [vmem:[%s6 + $0x80] sm:$0xf]
  %v101 = vld [vmem:[%s6 + $0x84] sm:$0xff]
  %v102 = vld [vmem:[%s6 + $0x8c] sm:$0xf]
  %v103 = vld [vmem:[%s6 + $0x90] sm:$0xff]
  %v104 = vld [vmem:[%s6 + $0x98] sm:$0xf]
  %v105 = vld [vmem:[%s6 + $0x9c] sm:$0xff]
  %v106 = vld [vmem:[%s6 + $0xa4] sm:$0xf]
  %v107 = vld [vmem:[%s6 + $0xa8] sm:$0xff]
  %v108 = vld [vmem:[%s6 + $0xb0] sm:$0xf]
  %v109 = vld [vmem:[%s6 + $0xb4] sm:$0xff]
  %v110 = vld [vmem:[%s6 + $0xbc] sm:$0xf]
  %v111 = vld [vmem:[%s7] sm:$0xff]
  %v112 = vld [vmem:[%s7 + $0x8] sm:$0xf]
  %v113 = vld [vmem:[%s7 + $0xc] sm:$0xff]
  %v114 = vld [vmem:[%s7 + $0x14] sm:$0xf]
  %v115 = vld [vmem:[%s7 + $0x18] sm:$0xff]
  %v116 = vld [vmem:[%s7 + $0x20] sm:$0xf]
  %v117 = vld [vmem:[%s7 + $0x24] sm:$0xff]
  %v118 = vld [vmem:[%s7 + $0x2c] sm:$0xf]
  %v119 = vld [vmem:[%s7 + $0x30] sm:$0xff]
  %v120 = vld [vmem:[%s7 + $0x38] sm:$0xf]
  %v121 = vld [vmem:[%s7 + $0x3c] sm:$0xff]
  %v122 = vld [vmem:[%s7 + $0x44] sm:$0xf]
  %v123 = vld [vmem:[%s7 + $0x48] sm:$0xff]
  %v124 = vld [vmem:[%s7 + $0x50] sm:$0xf]
  %v125 = vld [vmem:[%s7 + $0x54] sm:$0xff]
  %v126 = vld [vmem:[%s7 + $0x5c] sm:$0xf]
  %v127 = vld [vmem:[%s7 + $0x60] sm:$0xff]
  %v128 = vld [vmem:[%s7 + $0x68] sm:$0xf]
  %v129 = vld [vmem:[%s7 + $0x6c] sm:$0xff]
  %v130 = vld [vmem:[%s7 + $0x74] sm:$0xf]
  %v131 = vld [vmem:[%s7 + $0x78] sm:$0xff]
  %v132 = vld [vmem:[%s7 + $0x80] sm:$0xf]
  %v133 = vld [vmem:[%s7 + $0x84] sm:$0xff]
  %v134 = vld [vmem:[%s7 + $0x8c] sm:$0xf]
  %v135 = vld [vmem:[%s7 + $0x90] sm:$0xff]
  %v136 = vld [vmem:[%s7 + $0x98] sm:$0xf]
  %v137 = vld [vmem:[%s7 + $0x9c] sm:$0xff]
  %v138 = vld [vmem:[%s7 + $0xa4] sm:$0xf]
  %v139 = vld [vmem:[%s7 + $0xa8] sm:$0xff]
  %v140 = vld [vmem:[%s7 + $0xb0] sm:$0xf]
  %v141 = vld [vmem:[%s7 + $0xb4] sm:$0xff]
  %v142 = vld [vmem:[%s7 + $0xbc] sm:$0xf]
  %v143 = vld [vmem:[%s8] sm:$0x7]
  %v144 = vld [vmem:[%s9] sm:$0xf]
  %v145 = vld [vmem:[%s9 + $0x4] sm:$0xf]
  %v146 = vld [vmem:[%s9 + $0x8] sm:$0xf]
  %v147 = vld [vmem:[%s9 + $0xc] sm:$0xf]
  %v148 = vld [vmem:[%s9 + $0x10] sm:$0xf]
  %v149 = vld [vmem:[%s9 + $0x14] sm:$0xf]
  %v150 = vld [vmem:[%s9 + $0x18] sm:$0xf]
  %v151 = vld [vmem:[%s9 + $0x1c] sm:$0xf]
  %v152 = vld [vmem:[%s9 + $0x20] sm:$0xf]
  %v153 = vld [vmem:[%s9 + $0x24] sm:$0xf]
  %v154 = vld [vmem:[%s9 + $0x28] sm:$0xf]
  %v155 = vld [vmem:[%s9 + $0x2c] sm:$0xf]
  %v156 = vld [vmem:[%s9 + $0x30] sm:$0xf]
  %v157 = vld [vmem:[%s9 + $0x34] sm:$0xf]
  %v158 = vld [vmem:[%s9 + $0x38] sm:$0xf]
  %v159 = vld [vmem:[%s9 + $0x3c] sm:$0xf]
  %v160 = vld [vmem:[%s10] sm:$0x1]
  %v161 = vld [vmem:[%s11] sm:$0xff]
  %v162 = vld [vmem:[%s0] sm:$0xff]
  %v163 = vld [vmem:[%s0 + $0x8] sm:$0xff]
  %v164 = vld [vmem:[%s0 + $0x10] sm:$0xff]
  %v165 = vpack.c.bf16 %v161, %v161
  %v167 = vlaneseq
  %v168 = vshrl.u32 %v167, 7
  %v169 = vsub.s32 0, %v168
  %v170 = vrot.slane %v77, %v169
  %v188 = vunpack.c.l.b16 %v61
  %v189 = vunpack.c.l.b16 %v62
  %v190 = vunpack.c.l.b16 %v63
  %v191 = vunpack.c.l.b16 %v64
  %v192 = vunpack.c.l.b16 %v65
  %v193 = vunpack.c.l.b16 %v66
  %v194 = vunpack.c.l.b16 %v67
  %v195 = vunpack.c.l.b16 %v68
  %v196 = vunpack.c.l.b16 %v69
  %v197 = vunpack.c.l.b16 %v70
  %v198 = vunpack.c.l.b16 %v71
  %v199 = vunpack.c.l.b16 %v72
  %v200 = vunpack.c.l.b16 %v73
  %v201 = vunpack.c.l.b16 %v74
  %v202 = vunpack.c.l.b16 %v75
  %v203 = vunpack.c.l.b16 %v76
  %v204 = vpack.c.b16 %v189, %v188
  %v205 = vpack.c.b16 %v191, %v190
  %v206 = vpack.c.b16 %v193, %v192
  %v207 = vpack.c.b16 %v195, %v194
  %v208 = vpack.c.b16 %v197, %v196
  %v209 = vpack.c.b16 %v199, %v198
  %v210 = vpack.c.b16 %v201, %v200
  %v211 = vpack.c.b16 %v203, %v202
  %220 = vmatprep.subr.bf16.mxu0 0
  %221 = vmatpush1.bf16.msra.mxu0 %v211
  %222 = vmatprep.subr.bf16.mxu0 0
  %223 = vmatpush1.bf16.msra.mxu0 %v210
  %224 = vmatprep.subr.bf16.mxu0 0
  %225 = vmatpush1.bf16.msra.mxu0 %v209
  %226 = vmatprep.subr.bf16.mxu0 0
  %227 = vmatpush1.bf16.msra.mxu0 %v208
  %228 = vmatprep.subr.bf16.mxu0 0
  %229 = vmatpush1.bf16.msra.mxu0 %v207
  %230 = vmatprep.subr.bf16.mxu0 0
  %231 = vmatpush1.bf16.msra.mxu0 %v206
  %232 = vmatprep.subr.bf16.mxu0 0
  %233 = vmatpush1.bf16.msra.mxu0 %v205
  %234 = vmatprep.subr.bf16.mxu0 0
  %235 = vmatpush1.bf16.msra.mxu0 %v204
  %236 = vmatprep.subr.bf16.mxu0 0
  %237 = vmatpush2.bf16.msra.mxu0 0
  %238 = vmatprep.subr.bf16.mxu0 0
  %239 = vmatpush2.bf16.msra.mxu0 0
  %240 = vmatprep.subr.bf16.mxu0 0
  %241 = vmatpush2.bf16.msra.mxu0 0
  %242 = vmatprep.subr.bf16.mxu0 0
  %243 = vmatpush2.bf16.msra.mxu0 0
  %244 = vmatprep.subr.bf16.mxu0 0
  %245 = vmatpush2.bf16.msra.mxu0 0
  %246 = vmatprep.subr.bf16.mxu0 0
  %247 = vmatpush2.bf16.msra.mxu0 0
  %248 = vmatprep.subr.bf16.mxu0 0
  %249 = vmatpush2.bf16.msra.mxu0 0
  %250 = vmatprep.subr.bf16.mxu0 0
  %251 = vmatpush2.bf16.msra.mxu0 0
  %252 = vmatprep.mubr.bf16.mxu0 0
  %253 = vmatmul.mubr.bf16.gmra.mxu0 %v165
  %v254 = vpop.f32.mrf.mxu0
  %v255 = vadd.f32 %v170, %v254
  %v256 = vpop.f32.mrf.mxu0
  %v257 = vpop.f32.mrf.mxu0
  %v258 = vpop.f32.mrf.mxu0
  %259 = vdwg.mxu0
  %v261 = vcombine.high %v255, %v255
  %v263 = vunpack.c.l.s4 1966171168
  %v264 = vunpack.c.0.s8 %v263
  %v265 = vlaneseq
  %v266 = vshrl.u32 %v265, 7
  %v267 = vsub.s32 %v264, %v266
  %v268 = vrot.slane %v255, %v267
  %v270 = vunpack.c.l.s4 1966171168
  %v271 = vunpack.c.0.s8 %v270
  %v272 = vlaneseq
  %v273 = vshrl.u32 %v272, 7
  %v274 = vsub.s32 %v271, %v273
  %v275 = vrot.slane %v261, %v274
  %v276 = vcombine.high %v268, %v268
  %v277 = vcombine.high %v275, %v275
  %v279 = vunpack.c.l.s4 1966171168
  %v280 = vunpack.c.0.s8 %v279
  %v281 = vlaneseq
  %v282 = vshrl.u32 %v281, 7
  %v283 = vsub.s32 %v280, %v282
  %v284 = vrot.slane %v268, %v283
  %v286 = vunpack.c.l.s4 1966171168
  %v287 = vunpack.c.0.s8 %v286
  %v288 = vlaneseq
  %v289 = vshrl.u32 %v288, 7
  %v290 = vsub.s32 %v287, %v289
  %v291 = vrot.slane %v275, %v290
  %v293 = vunpack.c.l.s4 1966171168
  %v294 = vunpack.c.0.s8 %v293
  %v295 = vlaneseq
  %v296 = vshrl.u32 %v295, 7
  %v297 = vsub.s32 %v294, %v296
  %v298 = vrot.slane %v276, %v297
  %v300 = vunpack.c.l.s4 1966171168
  %v301 = vunpack.c.0.s8 %v300
  %v302 = vlaneseq
  %v303 = vshrl.u32 %v302, 7
  %v304 = vsub.s32 %v301, %v303
  %v305 = vrot.slane %v277, %v304
  %v306 = vcombine.high %v284, %v284
  %v307 = vcombine.high %v291, %v291
  %v308 = vcombine.high %v298, %v298
  %v309 = vcombine.high %v305, %v305
  %v310 = vlaneseq
  %v311 = vshrl.u32 %v310, 7
  %v312 = vsub.s32 0, %v311
  %v313 = vrot.slane %v284, %v312
  %v314 = vlaneseq
  %v315 = vshrl.u32 %v314, 7
  %v316 = vsub.s32 0, %v315
  %v317 = vrot.slane %v298, %v316
  %v318 = vlaneseq
  %v319 = vshrl.u32 %v318, 7
  %v320 = vsub.s32 0, %v319
  %v321 = vrot.slane %v306, %v320
  %v322 = vlaneseq
  %v323 = vshrl.u32 %v322, 7
  %v324 = vsub.s32 0, %v323
  %v325 = vrot.slane %v308, %v324
  %v326 = vlaneseq
  %v327 = vshrl.u32 %v326, 7
  %v328 = vsub.s32 0, %v327
  %v329 = vrot.slane %v291, %v328
  %v330 = vlaneseq
  %v331 = vshrl.u32 %v330, 7
  %v332 = vsub.s32 0, %v331
  %v333 = vrot.slane %v305, %v332
  %v334 = vlaneseq
  %v335 = vshrl.u32 %v334, 7
  %v336 = vsub.s32 0, %v335
  %v337 = vrot.slane %v307, %v336
  %v338 = vlaneseq
  %v339 = vshrl.u32 %v338, 7
  %v340 = vsub.s32 0, %v339
  %v341 = vrot.slane %v309, %v340
  %v350 = vadd.f32 %v313, %v45
  %v351 = vadd.f32 %v317, %v46
  %v352 = vadd.f32 %v321, %v47
  %v353 = vadd.f32 %v325, %v48
  %v354 = vadd.f32 %v329, %v49
  %v355 = vadd.f32 %v333, %v50
  %v356 = vadd.f32 %v337, %v51
  %v357 = vadd.f32 %v341, %v52
  %v358 = vtanh.pop %v350
  %v359 = vtanh.pop %v351
  %v360 = vtanh.pop %v352
  %v361 = vtanh.pop %v353
  %v362 = vtanh.pop %v354
  %v363 = vtanh.pop %v355
  %v364 = vtanh.pop %v356
  %v365 = vtanh.pop %v357
  %v367 = vlaneseq
  %v368 = vshrl.u32 %v367, 7
  %v369 = vsub.s32 0, %v368
  %v370 = vrot.slane %v78, %v369
  %v372 = vmul.f32 %v358, %v370
  %v373 = vmul.f32 %v359, %v370
  %v374 = vmul.f32 %v360, %v370
  %v375 = vmul.f32 %v361, %v370
  %v376 = vmul.f32 %v362, %v370
  %v377 = vmul.f32 %v363, %v370
  %v378 = vmul.f32 %v364, %v370
  %v379 = vmul.f32 %v365, %v370
  %380 = vadd.xlane.f32.xlu0 %v372
  %v381 = vpop.xlane.xlu0 %380
  %382 = vadd.xlane.f32.xlu0 %v373
  %v383 = vpop.xlane.xlu0 %382
  %384 = vadd.xlane.f32.xlu0 %v374
  %v385 = vpop.xlane.xlu0 %384
  %386 = vadd.xlane.f32.xlu0 %v375
  %v387 = vpop.xlane.xlu0 %386
  %388 = vadd.xlane.f32.xlu0 %v376
  %v389 = vpop.xlane.xlu0 %388
  %390 = vadd.xlane.f32.xlu0 %v377
  %v391 = vpop.xlane.xlu0 %390
  %392 = vadd.xlane.f32.xlu0 %v378
  %v393 = vpop.xlane.xlu0 %392
  %394 = vadd.xlane.f32.xlu0 %v379
  %v395 = vpop.xlane.xlu0 %394
  %v404 = vlaneseq
  %v405 = vand.u32 %v404, 127
  %v406 = vlaneseq
  %v407 = vshrl.u32 %v406, 7
  %v408 = vsub.s32 %v405, %v407
  %v409 = vrot.slane %v381, %v408
  %v410 = vlaneseq
  %v411 = vshrl.u32 %v410, 7
  %v412 = vsub.s32 %v405, %v411
  %v413 = vrot.slane %v383, %v412
  %v414 = vlaneseq
  %v415 = vshrl.u32 %v414, 7
  %v416 = vsub.s32 %v405, %v415
  %v417 = vrot.slane %v385, %v416
  %v418 = vlaneseq
  %v419 = vshrl.u32 %v418, 7
  %v420 = vsub.s32 %v405, %v419
  %v421 = vrot.slane %v387, %v420
  %v422 = vlaneseq
  %v423 = vshrl.u32 %v422, 7
  %v424 = vsub.s32 %v405, %v423
  %v425 = vrot.slane %v389, %v424
  %v426 = vlaneseq
  %v427 = vshrl.u32 %v426, 7
  %v428 = vsub.s32 %v405, %v427
  %v429 = vrot.slane %v391, %v428
  %v430 = vlaneseq
  %v431 = vshrl.u32 %v430, 7
  %v432 = vsub.s32 %v405, %v431
  %v433 = vrot.slane %v393, %v432
  %v434 = vlaneseq
  %v435 = vshrl.u32 %v434, 7
  %v436 = vsub.s32 %v405, %v435
  %v437 = vrot.slane %v395, %v436
  %vm438 = vcmask 1041409
  %v439 = vsel %vm438, %v413, %v409
  %vm440 = vcmask 1042434
  %v441 = vsel %vm440, %v417, %v439
  %vm442 = vcmask 1043459
  %v443 = vsel %vm442, %v421, %v441
  %vm444 = vcmask 1044484
  %v445 = vsel %vm444, %v425, %v443
  %vm446 = vcmask 1045509
  %v447 = vsel %vm446, %v429, %v445
  %vm448 = vcmask 1046534
  %v449 = vsel %vm448, %v433, %v447
  %vm450 = vcmask 1047559
  %v451 = vsel %vm450, %v437, %v449
  %vm453 = vcmask 64512
  %v454 = vsel %vm453, %v451, -inf
  %455 = vmax.xlane.f32.xlu0 %v454
  %v456 = vpop.xlane.xlu0 %455
  %v458 = vlaneseq
  %v459 = vshrl.u32 %v458, 7
  %v460 = vsub.s32 0, %v459
  %v461 = vrot.slane %v456, %v460
  %v462 = vlaneseq
  %v463 = vshrl.u32 %v462, 7
  %v464 = vsub.s32 1, %v463
  %v465 = vrot.slane %v456, %v464
  %v466 = vlaneseq
  %v467 = vshrl.u32 %v466, 7
  %v468 = vsub.s32 2, %v467
  %v469 = vrot.slane %v456, %v468
  %v470 = vlaneseq
  %v471 = vshrl.u32 %v470, 7
  %v472 = vsub.s32 3, %v471
  %v473 = vrot.slane %v456, %v472
  %v474 = vlaneseq
  %v475 = vshrl.u32 %v474, 7
  %v476 = vsub.s32 4, %v475
  %v477 = vrot.slane %v456, %v476
  %v478 = vlaneseq
  %v479 = vshrl.u32 %v478, 7
  %v480 = vsub.s32 5, %v479
  %v481 = vrot.slane %v456, %v480
  %v482 = vlaneseq
  %v483 = vshrl.u32 %v482, 7
  %v484 = vsub.s32 6, %v483
  %v485 = vrot.slane %v456, %v484
  %v486 = vlaneseq
  %v487 = vshrl.u32 %v486, 7
  %v488 = vsub.s32 7, %v487
  %v489 = vrot.slane %v456, %v488
  %v498 = vsub.f32 %v381, %v461
  %v499 = vsub.f32 %v383, %v465
  %v500 = vsub.f32 %v385, %v469
  %v501 = vsub.f32 %v387, %v473
  %v502 = vsub.f32 %v389, %v477
  %v503 = vsub.f32 %v391, %v481
  %v504 = vsub.f32 %v393, %v485
  %v505 = vsub.f32 %v395, %v489
  %v506 = vmul.f32 %v498, 1.442695
  %v507 = vpow.pop %v506
  %v508 = vmul.f32 %v499, 1.442695
  %v509 = vpow.pop %v508
  %v510 = vmul.f32 %v500, 1.442695
  %v511 = vpow.pop %v510
  %v512 = vmul.f32 %v501, 1.442695
  %v513 = vpow.pop %v512
  %v514 = vmul.f32 %v502, 1.442695
  %v515 = vpow.pop %v514
  %v516 = vmul.f32 %v503, 1.442695
  %v517 = vpow.pop %v516
  %v518 = vmul.f32 %v504, 1.442695
  %v519 = vpow.pop %v518
  %v520 = vmul.f32 %v505, 1.442695
  %v521 = vpow.pop %v520
  %530 = vset.pattern.permute.xlu0 0
  %531 = vperm.xlu0 %530, %v507
  %v532 = vpop.permute.xlu0 %531
  %533 = vset.pattern.permute.xlu0 0
  %534 = vperm.xlu0 %533, %v509
  %v535 = vpop.permute.xlu0 %534
  %536 = vset.pattern.permute.xlu0 0
  %537 = vperm.xlu0 %536, %v511
  %v538 = vpop.permute.xlu0 %537
  %539 = vset.pattern.permute.xlu0 0
  %540 = vperm.xlu0 %539, %v513
  %v541 = vpop.permute.xlu0 %540
  %542 = vset.pattern.permute.xlu0 0
  %543 = vperm.xlu0 %542, %v515
  %v544 = vpop.permute.xlu0 %543
  %545 = vset.pattern.permute.xlu0 0
  %546 = vperm.xlu0 %545, %v517
  %v547 = vpop.permute.xlu0 %546
  %548 = vset.pattern.permute.xlu0 0
  %549 = vperm.xlu0 %548, %v519
  %v550 = vpop.permute.xlu0 %549
  %551 = vset.pattern.permute.xlu0 0
  %552 = vperm.xlu0 %551, %v521
  %v553 = vpop.permute.xlu0 %552
  %v554 = vlaneseq
  %v555 = vshrl.u32 %v554, 7
  %v556 = vsub.s32 %v405, %v555
  %v557 = vrot.slane %v532, %v556
  %v558 = vlaneseq
  %v559 = vshrl.u32 %v558, 7
  %v560 = vsub.s32 %v405, %v559
  %v561 = vrot.slane %v535, %v560
  %v562 = vlaneseq
  %v563 = vshrl.u32 %v562, 7
  %v564 = vsub.s32 %v405, %v563
  %v565 = vrot.slane %v538, %v564
  %v566 = vlaneseq
  %v567 = vshrl.u32 %v566, 7
  %v568 = vsub.s32 %v405, %v567
  %v569 = vrot.slane %v541, %v568
  %v570 = vlaneseq
  %v571 = vshrl.u32 %v570, 7
  %v572 = vsub.s32 %v405, %v571
  %v573 = vrot.slane %v544, %v572
  %v574 = vlaneseq
  %v575 = vshrl.u32 %v574, 7
  %v576 = vsub.s32 %v405, %v575
  %v577 = vrot.slane %v547, %v576
  %v578 = vlaneseq
  %v579 = vshrl.u32 %v578, 7
  %v580 = vsub.s32 %v405, %v579
  %v581 = vrot.slane %v550, %v580
  %v582 = vlaneseq
  %v583 = vshrl.u32 %v582, 7
  %v584 = vsub.s32 %v405, %v583
  %v585 = vrot.slane %v553, %v584
  %v586 = vsel %vm438, %v561, %v557
  %v587 = vsel %vm440, %v565, %v586
  %v588 = vsel %vm442, %v569, %v587
  %v589 = vsel %vm444, %v573, %v588
  %v590 = vsel %vm446, %v577, %v589
  %v591 = vsel %vm448, %v581, %v590
  %v592 = vsel %vm450, %v585, %v591
  %v594 = vsel %vm453, %v592, 0.0
  %595 = vadd.xlane.f32.xlu0 %v594
  %v596 = vpop.xlane.xlu0 %595
  %v598 = vlaneseq
  %v599 = vshrl.u32 %v598, 7
  %v600 = vsub.s32 0, %v599
  %v601 = vrot.slane %v596, %v600
  %v602 = vlaneseq
  %v603 = vshrl.u32 %v602, 7
  %v604 = vsub.s32 1, %v603
  %v605 = vrot.slane %v596, %v604
  %v606 = vlaneseq
  %v607 = vshrl.u32 %v606, 7
  %v608 = vsub.s32 2, %v607
  %v609 = vrot.slane %v596, %v608
  %v610 = vlaneseq
  %v611 = vshrl.u32 %v610, 7
  %v612 = vsub.s32 3, %v611
  %v613 = vrot.slane %v596, %v612
  %v614 = vlaneseq
  %v615 = vshrl.u32 %v614, 7
  %v616 = vsub.s32 4, %v615
  %v617 = vrot.slane %v596, %v616
  %v618 = vlaneseq
  %v619 = vshrl.u32 %v618, 7
  %v620 = vsub.s32 5, %v619
  %v621 = vrot.slane %v596, %v620
  %v622 = vlaneseq
  %v623 = vshrl.u32 %v622, 7
  %v624 = vsub.s32 6, %v623
  %v625 = vrot.slane %v596, %v624
  %v626 = vlaneseq
  %v627 = vshrl.u32 %v626, 7
  %v628 = vsub.s32 7, %v627
  %v629 = vrot.slane %v596, %v628
  %v638 = vrcp.pop %v601
  %v639 = vmul.f32 %v507, %v638
  %v640 = vrcp.pop %v605
  %v641 = vmul.f32 %v509, %v640
  %v642 = vrcp.pop %v609
  %v643 = vmul.f32 %v511, %v642
  %v644 = vrcp.pop %v613
  %v645 = vmul.f32 %v513, %v644
  %v646 = vrcp.pop %v617
  %v647 = vmul.f32 %v515, %v646
  %v648 = vrcp.pop %v621
  %v649 = vmul.f32 %v517, %v648
  %v650 = vrcp.pop %v625
  %v651 = vmul.f32 %v519, %v650
  %v652 = vrcp.pop %v629
  %v653 = vmul.f32 %v521, %v652
  %655 = vset.pattern.permute.xlu0 0
  %656 = vperm.xlu0 %655, %v639
  %v657 = vpop.permute.xlu0 %656
  %660 = vset.pattern.permute.xlu0 0
  %661 = vperm.xlu0 %660, %v641
  %v662 = vpop.permute.xlu0 %661
  %665 = vset.pattern.permute.xlu0 0
  %666 = vperm.xlu0 %665, %v643
  %v667 = vpop.permute.xlu0 %666
  %670 = vset.pattern.permute.xlu0 0
  %671 = vperm.xlu0 %670, %v645
  %v672 = vpop.permute.xlu0 %671
  %675 = vset.pattern.permute.xlu0 0
  %676 = vperm.xlu0 %675, %v647
  %v677 = vpop.permute.xlu0 %676
  %680 = vset.pattern.permute.xlu0 0
  %681 = vperm.xlu0 %680, %v649
  %v682 = vpop.permute.xlu0 %681
  %685 = vset.pattern.permute.xlu0 0
  %686 = vperm.xlu0 %685, %v651
  %v687 = vpop.permute.xlu0 %686
  %690 = vset.pattern.permute.xlu0 0
  %691 = vperm.xlu0 %690, %v653
  %v692 = vpop.permute.xlu0 %691
  %v694 = vmul.f32 %v657, %v53
  %v695 = vmul.f32 %v662, %v54
  %v696 = vmul.f32 %v667, %v55
  %v697 = vmul.f32 %v672, %v56
  %v698 = vmul.f32 %v677, %v57
  %v699 = vmul.f32 %v682, %v58
  %v700 = vmul.f32 %v687, %v59
  %v701 = vmul.f32 %v692, %v60
  %v702 = vrot.slane %v694, 4
  %v703 = vadd.f32 %v694, %v702
  %v704 = vrot.slane %v703, 2
  %v705 = vadd.f32 %v703, %v704
  %v706 = vrot.slane %v705, 1
  %v707 = vadd.f32 %v705, %v706
  %v708 = vrot.slane %v695, 4
  %v709 = vadd.f32 %v695, %v708
  %v710 = vrot.slane %v709, 2
  %v711 = vadd.f32 %v709, %v710
  %v712 = vrot.slane %v711, 1
  %v713 = vadd.f32 %v711, %v712
  %v714 = vrot.slane %v696, 4
  %v715 = vadd.f32 %v696, %v714
  %v716 = vrot.slane %v715, 2
  %v717 = vadd.f32 %v715, %v716
  %v718 = vrot.slane %v717, 1
  %v719 = vadd.f32 %v717, %v718
  %v720 = vrot.slane %v697, 4
  %v721 = vadd.f32 %v697, %v720
  %v722 = vrot.slane %v721, 2
  %v723 = vadd.f32 %v721, %v722
  %v724 = vrot.slane %v723, 1
  %v725 = vadd.f32 %v723, %v724
  %v726 = vrot.slane %v698, 4
  %v727 = vadd.f32 %v698, %v726
  %v728 = vrot.slane %v727, 2
  %v729 = vadd.f32 %v727, %v728
  %v730 = vrot.slane %v729, 1
  %v731 = vadd.f32 %v729, %v730
  %v732 = vrot.slane %v699, 4
  %v733 = vadd.f32 %v699, %v732
  %v734 = vrot.slane %v733, 2
  %v735 = vadd.f32 %v733, %v734
  %v736 = vrot.slane %v735, 1
  %v737 = vadd.f32 %v735, %v736
  %v738 = vrot.slane %v700, 4
  %v739 = vadd.f32 %v700, %v738
  %v740 = vrot.slane %v739, 2
  %v741 = vadd.f32 %v739, %v740
  %v742 = vrot.slane %v741, 1
  %v743 = vadd.f32 %v741, %v742
  %v744 = vrot.slane %v701, 4
  %v745 = vadd.f32 %v701, %v744
  %v746 = vrot.slane %v745, 2
  %v747 = vadd.f32 %v745, %v746
  %v748 = vrot.slane %v747, 1
  %v749 = vadd.f32 %v747, %v748
  %v750 = vpack.c.bf16 %v707, %v707
  %v751 = vpack.c.bf16 %v713, %v713
  %v752 = vpack.c.bf16 %v719, %v719
  %v753 = vpack.c.bf16 %v725, %v725
  %v754 = vpack.c.bf16 %v731, %v731
  %v755 = vpack.c.bf16 %v737, %v737
  %v756 = vpack.c.bf16 %v743, %v743
  %v757 = vpack.c.bf16 %v749, %v749
  %v766 = vunpack.c.l.b16 %v750
  %v767 = vunpack.c.l.b16 %v751
  %v768 = vunpack.c.l.b16 %v752
  %v769 = vunpack.c.l.b16 %v753
  %v770 = vunpack.c.l.b16 %v754
  %v771 = vunpack.c.l.b16 %v755
  %v772 = vunpack.c.l.b16 %v756
  %v773 = vunpack.c.l.b16 %v757
  %v774 = vsel %vm438, %v767, %v766
  %v775 = vsel %vm440, %v768, %v774
  %v776 = vsel %vm442, %v769, %v775
  %v777 = vsel %vm444, %v770, %v776
  %v778 = vsel %vm446, %v771, %v777
  %v779 = vsel %vm448, %v772, %v778
  %v780 = vsel %vm450, %v773, %v779
  %v781 = vpack.c.b16 %v780, %v780
  %v815 = vunpack.c.l.b16 %v79
  %v816 = vunpack.c.h.b16 %v79
  %v817 = vunpack.c.l.b16 %v80
  %v818 = vunpack.c.l.b16 %v81
  %v819 = vunpack.c.h.b16 %v81
  %v820 = vunpack.c.l.b16 %v82
  %v821 = vunpack.c.l.b16 %v83
  %v822 = vunpack.c.h.b16 %v83
  %v823 = vunpack.c.l.b16 %v84
  %v824 = vunpack.c.l.b16 %v85
  %v825 = vunpack.c.h.b16 %v85
  %v826 = vunpack.c.l.b16 %v86
  %v827 = vunpack.c.l.b16 %v87
  %v828 = vunpack.c.h.b16 %v87
  %v829 = vunpack.c.l.b16 %v88
  %v830 = vunpack.c.l.b16 %v89
  %v831 = vunpack.c.h.b16 %v89
  %v832 = vunpack.c.l.b16 %v90
  %v833 = vunpack.c.l.b16 %v91
  %v834 = vunpack.c.h.b16 %v91
  %v835 = vunpack.c.l.b16 %v92
  %v836 = vunpack.c.l.b16 %v93
  %v837 = vunpack.c.h.b16 %v93
  %v838 = vunpack.c.l.b16 %v94
  %v839 = vunpack.c.l.b16 %v95
  %v840 = vunpack.c.h.b16 %v95
  %v841 = vunpack.c.l.b16 %v96
  %v842 = vunpack.c.l.b16 %v97
  %v843 = vunpack.c.h.b16 %v97
  %v844 = vunpack.c.l.b16 %v98
  %v845 = vunpack.c.l.b16 %v99
  %v846 = vunpack.c.h.b16 %v99
  %v847 = vunpack.c.l.b16 %v100
  %v848 = vunpack.c.l.b16 %v101
  %v849 = vunpack.c.h.b16 %v101
  %v850 = vunpack.c.l.b16 %v102
  %v851 = vunpack.c.l.b16 %v103
  %v852 = vunpack.c.h.b16 %v103
  %v853 = vunpack.c.l.b16 %v104
  %v854 = vunpack.c.l.b16 %v105
  %v855 = vunpack.c.h.b16 %v105
  %v856 = vunpack.c.l.b16 %v106
  %v857 = vunpack.c.l.b16 %v107
  %v858 = vunpack.c.h.b16 %v107
  %v859 = vunpack.c.l.b16 %v108
  %v860 = vunpack.c.l.b16 %v109
  %v861 = vunpack.c.h.b16 %v109
  %v862 = vunpack.c.l.b16 %v110
  %v863 = vpack.c.b16 %v818, %v815
  %v864 = vpack.c.b16 %v819, %v816
  %v865 = vpack.c.b16 %v820, %v817
  %v866 = vpack.c.b16 %v824, %v821
  %v867 = vpack.c.b16 %v825, %v822
  %v868 = vpack.c.b16 %v826, %v823
  %v869 = vpack.c.b16 %v830, %v827
  %v870 = vpack.c.b16 %v831, %v828
  %v871 = vpack.c.b16 %v832, %v829
  %v872 = vpack.c.b16 %v836, %v833
  %v873 = vpack.c.b16 %v837, %v834
  %v874 = vpack.c.b16 %v838, %v835
  %v875 = vpack.c.b16 %v842, %v839
  %v876 = vpack.c.b16 %v843, %v840
  %v877 = vpack.c.b16 %v844, %v841
  %v878 = vpack.c.b16 %v848, %v845
  %v879 = vpack.c.b16 %v849, %v846
  %v880 = vpack.c.b16 %v850, %v847
  %v881 = vpack.c.b16 %v854, %v851
  %v882 = vpack.c.b16 %v855, %v852
  %v883 = vpack.c.b16 %v856, %v853
  %v884 = vpack.c.b16 %v860, %v857
  %v885 = vpack.c.b16 %v861, %v858
  %v886 = vpack.c.b16 %v862, %v859
  %911 = vmatprep.subr.bf16.mxu0 %v885
  %912 = vmatpush1.bf16.msra.mxu0 %v884
  %913 = vmatprep.subr.bf16.mxu0 %v882
  %914 = vmatpush1.bf16.msra.mxu0 %v881
  %915 = vmatprep.subr.bf16.mxu0 %v879
  %916 = vmatpush1.bf16.msra.mxu0 %v878
  %917 = vmatprep.subr.bf16.mxu0 %v876
  %918 = vmatpush1.bf16.msra.mxu0 %v875
  %919 = vmatprep.subr.bf16.mxu0 %v873
  %920 = vmatpush1.bf16.msra.mxu0 %v872
  %921 = vmatprep.subr.bf16.mxu0 %v870
  %922 = vmatpush1.bf16.msra.mxu0 %v869
  %923 = vmatprep.subr.bf16.mxu0 %v867
  %924 = vmatpush1.bf16.msra.mxu0 %v866
  %925 = vmatprep.subr.bf16.mxu0 %v864
  %926 = vmatpush1.bf16.msra.mxu0 %v863
  %927 = vmatprep.subr.bf16.mxu0 0
  %928 = vmatpush2.bf16.msra.mxu0 0
  %929 = vmatprep.subr.bf16.mxu0 0
  %930 = vmatpush2.bf16.msra.mxu0 0
  %931 = vmatprep.subr.bf16.mxu0 0
  %932 = vmatpush2.bf16.msra.mxu0 0
  %933 = vmatprep.subr.bf16.mxu0 0
  %934 = vmatpush2.bf16.msra.mxu0 0
  %935 = vmatprep.subr.bf16.mxu0 0
  %936 = vmatpush2.bf16.msra.mxu0 0
  %937 = vmatprep.subr.bf16.mxu0 0
  %938 = vmatpush2.bf16.msra.mxu0 0
  %939 = vmatprep.subr.bf16.mxu0 0
  %940 = vmatpush2.bf16.msra.mxu0 0
  %941 = vmatprep.subr.bf16.mxu0 0
  %942 = vmatpush2.bf16.msra.mxu0 0
  %943 = vmatprep.mubr.bf16.mxu0 0
  %944 = vmatmul.mubr.bf16.gmra.mxu0 %v781
  %v945 = vpop.f32.mrf.mxu0
  %v946 = vadd.f32 0.0, %v945
  %v947 = vpop.f32.mrf.mxu0
  %v948 = vadd.f32 0.0, %v947
  %v949 = vpop.f32.mrf.mxu0
  %v950 = vpop.f32.mrf.mxu0
  %951 = vdwg.mxu0
  %952 = vmatprep.subr.bf16.mxu0 0
  %953 = vmatpush1.bf16.msra.mxu0 %v886
  %954 = vmatprep.subr.bf16.mxu0 0
  %955 = vmatpush1.bf16.msra.mxu0 %v883
  %956 = vmatprep.subr.bf16.mxu0 0
  %957 = vmatpush1.bf16.msra.mxu0 %v880
  %958 = vmatprep.subr.bf16.mxu0 0
  %959 = vmatpush1.bf16.msra.mxu0 %v877
  %960 = vmatprep.subr.bf16.mxu0 0
  %961 = vmatpush1.bf16.msra.mxu0 %v874
  %962 = vmatprep.subr.bf16.mxu0 0
  %963 = vmatpush1.bf16.msra.mxu0 %v871
  %964 = vmatprep.subr.bf16.mxu0 0
  %965 = vmatpush1.bf16.msra.mxu0 %v868
  %966 = vmatprep.subr.bf16.mxu0 0
  %967 = vmatpush1.bf16.msra.mxu0 %v865
  %968 = vmatprep.subr.bf16.mxu0 0
  %969 = vmatpush2.bf16.msra.mxu0 0
  %970 = vmatprep.subr.bf16.mxu0 0
  %971 = vmatpush2.bf16.msra.mxu0 0
  %972 = vmatprep.subr.bf16.mxu0 0
  %973 = vmatpush2.bf16.msra.mxu0 0
  %974 = vmatprep.subr.bf16.mxu0 0
  %975 = vmatpush2.bf16.msra.mxu0 0
  %976 = vmatprep.subr.bf16.mxu0 0
  %977 = vmatpush2.bf16.msra.mxu0 0
  %978 = vmatprep.subr.bf16.mxu0 0
  %979 = vmatpush2.bf16.msra.mxu0 0
  %980 = vmatprep.subr.bf16.mxu0 0
  %981 = vmatpush2.bf16.msra.mxu0 0
  %982 = vmatprep.subr.bf16.mxu0 0
  %983 = vmatpush2.bf16.msra.mxu0 0
  %984 = vmatprep.mubr.bf16.mxu0 0
  %985 = vmatmul.mubr.bf16.gmra.mxu0 %v781
  %v986 = vpop.f32.mrf.mxu0
  %v987 = vadd.f32 0.0, %v986
  %v988 = vpop.f32.mrf.mxu0
  %v989 = vpop.f32.mrf.mxu0
  %v990 = vpop.f32.mrf.mxu0
  %991 = vdwg.mxu0
  %v992 = vadd.f32 %v162, %v946
  %v993 = vadd.f32 %v163, %v948
  %v994 = vadd.f32 %v164, %v987
  %v996 = vlaneseq
  %v997 = vshrl.u32 %v996, 7
  %v998 = vsub.s32 0, %v997
  %v999 = vrot.slane %v143, %v998
  %v1000 = vlaneseq
  %v1001 = vshrl.u32 %v1000, 7
  %v1002 = vsub.s32 1, %v1001
  %v1003 = vrot.slane %v143, %v1002
  %v1004 = vlaneseq
  %v1005 = vshrl.u32 %v1004, 7
  %v1006 = vsub.s32 2, %v1005
  %v1007 = vrot.slane %v143, %v1006
  %v1043 = vunpack.c.l.b16 %v111
  %v1044 = vunpack.c.h.b16 %v111
  %v1045 = vunpack.c.l.b16 %v112
  %v1046 = vunpack.c.l.b16 %v113
  %v1047 = vunpack.c.h.b16 %v113
  %v1048 = vunpack.c.l.b16 %v114
  %v1049 = vunpack.c.l.b16 %v115
  %v1050 = vunpack.c.h.b16 %v115
  %v1051 = vunpack.c.l.b16 %v116
  %v1052 = vunpack.c.l.b16 %v117
  %v1053 = vunpack.c.h.b16 %v117
  %v1054 = vunpack.c.l.b16 %v118
  %v1055 = vunpack.c.l.b16 %v119
  %v1056 = vunpack.c.h.b16 %v119
  %v1057 = vunpack.c.l.b16 %v120
  %v1058 = vunpack.c.l.b16 %v121
  %v1059 = vunpack.c.h.b16 %v121
  %v1060 = vunpack.c.l.b16 %v122
  %v1061 = vunpack.c.l.b16 %v123
  %v1062 = vunpack.c.h.b16 %v123
  %v1063 = vunpack.c.l.b16 %v124
  %v1064 = vunpack.c.l.b16 %v125
  %v1065 = vunpack.c.h.b16 %v125
  %v1066 = vunpack.c.l.b16 %v126
  %v1067 = vunpack.c.l.b16 %v127
  %v1068 = vunpack.c.h.b16 %v127
  %v1069 = vunpack.c.l.b16 %v128
  %v1070 = vunpack.c.l.b16 %v129
  %v1071 = vunpack.c.h.b16 %v129
  %v1072 = vunpack.c.l.b16 %v130
  %v1073 = vunpack.c.l.b16 %v131
  %v1074 = vunpack.c.h.b16 %v131
  %v1075 = vunpack.c.l.b16 %v132
  %v1076 = vunpack.c.l.b16 %v133
  %v1077 = vunpack.c.h.b16 %v133
  %v1078 = vunpack.c.l.b16 %v134
  %v1079 = vunpack.c.l.b16 %v135
  %v1080 = vunpack.c.h.b16 %v135
  %v1081 = vunpack.c.l.b16 %v136
  %v1082 = vunpack.c.l.b16 %v137
  %v1083 = vunpack.c.h.b16 %v137
  %v1084 = vunpack.c.l.b16 %v138
  %v1085 = vunpack.c.l.b16 %v139
  %v1086 = vunpack.c.h.b16 %v139
  %v1087 = vunpack.c.l.b16 %v140
  %v1088 = vunpack.c.l.b16 %v141
  %v1089 = vunpack.c.h.b16 %v141
  %v1090 = vunpack.c.l.b16 %v142
  %v1091 = vpack.c.b16 %v1046, %v1043
  %v1092 = vpack.c.b16 %v1047, %v1044
  %v1093 = vpack.c.b16 %v1048, %v1045
  %v1094 = vpack.c.b16 %v1052, %v1049
  %v1095 = vpack.c.b16 %v1053, %v1050
  %v1096 = vpack.c.b16 %v1054, %v1051
  %v1097 = vpack.c.b16 %v1058, %v1055
  %v1098 = vpack.c.b16 %v1059, %v1056
  %v1099 = vpack.c.b16 %v1060, %v1057
  %v1100 = vpack.c.b16 %v1064, %v1061
  %v1101 = vpack.c.b16 %v1065, %v1062
  %v1102 = vpack.c.b16 %v1066, %v1063
  %v1103 = vpack.c.b16 %v1070, %v1067
  %v1104 = vpack.c.b16 %v1071, %v1068
  %v1105 = vpack.c.b16 %v1072, %v1069
  %v1106 = vpack.c.b16 %v1076, %v1073
  %v1107 = vpack.c.b16 %v1077, %v1074
  %v1108 = vpack.c.b16 %v1078, %v1075
  %v1109 = vpack.c.b16 %v1082, %v1079
  %v1110 = vpack.c.b16 %v1083, %v1080
  %v1111 = vpack.c.b16 %v1084, %v1081
  %v1112 = vpack.c.b16 %v1088, %v1085
  %v1113 = vpack.c.b16 %v1089, %v1086
  %v1114 = vpack.c.b16 %v1090, %v1087
  %1139 = vmatprep.subr.bf16.mxu0 %v1113
  %1140 = vmatpush1.bf16.msra.mxu0 %v1112
  %1141 = vmatprep.subr.bf16.mxu0 %v1110
  %1142 = vmatpush1.bf16.msra.mxu0 %v1109
  %1143 = vmatprep.subr.bf16.mxu0 %v1107
  %1144 = vmatpush1.bf16.msra.mxu0 %v1106
  %1145 = vmatprep.subr.bf16.mxu0 %v1104
  %1146 = vmatpush1.bf16.msra.mxu0 %v1103
  %1147 = vmatprep.subr.bf16.mxu0 %v1101
  %1148 = vmatpush1.bf16.msra.mxu0 %v1100
  %1149 = vmatprep.subr.bf16.mxu0 %v1098
  %1150 = vmatpush1.bf16.msra.mxu0 %v1097
  %1151 = vmatprep.subr.bf16.mxu0 %v1095
  %1152 = vmatpush1.bf16.msra.mxu0 %v1094
  %1153 = vmatprep.subr.bf16.mxu0 %v1092
  %1154 = vmatpush1.bf16.msra.mxu0 %v1091
  %1155 = vmatprep.subr.bf16.mxu0 0
  %1156 = vmatpush2.bf16.msra.mxu0 0
  %1157 = vmatprep.subr.bf16.mxu0 0
  %1158 = vmatpush2.bf16.msra.mxu0 0
  %1159 = vmatprep.subr.bf16.mxu0 0
  %1160 = vmatpush2.bf16.msra.mxu0 0
  %1161 = vmatprep.subr.bf16.mxu0 0
  %1162 = vmatpush2.bf16.msra.mxu0 0
  %1163 = vmatprep.subr.bf16.mxu0 0
  %1164 = vmatpush2.bf16.msra.mxu0 0
  %1165 = vmatprep.subr.bf16.mxu0 0
  %1166 = vmatpush2.bf16.msra.mxu0 0
  %1167 = vmatprep.subr.bf16.mxu0 0
  %1168 = vmatpush2.bf16.msra.mxu0 0
  %1169 = vmatprep.subr.bf16.mxu0 0
  %1170 = vmatpush2.bf16.msra.mxu0 0
  %1171 = vmatprep.mubr.bf16.mxu0 0
  %1172 = vmatmul.mubr.bf16.gmra.mxu0 %v165
  %v1173 = vpop.f32.mrf.mxu0
  %v1174 = vadd.f32 %v999, %v1173
  %v1175 = vpop.f32.mrf.mxu0
  %v1176 = vadd.f32 %v1003, %v1175
  %v1177 = vpop.f32.mrf.mxu0
  %v1178 = vpop.f32.mrf.mxu0
  %1179 = vdwg.mxu0
  %1180 = vmatprep.subr.bf16.mxu0 0
  %1181 = vmatpush1.bf16.msra.mxu0 %v1114
  %1182 = vmatprep.subr.bf16.mxu0 0
  %1183 = vmatpush1.bf16.msra.mxu0 %v1111
  %1184 = vmatprep.subr.bf16.mxu0 0
  %1185 = vmatpush1.bf16.msra.mxu0 %v1108
  %1186 = vmatprep.subr.bf16.mxu0 0
  %1187 = vmatpush1.bf16.msra.mxu0 %v1105
  %1188 = vmatprep.subr.bf16.mxu0 0
  %1189 = vmatpush1.bf16.msra.mxu0 %v1102
  %1190 = vmatprep.subr.bf16.mxu0 0
  %1191 = vmatpush1.bf16.msra.mxu0 %v1099
  %1192 = vmatprep.subr.bf16.mxu0 0
  %1193 = vmatpush1.bf16.msra.mxu0 %v1096
  %1194 = vmatprep.subr.bf16.mxu0 0
  %1195 = vmatpush1.bf16.msra.mxu0 %v1093
  %1196 = vmatprep.subr.bf16.mxu0 0
  %1197 = vmatpush2.bf16.msra.mxu0 0
  %1198 = vmatprep.subr.bf16.mxu0 0
  %1199 = vmatpush2.bf16.msra.mxu0 0
  %1200 = vmatprep.subr.bf16.mxu0 0
  %1201 = vmatpush2.bf16.msra.mxu0 0
  %1202 = vmatprep.subr.bf16.mxu0 0
  %1203 = vmatpush2.bf16.msra.mxu0 0
  %1204 = vmatprep.subr.bf16.mxu0 0
  %1205 = vmatpush2.bf16.msra.mxu0 0
  %1206 = vmatprep.subr.bf16.mxu0 0
  %1207 = vmatpush2.bf16.msra.mxu0 0
  %1208 = vmatprep.subr.bf16.mxu0 0
  %1209 = vmatpush2.bf16.msra.mxu0 0
  %1210 = vmatprep.subr.bf16.mxu0 0
  %1211 = vmatpush2.bf16.msra.mxu0 0
  %1212 = vmatprep.mubr.bf16.mxu0 0
  %1213 = vmatmul.mubr.bf16.gmra.mxu0 %v165
  %v1214 = vpop.f32.mrf.mxu0
  %v1215 = vadd.f32 %v1007, %v1214
  %v1216 = vpop.f32.mrf.mxu0
  %v1217 = vpop.f32.mrf.mxu0
  %v1218 = vpop.f32.mrf.mxu0
  %1219 = vdwg.mxu0
  %v1220 = vadd.f32 %v992, %v1174
  %v1221 = vxor.u32 %v1220, 2147483648
  %v1222 = vmul.f32 %v1221, 1.442695
  %v1223 = vpow.pop %v1222
  %v1224 = vadd.f32 %v1223, 1.0
  %v1225 = vrcp.pop %v1224
  %v1226 = vmul.f32 1.0, %v1225
  %v1227 = vadd.f32 %v993, %v1176
  %v1228 = vxor.u32 %v1227, 2147483648
  %v1229 = vmul.f32 %v1228, 1.442695
  %v1230 = vpow.pop %v1229
  %v1231 = vadd.f32 %v1230, 1.0
  %v1232 = vrcp.pop %v1231
  %v1233 = vmul.f32 1.0, %v1232
  %v1234 = vmul.f32 %v1226, %v1215
  %v1235 = vadd.f32 %v994, %v1234
  %v1236 = vtanh.pop %v1235
  %v1237 = vsub.f32 1.0, %v1233
  %v1238 = vmul.f32 %v1237, %v1236
  %v1239 = vmul.f32 %v1233, %v161
  %v1240 = vadd.f32 %v1238, %v1239
  %v1241 = vpack.c.bf16 %v1240, %v1240
  %v1243 = vlaneseq
  %v1244 = vshrl.u32 %v1243, 7
  %v1245 = vsub.s32 0, %v1244
  %v1246 = vrot.slane %v160, %v1245
  %v1264 = vunpack.c.l.b16 %v144
  %v1265 = vunpack.c.l.b16 %v145
  %v1266 = vunpack.c.l.b16 %v146
  %v1267 = vunpack.c.l.b16 %v147
  %v1268 = vunpack.c.l.b16 %v148
  %v1269 = vunpack.c.l.b16 %v149
  %v1270 = vunpack.c.l.b16 %v150
  %v1271 = vunpack.c.l.b16 %v151
  %v1272 = vunpack.c.l.b16 %v152
  %v1273 = vunpack.c.l.b16 %v153
  %v1274 = vunpack.c.l.b16 %v154
  %v1275 = vunpack.c.l.b16 %v155
  %v1276 = vunpack.c.l.b16 %v156
  %v1277 = vunpack.c.l.b16 %v157
  %v1278 = vunpack.c.l.b16 %v158
  %v1279 = vunpack.c.l.b16 %v159
  %v1280 = vpack.c.b16 %v1265, %v1264
  %v1281 = vpack.c.b16 %v1267, %v1266
  %v1282 = vpack.c.b16 %v1269, %v1268
  %v1283 = vpack.c.b16 %v1271, %v1270
  %v1284 = vpack.c.b16 %v1273, %v1272
  %v1285 = vpack.c.b16 %v1275, %v1274
  %v1286 = vpack.c.b16 %v1277, %v1276
  %v1287 = vpack.c.b16 %v1279, %v1278
  %1296 = vmatprep.subr.bf16.mxu0 0
  %1297 = vmatpush1.bf16.msra.mxu0 %v1287
  %1298 = vmatprep.subr.bf16.mxu0 0
  %1299 = vmatpush1.bf16.msra.mxu0 %v1286
  %1300 = vmatprep.subr.bf16.mxu0 0
  %1301 = vmatpush1.bf16.msra.mxu0 %v1285
  %1302 = vmatprep.subr.bf16.mxu0 0
  %1303 = vmatpush1.bf16.msra.mxu0 %v1284
  %1304 = vmatprep.subr.bf16.mxu0 0
  %1305 = vmatpush1.bf16.msra.mxu0 %v1283
  %1306 = vmatprep.subr.bf16.mxu0 0
  %1307 = vmatpush1.bf16.msra.mxu0 %v1282
  %1308 = vmatprep.subr.bf16.mxu0 0
  %1309 = vmatpush1.bf16.msra.mxu0 %v1281
  %1310 = vmatprep.subr.bf16.mxu0 0
  %1311 = vmatpush1.bf16.msra.mxu0 %v1280
  %1312 = vmatprep.subr.bf16.mxu0 0
  %1313 = vmatpush2.bf16.msra.mxu0 0
  %1314 = vmatprep.subr.bf16.mxu0 0
  %1315 = vmatpush2.bf16.msra.mxu0 0
  %1316 = vmatprep.subr.bf16.mxu0 0
  %1317 = vmatpush2.bf16.msra.mxu0 0
  %1318 = vmatprep.subr.bf16.mxu0 0
  %1319 = vmatpush2.bf16.msra.mxu0 0
  %1320 = vmatprep.subr.bf16.mxu0 0
  %1321 = vmatpush2.bf16.msra.mxu0 0
  %1322 = vmatprep.subr.bf16.mxu0 0
  %1323 = vmatpush2.bf16.msra.mxu0 0
  %1324 = vmatprep.subr.bf16.mxu0 0
  %1325 = vmatpush2.bf16.msra.mxu0 0
  %1326 = vmatprep.subr.bf16.mxu0 0
  %1327 = vmatpush2.bf16.msra.mxu0 0
  %1328 = vmatprep.mubr.bf16.mxu0 0
  %1329 = vmatmul.mubr.bf16.gmra.mxu0 %v1241
  %v1330 = vpop.f32.mrf.mxu0
  %v1331 = vadd.f32 %v1246, %v1330
  %v1332 = vpop.f32.mrf.mxu0
  %v1333 = vpop.f32.mrf.mxu0
  %v1334 = vpop.f32.mrf.mxu0
  %1335 = vdwg.mxu0
  %1336 = vmax.xlane.f32.xlu0 %v1331
  %v1337 = vpop.xlane.xlu0 %1336
  %v1338 = vsub.f32 %v1331, %v1337
  %v1339 = vmul.f32 %v1338, 1.442695
  %v1340 = vpow.pop %v1339
  %1341 = vadd.xlane.f32.xlu0 %v1340
  %v1342 = vpop.xlane.xlu0 %1341
  %v1343 = vlog2.pop %v1342
  %v1344 = vmul.f32 %v1343, 0.6931472
  %v1345 = vadd.f32 %v1344, %v1337
  %v1346 = vsub.f32 %v1331, %v1345
  %1347 = vst [vmem:[%s12] sm:$0xff] %v1346
  %v1348 = vlaneseq
  %v1349 = vshrl.u32 %v1348, 7
  %v1350 = vsub.s32 %v405, %v1349
  %v1351 = vrot.slane %v657, %v1350
  %v1352 = vlaneseq
  %v1353 = vshrl.u32 %v1352, 7
  %v1354 = vsub.s32 %v405, %v1353
  %v1355 = vrot.slane %v662, %v1354
  %v1356 = vlaneseq
  %v1357 = vshrl.u32 %v1356, 7
  %v1358 = vsub.s32 %v405, %v1357
  %v1359 = vrot.slane %v667, %v1358
  %v1360 = vlaneseq
  %v1361 = vshrl.u32 %v1360, 7
  %v1362 = vsub.s32 %v405, %v1361
  %v1363 = vrot.slane %v672, %v1362
  %v1364 = vlaneseq
  %v1365 = vshrl.u32 %v1364, 7
  %v1366 = vsub.s32 %v405, %v1365
  %v1367 = vrot.slane %v677, %v1366
  %v1368 = vlaneseq
  %v1369 = vshrl.u32 %v1368, 7
  %v1370 = vsub.s32 %v405, %v1369
  %v1371 = vrot.slane %v682, %v1370
  %v1372 = vlaneseq
  %v1373 = vshrl.u32 %v1372, 7
  %v1374 = vsub.s32 %v405, %v1373
  %v1375 = vrot.slane %v687, %v1374
  %v1376 = vlaneseq
  %v1377 = vshrl.u32 %v1376, 7
  %v1378 = vsub.s32 %v405, %v1377
  %v1379 = vrot.slane %v692, %v1378
  %v1380 = vsel %vm438, %v1355, %v1351
  %v1381 = vsel %vm440, %v1359, %v1380
  %v1382 = vsel %vm442, %v1363, %v1381
  %v1383 = vsel %vm444, %v1367, %v1382
  %v1384 = vsel %vm446, %v1371, %v1383
  %v1385 = vsel %vm448, %v1375, %v1384
  %v1386 = vsel %vm450, %v1379, %v1385
  %1388 = vst.msk [vmem:[%s13] sm:$0xff] %vm453, %v1386
  %s1389 = scalar_lea.vmem %s0, 24
  %v1390 = vld [vmem:[%s1389] sm:$0xff]
  %v1391 = vld [vmem:[%s1389 + $0x8] sm:$0xff]
  %v1392 = vld [vmem:[%s1389 + $0x10] sm:$0xff]
  %1393 = vmatprep.subr.bf16.mxu0 0
  %1394 = vmatpush1.bf16.msra.mxu0 %v211
  %1395 = vmatprep.subr.bf16.mxu0 0
  %1396 = vmatpush1.bf16.msra.mxu0 %v210
  %1397 = vmatprep.subr.bf16.mxu0 0
  %1398 = vmatpush1.bf16.msra.mxu0 %v209
  %1399 = vmatprep.subr.bf16.mxu0 0
  %1400 = vmatpush1.bf16.msra.mxu0 %v208
  %1401 = vmatprep.subr.bf16.mxu0 0
  %1402 = vmatpush1.bf16.msra.mxu0 %v207
  %1403 = vmatprep.subr.bf16.mxu0 0
  %1404 = vmatpush1.bf16.msra.mxu0 %v206
  %1405 = vmatprep.subr.bf16.mxu0 0
  %1406 = vmatpush1.bf16.msra.mxu0 %v205
  %1407 = vmatprep.subr.bf16.mxu0 0
  %1408 = vmatpush1.bf16.msra.mxu0 %v204
  %1409 = vmatprep.subr.bf16.mxu0 0
  %1410 = vmatpush2.bf16.msra.mxu0 0
  %1411 = vmatprep.subr.bf16.mxu0 0
  %1412 = vmatpush2.bf16.msra.mxu0 0
  %1413 = vmatprep.subr.bf16.mxu0 0
  %1414 = vmatpush2.bf16.msra.mxu0 0
  %1415 = vmatprep.subr.bf16.mxu0 0
  %1416 = vmatpush2.bf16.msra.mxu0 0
  %1417 = vmatprep.subr.bf16.mxu0 0
  %1418 = vmatpush2.bf16.msra.mxu0 0
  %1419 = vmatprep.subr.bf16.mxu0 0
  %1420 = vmatpush2.bf16.msra.mxu0 0
  %1421 = vmatprep.subr.bf16.mxu0 0
  %1422 = vmatpush2.bf16.msra.mxu0 0
  %1423 = vmatprep.subr.bf16.mxu0 0
  %1424 = vmatpush2.bf16.msra.mxu0 0
  %1425 = vmatprep.mubr.bf16.mxu0 0
  %1426 = vmatmul.mubr.bf16.gmra.mxu0 %v1241
  %v1427 = vpop.f32.mrf.mxu0
  %v1428 = vadd.f32 %v170, %v1427
  %v1429 = vpop.f32.mrf.mxu0
  %v1430 = vpop.f32.mrf.mxu0
  %v1431 = vpop.f32.mrf.mxu0
  %1432 = vdwg.mxu0
  %v1434 = vcombine.high %v1428, %v1428
  %v1436 = vunpack.c.l.s4 1966171168
  %v1437 = vunpack.c.0.s8 %v1436
  %v1438 = vlaneseq
  %v1439 = vshrl.u32 %v1438, 7
  %v1440 = vsub.s32 %v1437, %v1439
  %v1441 = vrot.slane %v1428, %v1440
  %v1443 = vunpack.c.l.s4 1966171168
  %v1444 = vunpack.c.0.s8 %v1443
  %v1445 = vlaneseq
  %v1446 = vshrl.u32 %v1445, 7
  %v1447 = vsub.s32 %v1444, %v1446
  %v1448 = vrot.slane %v1434, %v1447
  %v1449 = vcombine.high %v1441, %v1441
  %v1450 = vcombine.high %v1448, %v1448
  %v1452 = vunpack.c.l.s4 1966171168
  %v1453 = vunpack.c.0.s8 %v1452
  %v1454 = vlaneseq
  %v1455 = vshrl.u32 %v1454, 7
  %v1456 = vsub.s32 %v1453, %v1455
  %v1457 = vrot.slane %v1441, %v1456
  %v1459 = vunpack.c.l.s4 1966171168
  %v1460 = vunpack.c.0.s8 %v1459
  %v1461 = vlaneseq
  %v1462 = vshrl.u32 %v1461, 7
  %v1463 = vsub.s32 %v1460, %v1462
  %v1464 = vrot.slane %v1448, %v1463
  %v1466 = vunpack.c.l.s4 1966171168
  %v1467 = vunpack.c.0.s8 %v1466
  %v1468 = vlaneseq
  %v1469 = vshrl.u32 %v1468, 7
  %v1470 = vsub.s32 %v1467, %v1469
  %v1471 = vrot.slane %v1449, %v1470
  %v1473 = vunpack.c.l.s4 1966171168
  %v1474 = vunpack.c.0.s8 %v1473
  %v1475 = vlaneseq
  %v1476 = vshrl.u32 %v1475, 7
  %v1477 = vsub.s32 %v1474, %v1476
  %v1478 = vrot.slane %v1450, %v1477
  %v1479 = vcombine.high %v1457, %v1457
  %v1480 = vcombine.high %v1464, %v1464
  %v1481 = vcombine.high %v1471, %v1471
  %v1482 = vcombine.high %v1478, %v1478
  %v1483 = vlaneseq
  %v1484 = vshrl.u32 %v1483, 7
  %v1485 = vsub.s32 0, %v1484
  %v1486 = vrot.slane %v1457, %v1485
  %v1487 = vlaneseq
  %v1488 = vshrl.u32 %v1487, 7
  %v1489 = vsub.s32 0, %v1488
  %v1490 = vrot.slane %v1471, %v1489
  %v1491 = vlaneseq
  %v1492 = vshrl.u32 %v1491, 7
  %v1493 = vsub.s32 0, %v1492
  %v1494 = vrot.slane %v1479, %v1493
  %v1495 = vlaneseq
  %v1496 = vshrl.u32 %v1495, 7
  %v1497 = vsub.s32 0, %v1496
  %v1498 = vrot.slane %v1481, %v1497
  %v1499 = vlaneseq
  %v1500 = vshrl.u32 %v1499, 7
  %v1501 = vsub.s32 0, %v1500
  %v1502 = vrot.slane %v1464, %v1501
  %v1503 = vlaneseq
  %v1504 = vshrl.u32 %v1503, 7
  %v1505 = vsub.s32 0, %v1504
  %v1506 = vrot.slane %v1478, %v1505
  %v1507 = vlaneseq
  %v1508 = vshrl.u32 %v1507, 7
  %v1509 = vsub.s32 0, %v1508
  %v1510 = vrot.slane %v1480, %v1509
  %v1511 = vlaneseq
  %v1512 = vshrl.u32 %v1511, 7
  %v1513 = vsub.s32 0, %v1512
  %v1514 = vrot.slane %v1482, %v1513
  %v1523 = vadd.f32 %v1486, %v45
  %v1524 = vadd.f32 %v1490, %v46
  %v1525 = vadd.f32 %v1494, %v47
  %v1526 = vadd.f32 %v1498, %v48
  %v1527 = vadd.f32 %v1502, %v49
  %v1528 = vadd.f32 %v1506, %v50
  %v1529 = vadd.f32 %v1510, %v51
  %v1530 = vadd.f32 %v1514, %v52
  %v1531 = vtanh.pop %v1523
  %v1532 = vtanh.pop %v1524
  %v1533 = vtanh.pop %v1525
  %v1534 = vtanh.pop %v1526
  %v1535 = vtanh.pop %v1527
  %v1536 = vtanh.pop %v1528
  %v1537 = vtanh.pop %v1529
  %v1538 = vtanh.pop %v1530
  %v1539 = vmul.f32 %v1531, %v370
  %v1540 = vmul.f32 %v1532, %v370
  %v1541 = vmul.f32 %v1533, %v370
  %v1542 = vmul.f32 %v1534, %v370
  %v1543 = vmul.f32 %v1535, %v370
  %v1544 = vmul.f32 %v1536, %v370
  %v1545 = vmul.f32 %v1537, %v370
  %v1546 = vmul.f32 %v1538, %v370
  %1547 = vadd.xlane.f32.xlu0 %v1539
  %v1548 = vpop.xlane.xlu0 %1547
  %1549 = vadd.xlane.f32.xlu0 %v1540
  %v1550 = vpop.xlane.xlu0 %1549
  %1551 = vadd.xlane.f32.xlu0 %v1541
  %v1552 = vpop.xlane.xlu0 %1551
  %1553 = vadd.xlane.f32.xlu0 %v1542
  %v1554 = vpop.xlane.xlu0 %1553
  %1555 = vadd.xlane.f32.xlu0 %v1543
  %v1556 = vpop.xlane.xlu0 %1555
  %1557 = vadd.xlane.f32.xlu0 %v1544
  %v1558 = vpop.xlane.xlu0 %1557
  %1559 = vadd.xlane.f32.xlu0 %v1545
  %v1560 = vpop.xlane.xlu0 %1559
  %1561 = vadd.xlane.f32.xlu0 %v1546
  %v1562 = vpop.xlane.xlu0 %1561
  %v1571 = vlaneseq
  %v1572 = vshrl.u32 %v1571, 7
  %v1573 = vsub.s32 %v405, %v1572
  %v1574 = vrot.slane %v1548, %v1573
  %v1575 = vlaneseq
  %v1576 = vshrl.u32 %v1575, 7
  %v1577 = vsub.s32 %v405, %v1576
  %v1578 = vrot.slane %v1550, %v1577
  %v1579 = vlaneseq
  %v1580 = vshrl.u32 %v1579, 7
  %v1581 = vsub.s32 %v405, %v1580
  %v1582 = vrot.slane %v1552, %v1581
  %v1583 = vlaneseq
  %v1584 = vshrl.u32 %v1583, 7
  %v1585 = vsub.s32 %v405, %v1584
  %v1586 = vrot.slane %v1554, %v1585
  %v1587 = vlaneseq
  %v1588 = vshrl.u32 %v1587, 7
  %v1589 = vsub.s32 %v405, %v1588
  %v1590 = vrot.slane %v1556, %v1589
  %v1591 = vlaneseq
  %v1592 = vshrl.u32 %v1591, 7
  %v1593 = vsub.s32 %v405, %v1592
  %v1594 = vrot.slane %v1558, %v1593
  %v1595 = vlaneseq
  %v1596 = vshrl.u32 %v1595, 7
  %v1597 = vsub.s32 %v405, %v1596
  %v1598 = vrot.slane %v1560, %v1597
  %v1599 = vlaneseq
  %v1600 = vshrl.u32 %v1599, 7
  %v1601 = vsub.s32 %v405, %v1600
  %v1602 = vrot.slane %v1562, %v1601
  %v1603 = vsel %vm438, %v1578, %v1574
  %v1604 = vsel %vm440, %v1582, %v1603
  %v1605 = vsel %vm442, %v1586, %v1604
  %v1606 = vsel %vm444, %v1590, %v1605
  %v1607 = vsel %vm446, %v1594, %v1606
  %v1608 = vsel %vm448, %v1598, %v1607
  %v1609 = vsel %vm450, %v1602, %v1608
  %v1611 = vsel %vm453, %v1609, -inf
  %1612 = vmax.xlane.f32.xlu0 %v1611
  %v1613 = vpop.xlane.xlu0 %1612
  %v1615 = vlaneseq
  %v1616 = vshrl.u32 %v1615, 7
  %v1617 = vsub.s32 0, %v1616
  %v1618 = vrot.slane %v1613, %v1617
  %v1619 = vlaneseq
  %v1620 = vshrl.u32 %v1619, 7
  %v1621 = vsub.s32 1, %v1620
  %v1622 = vrot.slane %v1613, %v1621
  %v1623 = vlaneseq
  %v1624 = vshrl.u32 %v1623, 7
  %v1625 = vsub.s32 2, %v1624
  %v1626 = vrot.slane %v1613, %v1625
  %v1627 = vlaneseq
  %v1628 = vshrl.u32 %v1627, 7
  %v1629 = vsub.s32 3, %v1628
  %v1630 = vrot.slane %v1613, %v1629
  %v1631 = vlaneseq
  %v1632 = vshrl.u32 %v1631, 7
  %v1633 = vsub.s32 4, %v1632
  %v1634 = vrot.slane %v1613, %v1633
  %v1635 = vlaneseq
  %v1636 = vshrl.u32 %v1635, 7
  %v1637 = vsub.s32 5, %v1636
  %v1638 = vrot.slane %v1613, %v1637
  %v1639 = vlaneseq
  %v1640 = vshrl.u32 %v1639, 7
  %v1641 = vsub.s32 6, %v1640
  %v1642 = vrot.slane %v1613, %v1641
  %v1643 = vlaneseq
  %v1644 = vshrl.u32 %v1643, 7
  %v1645 = vsub.s32 7, %v1644
  %v1646 = vrot.slane %v1613, %v1645
  %v1655 = vsub.f32 %v1548, %v1618
  %v1656 = vsub.f32 %v1550, %v1622
  %v1657 = vsub.f32 %v1552, %v1626
  %v1658 = vsub.f32 %v1554, %v1630
  %v1659 = vsub.f32 %v1556, %v1634
  %v1660 = vsub.f32 %v1558, %v1638
  %v1661 = vsub.f32 %v1560, %v1642
  %v1662 = vsub.f32 %v1562, %v1646
  %v1663 = vmul.f32 %v1655, 1.442695
  %v1664 = vpow.pop %v1663
  %v1665 = vmul.f32 %v1656, 1.442695
  %v1666 = vpow.pop %v1665
  %v1667 = vmul.f32 %v1657, 1.442695
  %v1668 = vpow.pop %v1667
  %v1669 = vmul.f32 %v1658, 1.442695
  %v1670 = vpow.pop %v1669
  %v1671 = vmul.f32 %v1659, 1.442695
  %v1672 = vpow.pop %v1671
  %v1673 = vmul.f32 %v1660, 1.442695
  %v1674 = vpow.pop %v1673
  %v1675 = vmul.f32 %v1661, 1.442695
  %v1676 = vpow.pop %v1675
  %v1677 = vmul.f32 %v1662, 1.442695
  %v1678 = vpow.pop %v1677
  %1687 = vset.pattern.permute.xlu0 0
  %1688 = vperm.xlu0 %1687, %v1664
  %v1689 = vpop.permute.xlu0 %1688
  %1690 = vset.pattern.permute.xlu0 0
  %1691 = vperm.xlu0 %1690, %v1666
  %v1692 = vpop.permute.xlu0 %1691
  %1693 = vset.pattern.permute.xlu0 0
  %1694 = vperm.xlu0 %1693, %v1668
  %v1695 = vpop.permute.xlu0 %1694
  %1696 = vset.pattern.permute.xlu0 0
  %1697 = vperm.xlu0 %1696, %v1670
  %v1698 = vpop.permute.xlu0 %1697
  %1699 = vset.pattern.permute.xlu0 0
  %1700 = vperm.xlu0 %1699, %v1672
  %v1701 = vpop.permute.xlu0 %1700
  %1702 = vset.pattern.permute.xlu0 0
  %1703 = vperm.xlu0 %1702, %v1674
  %v1704 = vpop.permute.xlu0 %1703
  %1705 = vset.pattern.permute.xlu0 0
  %1706 = vperm.xlu0 %1705, %v1676
  %v1707 = vpop.permute.xlu0 %1706
  %1708 = vset.pattern.permute.xlu0 0
  %1709 = vperm.xlu0 %1708, %v1678
  %v1710 = vpop.permute.xlu0 %1709
  %v1711 = vlaneseq
  %v1712 = vshrl.u32 %v1711, 7
  %v1713 = vsub.s32 %v405, %v1712
  %v1714 = vrot.slane %v1689, %v1713
  %v1715 = vlaneseq
  %v1716 = vshrl.u32 %v1715, 7
  %v1717 = vsub.s32 %v405, %v1716
  %v1718 = vrot.slane %v1692, %v1717
  %v1719 = vlaneseq
  %v1720 = vshrl.u32 %v1719, 7
  %v1721 = vsub.s32 %v405, %v1720
  %v1722 = vrot.slane %v1695, %v1721
  %v1723 = vlaneseq
  %v1724 = vshrl.u32 %v1723, 7
  %v1725 = vsub.s32 %v405, %v1724
  %v1726 = vrot.slane %v1698, %v1725
  %v1727 = vlaneseq
  %v1728 = vshrl.u32 %v1727, 7
  %v1729 = vsub.s32 %v405, %v1728
  %v1730 = vrot.slane %v1701, %v1729
  %v1731 = vlaneseq
  %v1732 = vshrl.u32 %v1731, 7
  %v1733 = vsub.s32 %v405, %v1732
  %v1734 = vrot.slane %v1704, %v1733
  %v1735 = vlaneseq
  %v1736 = vshrl.u32 %v1735, 7
  %v1737 = vsub.s32 %v405, %v1736
  %v1738 = vrot.slane %v1707, %v1737
  %v1739 = vlaneseq
  %v1740 = vshrl.u32 %v1739, 7
  %v1741 = vsub.s32 %v405, %v1740
  %v1742 = vrot.slane %v1710, %v1741
  %v1743 = vsel %vm438, %v1718, %v1714
  %v1744 = vsel %vm440, %v1722, %v1743
  %v1745 = vsel %vm442, %v1726, %v1744
  %v1746 = vsel %vm444, %v1730, %v1745
  %v1747 = vsel %vm446, %v1734, %v1746
  %v1748 = vsel %vm448, %v1738, %v1747
  %v1749 = vsel %vm450, %v1742, %v1748
  %v1751 = vsel %vm453, %v1749, 0.0
  %1752 = vadd.xlane.f32.xlu0 %v1751
  %v1753 = vpop.xlane.xlu0 %1752
  %v1755 = vlaneseq
  %v1756 = vshrl.u32 %v1755, 7
  %v1757 = vsub.s32 0, %v1756
  %v1758 = vrot.slane %v1753, %v1757
  %v1759 = vlaneseq
  %v1760 = vshrl.u32 %v1759, 7
  %v1761 = vsub.s32 1, %v1760
  %v1762 = vrot.slane %v1753, %v1761
  %v1763 = vlaneseq
  %v1764 = vshrl.u32 %v1763, 7
  %v1765 = vsub.s32 2, %v1764
  %v1766 = vrot.slane %v1753, %v1765
  %v1767 = vlaneseq
  %v1768 = vshrl.u32 %v1767, 7
  %v1769 = vsub.s32 3, %v1768
  %v1770 = vrot.slane %v1753, %v1769
  %v1771 = vlaneseq
  %v1772 = vshrl.u32 %v1771, 7
  %v1773 = vsub.s32 4, %v1772
  %v1774 = vrot.slane %v1753, %v1773
  %v1775 = vlaneseq
  %v1776 = vshrl.u32 %v1775, 7
  %v1777 = vsub.s32 5, %v1776
  %v1778 = vrot.slane %v1753, %v1777
  %v1779 = vlaneseq
  %v1780 = vshrl.u32 %v1779, 7
  %v1781 = vsub.s32 6, %v1780
  %v1782 = vrot.slane %v1753, %v1781
  %v1783 = vlaneseq
  %v1784 = vshrl.u32 %v1783, 7
  %v1785 = vsub.s32 7, %v1784
  %v1786 = vrot.slane %v1753, %v1785
  %v1795 = vrcp.pop %v1758
  %v1796 = vmul.f32 %v1664, %v1795
  %v1797 = vrcp.pop %v1762
  %v1798 = vmul.f32 %v1666, %v1797
  %v1799 = vrcp.pop %v1766
  %v1800 = vmul.f32 %v1668, %v1799
  %v1801 = vrcp.pop %v1770
  %v1802 = vmul.f32 %v1670, %v1801
  %v1803 = vrcp.pop %v1774
  %v1804 = vmul.f32 %v1672, %v1803
  %v1805 = vrcp.pop %v1778
  %v1806 = vmul.f32 %v1674, %v1805
  %v1807 = vrcp.pop %v1782
  %v1808 = vmul.f32 %v1676, %v1807
  %v1809 = vrcp.pop %v1786
  %v1810 = vmul.f32 %v1678, %v1809
  %1812 = vset.pattern.permute.xlu0 0
  %1813 = vperm.xlu0 %1812, %v1796
  %v1814 = vpop.permute.xlu0 %1813
  %1817 = vset.pattern.permute.xlu0 0
  %1818 = vperm.xlu0 %1817, %v1798
  %v1819 = vpop.permute.xlu0 %1818
  %1822 = vset.pattern.permute.xlu0 0
  %1823 = vperm.xlu0 %1822, %v1800
  %v1824 = vpop.permute.xlu0 %1823
  %1827 = vset.pattern.permute.xlu0 0
  %1828 = vperm.xlu0 %1827, %v1802
  %v1829 = vpop.permute.xlu0 %1828
  %1832 = vset.pattern.permute.xlu0 0
  %1833 = vperm.xlu0 %1832, %v1804
  %v1834 = vpop.permute.xlu0 %1833
  %1837 = vset.pattern.permute.xlu0 0
  %1838 = vperm.xlu0 %1837, %v1806
  %v1839 = vpop.permute.xlu0 %1838
  %1842 = vset.pattern.permute.xlu0 0
  %1843 = vperm.xlu0 %1842, %v1808
  %v1844 = vpop.permute.xlu0 %1843
  %1847 = vset.pattern.permute.xlu0 0
  %1848 = vperm.xlu0 %1847, %v1810
  %v1849 = vpop.permute.xlu0 %1848
  %v1851 = vmul.f32 %v1814, %v53
  %v1852 = vmul.f32 %v1819, %v54
  %v1853 = vmul.f32 %v1824, %v55
  %v1854 = vmul.f32 %v1829, %v56
  %v1855 = vmul.f32 %v1834, %v57
  %v1856 = vmul.f32 %v1839, %v58
  %v1857 = vmul.f32 %v1844, %v59
  %v1858 = vmul.f32 %v1849, %v60
  %v1859 = vrot.slane %v1851, 4
  %v1860 = vadd.f32 %v1851, %v1859
  %v1861 = vrot.slane %v1860, 2
  %v1862 = vadd.f32 %v1860, %v1861
  %v1863 = vrot.slane %v1862, 1
  %v1864 = vadd.f32 %v1862, %v1863
  %v1865 = vrot.slane %v1852, 4
  %v1866 = vadd.f32 %v1852, %v1865
  %v1867 = vrot.slane %v1866, 2
  %v1868 = vadd.f32 %v1866, %v1867
  %v1869 = vrot.slane %v1868, 1
  %v1870 = vadd.f32 %v1868, %v1869
  %v1871 = vrot.slane %v1853, 4
  %v1872 = vadd.f32 %v1853, %v1871
  %v1873 = vrot.slane %v1872, 2
  %v1874 = vadd.f32 %v1872, %v1873
  %v1875 = vrot.slane %v1874, 1
  %v1876 = vadd.f32 %v1874, %v1875
  %v1877 = vrot.slane %v1854, 4
  %v1878 = vadd.f32 %v1854, %v1877
  %v1879 = vrot.slane %v1878, 2
  %v1880 = vadd.f32 %v1878, %v1879
  %v1881 = vrot.slane %v1880, 1
  %v1882 = vadd.f32 %v1880, %v1881
  %v1883 = vrot.slane %v1855, 4
  %v1884 = vadd.f32 %v1855, %v1883
  %v1885 = vrot.slane %v1884, 2
  %v1886 = vadd.f32 %v1884, %v1885
  %v1887 = vrot.slane %v1886, 1
  %v1888 = vadd.f32 %v1886, %v1887
  %v1889 = vrot.slane %v1856, 4
  %v1890 = vadd.f32 %v1856, %v1889
  %v1891 = vrot.slane %v1890, 2
  %v1892 = vadd.f32 %v1890, %v1891
  %v1893 = vrot.slane %v1892, 1
  %v1894 = vadd.f32 %v1892, %v1893
  %v1895 = vrot.slane %v1857, 4
  %v1896 = vadd.f32 %v1857, %v1895
  %v1897 = vrot.slane %v1896, 2
  %v1898 = vadd.f32 %v1896, %v1897
  %v1899 = vrot.slane %v1898, 1
  %v1900 = vadd.f32 %v1898, %v1899
  %v1901 = vrot.slane %v1858, 4
  %v1902 = vadd.f32 %v1858, %v1901
  %v1903 = vrot.slane %v1902, 2
  %v1904 = vadd.f32 %v1902, %v1903
  %v1905 = vrot.slane %v1904, 1
  %v1906 = vadd.f32 %v1904, %v1905
  %v1907 = vpack.c.bf16 %v1864, %v1864
  %v1908 = vpack.c.bf16 %v1870, %v1870
  %v1909 = vpack.c.bf16 %v1876, %v1876
  %v1910 = vpack.c.bf16 %v1882, %v1882
  %v1911 = vpack.c.bf16 %v1888, %v1888
  %v1912 = vpack.c.bf16 %v1894, %v1894
  %v1913 = vpack.c.bf16 %v1900, %v1900
  %v1914 = vpack.c.bf16 %v1906, %v1906
  %v1923 = vunpack.c.l.b16 %v1907
  %v1924 = vunpack.c.l.b16 %v1908
  %v1925 = vunpack.c.l.b16 %v1909
  %v1926 = vunpack.c.l.b16 %v1910
  %v1927 = vunpack.c.l.b16 %v1911
  %v1928 = vunpack.c.l.b16 %v1912
  %v1929 = vunpack.c.l.b16 %v1913
  %v1930 = vunpack.c.l.b16 %v1914
  %v1931 = vsel %vm438, %v1924, %v1923
  %v1932 = vsel %vm440, %v1925, %v1931
  %v1933 = vsel %vm442, %v1926, %v1932
  %v1934 = vsel %vm444, %v1927, %v1933
  %v1935 = vsel %vm446, %v1928, %v1934
  %v1936 = vsel %vm448, %v1929, %v1935
  %v1937 = vsel %vm450, %v1930, %v1936
  %v1938 = vpack.c.b16 %v1937, %v1937
  %1940 = vmatprep.subr.bf16.mxu0 %v885
  %1941 = vmatpush1.bf16.msra.mxu0 %v884
  %1942 = vmatprep.subr.bf16.mxu0 %v882
  %1943 = vmatpush1.bf16.msra.mxu0 %v881
  %1944 = vmatprep.subr.bf16.mxu0 %v879
  %1945 = vmatpush1.bf16.msra.mxu0 %v878
  %1946 = vmatprep.subr.bf16.mxu0 %v876
  %1947 = vmatpush1.bf16.msra.mxu0 %v875
  %1948 = vmatprep.subr.bf16.mxu0 %v873
  %1949 = vmatpush1.bf16.msra.mxu0 %v872
  %1950 = vmatprep.subr.bf16.mxu0 %v870
  %1951 = vmatpush1.bf16.msra.mxu0 %v869
  %1952 = vmatprep.subr.bf16.mxu0 %v867
  %1953 = vmatpush1.bf16.msra.mxu0 %v866
  %1954 = vmatprep.subr.bf16.mxu0 %v864
  %1955 = vmatpush1.bf16.msra.mxu0 %v863
  %1956 = vmatprep.subr.bf16.mxu0 0
  %1957 = vmatpush2.bf16.msra.mxu0 0
  %1958 = vmatprep.subr.bf16.mxu0 0
  %1959 = vmatpush2.bf16.msra.mxu0 0
  %1960 = vmatprep.subr.bf16.mxu0 0
  %1961 = vmatpush2.bf16.msra.mxu0 0
  %1962 = vmatprep.subr.bf16.mxu0 0
  %1963 = vmatpush2.bf16.msra.mxu0 0
  %1964 = vmatprep.subr.bf16.mxu0 0
  %1965 = vmatpush2.bf16.msra.mxu0 0
  %1966 = vmatprep.subr.bf16.mxu0 0
  %1967 = vmatpush2.bf16.msra.mxu0 0
  %1968 = vmatprep.subr.bf16.mxu0 0
  %1969 = vmatpush2.bf16.msra.mxu0 0
  %1970 = vmatprep.subr.bf16.mxu0 0
  %1971 = vmatpush2.bf16.msra.mxu0 0
  %1972 = vmatprep.mubr.bf16.mxu0 0
  %1973 = vmatmul.mubr.bf16.gmra.mxu0 %v1938
  %v1974 = vpop.f32.mrf.mxu0
  %v1975 = vadd.f32 0.0, %v1974
  %v1976 = vpop.f32.mrf.mxu0
  %v1977 = vadd.f32 0.0, %v1976
  %v1978 = vpop.f32.mrf.mxu0
  %v1979 = vpop.f32.mrf.mxu0
  %1980 = vdwg.mxu0
  %1981 = vmatprep.subr.bf16.mxu0 0
  %1982 = vmatpush1.bf16.msra.mxu0 %v886
  %1983 = vmatprep.subr.bf16.mxu0 0
  %1984 = vmatpush1.bf16.msra.mxu0 %v883
  %1985 = vmatprep.subr.bf16.mxu0 0
  %1986 = vmatpush1.bf16.msra.mxu0 %v880
  %1987 = vmatprep.subr.bf16.mxu0 0
  %1988 = vmatpush1.bf16.msra.mxu0 %v877
  %1989 = vmatprep.subr.bf16.mxu0 0
  %1990 = vmatpush1.bf16.msra.mxu0 %v874
  %1991 = vmatprep.subr.bf16.mxu0 0
  %1992 = vmatpush1.bf16.msra.mxu0 %v871
  %1993 = vmatprep.subr.bf16.mxu0 0
  %1994 = vmatpush1.bf16.msra.mxu0 %v868
  %1995 = vmatprep.subr.bf16.mxu0 0
  %1996 = vmatpush1.bf16.msra.mxu0 %v865
  %1997 = vmatprep.subr.bf16.mxu0 0
  %1998 = vmatpush2.bf16.msra.mxu0 0
  %1999 = vmatprep.subr.bf16.mxu0 0
  %2000 = vmatpush2.bf16.msra.mxu0 0
  %2001 = vmatprep.subr.bf16.mxu0 0
  %2002 = vmatpush2.bf16.msra.mxu0 0
  %2003 = vmatprep.subr.bf16.mxu0 0
  %2004 = vmatpush2.bf16.msra.mxu0 0
  %2005 = vmatprep.subr.bf16.mxu0 0
  %2006 = vmatpush2.bf16.msra.mxu0 0
  %2007 = vmatprep.subr.bf16.mxu0 0
  %2008 = vmatpush2.bf16.msra.mxu0 0
  %2009 = vmatprep.subr.bf16.mxu0 0
  %2010 = vmatpush2.bf16.msra.mxu0 0
  %2011 = vmatprep.subr.bf16.mxu0 0
  %2012 = vmatpush2.bf16.msra.mxu0 0
  %2013 = vmatprep.mubr.bf16.mxu0 0
  %2014 = vmatmul.mubr.bf16.gmra.mxu0 %v1938
  %v2015 = vpop.f32.mrf.mxu0
  %v2016 = vadd.f32 0.0, %v2015
  %v2017 = vpop.f32.mrf.mxu0
  %v2018 = vpop.f32.mrf.mxu0
  %v2019 = vpop.f32.mrf.mxu0
  %2020 = vdwg.mxu0
  %v2021 = vadd.f32 %v1390, %v1975
  %v2022 = vadd.f32 %v1391, %v1977
  %v2023 = vadd.f32 %v1392, %v2016
  %2024 = vmatprep.subr.bf16.mxu0 %v1113
  %2025 = vmatpush1.bf16.msra.mxu0 %v1112
  %2026 = vmatprep.subr.bf16.mxu0 %v1110
  %2027 = vmatpush1.bf16.msra.mxu0 %v1109
  %2028 = vmatprep.subr.bf16.mxu0 %v1107
  %2029 = vmatpush1.bf16.msra.mxu0 %v1106
  %2030 = vmatprep.subr.bf16.mxu0 %v1104
  %2031 = vmatpush1.bf16.msra.mxu0 %v1103
  %2032 = vmatprep.subr.bf16.mxu0 %v1101
  %2033 = vmatpush1.bf16.msra.mxu0 %v1100
  %2034 = vmatprep.subr.bf16.mxu0 %v1098
  %2035 = vmatpush1.bf16.msra.mxu0 %v1097
  %2036 = vmatprep.subr.bf16.mxu0 %v1095
  %2037 = vmatpush1.bf16.msra.mxu0 %v1094
  %2038 = vmatprep.subr.bf16.mxu0 %v1092
  %2039 = vmatpush1.bf16.msra.mxu0 %v1091
  %2040 = vmatprep.subr.bf16.mxu0 0
  %2041 = vmatpush2.bf16.msra.mxu0 0
  %2042 = vmatprep.subr.bf16.mxu0 0
  %2043 = vmatpush2.bf16.msra.mxu0 0
  %2044 = vmatprep.subr.bf16.mxu0 0
  %2045 = vmatpush2.bf16.msra.mxu0 0
  %2046 = vmatprep.subr.bf16.mxu0 0
  %2047 = vmatpush2.bf16.msra.mxu0 0
  %2048 = vmatprep.subr.bf16.mxu0 0
  %2049 = vmatpush2.bf16.msra.mxu0 0
  %2050 = vmatprep.subr.bf16.mxu0 0
  %2051 = vmatpush2.bf16.msra.mxu0 0
  %2052 = vmatprep.subr.bf16.mxu0 0
  %2053 = vmatpush2.bf16.msra.mxu0 0
  %2054 = vmatprep.subr.bf16.mxu0 0
  %2055 = vmatpush2.bf16.msra.mxu0 0
  %2056 = vmatprep.mubr.bf16.mxu0 0
  %2057 = vmatmul.mubr.bf16.gmra.mxu0 %v1241
  %v2058 = vpop.f32.mrf.mxu0
  %v2059 = vadd.f32 %v999, %v2058
  %v2060 = vpop.f32.mrf.mxu0
  %v2061 = vadd.f32 %v1003, %v2060
  %v2062 = vpop.f32.mrf.mxu0
  %v2063 = vpop.f32.mrf.mxu0
  %2064 = vdwg.mxu0
  %2065 = vmatprep.subr.bf16.mxu0 0
  %2066 = vmatpush1.bf16.msra.mxu0 %v1114
  %2067 = vmatprep.subr.bf16.mxu0 0
  %2068 = vmatpush1.bf16.msra.mxu0 %v1111
  %2069 = vmatprep.subr.bf16.mxu0 0
  %2070 = vmatpush1.bf16.msra.mxu0 %v1108
  %2071 = vmatprep.subr.bf16.mxu0 0
  %2072 = vmatpush1.bf16.msra.mxu0 %v1105
  %2073 = vmatprep.subr.bf16.mxu0 0
  %2074 = vmatpush1.bf16.msra.mxu0 %v1102
  %2075 = vmatprep.subr.bf16.mxu0 0
  %2076 = vmatpush1.bf16.msra.mxu0 %v1099
  %2077 = vmatprep.subr.bf16.mxu0 0
  %2078 = vmatpush1.bf16.msra.mxu0 %v1096
  %2079 = vmatprep.subr.bf16.mxu0 0
  %2080 = vmatpush1.bf16.msra.mxu0 %v1093
  %2081 = vmatprep.subr.bf16.mxu0 0
  %2082 = vmatpush2.bf16.msra.mxu0 0
  %2083 = vmatprep.subr.bf16.mxu0 0
  %2084 = vmatpush2.bf16.msra.mxu0 0
  %2085 = vmatprep.subr.bf16.mxu0 0
  %2086 = vmatpush2.bf16.msra.mxu0 0
  %2087 = vmatprep.subr.bf16.mxu0 0
  %2088 = vmatpush2.bf16.msra.mxu0 0
  %2089 = vmatprep.subr.bf16.mxu0 0
  %2090 = vmatpush2.bf16.msra.mxu0 0
  %2091 = vmatprep.subr.bf16.mxu0 0
  %2092 = vmatpush2.bf16.msra.mxu0 0
  %2093 = vmatprep.subr.bf16.mxu0 0
  %2094 = vmatpush2.bf16.msra.mxu0 0
  %2095 = vmatprep.subr.bf16.mxu0 0
  %2096 = vmatpush2.bf16.msra.mxu0 0
  %2097 = vmatprep.mubr.bf16.mxu0 0
  %2098 = vmatmul.mubr.bf16.gmra.mxu0 %v1241
  %v2099 = vpop.f32.mrf.mxu0
  %v2100 = vadd.f32 %v1007, %v2099
  %v2101 = vpop.f32.mrf.mxu0
  %v2102 = vpop.f32.mrf.mxu0
  %v2103 = vpop.f32.mrf.mxu0
  %2104 = vdwg.mxu0
  %v2105 = vadd.f32 %v2021, %v2059
  %v2106 = vxor.u32 %v2105, 2147483648
  %v2107 = vmul.f32 %v2106, 1.442695
  %v2108 = vpow.pop %v2107
  %v2109 = vadd.f32 %v2108, 1.0
  %v2110 = vrcp.pop %v2109
  %v2111 = vmul.f32 1.0, %v2110
  %v2112 = vadd.f32 %v2022, %v2061
  %v2113 = vxor.u32 %v2112, 2147483648
  %v2114 = vmul.f32 %v2113, 1.442695
  %v2115 = vpow.pop %v2114
  %v2116 = vadd.f32 %v2115, 1.0
  %v2117 = vrcp.pop %v2116
  %v2118 = vmul.f32 1.0, %v2117
  %v2119 = vmul.f32 %v2111, %v2100
  %v2120 = vadd.f32 %v2023, %v2119
  %v2121 = vtanh.pop %v2120
  %v2122 = vsub.f32 1.0, %v2118
  %v2123 = vmul.f32 %v2122, %v2121
  %v2124 = vmul.f32 %v2118, %v1240
  %v2125 = vadd.f32 %v2123, %v2124
  %v2126 = vpack.c.bf16 %v2125, %v2125
  %2127 = vmatprep.subr.bf16.mxu0 0
  %2128 = vmatpush1.bf16.msra.mxu0 %v1287
  %2129 = vmatprep.subr.bf16.mxu0 0
  %2130 = vmatpush1.bf16.msra.mxu0 %v1286
  %2131 = vmatprep.subr.bf16.mxu0 0
  %2132 = vmatpush1.bf16.msra.mxu0 %v1285
  %2133 = vmatprep.subr.bf16.mxu0 0
  %2134 = vmatpush1.bf16.msra.mxu0 %v1284
  %2135 = vmatprep.subr.bf16.mxu0 0
  %2136 = vmatpush1.bf16.msra.mxu0 %v1283
  %2137 = vmatprep.subr.bf16.mxu0 0
  %2138 = vmatpush1.bf16.msra.mxu0 %v1282
  %2139 = vmatprep.subr.bf16.mxu0 0
  %2140 = vmatpush1.bf16.msra.mxu0 %v1281
  %2141 = vmatprep.subr.bf16.mxu0 0
  %2142 = vmatpush1.bf16.msra.mxu0 %v1280
  %2143 = vmatprep.subr.bf16.mxu0 0
  %2144 = vmatpush2.bf16.msra.mxu0 0
  %2145 = vmatprep.subr.bf16.mxu0 0
  %2146 = vmatpush2.bf16.msra.mxu0 0
  %2147 = vmatprep.subr.bf16.mxu0 0
  %2148 = vmatpush2.bf16.msra.mxu0 0
  %2149 = vmatprep.subr.bf16.mxu0 0
  %2150 = vmatpush2.bf16.msra.mxu0 0
  %2151 = vmatprep.subr.bf16.mxu0 0
  %2152 = vmatpush2.bf16.msra.mxu0 0
  %2153 = vmatprep.subr.bf16.mxu0 0
  %2154 = vmatpush2.bf16.msra.mxu0 0
  %2155 = vmatprep.subr.bf16.mxu0 0
  %2156 = vmatpush2.bf16.msra.mxu0 0
  %2157 = vmatprep.subr.bf16.mxu0 0
  %2158 = vmatpush2.bf16.msra.mxu0 0
  %2159 = vmatprep.mubr.bf16.mxu0 0
  %2160 = vmatmul.mubr.bf16.gmra.mxu0 %v2126
  %v2161 = vpop.f32.mrf.mxu0
  %v2162 = vadd.f32 %v1246, %v2161
  %v2163 = vpop.f32.mrf.mxu0
  %v2164 = vpop.f32.mrf.mxu0
  %v2165 = vpop.f32.mrf.mxu0
  %2166 = vdwg.mxu0
  %2167 = vmax.xlane.f32.xlu0 %v2162
  %v2168 = vpop.xlane.xlu0 %2167
  %v2169 = vsub.f32 %v2162, %v2168
  %v2170 = vmul.f32 %v2169, 1.442695
  %v2171 = vpow.pop %v2170
  %2172 = vadd.xlane.f32.xlu0 %v2171
  %v2173 = vpop.xlane.xlu0 %2172
  %v2174 = vlog2.pop %v2173
  %v2175 = vmul.f32 %v2174, 0.6931472
  %v2176 = vadd.f32 %v2175, %v2168
  %v2177 = vsub.f32 %v2162, %v2176
  %s2178 = scalar_lea.vmem %s12, 8
  %2179 = vst [vmem:[%s2178] sm:$0xff] %v2177
  %v2180 = vlaneseq
  %v2181 = vshrl.u32 %v2180, 7
  %v2182 = vsub.s32 %v405, %v2181
  %v2183 = vrot.slane %v1814, %v2182
  %v2184 = vlaneseq
  %v2185 = vshrl.u32 %v2184, 7
  %v2186 = vsub.s32 %v405, %v2185
  %v2187 = vrot.slane %v1819, %v2186
  %v2188 = vlaneseq
  %v2189 = vshrl.u32 %v2188, 7
  %v2190 = vsub.s32 %v405, %v2189
  %v2191 = vrot.slane %v1824, %v2190
  %v2192 = vlaneseq
  %v2193 = vshrl.u32 %v2192, 7
  %v2194 = vsub.s32 %v405, %v2193
  %v2195 = vrot.slane %v1829, %v2194
  %v2196 = vlaneseq
  %v2197 = vshrl.u32 %v2196, 7
  %v2198 = vsub.s32 %v405, %v2197
  %v2199 = vrot.slane %v1834, %v2198
  %v2200 = vlaneseq
  %v2201 = vshrl.u32 %v2200, 7
  %v2202 = vsub.s32 %v405, %v2201
  %v2203 = vrot.slane %v1839, %v2202
  %v2204 = vlaneseq
  %v2205 = vshrl.u32 %v2204, 7
  %v2206 = vsub.s32 %v405, %v2205
  %v2207 = vrot.slane %v1844, %v2206
  %v2208 = vlaneseq
  %v2209 = vshrl.u32 %v2208, 7
  %v2210 = vsub.s32 %v405, %v2209
  %v2211 = vrot.slane %v1849, %v2210
  %v2212 = vsel %vm438, %v2187, %v2183
  %v2213 = vsel %vm440, %v2191, %v2212
  %v2214 = vsel %vm442, %v2195, %v2213
  %v2215 = vsel %vm444, %v2199, %v2214
  %v2216 = vsel %vm446, %v2203, %v2215
  %v2217 = vsel %vm448, %v2207, %v2216
  %v2218 = vsel %vm450, %v2211, %v2217
  %s2220 = scalar_lea.vmem %s13, 8
  %2221 = vst.msk [vmem:[%s2220] sm:$0xff] %vm453, %v2218
  %s2222 = scalar_lea.vmem %s0, 48
  %v2223 = vld [vmem:[%s2222] sm:$0xff]
  %v2224 = vld [vmem:[%s2222 + $0x8] sm:$0xff]
  %v2225 = vld [vmem:[%s2222 + $0x10] sm:$0xff]
  %2226 = vmatprep.subr.bf16.mxu0 0
  %2227 = vmatpush1.bf16.msra.mxu0 %v211
  %2228 = vmatprep.subr.bf16.mxu0 0
  %2229 = vmatpush1.bf16.msra.mxu0 %v210
  %2230 = vmatprep.subr.bf16.mxu0 0
  %2231 = vmatpush1.bf16.msra.mxu0 %v209
  %2232 = vmatprep.subr.bf16.mxu0 0
  %2233 = vmatpush1.bf16.msra.mxu0 %v208
  %2234 = vmatprep.subr.bf16.mxu0 0
  %2235 = vmatpush1.bf16.msra.mxu0 %v207
  %2236 = vmatprep.subr.bf16.mxu0 0
  %2237 = vmatpush1.bf16.msra.mxu0 %v206
  %2238 = vmatprep.subr.bf16.mxu0 0
  %2239 = vmatpush1.bf16.msra.mxu0 %v205
  %2240 = vmatprep.subr.bf16.mxu0 0
  %2241 = vmatpush1.bf16.msra.mxu0 %v204
  %2242 = vmatprep.subr.bf16.mxu0 0
  %2243 = vmatpush2.bf16.msra.mxu0 0
  %2244 = vmatprep.subr.bf16.mxu0 0
  %2245 = vmatpush2.bf16.msra.mxu0 0
  %2246 = vmatprep.subr.bf16.mxu0 0
  %2247 = vmatpush2.bf16.msra.mxu0 0
  %2248 = vmatprep.subr.bf16.mxu0 0
  %2249 = vmatpush2.bf16.msra.mxu0 0
  %2250 = vmatprep.subr.bf16.mxu0 0
  %2251 = vmatpush2.bf16.msra.mxu0 0
  %2252 = vmatprep.subr.bf16.mxu0 0
  %2253 = vmatpush2.bf16.msra.mxu0 0
  %2254 = vmatprep.subr.bf16.mxu0 0
  %2255 = vmatpush2.bf16.msra.mxu0 0
  %2256 = vmatprep.subr.bf16.mxu0 0
  %2257 = vmatpush2.bf16.msra.mxu0 0
  %2258 = vmatprep.mubr.bf16.mxu0 0
  %2259 = vmatmul.mubr.bf16.gmra.mxu0 %v2126
  %v2260 = vpop.f32.mrf.mxu0
  %v2261 = vadd.f32 %v170, %v2260
  %v2262 = vpop.f32.mrf.mxu0
  %v2263 = vpop.f32.mrf.mxu0
  %v2264 = vpop.f32.mrf.mxu0
  %2265 = vdwg.mxu0
  %v2267 = vcombine.high %v2261, %v2261
  %v2269 = vunpack.c.l.s4 1966171168
  %v2270 = vunpack.c.0.s8 %v2269
  %v2271 = vlaneseq
  %v2272 = vshrl.u32 %v2271, 7
  %v2273 = vsub.s32 %v2270, %v2272
  %v2274 = vrot.slane %v2261, %v2273
  %v2276 = vunpack.c.l.s4 1966171168
  %v2277 = vunpack.c.0.s8 %v2276
  %v2278 = vlaneseq
  %v2279 = vshrl.u32 %v2278, 7
  %v2280 = vsub.s32 %v2277, %v2279
  %v2281 = vrot.slane %v2267, %v2280
  %v2282 = vcombine.high %v2274, %v2274
  %v2283 = vcombine.high %v2281, %v2281
  %v2285 = vunpack.c.l.s4 1966171168
  %v2286 = vunpack.c.0.s8 %v2285
  %v2287 = vlaneseq
  %v2288 = vshrl.u32 %v2287, 7
  %v2289 = vsub.s32 %v2286, %v2288
  %v2290 = vrot.slane %v2274, %v2289
  %v2292 = vunpack.c.l.s4 1966171168
  %v2293 = vunpack.c.0.s8 %v2292
  %v2294 = vlaneseq
  %v2295 = vshrl.u32 %v2294, 7
  %v2296 = vsub.s32 %v2293, %v2295
  %v2297 = vrot.slane %v2281, %v2296
  %v2299 = vunpack.c.l.s4 1966171168
  %v2300 = vunpack.c.0.s8 %v2299
  %v2301 = vlaneseq
  %v2302 = vshrl.u32 %v2301, 7
  %v2303 = vsub.s32 %v2300, %v2302
  %v2304 = vrot.slane %v2282, %v2303
  %v2306 = vunpack.c.l.s4 1966171168
  %v2307 = vunpack.c.0.s8 %v2306
  %v2308 = vlaneseq
  %v2309 = vshrl.u32 %v2308, 7
  %v2310 = vsub.s32 %v2307, %v2309
  %v2311 = vrot.slane %v2283, %v2310
  %v2312 = vcombine.high %v2290, %v2290
  %v2313 = vcombine.high %v2297, %v2297
  %v2314 = vcombine.high %v2304, %v2304
  %v2315 = vcombine.high %v2311, %v2311
  %v2316 = vlaneseq
  %v2317 = vshrl.u32 %v2316, 7
  %v2318 = vsub.s32 0, %v2317
  %v2319 = vrot.slane %v2290, %v2318
  %v2320 = vlaneseq
  %v2321 = vshrl.u32 %v2320, 7
  %v2322 = vsub.s32 0, %v2321
  %v2323 = vrot.slane %v2304, %v2322
  %v2324 = vlaneseq
  %v2325 = vshrl.u32 %v2324, 7
  %v2326 = vsub.s32 0, %v2325
  %v2327 = vrot.slane %v2312, %v2326
  %v2328 = vlaneseq
  %v2329 = vshrl.u32 %v2328, 7
  %v2330 = vsub.s32 0, %v2329
  %v2331 = vrot.slane %v2314, %v2330
  %v2332 = vlaneseq
  %v2333 = vshrl.u32 %v2332, 7
  %v2334 = vsub.s32 0, %v2333
  %v2335 = vrot.slane %v2297, %v2334
  %v2336 = vlaneseq
  %v2337 = vshrl.u32 %v2336, 7
  %v2338 = vsub.s32 0, %v2337
  %v2339 = vrot.slane %v2311, %v2338
  %v2340 = vlaneseq
  %v2341 = vshrl.u32 %v2340, 7
  %v2342 = vsub.s32 0, %v2341
  %v2343 = vrot.slane %v2313, %v2342
  %v2344 = vlaneseq
  %v2345 = vshrl.u32 %v2344, 7
  %v2346 = vsub.s32 0, %v2345
  %v2347 = vrot.slane %v2315, %v2346
  %v2356 = vadd.f32 %v2319, %v45
  %v2357 = vadd.f32 %v2323, %v46
  %v2358 = vadd.f32 %v2327, %v47
  %v2359 = vadd.f32 %v2331, %v48
  %v2360 = vadd.f32 %v2335, %v49
  %v2361 = vadd.f32 %v2339, %v50
  %v2362 = vadd.f32 %v2343, %v51
  %v2363 = vadd.f32 %v2347, %v52
  %v2364 = vtanh.pop %v2356
  %v2365 = vtanh.pop %v2357
  %v2366 = vtanh.pop %v2358
  %v2367 = vtanh.pop %v2359
  %v2368 = vtanh.pop %v2360
  %v2369 = vtanh.pop %v2361
  %v2370 = vtanh.pop %v2362
  %v2371 = vtanh.pop %v2363
  %v2372 = vmul.f32 %v2364, %v370
  %v2373 = vmul.f32 %v2365, %v370
  %v2374 = vmul.f32 %v2366, %v370
  %v2375 = vmul.f32 %v2367, %v370
  %v2376 = vmul.f32 %v2368, %v370
  %v2377 = vmul.f32 %v2369, %v370
  %v2378 = vmul.f32 %v2370, %v370
  %v2379 = vmul.f32 %v2371, %v370
  %2380 = vadd.xlane.f32.xlu0 %v2372
  %v2381 = vpop.xlane.xlu0 %2380
  %2382 = vadd.xlane.f32.xlu0 %v2373
  %v2383 = vpop.xlane.xlu0 %2382
  %2384 = vadd.xlane.f32.xlu0 %v2374
  %v2385 = vpop.xlane.xlu0 %2384
  %2386 = vadd.xlane.f32.xlu0 %v2375
  %v2387 = vpop.xlane.xlu0 %2386
  %2388 = vadd.xlane.f32.xlu0 %v2376
  %v2389 = vpop.xlane.xlu0 %2388
  %2390 = vadd.xlane.f32.xlu0 %v2377
  %v2391 = vpop.xlane.xlu0 %2390
  %2392 = vadd.xlane.f32.xlu0 %v2378
  %v2393 = vpop.xlane.xlu0 %2392
  %2394 = vadd.xlane.f32.xlu0 %v2379
  %v2395 = vpop.xlane.xlu0 %2394
  %v2404 = vlaneseq
  %v2405 = vshrl.u32 %v2404, 7
  %v2406 = vsub.s32 %v405, %v2405
  %v2407 = vrot.slane %v2381, %v2406
  %v2408 = vlaneseq
  %v2409 = vshrl.u32 %v2408, 7
  %v2410 = vsub.s32 %v405, %v2409
  %v2411 = vrot.slane %v2383, %v2410
  %v2412 = vlaneseq
  %v2413 = vshrl.u32 %v2412, 7
  %v2414 = vsub.s32 %v405, %v2413
  %v2415 = vrot.slane %v2385, %v2414
  %v2416 = vlaneseq
  %v2417 = vshrl.u32 %v2416, 7
  %v2418 = vsub.s32 %v405, %v2417
  %v2419 = vrot.slane %v2387, %v2418
  %v2420 = vlaneseq
  %v2421 = vshrl.u32 %v2420, 7
  %v2422 = vsub.s32 %v405, %v2421
  %v2423 = vrot.slane %v2389, %v2422
  %v2424 = vlaneseq
  %v2425 = vshrl.u32 %v2424, 7
  %v2426 = vsub.s32 %v405, %v2425
  %v2427 = vrot.slane %v2391, %v2426
  %v2428 = vlaneseq
  %v2429 = vshrl.u32 %v2428, 7
  %v2430 = vsub.s32 %v405, %v2429
  %v2431 = vrot.slane %v2393, %v2430
  %v2432 = vlaneseq
  %v2433 = vshrl.u32 %v2432, 7
  %v2434 = vsub.s32 %v405, %v2433
  %v2435 = vrot.slane %v2395, %v2434
  %v2436 = vsel %vm438, %v2411, %v2407
  %v2437 = vsel %vm440, %v2415, %v2436
  %v2438 = vsel %vm442, %v2419, %v2437
  %v2439 = vsel %vm444, %v2423, %v2438
  %v2440 = vsel %vm446, %v2427, %v2439
  %v2441 = vsel %vm448, %v2431, %v2440
  %v2442 = vsel %vm450, %v2435, %v2441
  %v2444 = vsel %vm453, %v2442, -inf
  %2445 = vmax.xlane.f32.xlu0 %v2444
  %v2446 = vpop.xlane.xlu0 %2445
  %v2448 = vlaneseq
  %v2449 = vshrl.u32 %v2448, 7
  %v2450 = vsub.s32 0, %v2449
  %v2451 = vrot.slane %v2446, %v2450
  %v2452 = vlaneseq
  %v2453 = vshrl.u32 %v2452, 7
  %v2454 = vsub.s32 1, %v2453
  %v2455 = vrot.slane %v2446, %v2454
  %v2456 = vlaneseq
  %v2457 = vshrl.u32 %v2456, 7
  %v2458 = vsub.s32 2, %v2457
  %v2459 = vrot.slane %v2446, %v2458
  %v2460 = vlaneseq
  %v2461 = vshrl.u32 %v2460, 7
  %v2462 = vsub.s32 3, %v2461
  %v2463 = vrot.slane %v2446, %v2462
  %v2464 = vlaneseq
  %v2465 = vshrl.u32 %v2464, 7
  %v2466 = vsub.s32 4, %v2465
  %v2467 = vrot.slane %v2446, %v2466
  %v2468 = vlaneseq
  %v2469 = vshrl.u32 %v2468, 7
  %v2470 = vsub.s32 5, %v2469
  %v2471 = vrot.slane %v2446, %v2470
  %v2472 = vlaneseq
  %v2473 = vshrl.u32 %v2472, 7
  %v2474 = vsub.s32 6, %v2473
  %v2475 = vrot.slane %v2446, %v2474
  %v2476 = vlaneseq
  %v2477 = vshrl.u32 %v2476, 7
  %v2478 = vsub.s32 7, %v2477
  %v2479 = vrot.slane %v2446, %v2478
  %v2488 = vsub.f32 %v2381, %v2451
  %v2489 = vsub.f32 %v2383, %v2455
  %v2490 = vsub.f32 %v2385, %v2459
  %v2491 = vsub.f32 %v2387, %v2463
  %v2492 = vsub.f32 %v2389, %v2467
  %v2493 = vsub.f32 %v2391, %v2471
  %v2494 = vsub.f32 %v2393, %v2475
  %v2495 = vsub.f32 %v2395, %v2479
  %v2496 = vmul.f32 %v2488, 1.442695
  %v2497 = vpow.pop %v2496
  %v2498 = vmul.f32 %v2489, 1.442695
  %v2499 = vpow.pop %v2498
  %v2500 = vmul.f32 %v2490, 1.442695
  %v2501 = vpow.pop %v2500
  %v2502 = vmul.f32 %v2491, 1.442695
  %v2503 = vpow.pop %v2502
  %v2504 = vmul.f32 %v2492, 1.442695
  %v2505 = vpow.pop %v2504
  %v2506 = vmul.f32 %v2493, 1.442695
  %v2507 = vpow.pop %v2506
  %v2508 = vmul.f32 %v2494, 1.442695
  %v2509 = vpow.pop %v2508
  %v2510 = vmul.f32 %v2495, 1.442695
  %v2511 = vpow.pop %v2510
  %2520 = vset.pattern.permute.xlu0 0
  %2521 = vperm.xlu0 %2520, %v2497
  %v2522 = vpop.permute.xlu0 %2521
  %2523 = vset.pattern.permute.xlu0 0
  %2524 = vperm.xlu0 %2523, %v2499
  %v2525 = vpop.permute.xlu0 %2524
  %2526 = vset.pattern.permute.xlu0 0
  %2527 = vperm.xlu0 %2526, %v2501
  %v2528 = vpop.permute.xlu0 %2527
  %2529 = vset.pattern.permute.xlu0 0
  %2530 = vperm.xlu0 %2529, %v2503
  %v2531 = vpop.permute.xlu0 %2530
  %2532 = vset.pattern.permute.xlu0 0
  %2533 = vperm.xlu0 %2532, %v2505
  %v2534 = vpop.permute.xlu0 %2533
  %2535 = vset.pattern.permute.xlu0 0
  %2536 = vperm.xlu0 %2535, %v2507
  %v2537 = vpop.permute.xlu0 %2536
  %2538 = vset.pattern.permute.xlu0 0
  %2539 = vperm.xlu0 %2538, %v2509
  %v2540 = vpop.permute.xlu0 %2539
  %2541 = vset.pattern.permute.xlu0 0
  %2542 = vperm.xlu0 %2541, %v2511
  %v2543 = vpop.permute.xlu0 %2542
  %v2544 = vlaneseq
  %v2545 = vshrl.u32 %v2544, 7
  %v2546 = vsub.s32 %v405, %v2545
  %v2547 = vrot.slane %v2522, %v2546
  %v2548 = vlaneseq
  %v2549 = vshrl.u32 %v2548, 7
  %v2550 = vsub.s32 %v405, %v2549
  %v2551 = vrot.slane %v2525, %v2550
  %v2552 = vlaneseq
  %v2553 = vshrl.u32 %v2552, 7
  %v2554 = vsub.s32 %v405, %v2553
  %v2555 = vrot.slane %v2528, %v2554
  %v2556 = vlaneseq
  %v2557 = vshrl.u32 %v2556, 7
  %v2558 = vsub.s32 %v405, %v2557
  %v2559 = vrot.slane %v2531, %v2558
  %v2560 = vlaneseq
  %v2561 = vshrl.u32 %v2560, 7
  %v2562 = vsub.s32 %v405, %v2561
  %v2563 = vrot.slane %v2534, %v2562
  %v2564 = vlaneseq
  %v2565 = vshrl.u32 %v2564, 7
  %v2566 = vsub.s32 %v405, %v2565
  %v2567 = vrot.slane %v2537, %v2566
  %v2568 = vlaneseq
  %v2569 = vshrl.u32 %v2568, 7
  %v2570 = vsub.s32 %v405, %v2569
  %v2571 = vrot.slane %v2540, %v2570
  %v2572 = vlaneseq
  %v2573 = vshrl.u32 %v2572, 7
  %v2574 = vsub.s32 %v405, %v2573
  %v2575 = vrot.slane %v2543, %v2574
  %v2576 = vsel %vm438, %v2551, %v2547
  %v2577 = vsel %vm440, %v2555, %v2576
  %v2578 = vsel %vm442, %v2559, %v2577
  %v2579 = vsel %vm444, %v2563, %v2578
  %v2580 = vsel %vm446, %v2567, %v2579
  %v2581 = vsel %vm448, %v2571, %v2580
  %v2582 = vsel %vm450, %v2575, %v2581
  %v2584 = vsel %vm453, %v2582, 0.0
  %2585 = vadd.xlane.f32.xlu0 %v2584
  %v2586 = vpop.xlane.xlu0 %2585
  %v2588 = vlaneseq
  %v2589 = vshrl.u32 %v2588, 7
  %v2590 = vsub.s32 0, %v2589
  %v2591 = vrot.slane %v2586, %v2590
  %v2592 = vlaneseq
  %v2593 = vshrl.u32 %v2592, 7
  %v2594 = vsub.s32 1, %v2593
  %v2595 = vrot.slane %v2586, %v2594
  %v2596 = vlaneseq
  %v2597 = vshrl.u32 %v2596, 7
  %v2598 = vsub.s32 2, %v2597
  %v2599 = vrot.slane %v2586, %v2598
  %v2600 = vlaneseq
  %v2601 = vshrl.u32 %v2600, 7
  %v2602 = vsub.s32 3, %v2601
  %v2603 = vrot.slane %v2586, %v2602
  %v2604 = vlaneseq
  %v2605 = vshrl.u32 %v2604, 7
  %v2606 = vsub.s32 4, %v2605
  %v2607 = vrot.slane %v2586, %v2606
  %v2608 = vlaneseq
  %v2609 = vshrl.u32 %v2608, 7
  %v2610 = vsub.s32 5, %v2609
  %v2611 = vrot.slane %v2586, %v2610
  %v2612 = vlaneseq
  %v2613 = vshrl.u32 %v2612, 7
  %v2614 = vsub.s32 6, %v2613
  %v2615 = vrot.slane %v2586, %v2614
  %v2616 = vlaneseq
  %v2617 = vshrl.u32 %v2616, 7
  %v2618 = vsub.s32 7, %v2617
  %v2619 = vrot.slane %v2586, %v2618
  %v2628 = vrcp.pop %v2591
  %v2629 = vmul.f32 %v2497, %v2628
  %v2630 = vrcp.pop %v2595
  %v2631 = vmul.f32 %v2499, %v2630
  %v2632 = vrcp.pop %v2599
  %v2633 = vmul.f32 %v2501, %v2632
  %v2634 = vrcp.pop %v2603
  %v2635 = vmul.f32 %v2503, %v2634
  %v2636 = vrcp.pop %v2607
  %v2637 = vmul.f32 %v2505, %v2636
  %v2638 = vrcp.pop %v2611
  %v2639 = vmul.f32 %v2507, %v2638
  %v2640 = vrcp.pop %v2615
  %v2641 = vmul.f32 %v2509, %v2640
  %v2642 = vrcp.pop %v2619
  %v2643 = vmul.f32 %v2511, %v2642
  %2645 = vset.pattern.permute.xlu0 0
  %2646 = vperm.xlu0 %2645, %v2629
  %v2647 = vpop.permute.xlu0 %2646
  %2650 = vset.pattern.permute.xlu0 0
  %2651 = vperm.xlu0 %2650, %v2631
  %v2652 = vpop.permute.xlu0 %2651
  %2655 = vset.pattern.permute.xlu0 0
  %2656 = vperm.xlu0 %2655, %v2633
  %v2657 = vpop.permute.xlu0 %2656
  %2660 = vset.pattern.permute.xlu0 0
  %2661 = vperm.xlu0 %2660, %v2635
  %v2662 = vpop.permute.xlu0 %2661
  %2665 = vset.pattern.permute.xlu0 0
  %2666 = vperm.xlu0 %2665, %v2637
  %v2667 = vpop.permute.xlu0 %2666
  %2670 = vset.pattern.permute.xlu0 0
  %2671 = vperm.xlu0 %2670, %v2639
  %v2672 = vpop.permute.xlu0 %2671
  %2675 = vset.pattern.permute.xlu0 0
  %2676 = vperm.xlu0 %2675, %v2641
  %v2677 = vpop.permute.xlu0 %2676
  %2680 = vset.pattern.permute.xlu0 0
  %2681 = vperm.xlu0 %2680, %v2643
  %v2682 = vpop.permute.xlu0 %2681
  %v2684 = vmul.f32 %v2647, %v53
  %v2685 = vmul.f32 %v2652, %v54
  %v2686 = vmul.f32 %v2657, %v55
  %v2687 = vmul.f32 %v2662, %v56
  %v2688 = vmul.f32 %v2667, %v57
  %v2689 = vmul.f32 %v2672, %v58
  %v2690 = vmul.f32 %v2677, %v59
  %v2691 = vmul.f32 %v2682, %v60
  %v2692 = vrot.slane %v2684, 4
  %v2693 = vadd.f32 %v2684, %v2692
  %v2694 = vrot.slane %v2693, 2
  %v2695 = vadd.f32 %v2693, %v2694
  %v2696 = vrot.slane %v2695, 1
  %v2697 = vadd.f32 %v2695, %v2696
  %v2698 = vrot.slane %v2685, 4
  %v2699 = vadd.f32 %v2685, %v2698
  %v2700 = vrot.slane %v2699, 2
  %v2701 = vadd.f32 %v2699, %v2700
  %v2702 = vrot.slane %v2701, 1
  %v2703 = vadd.f32 %v2701, %v2702
  %v2704 = vrot.slane %v2686, 4
  %v2705 = vadd.f32 %v2686, %v2704
  %v2706 = vrot.slane %v2705, 2
  %v2707 = vadd.f32 %v2705, %v2706
  %v2708 = vrot.slane %v2707, 1
  %v2709 = vadd.f32 %v2707, %v2708
  %v2710 = vrot.slane %v2687, 4
  %v2711 = vadd.f32 %v2687, %v2710
  %v2712 = vrot.slane %v2711, 2
  %v2713 = vadd.f32 %v2711, %v2712
  %v2714 = vrot.slane %v2713, 1
  %v2715 = vadd.f32 %v2713, %v2714
  %v2716 = vrot.slane %v2688, 4
  %v2717 = vadd.f32 %v2688, %v2716
  %v2718 = vrot.slane %v2717, 2
  %v2719 = vadd.f32 %v2717, %v2718
  %v2720 = vrot.slane %v2719, 1
  %v2721 = vadd.f32 %v2719, %v2720
  %v2722 = vrot.slane %v2689, 4
  %v2723 = vadd.f32 %v2689, %v2722
  %v2724 = vrot.slane %v2723, 2
  %v2725 = vadd.f32 %v2723, %v2724
  %v2726 = vrot.slane %v2725, 1
  %v2727 = vadd.f32 %v2725, %v2726
  %v2728 = vrot.slane %v2690, 4
  %v2729 = vadd.f32 %v2690, %v2728
  %v2730 = vrot.slane %v2729, 2
  %v2731 = vadd.f32 %v2729, %v2730
  %v2732 = vrot.slane %v2731, 1
  %v2733 = vadd.f32 %v2731, %v2732
  %v2734 = vrot.slane %v2691, 4
  %v2735 = vadd.f32 %v2691, %v2734
  %v2736 = vrot.slane %v2735, 2
  %v2737 = vadd.f32 %v2735, %v2736
  %v2738 = vrot.slane %v2737, 1
  %v2739 = vadd.f32 %v2737, %v2738
  %v2740 = vpack.c.bf16 %v2697, %v2697
  %v2741 = vpack.c.bf16 %v2703, %v2703
  %v2742 = vpack.c.bf16 %v2709, %v2709
  %v2743 = vpack.c.bf16 %v2715, %v2715
  %v2744 = vpack.c.bf16 %v2721, %v2721
  %v2745 = vpack.c.bf16 %v2727, %v2727
  %v2746 = vpack.c.bf16 %v2733, %v2733
  %v2747 = vpack.c.bf16 %v2739, %v2739
  %v2756 = vunpack.c.l.b16 %v2740
  %v2757 = vunpack.c.l.b16 %v2741
  %v2758 = vunpack.c.l.b16 %v2742
  %v2759 = vunpack.c.l.b16 %v2743
  %v2760 = vunpack.c.l.b16 %v2744
  %v2761 = vunpack.c.l.b16 %v2745
  %v2762 = vunpack.c.l.b16 %v2746
  %v2763 = vunpack.c.l.b16 %v2747
  %v2764 = vsel %vm438, %v2757, %v2756
  %v2765 = vsel %vm440, %v2758, %v2764
  %v2766 = vsel %vm442, %v2759, %v2765
  %v2767 = vsel %vm444, %v2760, %v2766
  %v2768 = vsel %vm446, %v2761, %v2767
  %v2769 = vsel %vm448, %v2762, %v2768
  %v2770 = vsel %vm450, %v2763, %v2769
  %v2771 = vpack.c.b16 %v2770, %v2770
  %2773 = vmatprep.subr.bf16.mxu0 %v885
  %2774 = vmatpush1.bf16.msra.mxu0 %v884
  %2775 = vmatprep.subr.bf16.mxu0 %v882
  %2776 = vmatpush1.bf16.msra.mxu0 %v881
  %2777 = vmatprep.subr.bf16.mxu0 %v879
  %2778 = vmatpush1.bf16.msra.mxu0 %v878
  %2779 = vmatprep.subr.bf16.mxu0 %v876
  %2780 = vmatpush1.bf16.msra.mxu0 %v875
  %2781 = vmatprep.subr.bf16.mxu0 %v873
  %2782 = vmatpush1.bf16.msra.mxu0 %v872
  %2783 = vmatprep.subr.bf16.mxu0 %v870
  %2784 = vmatpush1.bf16.msra.mxu0 %v869
  %2785 = vmatprep.subr.bf16.mxu0 %v867
  %2786 = vmatpush1.bf16.msra.mxu0 %v866
  %2787 = vmatprep.subr.bf16.mxu0 %v864
  %2788 = vmatpush1.bf16.msra.mxu0 %v863
  %2789 = vmatprep.subr.bf16.mxu0 0
  %2790 = vmatpush2.bf16.msra.mxu0 0
  %2791 = vmatprep.subr.bf16.mxu0 0
  %2792 = vmatpush2.bf16.msra.mxu0 0
  %2793 = vmatprep.subr.bf16.mxu0 0
  %2794 = vmatpush2.bf16.msra.mxu0 0
  %2795 = vmatprep.subr.bf16.mxu0 0
  %2796 = vmatpush2.bf16.msra.mxu0 0
  %2797 = vmatprep.subr.bf16.mxu0 0
  %2798 = vmatpush2.bf16.msra.mxu0 0
  %2799 = vmatprep.subr.bf16.mxu0 0
  %2800 = vmatpush2.bf16.msra.mxu0 0
  %2801 = vmatprep.subr.bf16.mxu0 0
  %2802 = vmatpush2.bf16.msra.mxu0 0
  %2803 = vmatprep.subr.bf16.mxu0 0
  %2804 = vmatpush2.bf16.msra.mxu0 0
  %2805 = vmatprep.mubr.bf16.mxu0 0
  %2806 = vmatmul.mubr.bf16.gmra.mxu0 %v2771
  %v2807 = vpop.f32.mrf.mxu0
  %v2808 = vadd.f32 0.0, %v2807
  %v2809 = vpop.f32.mrf.mxu0
  %v2810 = vadd.f32 0.0, %v2809
  %v2811 = vpop.f32.mrf.mxu0
  %v2812 = vpop.f32.mrf.mxu0
  %2813 = vdwg.mxu0
  %2814 = vmatprep.subr.bf16.mxu0 0
  %2815 = vmatpush1.bf16.msra.mxu0 %v886
  %2816 = vmatprep.subr.bf16.mxu0 0
  %2817 = vmatpush1.bf16.msra.mxu0 %v883
  %2818 = vmatprep.subr.bf16.mxu0 0
  %2819 = vmatpush1.bf16.msra.mxu0 %v880
  %2820 = vmatprep.subr.bf16.mxu0 0
  %2821 = vmatpush1.bf16.msra.mxu0 %v877
  %2822 = vmatprep.subr.bf16.mxu0 0
  %2823 = vmatpush1.bf16.msra.mxu0 %v874
  %2824 = vmatprep.subr.bf16.mxu0 0
  %2825 = vmatpush1.bf16.msra.mxu0 %v871
  %2826 = vmatprep.subr.bf16.mxu0 0
  %2827 = vmatpush1.bf16.msra.mxu0 %v868
  %2828 = vmatprep.subr.bf16.mxu0 0
  %2829 = vmatpush1.bf16.msra.mxu0 %v865
  %2830 = vmatprep.subr.bf16.mxu0 0
  %2831 = vmatpush2.bf16.msra.mxu0 0
  %2832 = vmatprep.subr.bf16.mxu0 0
  %2833 = vmatpush2.bf16.msra.mxu0 0
  %2834 = vmatprep.subr.bf16.mxu0 0
  %2835 = vmatpush2.bf16.msra.mxu0 0
  %2836 = vmatprep.subr.bf16.mxu0 0
  %2837 = vmatpush2.bf16.msra.mxu0 0
  %2838 = vmatprep.subr.bf16.mxu0 0
  %2839 = vmatpush2.bf16.msra.mxu0 0
  %2840 = vmatprep.subr.bf16.mxu0 0
  %2841 = vmatpush2.bf16.msra.mxu0 0
  %2842 = vmatprep.subr.bf16.mxu0 0
  %2843 = vmatpush2.bf16.msra.mxu0 0
  %2844 = vmatprep.subr.bf16.mxu0 0
  %2845 = vmatpush2.bf16.msra.mxu0 0
  %2846 = vmatprep.mubr.bf16.mxu0 0
  %2847 = vmatmul.mubr.bf16.gmra.mxu0 %v2771
  %v2848 = vpop.f32.mrf.mxu0
  %v2849 = vadd.f32 0.0, %v2848
  %v2850 = vpop.f32.mrf.mxu0
  %v2851 = vpop.f32.mrf.mxu0
  %v2852 = vpop.f32.mrf.mxu0
  %2853 = vdwg.mxu0
  %v2854 = vadd.f32 %v2223, %v2808
  %v2855 = vadd.f32 %v2224, %v2810
  %v2856 = vadd.f32 %v2225, %v2849
  %2857 = vmatprep.subr.bf16.mxu0 %v1113
  %2858 = vmatpush1.bf16.msra.mxu0 %v1112
  %2859 = vmatprep.subr.bf16.mxu0 %v1110
  %2860 = vmatpush1.bf16.msra.mxu0 %v1109
  %2861 = vmatprep.subr.bf16.mxu0 %v1107
  %2862 = vmatpush1.bf16.msra.mxu0 %v1106
  %2863 = vmatprep.subr.bf16.mxu0 %v1104
  %2864 = vmatpush1.bf16.msra.mxu0 %v1103
  %2865 = vmatprep.subr.bf16.mxu0 %v1101
  %2866 = vmatpush1.bf16.msra.mxu0 %v1100
  %2867 = vmatprep.subr.bf16.mxu0 %v1098
  %2868 = vmatpush1.bf16.msra.mxu0 %v1097
  %2869 = vmatprep.subr.bf16.mxu0 %v1095
  %2870 = vmatpush1.bf16.msra.mxu0 %v1094
  %2871 = vmatprep.subr.bf16.mxu0 %v1092
  %2872 = vmatpush1.bf16.msra.mxu0 %v1091
  %2873 = vmatprep.subr.bf16.mxu0 0
  %2874 = vmatpush2.bf16.msra.mxu0 0
  %2875 = vmatprep.subr.bf16.mxu0 0
  %2876 = vmatpush2.bf16.msra.mxu0 0
  %2877 = vmatprep.subr.bf16.mxu0 0
  %2878 = vmatpush2.bf16.msra.mxu0 0
  %2879 = vmatprep.subr.bf16.mxu0 0
  %2880 = vmatpush2.bf16.msra.mxu0 0
  %2881 = vmatprep.subr.bf16.mxu0 0
  %2882 = vmatpush2.bf16.msra.mxu0 0
  %2883 = vmatprep.subr.bf16.mxu0 0
  %2884 = vmatpush2.bf16.msra.mxu0 0
  %2885 = vmatprep.subr.bf16.mxu0 0
  %2886 = vmatpush2.bf16.msra.mxu0 0
  %2887 = vmatprep.subr.bf16.mxu0 0
  %2888 = vmatpush2.bf16.msra.mxu0 0
  %2889 = vmatprep.mubr.bf16.mxu0 0
  %2890 = vmatmul.mubr.bf16.gmra.mxu0 %v2126
  %v2891 = vpop.f32.mrf.mxu0
  %v2892 = vadd.f32 %v999, %v2891
  %v2893 = vpop.f32.mrf.mxu0
  %v2894 = vadd.f32 %v1003, %v2893
  %v2895 = vpop.f32.mrf.mxu0
  %v2896 = vpop.f32.mrf.mxu0
  %2897 = vdwg.mxu0
  %2898 = vmatprep.subr.bf16.mxu0 0
  %2899 = vmatpush1.bf16.msra.mxu0 %v1114
  %2900 = vmatprep.subr.bf16.mxu0 0
  %2901 = vmatpush1.bf16.msra.mxu0 %v1111
  %2902 = vmatprep.subr.bf16.mxu0 0
  %2903 = vmatpush1.bf16.msra.mxu0 %v1108
  %2904 = vmatprep.subr.bf16.mxu0 0
  %2905 = vmatpush1.bf16.msra.mxu0 %v1105
  %2906 = vmatprep.subr.bf16.mxu0 0
  %2907 = vmatpush1.bf16.msra.mxu0 %v1102
  %2908 = vmatprep.subr.bf16.mxu0 0
  %2909 = vmatpush1.bf16.msra.mxu0 %v1099
  %2910 = vmatprep.subr.bf16.mxu0 0
  %2911 = vmatpush1.bf16.msra.mxu0 %v1096
  %2912 = vmatprep.subr.bf16.mxu0 0
  %2913 = vmatpush1.bf16.msra.mxu0 %v1093
  %2914 = vmatprep.subr.bf16.mxu0 0
  %2915 = vmatpush2.bf16.msra.mxu0 0
  %2916 = vmatprep.subr.bf16.mxu0 0
  %2917 = vmatpush2.bf16.msra.mxu0 0
  %2918 = vmatprep.subr.bf16.mxu0 0
  %2919 = vmatpush2.bf16.msra.mxu0 0
  %2920 = vmatprep.subr.bf16.mxu0 0
  %2921 = vmatpush2.bf16.msra.mxu0 0
  %2922 = vmatprep.subr.bf16.mxu0 0
  %2923 = vmatpush2.bf16.msra.mxu0 0
  %2924 = vmatprep.subr.bf16.mxu0 0
  %2925 = vmatpush2.bf16.msra.mxu0 0
  %2926 = vmatprep.subr.bf16.mxu0 0
  %2927 = vmatpush2.bf16.msra.mxu0 0
  %2928 = vmatprep.subr.bf16.mxu0 0
  %2929 = vmatpush2.bf16.msra.mxu0 0
  %2930 = vmatprep.mubr.bf16.mxu0 0
  %2931 = vmatmul.mubr.bf16.gmra.mxu0 %v2126
  %v2932 = vpop.f32.mrf.mxu0
  %v2933 = vadd.f32 %v1007, %v2932
  %v2934 = vpop.f32.mrf.mxu0
  %v2935 = vpop.f32.mrf.mxu0
  %v2936 = vpop.f32.mrf.mxu0
  %2937 = vdwg.mxu0
  %v2938 = vadd.f32 %v2854, %v2892
  %v2939 = vxor.u32 %v2938, 2147483648
  %v2940 = vmul.f32 %v2939, 1.442695
  %v2941 = vpow.pop %v2940
  %v2942 = vadd.f32 %v2941, 1.0
  %v2943 = vrcp.pop %v2942
  %v2944 = vmul.f32 1.0, %v2943
  %v2945 = vadd.f32 %v2855, %v2894
  %v2946 = vxor.u32 %v2945, 2147483648
  %v2947 = vmul.f32 %v2946, 1.442695
  %v2948 = vpow.pop %v2947
  %v2949 = vadd.f32 %v2948, 1.0
  %v2950 = vrcp.pop %v2949
  %v2951 = vmul.f32 1.0, %v2950
  %v2952 = vmul.f32 %v2944, %v2933
  %v2953 = vadd.f32 %v2856, %v2952
  %v2954 = vtanh.pop %v2953
  %v2955 = vsub.f32 1.0, %v2951
  %v2956 = vmul.f32 %v2955, %v2954
  %v2957 = vmul.f32 %v2951, %v2125
  %v2958 = vadd.f32 %v2956, %v2957
  %v2959 = vpack.c.bf16 %v2958, %v2958
  %2960 = vmatprep.subr.bf16.mxu0 0
  %2961 = vmatpush1.bf16.msra.mxu0 %v1287
  %2962 = vmatprep.subr.bf16.mxu0 0
  %2963 = vmatpush1.bf16.msra.mxu0 %v1286
  %2964 = vmatprep.subr.bf16.mxu0 0
  %2965 = vmatpush1.bf16.msra.mxu0 %v1285
  %2966 = vmatprep.subr.bf16.mxu0 0
  %2967 = vmatpush1.bf16.msra.mxu0 %v1284
  %2968 = vmatprep.subr.bf16.mxu0 0
  %2969 = vmatpush1.bf16.msra.mxu0 %v1283
  %2970 = vmatprep.subr.bf16.mxu0 0
  %2971 = vmatpush1.bf16.msra.mxu0 %v1282
  %2972 = vmatprep.subr.bf16.mxu0 0
  %2973 = vmatpush1.bf16.msra.mxu0 %v1281
  %2974 = vmatprep.subr.bf16.mxu0 0
  %2975 = vmatpush1.bf16.msra.mxu0 %v1280
  %2976 = vmatprep.subr.bf16.mxu0 0
  %2977 = vmatpush2.bf16.msra.mxu0 0
  %2978 = vmatprep.subr.bf16.mxu0 0
  %2979 = vmatpush2.bf16.msra.mxu0 0
  %2980 = vmatprep.subr.bf16.mxu0 0
  %2981 = vmatpush2.bf16.msra.mxu0 0
  %2982 = vmatprep.subr.bf16.mxu0 0
  %2983 = vmatpush2.bf16.msra.mxu0 0
  %2984 = vmatprep.subr.bf16.mxu0 0
  %2985 = vmatpush2.bf16.msra.mxu0 0
  %2986 = vmatprep.subr.bf16.mxu0 0
  %2987 = vmatpush2.bf16.msra.mxu0 0
  %2988 = vmatprep.subr.bf16.mxu0 0
  %2989 = vmatpush2.bf16.msra.mxu0 0
  %2990 = vmatprep.subr.bf16.mxu0 0
  %2991 = vmatpush2.bf16.msra.mxu0 0
  %2992 = vmatprep.mubr.bf16.mxu0 0
  %2993 = vmatmul.mubr.bf16.gmra.mxu0 %v2959
  %v2994 = vpop.f32.mrf.mxu0
  %v2995 = vadd.f32 %v1246, %v2994
  %v2996 = vpop.f32.mrf.mxu0
  %v2997 = vpop.f32.mrf.mxu0
  %v2998 = vpop.f32.mrf.mxu0
  %2999 = vdwg.mxu0
  %3000 = vmax.xlane.f32.xlu0 %v2995
  %v3001 = vpop.xlane.xlu0 %3000
  %v3002 = vsub.f32 %v2995, %v3001
  %v3003 = vmul.f32 %v3002, 1.442695
  %v3004 = vpow.pop %v3003
  %3005 = vadd.xlane.f32.xlu0 %v3004
  %v3006 = vpop.xlane.xlu0 %3005
  %v3007 = vlog2.pop %v3006
  %v3008 = vmul.f32 %v3007, 0.6931472
  %v3009 = vadd.f32 %v3008, %v3001
  %v3010 = vsub.f32 %v2995, %v3009
  %s3011 = scalar_lea.vmem %s12, 16
  %3012 = vst [vmem:[%s3011] sm:$0xff] %v3010
  %v3013 = vlaneseq
  %v3014 = vshrl.u32 %v3013, 7
  %v3015 = vsub.s32 %v405, %v3014
  %v3016 = vrot.slane %v2647, %v3015
  %v3017 = vlaneseq
  %v3018 = vshrl.u32 %v3017, 7
  %v3019 = vsub.s32 %v405, %v3018
  %v3020 = vrot.slane %v2652, %v3019
  %v3021 = vlaneseq
  %v3022 = vshrl.u32 %v3021, 7
  %v3023 = vsub.s32 %v405, %v3022
  %v3024 = vrot.slane %v2657, %v3023
  %v3025 = vlaneseq
  %v3026 = vshrl.u32 %v3025, 7
  %v3027 = vsub.s32 %v405, %v3026
  %v3028 = vrot.slane %v2662, %v3027
  %v3029 = vlaneseq
  %v3030 = vshrl.u32 %v3029, 7
  %v3031 = vsub.s32 %v405, %v3030
  %v3032 = vrot.slane %v2667, %v3031
  %v3033 = vlaneseq
  %v3034 = vshrl.u32 %v3033, 7
  %v3035 = vsub.s32 %v405, %v3034
  %v3036 = vrot.slane %v2672, %v3035
  %v3037 = vlaneseq
  %v3038 = vshrl.u32 %v3037, 7
  %v3039 = vsub.s32 %v405, %v3038
  %v3040 = vrot.slane %v2677, %v3039
  %v3041 = vlaneseq
  %v3042 = vshrl.u32 %v3041, 7
  %v3043 = vsub.s32 %v405, %v3042
  %v3044 = vrot.slane %v2682, %v3043
  %v3045 = vsel %vm438, %v3020, %v3016
  %v3046 = vsel %vm440, %v3024, %v3045
  %v3047 = vsel %vm442, %v3028, %v3046
  %v3048 = vsel %vm444, %v3032, %v3047
  %v3049 = vsel %vm446, %v3036, %v3048
  %v3050 = vsel %vm448, %v3040, %v3049
  %v3051 = vsel %vm450, %v3044, %v3050
  %s3053 = scalar_lea.vmem %s13, 16
  %3054 = vst.msk [vmem:[%s3053] sm:$0xff] %vm453, %v3051
  %s3055 = scalar_lea.vmem %s0, 72
  %v3056 = vld [vmem:[%s3055] sm:$0xff]
  %v3057 = vld [vmem:[%s3055 + $0x8] sm:$0xff]
  %v3058 = vld [vmem:[%s3055 + $0x10] sm:$0xff]
  %3059 = vmatprep.subr.bf16.mxu0 0
  %3060 = vmatpush1.bf16.msra.mxu0 %v211
  %3061 = vmatprep.subr.bf16.mxu0 0
  %3062 = vmatpush1.bf16.msra.mxu0 %v210
  %3063 = vmatprep.subr.bf16.mxu0 0
  %3064 = vmatpush1.bf16.msra.mxu0 %v209
  %3065 = vmatprep.subr.bf16.mxu0 0
  %3066 = vmatpush1.bf16.msra.mxu0 %v208
  %3067 = vmatprep.subr.bf16.mxu0 0
  %3068 = vmatpush1.bf16.msra.mxu0 %v207
  %3069 = vmatprep.subr.bf16.mxu0 0
  %3070 = vmatpush1.bf16.msra.mxu0 %v206
  %3071 = vmatprep.subr.bf16.mxu0 0
  %3072 = vmatpush1.bf16.msra.mxu0 %v205
  %3073 = vmatprep.subr.bf16.mxu0 0
  %3074 = vmatpush1.bf16.msra.mxu0 %v204
  %3075 = vmatprep.subr.bf16.mxu0 0
  %3076 = vmatpush2.bf16.msra.mxu0 0
  %3077 = vmatprep.subr.bf16.mxu0 0
  %3078 = vmatpush2.bf16.msra.mxu0 0
  %3079 = vmatprep.subr.bf16.mxu0 0
  %3080 = vmatpush2.bf16.msra.mxu0 0
  %3081 = vmatprep.subr.bf16.mxu0 0
  %3082 = vmatpush2.bf16.msra.mxu0 0
  %3083 = vmatprep.subr.bf16.mxu0 0
  %3084 = vmatpush2.bf16.msra.mxu0 0
  %3085 = vmatprep.subr.bf16.mxu0 0
  %3086 = vmatpush2.bf16.msra.mxu0 0
  %3087 = vmatprep.subr.bf16.mxu0 0
  %3088 = vmatpush2.bf16.msra.mxu0 0
  %3089 = vmatprep.subr.bf16.mxu0 0
  %3090 = vmatpush2.bf16.msra.mxu0 0
  %3091 = vmatprep.mubr.bf16.mxu0 0
  %3092 = vmatmul.mubr.bf16.gmra.mxu0 %v2959
  %v3093 = vpop.f32.mrf.mxu0
  %v3094 = vadd.f32 %v170, %v3093
  %v3095 = vpop.f32.mrf.mxu0
  %v3096 = vpop.f32.mrf.mxu0
  %v3097 = vpop.f32.mrf.mxu0
  %3098 = vdwg.mxu0
  %v3100 = vcombine.high %v3094, %v3094
  %v3102 = vunpack.c.l.s4 1966171168
  %v3103 = vunpack.c.0.s8 %v3102
  %v3104 = vlaneseq
  %v3105 = vshrl.u32 %v3104, 7
  %v3106 = vsub.s32 %v3103, %v3105
  %v3107 = vrot.slane %v3094, %v3106
  %v3109 = vunpack.c.l.s4 1966171168
  %v3110 = vunpack.c.0.s8 %v3109
  %v3111 = vlaneseq
  %v3112 = vshrl.u32 %v3111, 7
  %v3113 = vsub.s32 %v3110, %v3112
  %v3114 = vrot.slane %v3100, %v3113
  %v3115 = vcombine.high %v3107, %v3107
  %v3116 = vcombine.high %v3114, %v3114
  %v3118 = vunpack.c.l.s4 1966171168
  %v3119 = vunpack.c.0.s8 %v3118
  %v3120 = vlaneseq
  %v3121 = vshrl.u32 %v3120, 7
  %v3122 = vsub.s32 %v3119, %v3121
  %v3123 = vrot.slane %v3107, %v3122
  %v3125 = vunpack.c.l.s4 1966171168
  %v3126 = vunpack.c.0.s8 %v3125
  %v3127 = vlaneseq
  %v3128 = vshrl.u32 %v3127, 7
  %v3129 = vsub.s32 %v3126, %v3128
  %v3130 = vrot.slane %v3114, %v3129
  %v3132 = vunpack.c.l.s4 1966171168
  %v3133 = vunpack.c.0.s8 %v3132
  %v3134 = vlaneseq
  %v3135 = vshrl.u32 %v3134, 7
  %v3136 = vsub.s32 %v3133, %v3135
  %v3137 = vrot.slane %v3115, %v3136
  %v3139 = vunpack.c.l.s4 1966171168
  %v3140 = vunpack.c.0.s8 %v3139
  %v3141 = vlaneseq
  %v3142 = vshrl.u32 %v3141, 7
  %v3143 = vsub.s32 %v3140, %v3142
  %v3144 = vrot.slane %v3116, %v3143
  %v3145 = vcombine.high %v3123, %v3123
  %v3146 = vcombine.high %v3130, %v3130
  %v3147 = vcombine.high %v3137, %v3137
  %v3148 = vcombine.high %v3144, %v3144
  %v3149 = vlaneseq
  %v3150 = vshrl.u32 %v3149, 7
  %v3151 = vsub.s32 0, %v3150
  %v3152 = vrot.slane %v3123, %v3151
  %v3153 = vlaneseq
  %v3154 = vshrl.u32 %v3153, 7
  %v3155 = vsub.s32 0, %v3154
  %v3156 = vrot.slane %v3137, %v3155
  %v3157 = vlaneseq
  %v3158 = vshrl.u32 %v3157, 7
  %v3159 = vsub.s32 0, %v3158
  %v3160 = vrot.slane %v3145, %v3159
  %v3161 = vlaneseq
  %v3162 = vshrl.u32 %v3161, 7
  %v3163 = vsub.s32 0, %v3162
  %v3164 = vrot.slane %v3147, %v3163
  %v3165 = vlaneseq
  %v3166 = vshrl.u32 %v3165, 7
  %v3167 = vsub.s32 0, %v3166
  %v3168 = vrot.slane %v3130, %v3167
  %v3169 = vlaneseq
  %v3170 = vshrl.u32 %v3169, 7
  %v3171 = vsub.s32 0, %v3170
  %v3172 = vrot.slane %v3144, %v3171
  %v3173 = vlaneseq
  %v3174 = vshrl.u32 %v3173, 7
  %v3175 = vsub.s32 0, %v3174
  %v3176 = vrot.slane %v3146, %v3175
  %v3177 = vlaneseq
  %v3178 = vshrl.u32 %v3177, 7
  %v3179 = vsub.s32 0, %v3178
  %v3180 = vrot.slane %v3148, %v3179
  %v3189 = vadd.f32 %v3152, %v45
  %v3190 = vadd.f32 %v3156, %v46
  %v3191 = vadd.f32 %v3160, %v47
  %v3192 = vadd.f32 %v3164, %v48
  %v3193 = vadd.f32 %v3168, %v49
  %v3194 = vadd.f32 %v3172, %v50
  %v3195 = vadd.f32 %v3176, %v51
  %v3196 = vadd.f32 %v3180, %v52
  %v3197 = vtanh.pop %v3189
  %v3198 = vtanh.pop %v3190
  %v3199 = vtanh.pop %v3191
  %v3200 = vtanh.pop %v3192
  %v3201 = vtanh.pop %v3193
  %v3202 = vtanh.pop %v3194
  %v3203 = vtanh.pop %v3195
  %v3204 = vtanh.pop %v3196
  %v3205 = vmul.f32 %v3197, %v370
  %v3206 = vmul.f32 %v3198, %v370
  %v3207 = vmul.f32 %v3199, %v370
  %v3208 = vmul.f32 %v3200, %v370
  %v3209 = vmul.f32 %v3201, %v370
  %v3210 = vmul.f32 %v3202, %v370
  %v3211 = vmul.f32 %v3203, %v370
  %v3212 = vmul.f32 %v3204, %v370
  %3213 = vadd.xlane.f32.xlu0 %v3205
  %v3214 = vpop.xlane.xlu0 %3213
  %3215 = vadd.xlane.f32.xlu0 %v3206
  %v3216 = vpop.xlane.xlu0 %3215
  %3217 = vadd.xlane.f32.xlu0 %v3207
  %v3218 = vpop.xlane.xlu0 %3217
  %3219 = vadd.xlane.f32.xlu0 %v3208
  %v3220 = vpop.xlane.xlu0 %3219
  %3221 = vadd.xlane.f32.xlu0 %v3209
  %v3222 = vpop.xlane.xlu0 %3221
  %3223 = vadd.xlane.f32.xlu0 %v3210
  %v3224 = vpop.xlane.xlu0 %3223
  %3225 = vadd.xlane.f32.xlu0 %v3211
  %v3226 = vpop.xlane.xlu0 %3225
  %3227 = vadd.xlane.f32.xlu0 %v3212
  %v3228 = vpop.xlane.xlu0 %3227
  %v3237 = vlaneseq
  %v3238 = vshrl.u32 %v3237, 7
  %v3239 = vsub.s32 %v405, %v3238
  %v3240 = vrot.slane %v3214, %v3239
  %v3241 = vlaneseq
  %v3242 = vshrl.u32 %v3241, 7
  %v3243 = vsub.s32 %v405, %v3242
  %v3244 = vrot.slane %v3216, %v3243
  %v3245 = vlaneseq
  %v3246 = vshrl.u32 %v3245, 7
  %v3247 = vsub.s32 %v405, %v3246
  %v3248 = vrot.slane %v3218, %v3247
  %v3249 = vlaneseq
  %v3250 = vshrl.u32 %v3249, 7
  %v3251 = vsub.s32 %v405, %v3250
  %v3252 = vrot.slane %v3220, %v3251
  %v3253 = vlaneseq
  %v3254 = vshrl.u32 %v3253, 7
  %v3255 = vsub.s32 %v405, %v3254
  %v3256 = vrot.slane %v3222, %v3255
  %v3257 = vlaneseq
  %v3258 = vshrl.u32 %v3257, 7
  %v3259 = vsub.s32 %v405, %v3258
  %v3260 = vrot.slane %v3224, %v3259
  %v3261 = vlaneseq
  %v3262 = vshrl.u32 %v3261, 7
  %v3263 = vsub.s32 %v405, %v3262
  %v3264 = vrot.slane %v3226, %v3263
  %v3265 = vlaneseq
  %v3266 = vshrl.u32 %v3265, 7
  %v3267 = vsub.s32 %v405, %v3266
  %v3268 = vrot.slane %v3228, %v3267
  %v3269 = vsel %vm438, %v3244, %v3240
  %v3270 = vsel %vm440, %v3248, %v3269
  %v3271 = vsel %vm442, %v3252, %v3270
  %v3272 = vsel %vm444, %v3256, %v3271
  %v3273 = vsel %vm446, %v3260, %v3272
  %v3274 = vsel %vm448, %v3264, %v3273
  %v3275 = vsel %vm450, %v3268, %v3274
  %v3277 = vsel %vm453, %v3275, -inf
  %3278 = vmax.xlane.f32.xlu0 %v3277
  %v3279 = vpop.xlane.xlu0 %3278
  %v3281 = vlaneseq
  %v3282 = vshrl.u32 %v3281, 7
  %v3283 = vsub.s32 0, %v3282
  %v3284 = vrot.slane %v3279, %v3283
  %v3285 = vlaneseq
  %v3286 = vshrl.u32 %v3285, 7
  %v3287 = vsub.s32 1, %v3286
  %v3288 = vrot.slane %v3279, %v3287
  %v3289 = vlaneseq
  %v3290 = vshrl.u32 %v3289, 7
  %v3291 = vsub.s32 2, %v3290
  %v3292 = vrot.slane %v3279, %v3291
  %v3293 = vlaneseq
  %v3294 = vshrl.u32 %v3293, 7
  %v3295 = vsub.s32 3, %v3294
  %v3296 = vrot.slane %v3279, %v3295
  %v3297 = vlaneseq
  %v3298 = vshrl.u32 %v3297, 7
  %v3299 = vsub.s32 4, %v3298
  %v3300 = vrot.slane %v3279, %v3299
  %v3301 = vlaneseq
  %v3302 = vshrl.u32 %v3301, 7
  %v3303 = vsub.s32 5, %v3302
  %v3304 = vrot.slane %v3279, %v3303
  %v3305 = vlaneseq
  %v3306 = vshrl.u32 %v3305, 7
  %v3307 = vsub.s32 6, %v3306
  %v3308 = vrot.slane %v3279, %v3307
  %v3309 = vlaneseq
  %v3310 = vshrl.u32 %v3309, 7
  %v3311 = vsub.s32 7, %v3310
  %v3312 = vrot.slane %v3279, %v3311
  %v3321 = vsub.f32 %v3214, %v3284
  %v3322 = vsub.f32 %v3216, %v3288
  %v3323 = vsub.f32 %v3218, %v3292
  %v3324 = vsub.f32 %v3220, %v3296
  %v3325 = vsub.f32 %v3222, %v3300
  %v3326 = vsub.f32 %v3224, %v3304
  %v3327 = vsub.f32 %v3226, %v3308
  %v3328 = vsub.f32 %v3228, %v3312
  %v3329 = vmul.f32 %v3321, 1.442695
  %v3330 = vpow.pop %v3329
  %v3331 = vmul.f32 %v3322, 1.442695
  %v3332 = vpow.pop %v3331
  %v3333 = vmul.f32 %v3323, 1.442695
  %v3334 = vpow.pop %v3333
  %v3335 = vmul.f32 %v3324, 1.442695
  %v3336 = vpow.pop %v3335
  %v3337 = vmul.f32 %v3325, 1.442695
  %v3338 = vpow.pop %v3337
  %v3339 = vmul.f32 %v3326, 1.442695
  %v3340 = vpow.pop %v3339
  %v3341 = vmul.f32 %v3327, 1.442695
  %v3342 = vpow.pop %v3341
  %v3343 = vmul.f32 %v3328, 1.442695
  %v3344 = vpow.pop %v3343
  %3353 = vset.pattern.permute.xlu0 0
  %3354 = vperm.xlu0 %3353, %v3330
  %v3355 = vpop.permute.xlu0 %3354
  %3356 = vset.pattern.permute.xlu0 0
  %3357 = vperm.xlu0 %3356, %v3332
  %v3358 = vpop.permute.xlu0 %3357
  %3359 = vset.pattern.permute.xlu0 0
  %3360 = vperm.xlu0 %3359, %v3334
  %v3361 = vpop.permute.xlu0 %3360
  %3362 = vset.pattern.permute.xlu0 0
  %3363 = vperm.xlu0 %3362, %v3336
  %v3364 = vpop.permute.xlu0 %3363
  %3365 = vset.pattern.permute.xlu0 0
  %3366 = vperm.xlu0 %3365, %v3338
  %v3367 = vpop.permute.xlu0 %3366
  %3368 = vset.pattern.permute.xlu0 0
  %3369 = vperm.xlu0 %3368, %v3340
  %v3370 = vpop.permute.xlu0 %3369
  %3371 = vset.pattern.permute.xlu0 0
  %3372 = vperm.xlu0 %3371, %v3342
  %v3373 = vpop.permute.xlu0 %3372
  %3374 = vset.pattern.permute.xlu0 0
  %3375 = vperm.xlu0 %3374, %v3344
  %v3376 = vpop.permute.xlu0 %3375
  %v3377 = vlaneseq
  %v3378 = vshrl.u32 %v3377, 7
  %v3379 = vsub.s32 %v405, %v3378
  %v3380 = vrot.slane %v3355, %v3379
  %v3381 = vlaneseq
  %v3382 = vshrl.u32 %v3381, 7
  %v3383 = vsub.s32 %v405, %v3382
  %v3384 = vrot.slane %v3358, %v3383
  %v3385 = vlaneseq
  %v3386 = vshrl.u32 %v3385, 7
  %v3387 = vsub.s32 %v405, %v3386
  %v3388 = vrot.slane %v3361, %v3387
  %v3389 = vlaneseq
  %v3390 = vshrl.u32 %v3389, 7
  %v3391 = vsub.s32 %v405, %v3390
  %v3392 = vrot.slane %v3364, %v3391
  %v3393 = vlaneseq
  %v3394 = vshrl.u32 %v3393, 7
  %v3395 = vsub.s32 %v405, %v3394
  %v3396 = vrot.slane %v3367, %v3395
  %v3397 = vlaneseq
  %v3398 = vshrl.u32 %v3397, 7
  %v3399 = vsub.s32 %v405, %v3398
  %v3400 = vrot.slane %v3370, %v3399
  %v3401 = vlaneseq
  %v3402 = vshrl.u32 %v3401, 7
  %v3403 = vsub.s32 %v405, %v3402
  %v3404 = vrot.slane %v3373, %v3403
  %v3405 = vlaneseq
  %v3406 = vshrl.u32 %v3405, 7
  %v3407 = vsub.s32 %v405, %v3406
  %v3408 = vrot.slane %v3376, %v3407
  %v3409 = vsel %vm438, %v3384, %v3380
  %v3410 = vsel %vm440, %v3388, %v3409
  %v3411 = vsel %vm442, %v3392, %v3410
  %v3412 = vsel %vm444, %v3396, %v3411
  %v3413 = vsel %vm446, %v3400, %v3412
  %v3414 = vsel %vm448, %v3404, %v3413
  %v3415 = vsel %vm450, %v3408, %v3414
  %v3417 = vsel %vm453, %v3415, 0.0
  %3418 = vadd.xlane.f32.xlu0 %v3417
  %v3419 = vpop.xlane.xlu0 %3418
  %v3421 = vlaneseq
  %v3422 = vshrl.u32 %v3421, 7
  %v3423 = vsub.s32 0, %v3422
  %v3424 = vrot.slane %v3419, %v3423
  %v3425 = vlaneseq
  %v3426 = vshrl.u32 %v3425, 7
  %v3427 = vsub.s32 1, %v3426
  %v3428 = vrot.slane %v3419, %v3427
  %v3429 = vlaneseq
  %v3430 = vshrl.u32 %v3429, 7
  %v3431 = vsub.s32 2, %v3430
  %v3432 = vrot.slane %v3419, %v3431
  %v3433 = vlaneseq
  %v3434 = vshrl.u32 %v3433, 7
  %v3435 = vsub.s32 3, %v3434
  %v3436 = vrot.slane %v3419, %v3435
  %v3437 = vlaneseq
  %v3438 = vshrl.u32 %v3437, 7
  %v3439 = vsub.s32 4, %v3438
  %v3440 = vrot.slane %v3419, %v3439
  %v3441 = vlaneseq
  %v3442 = vshrl.u32 %v3441, 7
  %v3443 = vsub.s32 5, %v3442
  %v3444 = vrot.slane %v3419, %v3443
  %v3445 = vlaneseq
  %v3446 = vshrl.u32 %v3445, 7
  %v3447 = vsub.s32 6, %v3446
  %v3448 = vrot.slane %v3419, %v3447
  %v3449 = vlaneseq
  %v3450 = vshrl.u32 %v3449, 7
  %v3451 = vsub.s32 7, %v3450
  %v3452 = vrot.slane %v3419, %v3451
  %v3461 = vrcp.pop %v3424
  %v3462 = vmul.f32 %v3330, %v3461
  %v3463 = vrcp.pop %v3428
  %v3464 = vmul.f32 %v3332, %v3463
  %v3465 = vrcp.pop %v3432
  %v3466 = vmul.f32 %v3334, %v3465
  %v3467 = vrcp.pop %v3436
  %v3468 = vmul.f32 %v3336, %v3467
  %v3469 = vrcp.pop %v3440
  %v3470 = vmul.f32 %v3338, %v3469
  %v3471 = vrcp.pop %v3444
  %v3472 = vmul.f32 %v3340, %v3471
  %v3473 = vrcp.pop %v3448
  %v3474 = vmul.f32 %v3342, %v3473
  %v3475 = vrcp.pop %v3452
  %v3476 = vmul.f32 %v3344, %v3475
  %3478 = vset.pattern.permute.xlu0 0
  %3479 = vperm.xlu0 %3478, %v3462
  %v3480 = vpop.permute.xlu0 %3479
  %3483 = vset.pattern.permute.xlu0 0
  %3484 = vperm.xlu0 %3483, %v3464
  %v3485 = vpop.permute.xlu0 %3484
  %3488 = vset.pattern.permute.xlu0 0
  %3489 = vperm.xlu0 %3488, %v3466
  %v3490 = vpop.permute.xlu0 %3489
  %3493 = vset.pattern.permute.xlu0 0
  %3494 = vperm.xlu0 %3493, %v3468
  %v3495 = vpop.permute.xlu0 %3494
  %3498 = vset.pattern.permute.xlu0 0
  %3499 = vperm.xlu0 %3498, %v3470
  %v3500 = vpop.permute.xlu0 %3499
  %3503 = vset.pattern.permute.xlu0 0
  %3504 = vperm.xlu0 %3503, %v3472
  %v3505 = vpop.permute.xlu0 %3504
  %3508 = vset.pattern.permute.xlu0 0
  %3509 = vperm.xlu0 %3508, %v3474
  %v3510 = vpop.permute.xlu0 %3509
  %3513 = vset.pattern.permute.xlu0 0
  %3514 = vperm.xlu0 %3513, %v3476
  %v3515 = vpop.permute.xlu0 %3514
  %v3517 = vmul.f32 %v3480, %v53
  %v3518 = vmul.f32 %v3485, %v54
  %v3519 = vmul.f32 %v3490, %v55
  %v3520 = vmul.f32 %v3495, %v56
  %v3521 = vmul.f32 %v3500, %v57
  %v3522 = vmul.f32 %v3505, %v58
  %v3523 = vmul.f32 %v3510, %v59
  %v3524 = vmul.f32 %v3515, %v60
  %v3525 = vrot.slane %v3517, 4
  %v3526 = vadd.f32 %v3517, %v3525
  %v3527 = vrot.slane %v3526, 2
  %v3528 = vadd.f32 %v3526, %v3527
  %v3529 = vrot.slane %v3528, 1
  %v3530 = vadd.f32 %v3528, %v3529
  %v3531 = vrot.slane %v3518, 4
  %v3532 = vadd.f32 %v3518, %v3531
  %v3533 = vrot.slane %v3532, 2
  %v3534 = vadd.f32 %v3532, %v3533
  %v3535 = vrot.slane %v3534, 1
  %v3536 = vadd.f32 %v3534, %v3535
  %v3537 = vrot.slane %v3519, 4
  %v3538 = vadd.f32 %v3519, %v3537
  %v3539 = vrot.slane %v3538, 2
  %v3540 = vadd.f32 %v3538, %v3539
  %v3541 = vrot.slane %v3540, 1
  %v3542 = vadd.f32 %v3540, %v3541
  %v3543 = vrot.slane %v3520, 4
  %v3544 = vadd.f32 %v3520, %v3543
  %v3545 = vrot.slane %v3544, 2
  %v3546 = vadd.f32 %v3544, %v3545
  %v3547 = vrot.slane %v3546, 1
  %v3548 = vadd.f32 %v3546, %v3547
  %v3549 = vrot.slane %v3521, 4
  %v3550 = vadd.f32 %v3521, %v3549
  %v3551 = vrot.slane %v3550, 2
  %v3552 = vadd.f32 %v3550, %v3551
  %v3553 = vrot.slane %v3552, 1
  %v3554 = vadd.f32 %v3552, %v3553
  %v3555 = vrot.slane %v3522, 4
  %v3556 = vadd.f32 %v3522, %v3555
  %v3557 = vrot.slane %v3556, 2
  %v3558 = vadd.f32 %v3556, %v3557
  %v3559 = vrot.slane %v3558, 1
  %v3560 = vadd.f32 %v3558, %v3559
  %v3561 = vrot.slane %v3523, 4
  %v3562 = vadd.f32 %v3523, %v3561
  %v3563 = vrot.slane %v3562, 2
  %v3564 = vadd.f32 %v3562, %v3563
  %v3565 = vrot.slane %v3564, 1
  %v3566 = vadd.f32 %v3564, %v3565
  %v3567 = vrot.slane %v3524, 4
  %v3568 = vadd.f32 %v3524, %v3567
  %v3569 = vrot.slane %v3568, 2
  %v3570 = vadd.f32 %v3568, %v3569
  %v3571 = vrot.slane %v3570, 1
  %v3572 = vadd.f32 %v3570, %v3571
  %v3573 = vpack.c.bf16 %v3530, %v3530
  %v3574 = vpack.c.bf16 %v3536, %v3536
  %v3575 = vpack.c.bf16 %v3542, %v3542
  %v3576 = vpack.c.bf16 %v3548, %v3548
  %v3577 = vpack.c.bf16 %v3554, %v3554
  %v3578 = vpack.c.bf16 %v3560, %v3560
  %v3579 = vpack.c.bf16 %v3566, %v3566
  %v3580 = vpack.c.bf16 %v3572, %v3572
  %v3589 = vunpack.c.l.b16 %v3573
  %v3590 = vunpack.c.l.b16 %v3574
  %v3591 = vunpack.c.l.b16 %v3575
  %v3592 = vunpack.c.l.b16 %v3576
  %v3593 = vunpack.c.l.b16 %v3577
  %v3594 = vunpack.c.l.b16 %v3578
  %v3595 = vunpack.c.l.b16 %v3579
  %v3596 = vunpack.c.l.b16 %v3580
  %v3597 = vsel %vm438, %v3590, %v3589
  %v3598 = vsel %vm440, %v3591, %v3597
  %v3599 = vsel %vm442, %v3592, %v3598
  %v3600 = vsel %vm444, %v3593, %v3599
  %v3601 = vsel %vm446, %v3594, %v3600
  %v3602 = vsel %vm448, %v3595, %v3601
  %v3603 = vsel %vm450, %v3596, %v3602
  %v3604 = vpack.c.b16 %v3603, %v3603
  %3606 = vmatprep.subr.bf16.mxu0 %v885
  %3607 = vmatpush1.bf16.msra.mxu0 %v884
  %3608 = vmatprep.subr.bf16.mxu0 %v882
  %3609 = vmatpush1.bf16.msra.mxu0 %v881
  %3610 = vmatprep.subr.bf16.mxu0 %v879
  %3611 = vmatpush1.bf16.msra.mxu0 %v878
  %3612 = vmatprep.subr.bf16.mxu0 %v876
  %3613 = vmatpush1.bf16.msra.mxu0 %v875
  %3614 = vmatprep.subr.bf16.mxu0 %v873
  %3615 = vmatpush1.bf16.msra.mxu0 %v872
  %3616 = vmatprep.subr.bf16.mxu0 %v870
  %3617 = vmatpush1.bf16.msra.mxu0 %v869
  %3618 = vmatprep.subr.bf16.mxu0 %v867
  %3619 = vmatpush1.bf16.msra.mxu0 %v866
  %3620 = vmatprep.subr.bf16.mxu0 %v864
  %3621 = vmatpush1.bf16.msra.mxu0 %v863
  %3622 = vmatprep.subr.bf16.mxu0 0
  %3623 = vmatpush2.bf16.msra.mxu0 0
  %3624 = vmatprep.subr.bf16.mxu0 0
  %3625 = vmatpush2.bf16.msra.mxu0 0
  %3626 = vmatprep.subr.bf16.mxu0 0
  %3627 = vmatpush2.bf16.msra.mxu0 0
  %3628 = vmatprep.subr.bf16.mxu0 0
  %3629 = vmatpush2.bf16.msra.mxu0 0
  %3630 = vmatprep.subr.bf16.mxu0 0
  %3631 = vmatpush2.bf16.msra.mxu0 0
  %3632 = vmatprep.subr.bf16.mxu0 0
  %3633 = vmatpush2.bf16.msra.mxu0 0
  %3634 = vmatprep.subr.bf16.mxu0 0
  %3635 = vmatpush2.bf16.msra.mxu0 0
  %3636 = vmatprep.subr.bf16.mxu0 0
  %3637 = vmatpush2.bf16.msra.mxu0 0
  %3638 = vmatprep.mubr.bf16.mxu0 0
  %3639 = vmatmul.mubr.bf16.gmra.mxu0 %v3604
  %v3640 = vpop.f32.mrf.mxu0
  %v3641 = vadd.f32 0.0, %v3640
  %v3642 = vpop.f32.mrf.mxu0
  %v3643 = vadd.f32 0.0, %v3642
  %v3644 = vpop.f32.mrf.mxu0
  %v3645 = vpop.f32.mrf.mxu0
  %3646 = vdwg.mxu0
  %3647 = vmatprep.subr.bf16.mxu0 0
  %3648 = vmatpush1.bf16.msra.mxu0 %v886
  %3649 = vmatprep.subr.bf16.mxu0 0
  %3650 = vmatpush1.bf16.msra.mxu0 %v883
  %3651 = vmatprep.subr.bf16.mxu0 0
  %3652 = vmatpush1.bf16.msra.mxu0 %v880
  %3653 = vmatprep.subr.bf16.mxu0 0
  %3654 = vmatpush1.bf16.msra.mxu0 %v877
  %3655 = vmatprep.subr.bf16.mxu0 0
  %3656 = vmatpush1.bf16.msra.mxu0 %v874
  %3657 = vmatprep.subr.bf16.mxu0 0
  %3658 = vmatpush1.bf16.msra.mxu0 %v871
  %3659 = vmatprep.subr.bf16.mxu0 0
  %3660 = vmatpush1.bf16.msra.mxu0 %v868
  %3661 = vmatprep.subr.bf16.mxu0 0
  %3662 = vmatpush1.bf16.msra.mxu0 %v865
  %3663 = vmatprep.subr.bf16.mxu0 0
  %3664 = vmatpush2.bf16.msra.mxu0 0
  %3665 = vmatprep.subr.bf16.mxu0 0
  %3666 = vmatpush2.bf16.msra.mxu0 0
  %3667 = vmatprep.subr.bf16.mxu0 0
  %3668 = vmatpush2.bf16.msra.mxu0 0
  %3669 = vmatprep.subr.bf16.mxu0 0
  %3670 = vmatpush2.bf16.msra.mxu0 0
  %3671 = vmatprep.subr.bf16.mxu0 0
  %3672 = vmatpush2.bf16.msra.mxu0 0
  %3673 = vmatprep.subr.bf16.mxu0 0
  %3674 = vmatpush2.bf16.msra.mxu0 0
  %3675 = vmatprep.subr.bf16.mxu0 0
  %3676 = vmatpush2.bf16.msra.mxu0 0
  %3677 = vmatprep.subr.bf16.mxu0 0
  %3678 = vmatpush2.bf16.msra.mxu0 0
  %3679 = vmatprep.mubr.bf16.mxu0 0
  %3680 = vmatmul.mubr.bf16.gmra.mxu0 %v3604
  %v3681 = vpop.f32.mrf.mxu0
  %v3682 = vadd.f32 0.0, %v3681
  %v3683 = vpop.f32.mrf.mxu0
  %v3684 = vpop.f32.mrf.mxu0
  %v3685 = vpop.f32.mrf.mxu0
  %3686 = vdwg.mxu0
  %v3687 = vadd.f32 %v3056, %v3641
  %v3688 = vadd.f32 %v3057, %v3643
  %v3689 = vadd.f32 %v3058, %v3682
  %3690 = vmatprep.subr.bf16.mxu0 %v1113
  %3691 = vmatpush1.bf16.msra.mxu0 %v1112
  %3692 = vmatprep.subr.bf16.mxu0 %v1110
  %3693 = vmatpush1.bf16.msra.mxu0 %v1109
  %3694 = vmatprep.subr.bf16.mxu0 %v1107
  %3695 = vmatpush1.bf16.msra.mxu0 %v1106
  %3696 = vmatprep.subr.bf16.mxu0 %v1104
  %3697 = vmatpush1.bf16.msra.mxu0 %v1103
  %3698 = vmatprep.subr.bf16.mxu0 %v1101
  %3699 = vmatpush1.bf16.msra.mxu0 %v1100
  %3700 = vmatprep.subr.bf16.mxu0 %v1098
  %3701 = vmatpush1.bf16.msra.mxu0 %v1097
  %3702 = vmatprep.subr.bf16.mxu0 %v1095
  %3703 = vmatpush1.bf16.msra.mxu0 %v1094
  %3704 = vmatprep.subr.bf16.mxu0 %v1092
  %3705 = vmatpush1.bf16.msra.mxu0 %v1091
  %3706 = vmatprep.subr.bf16.mxu0 0
  %3707 = vmatpush2.bf16.msra.mxu0 0
  %3708 = vmatprep.subr.bf16.mxu0 0
  %3709 = vmatpush2.bf16.msra.mxu0 0
  %3710 = vmatprep.subr.bf16.mxu0 0
  %3711 = vmatpush2.bf16.msra.mxu0 0
  %3712 = vmatprep.subr.bf16.mxu0 0
  %3713 = vmatpush2.bf16.msra.mxu0 0
  %3714 = vmatprep.subr.bf16.mxu0 0
  %3715 = vmatpush2.bf16.msra.mxu0 0
  %3716 = vmatprep.subr.bf16.mxu0 0
  %3717 = vmatpush2.bf16.msra.mxu0 0
  %3718 = vmatprep.subr.bf16.mxu0 0
  %3719 = vmatpush2.bf16.msra.mxu0 0
  %3720 = vmatprep.subr.bf16.mxu0 0
  %3721 = vmatpush2.bf16.msra.mxu0 0
  %3722 = vmatprep.mubr.bf16.mxu0 0
  %3723 = vmatmul.mubr.bf16.gmra.mxu0 %v2959
  %v3724 = vpop.f32.mrf.mxu0
  %v3725 = vadd.f32 %v999, %v3724
  %v3726 = vpop.f32.mrf.mxu0
  %v3727 = vadd.f32 %v1003, %v3726
  %v3728 = vpop.f32.mrf.mxu0
  %v3729 = vpop.f32.mrf.mxu0
  %3730 = vdwg.mxu0
  %3731 = vmatprep.subr.bf16.mxu0 0
  %3732 = vmatpush1.bf16.msra.mxu0 %v1114
  %3733 = vmatprep.subr.bf16.mxu0 0
  %3734 = vmatpush1.bf16.msra.mxu0 %v1111
  %3735 = vmatprep.subr.bf16.mxu0 0
  %3736 = vmatpush1.bf16.msra.mxu0 %v1108
  %3737 = vmatprep.subr.bf16.mxu0 0
  %3738 = vmatpush1.bf16.msra.mxu0 %v1105
  %3739 = vmatprep.subr.bf16.mxu0 0
  %3740 = vmatpush1.bf16.msra.mxu0 %v1102
  %3741 = vmatprep.subr.bf16.mxu0 0
  %3742 = vmatpush1.bf16.msra.mxu0 %v1099
  %3743 = vmatprep.subr.bf16.mxu0 0
  %3744 = vmatpush1.bf16.msra.mxu0 %v1096
  %3745 = vmatprep.subr.bf16.mxu0 0
  %3746 = vmatpush1.bf16.msra.mxu0 %v1093
  %3747 = vmatprep.subr.bf16.mxu0 0
  %3748 = vmatpush2.bf16.msra.mxu0 0
  %3749 = vmatprep.subr.bf16.mxu0 0
  %3750 = vmatpush2.bf16.msra.mxu0 0
  %3751 = vmatprep.subr.bf16.mxu0 0
  %3752 = vmatpush2.bf16.msra.mxu0 0
  %3753 = vmatprep.subr.bf16.mxu0 0
  %3754 = vmatpush2.bf16.msra.mxu0 0
  %3755 = vmatprep.subr.bf16.mxu0 0
  %3756 = vmatpush2.bf16.msra.mxu0 0
  %3757 = vmatprep.subr.bf16.mxu0 0
  %3758 = vmatpush2.bf16.msra.mxu0 0
  %3759 = vmatprep.subr.bf16.mxu0 0
  %3760 = vmatpush2.bf16.msra.mxu0 0
  %3761 = vmatprep.subr.bf16.mxu0 0
  %3762 = vmatpush2.bf16.msra.mxu0 0
  %3763 = vmatprep.mubr.bf16.mxu0 0
  %3764 = vmatmul.mubr.bf16.gmra.mxu0 %v2959
  %v3765 = vpop.f32.mrf.mxu0
  %v3766 = vadd.f32 %v1007, %v3765
  %v3767 = vpop.f32.mrf.mxu0
  %v3768 = vpop.f32.mrf.mxu0
  %v3769 = vpop.f32.mrf.mxu0
  %3770 = vdwg.mxu0
  %v3771 = vadd.f32 %v3687, %v3725
  %v3772 = vxor.u32 %v3771, 2147483648
  %v3773 = vmul.f32 %v3772, 1.442695
  %v3774 = vpow.pop %v3773
  %v3775 = vadd.f32 %v3774, 1.0
  %v3776 = vrcp.pop %v3775
  %v3777 = vmul.f32 1.0, %v3776
  %v3778 = vadd.f32 %v3688, %v3727
  %v3779 = vxor.u32 %v3778, 2147483648
  %v3780 = vmul.f32 %v3779, 1.442695
  %v3781 = vpow.pop %v3780
  %v3782 = vadd.f32 %v3781, 1.0
  %v3783 = vrcp.pop %v3782
  %v3784 = vmul.f32 1.0, %v3783
  %v3785 = vmul.f32 %v3777, %v3766
  %v3786 = vadd.f32 %v3689, %v3785
  %v3787 = vtanh.pop %v3786
  %v3788 = vsub.f32 1.0, %v3784
  %v3789 = vmul.f32 %v3788, %v3787
  %v3790 = vmul.f32 %v3784, %v2958
  %v3791 = vadd.f32 %v3789, %v3790
  %v3792 = vpack.c.bf16 %v3791, %v3791
  %3793 = vmatprep.subr.bf16.mxu0 0
  %3794 = vmatpush1.bf16.msra.mxu0 %v1287
  %3795 = vmatprep.subr.bf16.mxu0 0
  %3796 = vmatpush1.bf16.msra.mxu0 %v1286
  %3797 = vmatprep.subr.bf16.mxu0 0
  %3798 = vmatpush1.bf16.msra.mxu0 %v1285
  %3799 = vmatprep.subr.bf16.mxu0 0
  %3800 = vmatpush1.bf16.msra.mxu0 %v1284
  %3801 = vmatprep.subr.bf16.mxu0 0
  %3802 = vmatpush1.bf16.msra.mxu0 %v1283
  %3803 = vmatprep.subr.bf16.mxu0 0
  %3804 = vmatpush1.bf16.msra.mxu0 %v1282
  %3805 = vmatprep.subr.bf16.mxu0 0
  %3806 = vmatpush1.bf16.msra.mxu0 %v1281
  %3807 = vmatprep.subr.bf16.mxu0 0
  %3808 = vmatpush1.bf16.msra.mxu0 %v1280
  %3809 = vmatprep.subr.bf16.mxu0 0
  %3810 = vmatpush2.bf16.msra.mxu0 0
  %3811 = vmatprep.subr.bf16.mxu0 0
  %3812 = vmatpush2.bf16.msra.mxu0 0
  %3813 = vmatprep.subr.bf16.mxu0 0
  %3814 = vmatpush2.bf16.msra.mxu0 0
  %3815 = vmatprep.subr.bf16.mxu0 0
  %3816 = vmatpush2.bf16.msra.mxu0 0
  %3817 = vmatprep.subr.bf16.mxu0 0
  %3818 = vmatpush2.bf16.msra.mxu0 0
  %3819 = vmatprep.subr.bf16.mxu0 0
  %3820 = vmatpush2.bf16.msra.mxu0 0
  %3821 = vmatprep.subr.bf16.mxu0 0
  %3822 = vmatpush2.bf16.msra.mxu0 0
  %3823 = vmatprep.subr.bf16.mxu0 0
  %3824 = vmatpush2.bf16.msra.mxu0 0
  %3825 = vmatprep.mubr.bf16.mxu0 0
  %3826 = vmatmul.mubr.bf16.gmra.mxu0 %v3792
  %v3827 = vpop.f32.mrf.mxu0
  %v3828 = vadd.f32 %v1246, %v3827
  %v3829 = vpop.f32.mrf.mxu0
  %v3830 = vpop.f32.mrf.mxu0
  %v3831 = vpop.f32.mrf.mxu0
  %3832 = vdwg.mxu0
  %3833 = vmax.xlane.f32.xlu0 %v3828
  %v3834 = vpop.xlane.xlu0 %3833
  %v3835 = vsub.f32 %v3828, %v3834
  %v3836 = vmul.f32 %v3835, 1.442695
  %v3837 = vpow.pop %v3836
  %3838 = vadd.xlane.f32.xlu0 %v3837
  %v3839 = vpop.xlane.xlu0 %3838
  %v3840 = vlog2.pop %v3839
  %v3841 = vmul.f32 %v3840, 0.6931472
  %v3842 = vadd.f32 %v3841, %v3834
  %v3843 = vsub.f32 %v3828, %v3842
  %s3844 = scalar_lea.vmem %s12, 24
  %3845 = vst [vmem:[%s3844] sm:$0xff] %v3843
  %v3846 = vlaneseq
  %v3847 = vshrl.u32 %v3846, 7
  %v3848 = vsub.s32 %v405, %v3847
  %v3849 = vrot.slane %v3480, %v3848
  %v3850 = vlaneseq
  %v3851 = vshrl.u32 %v3850, 7
  %v3852 = vsub.s32 %v405, %v3851
  %v3853 = vrot.slane %v3485, %v3852
  %v3854 = vlaneseq
  %v3855 = vshrl.u32 %v3854, 7
  %v3856 = vsub.s32 %v405, %v3855
  %v3857 = vrot.slane %v3490, %v3856
  %v3858 = vlaneseq
  %v3859 = vshrl.u32 %v3858, 7
  %v3860 = vsub.s32 %v405, %v3859
  %v3861 = vrot.slane %v3495, %v3860
  %v3862 = vlaneseq
  %v3863 = vshrl.u32 %v3862, 7
  %v3864 = vsub.s32 %v405, %v3863
  %v3865 = vrot.slane %v3500, %v3864
  %v3866 = vlaneseq
  %v3867 = vshrl.u32 %v3866, 7
  %v3868 = vsub.s32 %v405, %v3867
  %v3869 = vrot.slane %v3505, %v3868
  %v3870 = vlaneseq
  %v3871 = vshrl.u32 %v3870, 7
  %v3872 = vsub.s32 %v405, %v3871
  %v3873 = vrot.slane %v3510, %v3872
  %v3874 = vlaneseq
  %v3875 = vshrl.u32 %v3874, 7
  %v3876 = vsub.s32 %v405, %v3875
  %v3877 = vrot.slane %v3515, %v3876
  %v3878 = vsel %vm438, %v3853, %v3849
  %v3879 = vsel %vm440, %v3857, %v3878
  %v3880 = vsel %vm442, %v3861, %v3879
  %v3881 = vsel %vm444, %v3865, %v3880
  %v3882 = vsel %vm446, %v3869, %v3881
  %v3883 = vsel %vm448, %v3873, %v3882
  %v3884 = vsel %vm450, %v3877, %v3883
  %s3886 = scalar_lea.vmem %s13, 24
  %3887 = vst.msk [vmem:[%s3886] sm:$0xff] %vm453, %v3884
  %s3888 = scalar_lea.vmem %s0, 96
  %v3889 = vld [vmem:[%s3888] sm:$0xff]
  %v3890 = vld [vmem:[%s3888 + $0x8] sm:$0xff]
  %v3891 = vld [vmem:[%s3888 + $0x10] sm:$0xff]
  %3892 = vmatprep.subr.bf16.mxu0 0
  %3893 = vmatpush1.bf16.msra.mxu0 %v211
  %3894 = vmatprep.subr.bf16.mxu0 0
  %3895 = vmatpush1.bf16.msra.mxu0 %v210
  %3896 = vmatprep.subr.bf16.mxu0 0
  %3897 = vmatpush1.bf16.msra.mxu0 %v209
  %3898 = vmatprep.subr.bf16.mxu0 0
  %3899 = vmatpush1.bf16.msra.mxu0 %v208
  %3900 = vmatprep.subr.bf16.mxu0 0
  %3901 = vmatpush1.bf16.msra.mxu0 %v207
  %3902 = vmatprep.subr.bf16.mxu0 0
  %3903 = vmatpush1.bf16.msra.mxu0 %v206
  %3904 = vmatprep.subr.bf16.mxu0 0
  %3905 = vmatpush1.bf16.msra.mxu0 %v205
  %3906 = vmatprep.subr.bf16.mxu0 0
  %3907 = vmatpush1.bf16.msra.mxu0 %v204
  %3908 = vmatprep.subr.bf16.mxu0 0
  %3909 = vmatpush2.bf16.msra.mxu0 0
  %3910 = vmatprep.subr.bf16.mxu0 0
  %3911 = vmatpush2.bf16.msra.mxu0 0
  %3912 = vmatprep.subr.bf16.mxu0 0
  %3913 = vmatpush2.bf16.msra.mxu0 0
  %3914 = vmatprep.subr.bf16.mxu0 0
  %3915 = vmatpush2.bf16.msra.mxu0 0
  %3916 = vmatprep.subr.bf16.mxu0 0
  %3917 = vmatpush2.bf16.msra.mxu0 0
  %3918 = vmatprep.subr.bf16.mxu0 0
  %3919 = vmatpush2.bf16.msra.mxu0 0
  %3920 = vmatprep.subr.bf16.mxu0 0
  %3921 = vmatpush2.bf16.msra.mxu0 0
  %3922 = vmatprep.subr.bf16.mxu0 0
  %3923 = vmatpush2.bf16.msra.mxu0 0
  %3924 = vmatprep.mubr.bf16.mxu0 0
  %3925 = vmatmul.mubr.bf16.gmra.mxu0 %v3792
  %v3926 = vpop.f32.mrf.mxu0
  %v3927 = vadd.f32 %v170, %v3926
  %v3928 = vpop.f32.mrf.mxu0
  %v3929 = vpop.f32.mrf.mxu0
  %v3930 = vpop.f32.mrf.mxu0
  %3931 = vdwg.mxu0
  %v3933 = vcombine.high %v3927, %v3927
  %v3935 = vunpack.c.l.s4 1966171168
  %v3936 = vunpack.c.0.s8 %v3935
  %v3937 = vlaneseq
  %v3938 = vshrl.u32 %v3937, 7
  %v3939 = vsub.s32 %v3936, %v3938
  %v3940 = vrot.slane %v3927, %v3939
  %v3942 = vunpack.c.l.s4 1966171168
  %v3943 = vunpack.c.0.s8 %v3942
  %v3944 = vlaneseq
  %v3945 = vshrl.u32 %v3944, 7
  %v3946 = vsub.s32 %v3943, %v3945
  %v3947 = vrot.slane %v3933, %v3946
  %v3948 = vcombine.high %v3940, %v3940
  %v3949 = vcombine.high %v3947, %v3947
  %v3951 = vunpack.c.l.s4 1966171168
  %v3952 = vunpack.c.0.s8 %v3951
  %v3953 = vlaneseq
  %v3954 = vshrl.u32 %v3953, 7
  %v3955 = vsub.s32 %v3952, %v3954
  %v3956 = vrot.slane %v3940, %v3955
  %v3958 = vunpack.c.l.s4 1966171168
  %v3959 = vunpack.c.0.s8 %v3958
  %v3960 = vlaneseq
  %v3961 = vshrl.u32 %v3960, 7
  %v3962 = vsub.s32 %v3959, %v3961
  %v3963 = vrot.slane %v3947, %v3962
  %v3965 = vunpack.c.l.s4 1966171168
  %v3966 = vunpack.c.0.s8 %v3965
  %v3967 = vlaneseq
  %v3968 = vshrl.u32 %v3967, 7
  %v3969 = vsub.s32 %v3966, %v3968
  %v3970 = vrot.slane %v3948, %v3969
  %v3972 = vunpack.c.l.s4 1966171168
  %v3973 = vunpack.c.0.s8 %v3972
  %v3974 = vlaneseq
  %v3975 = vshrl.u32 %v3974, 7
  %v3976 = vsub.s32 %v3973, %v3975
  %v3977 = vrot.slane %v3949, %v3976
  %v3978 = vcombine.high %v3956, %v3956
  %v3979 = vcombine.high %v3963, %v3963
  %v3980 = vcombine.high %v3970, %v3970
  %v3981 = vcombine.high %v3977, %v3977
  %v3982 = vlaneseq
  %v3983 = vshrl.u32 %v3982, 7
  %v3984 = vsub.s32 0, %v3983
  %v3985 = vrot.slane %v3956, %v3984
  %v3986 = vlaneseq
  %v3987 = vshrl.u32 %v3986, 7
  %v3988 = vsub.s32 0, %v3987
  %v3989 = vrot.slane %v3970, %v3988
  %v3990 = vlaneseq
  %v3991 = vshrl.u32 %v3990, 7
  %v3992 = vsub.s32 0, %v3991
  %v3993 = vrot.slane %v3978, %v3992
  %v3994 = vlaneseq
  %v3995 = vshrl.u32 %v3994, 7
  %v3996 = vsub.s32 0, %v3995
  %v3997 = vrot.slane %v3980, %v3996
  %v3998 = vlaneseq
  %v3999 = vshrl.u32 %v3998, 7
  %v4000 = vsub.s32 0, %v3999
  %v4001 = vrot.slane %v3963, %v4000
  %v4002 = vlaneseq
  %v4003 = vshrl.u32 %v4002, 7
  %v4004 = vsub.s32 0, %v4003
  %v4005 = vrot.slane %v3977, %v4004
  %v4006 = vlaneseq
  %v4007 = vshrl.u32 %v4006, 7
  %v4008 = vsub.s32 0, %v4007
  %v4009 = vrot.slane %v3979, %v4008
  %v4010 = vlaneseq
  %v4011 = vshrl.u32 %v4010, 7
  %v4012 = vsub.s32 0, %v4011
  %v4013 = vrot.slane %v3981, %v4012
  %v4022 = vadd.f32 %v3985, %v45
  %v4023 = vadd.f32 %v3989, %v46
  %v4024 = vadd.f32 %v3993, %v47
  %v4025 = vadd.f32 %v3997, %v48
  %v4026 = vadd.f32 %v4001, %v49
  %v4027 = vadd.f32 %v4005, %v50
  %v4028 = vadd.f32 %v4009, %v51
  %v4029 = vadd.f32 %v4013, %v52
  %v4030 = vtanh.pop %v4022
  %v4031 = vtanh.pop %v4023
  %v4032 = vtanh.pop %v4024
  %v4033 = vtanh.pop %v4025
  %v4034 = vtanh.pop %v4026
  %v4035 = vtanh.pop %v4027
  %v4036 = vtanh.pop %v4028
  %v4037 = vtanh.pop %v4029
  %v4038 = vmul.f32 %v4030, %v370
  %v4039 = vmul.f32 %v4031, %v370
  %v4040 = vmul.f32 %v4032, %v370
  %v4041 = vmul.f32 %v4033, %v370
  %v4042 = vmul.f32 %v4034, %v370
  %v4043 = vmul.f32 %v4035, %v370
  %v4044 = vmul.f32 %v4036, %v370
  %v4045 = vmul.f32 %v4037, %v370
  %4046 = vadd.xlane.f32.xlu0 %v4038
  %v4047 = vpop.xlane.xlu0 %4046
  %4048 = vadd.xlane.f32.xlu0 %v4039
  %v4049 = vpop.xlane.xlu0 %4048
  %4050 = vadd.xlane.f32.xlu0 %v4040
  %v4051 = vpop.xlane.xlu0 %4050
  %4052 = vadd.xlane.f32.xlu0 %v4041
  %v4053 = vpop.xlane.xlu0 %4052
  %4054 = vadd.xlane.f32.xlu0 %v4042
  %v4055 = vpop.xlane.xlu0 %4054
  %4056 = vadd.xlane.f32.xlu0 %v4043
  %v4057 = vpop.xlane.xlu0 %4056
  %4058 = vadd.xlane.f32.xlu0 %v4044
  %v4059 = vpop.xlane.xlu0 %4058
  %4060 = vadd.xlane.f32.xlu0 %v4045
  %v4061 = vpop.xlane.xlu0 %4060
  %v4070 = vlaneseq
  %v4071 = vshrl.u32 %v4070, 7
  %v4072 = vsub.s32 %v405, %v4071
  %v4073 = vrot.slane %v4047, %v4072
  %v4074 = vlaneseq
  %v4075 = vshrl.u32 %v4074, 7
  %v4076 = vsub.s32 %v405, %v4075
  %v4077 = vrot.slane %v4049, %v4076
  %v4078 = vlaneseq
  %v4079 = vshrl.u32 %v4078, 7
  %v4080 = vsub.s32 %v405, %v4079
  %v4081 = vrot.slane %v4051, %v4080
  %v4082 = vlaneseq
  %v4083 = vshrl.u32 %v4082, 7
  %v4084 = vsub.s32 %v405, %v4083
  %v4085 = vrot.slane %v4053, %v4084
  %v4086 = vlaneseq
  %v4087 = vshrl.u32 %v4086, 7
  %v4088 = vsub.s32 %v405, %v4087
  %v4089 = vrot.slane %v4055, %v4088
  %v4090 = vlaneseq
  %v4091 = vshrl.u32 %v4090, 7
  %v4092 = vsub.s32 %v405, %v4091
  %v4093 = vrot.slane %v4057, %v4092
  %v4094 = vlaneseq
  %v4095 = vshrl.u32 %v4094, 7
  %v4096 = vsub.s32 %v405, %v4095
  %v4097 = vrot.slane %v4059, %v4096
  %v4098 = vlaneseq
  %v4099 = vshrl.u32 %v4098, 7
  %v4100 = vsub.s32 %v405, %v4099
  %v4101 = vrot.slane %v4061, %v4100
  %v4102 = vsel %vm438, %v4077, %v4073
  %v4103 = vsel %vm440, %v4081, %v4102
  %v4104 = vsel %vm442, %v4085, %v4103
  %v4105 = vsel %vm444, %v4089, %v4104
  %v4106 = vsel %vm446, %v4093, %v4105
  %v4107 = vsel %vm448, %v4097, %v4106
  %v4108 = vsel %vm450, %v4101, %v4107
  %v4110 = vsel %vm453, %v4108, -inf
  %4111 = vmax.xlane.f32.xlu0 %v4110
  %v4112 = vpop.xlane.xlu0 %4111
  %v4114 = vlaneseq
  %v4115 = vshrl.u32 %v4114, 7
  %v4116 = vsub.s32 0, %v4115
  %v4117 = vrot.slane %v4112, %v4116
  %v4118 = vlaneseq
  %v4119 = vshrl.u32 %v4118, 7
  %v4120 = vsub.s32 1, %v4119
  %v4121 = vrot.slane %v4112, %v4120
  %v4122 = vlaneseq
  %v4123 = vshrl.u32 %v4122, 7
  %v4124 = vsub.s32 2, %v4123
  %v4125 = vrot.slane %v4112, %v4124
  %v4126 = vlaneseq
  %v4127 = vshrl.u32 %v4126, 7
  %v4128 = vsub.s32 3, %v4127
  %v4129 = vrot.slane %v4112, %v4128
  %v4130 = vlaneseq
  %v4131 = vshrl.u32 %v4130, 7
  %v4132 = vsub.s32 4, %v4131
  %v4133 = vrot.slane %v4112, %v4132
  %v4134 = vlaneseq
  %v4135 = vshrl.u32 %v4134, 7
  %v4136 = vsub.s32 5, %v4135
  %v4137 = vrot.slane %v4112, %v4136
  %v4138 = vlaneseq
  %v4139 = vshrl.u32 %v4138, 7
  %v4140 = vsub.s32 6, %v4139
  %v4141 = vrot.slane %v4112, %v4140
  %v4142 = vlaneseq
  %v4143 = vshrl.u32 %v4142, 7
  %v4144 = vsub.s32 7, %v4143
  %v4145 = vrot.slane %v4112, %v4144
  %v4154 = vsub.f32 %v4047, %v4117
  %v4155 = vsub.f32 %v4049, %v4121
  %v4156 = vsub.f32 %v4051, %v4125
  %v4157 = vsub.f32 %v4053, %v4129
  %v4158 = vsub.f32 %v4055, %v4133
  %v4159 = vsub.f32 %v4057, %v4137
  %v4160 = vsub.f32 %v4059, %v4141
  %v4161 = vsub.f32 %v4061, %v4145
  %v4162 = vmul.f32 %v4154, 1.442695
  %v4163 = vpow.pop %v4162
  %v4164 = vmul.f32 %v4155, 1.442695
  %v4165 = vpow.pop %v4164
  %v4166 = vmul.f32 %v4156, 1.442695
  %v4167 = vpow.pop %v4166
  %v4168 = vmul.f32 %v4157, 1.442695
  %v4169 = vpow.pop %v4168
  %v4170 = vmul.f32 %v4158, 1.442695
  %v4171 = vpow.pop %v4170
  %v4172 = vmul.f32 %v4159, 1.442695
  %v4173 = vpow.pop %v4172
  %v4174 = vmul.f32 %v4160, 1.442695
  %v4175 = vpow.pop %v4174
  %v4176 = vmul.f32 %v4161, 1.442695
  %v4177 = vpow.pop %v4176
  %4186 = vset.pattern.permute.xlu0 0
  %4187 = vperm.xlu0 %4186, %v4163
  %v4188 = vpop.permute.xlu0 %4187
  %4189 = vset.pattern.permute.xlu0 0
  %4190 = vperm.xlu0 %4189, %v4165
  %v4191 = vpop.permute.xlu0 %4190
  %4192 = vset.pattern.permute.xlu0 0
  %4193 = vperm.xlu0 %4192, %v4167
  %v4194 = vpop.permute.xlu0 %4193
  %4195 = vset.pattern.permute.xlu0 0
  %4196 = vperm.xlu0 %4195, %v4169
  %v4197 = vpop.permute.xlu0 %4196
  %4198 = vset.pattern.permute.xlu0 0
  %4199 = vperm.xlu0 %4198, %v4171
  %v4200 = vpop.permute.xlu0 %4199
  %4201 = vset.pattern.permute.xlu0 0
  %4202 = vperm.xlu0 %4201, %v4173
  %v4203 = vpop.permute.xlu0 %4202
  %4204 = vset.pattern.permute.xlu0 0
  %4205 = vperm.xlu0 %4204, %v4175
  %v4206 = vpop.permute.xlu0 %4205
  %4207 = vset.pattern.permute.xlu0 0
  %4208 = vperm.xlu0 %4207, %v4177
  %v4209 = vpop.permute.xlu0 %4208
  %v4210 = vlaneseq
  %v4211 = vshrl.u32 %v4210, 7
  %v4212 = vsub.s32 %v405, %v4211
  %v4213 = vrot.slane %v4188, %v4212
  %v4214 = vlaneseq
  %v4215 = vshrl.u32 %v4214, 7
  %v4216 = vsub.s32 %v405, %v4215
  %v4217 = vrot.slane %v4191, %v4216
  %v4218 = vlaneseq
  %v4219 = vshrl.u32 %v4218, 7
  %v4220 = vsub.s32 %v405, %v4219
  %v4221 = vrot.slane %v4194, %v4220
  %v4222 = vlaneseq
  %v4223 = vshrl.u32 %v4222, 7
  %v4224 = vsub.s32 %v405, %v4223
  %v4225 = vrot.slane %v4197, %v4224
  %v4226 = vlaneseq
  %v4227 = vshrl.u32 %v4226, 7
  %v4228 = vsub.s32 %v405, %v4227
  %v4229 = vrot.slane %v4200, %v4228
  %v4230 = vlaneseq
  %v4231 = vshrl.u32 %v4230, 7
  %v4232 = vsub.s32 %v405, %v4231
  %v4233 = vrot.slane %v4203, %v4232
  %v4234 = vlaneseq
  %v4235 = vshrl.u32 %v4234, 7
  %v4236 = vsub.s32 %v405, %v4235
  %v4237 = vrot.slane %v4206, %v4236
  %v4238 = vlaneseq
  %v4239 = vshrl.u32 %v4238, 7
  %v4240 = vsub.s32 %v405, %v4239
  %v4241 = vrot.slane %v4209, %v4240
  %v4242 = vsel %vm438, %v4217, %v4213
  %v4243 = vsel %vm440, %v4221, %v4242
  %v4244 = vsel %vm442, %v4225, %v4243
  %v4245 = vsel %vm444, %v4229, %v4244
  %v4246 = vsel %vm446, %v4233, %v4245
  %v4247 = vsel %vm448, %v4237, %v4246
  %v4248 = vsel %vm450, %v4241, %v4247
  %v4250 = vsel %vm453, %v4248, 0.0
  %4251 = vadd.xlane.f32.xlu0 %v4250
  %v4252 = vpop.xlane.xlu0 %4251
  %v4254 = vlaneseq
  %v4255 = vshrl.u32 %v4254, 7
  %v4256 = vsub.s32 0, %v4255
  %v4257 = vrot.slane %v4252, %v4256
  %v4258 = vlaneseq
  %v4259 = vshrl.u32 %v4258, 7
  %v4260 = vsub.s32 1, %v4259
  %v4261 = vrot.slane %v4252, %v4260
  %v4262 = vlaneseq
  %v4263 = vshrl.u32 %v4262, 7
  %v4264 = vsub.s32 2, %v4263
  %v4265 = vrot.slane %v4252, %v4264
  %v4266 = vlaneseq
  %v4267 = vshrl.u32 %v4266, 7
  %v4268 = vsub.s32 3, %v4267
  %v4269 = vrot.slane %v4252, %v4268
  %v4270 = vlaneseq
  %v4271 = vshrl.u32 %v4270, 7
  %v4272 = vsub.s32 4, %v4271
  %v4273 = vrot.slane %v4252, %v4272
  %v4274 = vlaneseq
  %v4275 = vshrl.u32 %v4274, 7
  %v4276 = vsub.s32 5, %v4275
  %v4277 = vrot.slane %v4252, %v4276
  %v4278 = vlaneseq
  %v4279 = vshrl.u32 %v4278, 7
  %v4280 = vsub.s32 6, %v4279
  %v4281 = vrot.slane %v4252, %v4280
  %v4282 = vlaneseq
  %v4283 = vshrl.u32 %v4282, 7
  %v4284 = vsub.s32 7, %v4283
  %v4285 = vrot.slane %v4252, %v4284
  %v4294 = vrcp.pop %v4257
  %v4295 = vmul.f32 %v4163, %v4294
  %v4296 = vrcp.pop %v4261
  %v4297 = vmul.f32 %v4165, %v4296
  %v4298 = vrcp.pop %v4265
  %v4299 = vmul.f32 %v4167, %v4298
  %v4300 = vrcp.pop %v4269
  %v4301 = vmul.f32 %v4169, %v4300
  %v4302 = vrcp.pop %v4273
  %v4303 = vmul.f32 %v4171, %v4302
  %v4304 = vrcp.pop %v4277
  %v4305 = vmul.f32 %v4173, %v4304
  %v4306 = vrcp.pop %v4281
  %v4307 = vmul.f32 %v4175, %v4306
  %v4308 = vrcp.pop %v4285
  %v4309 = vmul.f32 %v4177, %v4308
  %4311 = vset.pattern.permute.xlu0 0
  %4312 = vperm.xlu0 %4311, %v4295
  %v4313 = vpop.permute.xlu0 %4312
  %4316 = vset.pattern.permute.xlu0 0
  %4317 = vperm.xlu0 %4316, %v4297
  %v4318 = vpop.permute.xlu0 %4317
  %4321 = vset.pattern.permute.xlu0 0
  %4322 = vperm.xlu0 %4321, %v4299
  %v4323 = vpop.permute.xlu0 %4322
  %4326 = vset.pattern.permute.xlu0 0
  %4327 = vperm.xlu0 %4326, %v4301
  %v4328 = vpop.permute.xlu0 %4327
  %4331 = vset.pattern.permute.xlu0 0
  %4332 = vperm.xlu0 %4331, %v4303
  %v4333 = vpop.permute.xlu0 %4332
  %4336 = vset.pattern.permute.xlu0 0
  %4337 = vperm.xlu0 %4336, %v4305
  %v4338 = vpop.permute.xlu0 %4337
  %4341 = vset.pattern.permute.xlu0 0
  %4342 = vperm.xlu0 %4341, %v4307
  %v4343 = vpop.permute.xlu0 %4342
  %4346 = vset.pattern.permute.xlu0 0
  %4347 = vperm.xlu0 %4346, %v4309
  %v4348 = vpop.permute.xlu0 %4347
  %v4350 = vmul.f32 %v4313, %v53
  %v4351 = vmul.f32 %v4318, %v54
  %v4352 = vmul.f32 %v4323, %v55
  %v4353 = vmul.f32 %v4328, %v56
  %v4354 = vmul.f32 %v4333, %v57
  %v4355 = vmul.f32 %v4338, %v58
  %v4356 = vmul.f32 %v4343, %v59
  %v4357 = vmul.f32 %v4348, %v60
  %v4358 = vrot.slane %v4350, 4
  %v4359 = vadd.f32 %v4350, %v4358
  %v4360 = vrot.slane %v4359, 2
  %v4361 = vadd.f32 %v4359, %v4360
  %v4362 = vrot.slane %v4361, 1
  %v4363 = vadd.f32 %v4361, %v4362
  %v4364 = vrot.slane %v4351, 4
  %v4365 = vadd.f32 %v4351, %v4364
  %v4366 = vrot.slane %v4365, 2
  %v4367 = vadd.f32 %v4365, %v4366
  %v4368 = vrot.slane %v4367, 1
  %v4369 = vadd.f32 %v4367, %v4368
  %v4370 = vrot.slane %v4352, 4
  %v4371 = vadd.f32 %v4352, %v4370
  %v4372 = vrot.slane %v4371, 2
  %v4373 = vadd.f32 %v4371, %v4372
  %v4374 = vrot.slane %v4373, 1
  %v4375 = vadd.f32 %v4373, %v4374
  %v4376 = vrot.slane %v4353, 4
  %v4377 = vadd.f32 %v4353, %v4376
  %v4378 = vrot.slane %v4377, 2
  %v4379 = vadd.f32 %v4377, %v4378
  %v4380 = vrot.slane %v4379, 1
  %v4381 = vadd.f32 %v4379, %v4380
  %v4382 = vrot.slane %v4354, 4
  %v4383 = vadd.f32 %v4354, %v4382
  %v4384 = vrot.slane %v4383, 2
  %v4385 = vadd.f32 %v4383, %v4384
  %v4386 = vrot.slane %v4385, 1
  %v4387 = vadd.f32 %v4385, %v4386
  %v4388 = vrot.slane %v4355, 4
  %v4389 = vadd.f32 %v4355, %v4388
  %v4390 = vrot.slane %v4389, 2
  %v4391 = vadd.f32 %v4389, %v4390
  %v4392 = vrot.slane %v4391, 1
  %v4393 = vadd.f32 %v4391, %v4392
  %v4394 = vrot.slane %v4356, 4
  %v4395 = vadd.f32 %v4356, %v4394
  %v4396 = vrot.slane %v4395, 2
  %v4397 = vadd.f32 %v4395, %v4396
  %v4398 = vrot.slane %v4397, 1
  %v4399 = vadd.f32 %v4397, %v4398
  %v4400 = vrot.slane %v4357, 4
  %v4401 = vadd.f32 %v4357, %v4400
  %v4402 = vrot.slane %v4401, 2
  %v4403 = vadd.f32 %v4401, %v4402
  %v4404 = vrot.slane %v4403, 1
  %v4405 = vadd.f32 %v4403, %v4404
  %v4406 = vpack.c.bf16 %v4363, %v4363
  %v4407 = vpack.c.bf16 %v4369, %v4369
  %v4408 = vpack.c.bf16 %v4375, %v4375
  %v4409 = vpack.c.bf16 %v4381, %v4381
  %v4410 = vpack.c.bf16 %v4387, %v4387
  %v4411 = vpack.c.bf16 %v4393, %v4393
  %v4412 = vpack.c.bf16 %v4399, %v4399
  %v4413 = vpack.c.bf16 %v4405, %v4405
  %v4422 = vunpack.c.l.b16 %v4406
  %v4423 = vunpack.c.l.b16 %v4407
  %v4424 = vunpack.c.l.b16 %v4408
  %v4425 = vunpack.c.l.b16 %v4409
  %v4426 = vunpack.c.l.b16 %v4410
  %v4427 = vunpack.c.l.b16 %v4411
  %v4428 = vunpack.c.l.b16 %v4412
  %v4429 = vunpack.c.l.b16 %v4413
  %v4430 = vsel %vm438, %v4423, %v4422
  %v4431 = vsel %vm440, %v4424, %v4430
  %v4432 = vsel %vm442, %v4425, %v4431
  %v4433 = vsel %vm444, %v4426, %v4432
  %v4434 = vsel %vm446, %v4427, %v4433
  %v4435 = vsel %vm448, %v4428, %v4434
  %v4436 = vsel %vm450, %v4429, %v4435
  %v4437 = vpack.c.b16 %v4436, %v4436
  %4439 = vmatprep.subr.bf16.mxu0 %v885
  %4440 = vmatpush1.bf16.msra.mxu0 %v884
  %4441 = vmatprep.subr.bf16.mxu0 %v882
  %4442 = vmatpush1.bf16.msra.mxu0 %v881
  %4443 = vmatprep.subr.bf16.mxu0 %v879
  %4444 = vmatpush1.bf16.msra.mxu0 %v878
  %4445 = vmatprep.subr.bf16.mxu0 %v876
  %4446 = vmatpush1.bf16.msra.mxu0 %v875
  %4447 = vmatprep.subr.bf16.mxu0 %v873
  %4448 = vmatpush1.bf16.msra.mxu0 %v872
  %4449 = vmatprep.subr.bf16.mxu0 %v870
  %4450 = vmatpush1.bf16.msra.mxu0 %v869
  %4451 = vmatprep.subr.bf16.mxu0 %v867
  %4452 = vmatpush1.bf16.msra.mxu0 %v866
  %4453 = vmatprep.subr.bf16.mxu0 %v864
  %4454 = vmatpush1.bf16.msra.mxu0 %v863
  %4455 = vmatprep.subr.bf16.mxu0 0
  %4456 = vmatpush2.bf16.msra.mxu0 0
  %4457 = vmatprep.subr.bf16.mxu0 0
  %4458 = vmatpush2.bf16.msra.mxu0 0
  %4459 = vmatprep.subr.bf16.mxu0 0
  %4460 = vmatpush2.bf16.msra.mxu0 0
  %4461 = vmatprep.subr.bf16.mxu0 0
  %4462 = vmatpush2.bf16.msra.mxu0 0
  %4463 = vmatprep.subr.bf16.mxu0 0
  %4464 = vmatpush2.bf16.msra.mxu0 0
  %4465 = vmatprep.subr.bf16.mxu0 0
  %4466 = vmatpush2.bf16.msra.mxu0 0
  %4467 = vmatprep.subr.bf16.mxu0 0
  %4468 = vmatpush2.bf16.msra.mxu0 0
  %4469 = vmatprep.subr.bf16.mxu0 0
  %4470 = vmatpush2.bf16.msra.mxu0 0
  %4471 = vmatprep.mubr.bf16.mxu0 0
  %4472 = vmatmul.mubr.bf16.gmra.mxu0 %v4437
  %v4473 = vpop.f32.mrf.mxu0
  %v4474 = vadd.f32 0.0, %v4473
  %v4475 = vpop.f32.mrf.mxu0
  %v4476 = vadd.f32 0.0, %v4475
  %v4477 = vpop.f32.mrf.mxu0
  %v4478 = vpop.f32.mrf.mxu0
  %4479 = vdwg.mxu0
  %4480 = vmatprep.subr.bf16.mxu0 0
  %4481 = vmatpush1.bf16.msra.mxu0 %v886
  %4482 = vmatprep.subr.bf16.mxu0 0
  %4483 = vmatpush1.bf16.msra.mxu0 %v883
  %4484 = vmatprep.subr.bf16.mxu0 0
  %4485 = vmatpush1.bf16.msra.mxu0 %v880
  %4486 = vmatprep.subr.bf16.mxu0 0
  %4487 = vmatpush1.bf16.msra.mxu0 %v877
  %4488 = vmatprep.subr.bf16.mxu0 0
  %4489 = vmatpush1.bf16.msra.mxu0 %v874
  %4490 = vmatprep.subr.bf16.mxu0 0
  %4491 = vmatpush1.bf16.msra.mxu0 %v871
  %4492 = vmatprep.subr.bf16.mxu0 0
  %4493 = vmatpush1.bf16.msra.mxu0 %v868
  %4494 = vmatprep.subr.bf16.mxu0 0
  %4495 = vmatpush1.bf16.msra.mxu0 %v865
  %4496 = vmatprep.subr.bf16.mxu0 0
  %4497 = vmatpush2.bf16.msra.mxu0 0
  %4498 = vmatprep.subr.bf16.mxu0 0
  %4499 = vmatpush2.bf16.msra.mxu0 0
  %4500 = vmatprep.subr.bf16.mxu0 0
  %4501 = vmatpush2.bf16.msra.mxu0 0
  %4502 = vmatprep.subr.bf16.mxu0 0
  %4503 = vmatpush2.bf16.msra.mxu0 0
  %4504 = vmatprep.subr.bf16.mxu0 0
  %4505 = vmatpush2.bf16.msra.mxu0 0
  %4506 = vmatprep.subr.bf16.mxu0 0
  %4507 = vmatpush2.bf16.msra.mxu0 0
  %4508 = vmatprep.subr.bf16.mxu0 0
  %4509 = vmatpush2.bf16.msra.mxu0 0
  %4510 = vmatprep.subr.bf16.mxu0 0
  %4511 = vmatpush2.bf16.msra.mxu0 0
  %4512 = vmatprep.mubr.bf16.mxu0 0
  %4513 = vmatmul.mubr.bf16.gmra.mxu0 %v4437
  %v4514 = vpop.f32.mrf.mxu0
  %v4515 = vadd.f32 0.0, %v4514
  %v4516 = vpop.f32.mrf.mxu0
  %v4517 = vpop.f32.mrf.mxu0
  %v4518 = vpop.f32.mrf.mxu0
  %4519 = vdwg.mxu0
  %v4520 = vadd.f32 %v3889, %v4474
  %v4521 = vadd.f32 %v3890, %v4476
  %v4522 = vadd.f32 %v3891, %v4515
  %4523 = vmatprep.subr.bf16.mxu0 %v1113
  %4524 = vmatpush1.bf16.msra.mxu0 %v1112
  %4525 = vmatprep.subr.bf16.mxu0 %v1110
  %4526 = vmatpush1.bf16.msra.mxu0 %v1109
  %4527 = vmatprep.subr.bf16.mxu0 %v1107
  %4528 = vmatpush1.bf16.msra.mxu0 %v1106
  %4529 = vmatprep.subr.bf16.mxu0 %v1104
  %4530 = vmatpush1.bf16.msra.mxu0 %v1103
  %4531 = vmatprep.subr.bf16.mxu0 %v1101
  %4532 = vmatpush1.bf16.msra.mxu0 %v1100
  %4533 = vmatprep.subr.bf16.mxu0 %v1098
  %4534 = vmatpush1.bf16.msra.mxu0 %v1097
  %4535 = vmatprep.subr.bf16.mxu0 %v1095
  %4536 = vmatpush1.bf16.msra.mxu0 %v1094
  %4537 = vmatprep.subr.bf16.mxu0 %v1092
  %4538 = vmatpush1.bf16.msra.mxu0 %v1091
  %4539 = vmatprep.subr.bf16.mxu0 0
  %4540 = vmatpush2.bf16.msra.mxu0 0
  %4541 = vmatprep.subr.bf16.mxu0 0
  %4542 = vmatpush2.bf16.msra.mxu0 0
  %4543 = vmatprep.subr.bf16.mxu0 0
  %4544 = vmatpush2.bf16.msra.mxu0 0
  %4545 = vmatprep.subr.bf16.mxu0 0
  %4546 = vmatpush2.bf16.msra.mxu0 0
  %4547 = vmatprep.subr.bf16.mxu0 0
  %4548 = vmatpush2.bf16.msra.mxu0 0
  %4549 = vmatprep.subr.bf16.mxu0 0
  %4550 = vmatpush2.bf16.msra.mxu0 0
  %4551 = vmatprep.subr.bf16.mxu0 0
  %4552 = vmatpush2.bf16.msra.mxu0 0
  %4553 = vmatprep.subr.bf16.mxu0 0
  %4554 = vmatpush2.bf16.msra.mxu0 0
  %4555 = vmatprep.mubr.bf16.mxu0 0
  %4556 = vmatmul.mubr.bf16.gmra.mxu0 %v3792
  %v4557 = vpop.f32.mrf.mxu0
  %v4558 = vadd.f32 %v999, %v4557
  %v4559 = vpop.f32.mrf.mxu0
  %v4560 = vadd.f32 %v1003, %v4559
  %v4561 = vpop.f32.mrf.mxu0
  %v4562 = vpop.f32.mrf.mxu0
  %4563 = vdwg.mxu0
  %4564 = vmatprep.subr.bf16.mxu0 0
  %4565 = vmatpush1.bf16.msra.mxu0 %v1114
  %4566 = vmatprep.subr.bf16.mxu0 0
  %4567 = vmatpush1.bf16.msra.mxu0 %v1111
  %4568 = vmatprep.subr.bf16.mxu0 0
  %4569 = vmatpush1.bf16.msra.mxu0 %v1108
  %4570 = vmatprep.subr.bf16.mxu0 0
  %4571 = vmatpush1.bf16.msra.mxu0 %v1105
  %4572 = vmatprep.subr.bf16.mxu0 0
  %4573 = vmatpush1.bf16.msra.mxu0 %v1102
  %4574 = vmatprep.subr.bf16.mxu0 0
  %4575 = vmatpush1.bf16.msra.mxu0 %v1099
  %4576 = vmatprep.subr.bf16.mxu0 0
  %4577 = vmatpush1.bf16.msra.mxu0 %v1096
  %4578 = vmatprep.subr.bf16.mxu0 0
  %4579 = vmatpush1.bf16.msra.mxu0 %v1093
  %4580 = vmatprep.subr.bf16.mxu0 0
  %4581 = vmatpush2.bf16.msra.mxu0 0
  %4582 = vmatprep.subr.bf16.mxu0 0
  %4583 = vmatpush2.bf16.msra.mxu0 0
  %4584 = vmatprep.subr.bf16.mxu0 0
  %4585 = vmatpush2.bf16.msra.mxu0 0
  %4586 = vmatprep.subr.bf16.mxu0 0
  %4587 = vmatpush2.bf16.msra.mxu0 0
  %4588 = vmatprep.subr.bf16.mxu0 0
  %4589 = vmatpush2.bf16.msra.mxu0 0
  %4590 = vmatprep.subr.bf16.mxu0 0
  %4591 = vmatpush2.bf16.msra.mxu0 0
  %4592 = vmatprep.subr.bf16.mxu0 0
  %4593 = vmatpush2.bf16.msra.mxu0 0
  %4594 = vmatprep.subr.bf16.mxu0 0
  %4595 = vmatpush2.bf16.msra.mxu0 0
  %4596 = vmatprep.mubr.bf16.mxu0 0
  %4597 = vmatmul.mubr.bf16.gmra.mxu0 %v3792
  %v4598 = vpop.f32.mrf.mxu0
  %v4599 = vadd.f32 %v1007, %v4598
  %v4600 = vpop.f32.mrf.mxu0
  %v4601 = vpop.f32.mrf.mxu0
  %v4602 = vpop.f32.mrf.mxu0
  %4603 = vdwg.mxu0
  %v4604 = vadd.f32 %v4520, %v4558
  %v4605 = vxor.u32 %v4604, 2147483648
  %v4606 = vmul.f32 %v4605, 1.442695
  %v4607 = vpow.pop %v4606
  %v4608 = vadd.f32 %v4607, 1.0
  %v4609 = vrcp.pop %v4608
  %v4610 = vmul.f32 1.0, %v4609
  %v4611 = vadd.f32 %v4521, %v4560
  %v4612 = vxor.u32 %v4611, 2147483648
  %v4613 = vmul.f32 %v4612, 1.442695
  %v4614 = vpow.pop %v4613
  %v4615 = vadd.f32 %v4614, 1.0
  %v4616 = vrcp.pop %v4615
  %v4617 = vmul.f32 1.0, %v4616
  %v4618 = vmul.f32 %v4610, %v4599
  %v4619 = vadd.f32 %v4522, %v4618
  %v4620 = vtanh.pop %v4619
  %v4621 = vsub.f32 1.0, %v4617
  %v4622 = vmul.f32 %v4621, %v4620
  %v4623 = vmul.f32 %v4617, %v3791
  %v4624 = vadd.f32 %v4622, %v4623
  %v4625 = vpack.c.bf16 %v4624, %v4624
  %4626 = vmatprep.subr.bf16.mxu0 0
  %4627 = vmatpush1.bf16.msra.mxu0 %v1287
  %4628 = vmatprep.subr.bf16.mxu0 0
  %4629 = vmatpush1.bf16.msra.mxu0 %v1286
  %4630 = vmatprep.subr.bf16.mxu0 0
  %4631 = vmatpush1.bf16.msra.mxu0 %v1285
  %4632 = vmatprep.subr.bf16.mxu0 0
  %4633 = vmatpush1.bf16.msra.mxu0 %v1284
  %4634 = vmatprep.subr.bf16.mxu0 0
  %4635 = vmatpush1.bf16.msra.mxu0 %v1283
  %4636 = vmatprep.subr.bf16.mxu0 0
  %4637 = vmatpush1.bf16.msra.mxu0 %v1282
  %4638 = vmatprep.subr.bf16.mxu0 0
  %4639 = vmatpush1.bf16.msra.mxu0 %v1281
  %4640 = vmatprep.subr.bf16.mxu0 0
  %4641 = vmatpush1.bf16.msra.mxu0 %v1280
  %4642 = vmatprep.subr.bf16.mxu0 0
  %4643 = vmatpush2.bf16.msra.mxu0 0
  %4644 = vmatprep.subr.bf16.mxu0 0
  %4645 = vmatpush2.bf16.msra.mxu0 0
  %4646 = vmatprep.subr.bf16.mxu0 0
  %4647 = vmatpush2.bf16.msra.mxu0 0
  %4648 = vmatprep.subr.bf16.mxu0 0
  %4649 = vmatpush2.bf16.msra.mxu0 0
  %4650 = vmatprep.subr.bf16.mxu0 0
  %4651 = vmatpush2.bf16.msra.mxu0 0
  %4652 = vmatprep.subr.bf16.mxu0 0
  %4653 = vmatpush2.bf16.msra.mxu0 0
  %4654 = vmatprep.subr.bf16.mxu0 0
  %4655 = vmatpush2.bf16.msra.mxu0 0
  %4656 = vmatprep.subr.bf16.mxu0 0
  %4657 = vmatpush2.bf16.msra.mxu0 0
  %4658 = vmatprep.mubr.bf16.mxu0 0
  %4659 = vmatmul.mubr.bf16.gmra.mxu0 %v4625
  %v4660 = vpop.f32.mrf.mxu0
  %v4661 = vadd.f32 %v1246, %v4660
  %v4662 = vpop.f32.mrf.mxu0
  %v4663 = vpop.f32.mrf.mxu0
  %v4664 = vpop.f32.mrf.mxu0
  %4665 = vdwg.mxu0
  %4666 = vmax.xlane.f32.xlu0 %v4661
  %v4667 = vpop.xlane.xlu0 %4666
  %v4668 = vsub.f32 %v4661, %v4667
  %v4669 = vmul.f32 %v4668, 1.442695
  %v4670 = vpow.pop %v4669
  %4671 = vadd.xlane.f32.xlu0 %v4670
  %v4672 = vpop.xlane.xlu0 %4671
  %v4673 = vlog2.pop %v4672
  %v4674 = vmul.f32 %v4673, 0.6931472
  %v4675 = vadd.f32 %v4674, %v4667
  %v4676 = vsub.f32 %v4661, %v4675
  %s4677 = scalar_lea.vmem %s12, 32
  %4678 = vst [vmem:[%s4677] sm:$0xff] %v4676
  %v4679 = vlaneseq
  %v4680 = vshrl.u32 %v4679, 7
  %v4681 = vsub.s32 %v405, %v4680
  %v4682 = vrot.slane %v4313, %v4681
  %v4683 = vlaneseq
  %v4684 = vshrl.u32 %v4683, 7
  %v4685 = vsub.s32 %v405, %v4684
  %v4686 = vrot.slane %v4318, %v4685
  %v4687 = vlaneseq
  %v4688 = vshrl.u32 %v4687, 7
  %v4689 = vsub.s32 %v405, %v4688
  %v4690 = vrot.slane %v4323, %v4689
  %v4691 = vlaneseq
  %v4692 = vshrl.u32 %v4691, 7
  %v4693 = vsub.s32 %v405, %v4692
  %v4694 = vrot.slane %v4328, %v4693
  %v4695 = vlaneseq
  %v4696 = vshrl.u32 %v4695, 7
  %v4697 = vsub.s32 %v405, %v4696
  %v4698 = vrot.slane %v4333, %v4697
  %v4699 = vlaneseq
  %v4700 = vshrl.u32 %v4699, 7
  %v4701 = vsub.s32 %v405, %v4700
  %v4702 = vrot.slane %v4338, %v4701
  %v4703 = vlaneseq
  %v4704 = vshrl.u32 %v4703, 7
  %v4705 = vsub.s32 %v405, %v4704
  %v4706 = vrot.slane %v4343, %v4705
  %v4707 = vlaneseq
  %v4708 = vshrl.u32 %v4707, 7
  %v4709 = vsub.s32 %v405, %v4708
  %v4710 = vrot.slane %v4348, %v4709
  %v4711 = vsel %vm438, %v4686, %v4682
  %v4712 = vsel %vm440, %v4690, %v4711
  %v4713 = vsel %vm442, %v4694, %v4712
  %v4714 = vsel %vm444, %v4698, %v4713
  %v4715 = vsel %vm446, %v4702, %v4714
  %v4716 = vsel %vm448, %v4706, %v4715
  %v4717 = vsel %vm450, %v4710, %v4716
  %s4719 = scalar_lea.vmem %s13, 32
  %4720 = vst.msk [vmem:[%s4719] sm:$0xff] %vm453, %v4717
  %s4721 = scalar_lea.vmem %s0, 120
  %v4722 = vld [vmem:[%s4721] sm:$0xff]
  %v4723 = vld [vmem:[%s4721 + $0x8] sm:$0xff]
  %v4724 = vld [vmem:[%s4721 + $0x10] sm:$0xff]
  %4725 = vmatprep.subr.bf16.mxu0 0
  %4726 = vmatpush1.bf16.msra.mxu0 %v211
  %4727 = vmatprep.subr.bf16.mxu0 0
  %4728 = vmatpush1.bf16.msra.mxu0 %v210
  %4729 = vmatprep.subr.bf16.mxu0 0
  %4730 = vmatpush1.bf16.msra.mxu0 %v209
  %4731 = vmatprep.subr.bf16.mxu0 0
  %4732 = vmatpush1.bf16.msra.mxu0 %v208
  %4733 = vmatprep.subr.bf16.mxu0 0
  %4734 = vmatpush1.bf16.msra.mxu0 %v207
  %4735 = vmatprep.subr.bf16.mxu0 0
  %4736 = vmatpush1.bf16.msra.mxu0 %v206
  %4737 = vmatprep.subr.bf16.mxu0 0
  %4738 = vmatpush1.bf16.msra.mxu0 %v205
  %4739 = vmatprep.subr.bf16.mxu0 0
  %4740 = vmatpush1.bf16.msra.mxu0 %v204
  %4741 = vmatprep.subr.bf16.mxu0 0
  %4742 = vmatpush2.bf16.msra.mxu0 0
  %4743 = vmatprep.subr.bf16.mxu0 0
  %4744 = vmatpush2.bf16.msra.mxu0 0
  %4745 = vmatprep.subr.bf16.mxu0 0
  %4746 = vmatpush2.bf16.msra.mxu0 0
  %4747 = vmatprep.subr.bf16.mxu0 0
  %4748 = vmatpush2.bf16.msra.mxu0 0
  %4749 = vmatprep.subr.bf16.mxu0 0
  %4750 = vmatpush2.bf16.msra.mxu0 0
  %4751 = vmatprep.subr.bf16.mxu0 0
  %4752 = vmatpush2.bf16.msra.mxu0 0
  %4753 = vmatprep.subr.bf16.mxu0 0
  %4754 = vmatpush2.bf16.msra.mxu0 0
  %4755 = vmatprep.subr.bf16.mxu0 0
  %4756 = vmatpush2.bf16.msra.mxu0 0
  %4757 = vmatprep.mubr.bf16.mxu0 0
  %4758 = vmatmul.mubr.bf16.gmra.mxu0 %v4625
  %v4759 = vpop.f32.mrf.mxu0
  %v4760 = vadd.f32 %v170, %v4759
  %v4761 = vpop.f32.mrf.mxu0
  %v4762 = vpop.f32.mrf.mxu0
  %v4763 = vpop.f32.mrf.mxu0
  %4764 = vdwg.mxu0
  %v4766 = vcombine.high %v4760, %v4760
  %v4768 = vunpack.c.l.s4 1966171168
  %v4769 = vunpack.c.0.s8 %v4768
  %v4770 = vlaneseq
  %v4771 = vshrl.u32 %v4770, 7
  %v4772 = vsub.s32 %v4769, %v4771
  %v4773 = vrot.slane %v4760, %v4772
  %v4775 = vunpack.c.l.s4 1966171168
  %v4776 = vunpack.c.0.s8 %v4775
  %v4777 = vlaneseq
  %v4778 = vshrl.u32 %v4777, 7
  %v4779 = vsub.s32 %v4776, %v4778
  %v4780 = vrot.slane %v4766, %v4779
  %v4781 = vcombine.high %v4773, %v4773
  %v4782 = vcombine.high %v4780, %v4780
  %v4784 = vunpack.c.l.s4 1966171168
  %v4785 = vunpack.c.0.s8 %v4784
  %v4786 = vlaneseq
  %v4787 = vshrl.u32 %v4786, 7
  %v4788 = vsub.s32 %v4785, %v4787
  %v4789 = vrot.slane %v4773, %v4788
  %v4791 = vunpack.c.l.s4 1966171168
  %v4792 = vunpack.c.0.s8 %v4791
  %v4793 = vlaneseq
  %v4794 = vshrl.u32 %v4793, 7
  %v4795 = vsub.s32 %v4792, %v4794
  %v4796 = vrot.slane %v4780, %v4795
  %v4798 = vunpack.c.l.s4 1966171168
  %v4799 = vunpack.c.0.s8 %v4798
  %v4800 = vlaneseq
  %v4801 = vshrl.u32 %v4800, 7
  %v4802 = vsub.s32 %v4799, %v4801
  %v4803 = vrot.slane %v4781, %v4802
  %v4805 = vunpack.c.l.s4 1966171168
  %v4806 = vunpack.c.0.s8 %v4805
  %v4807 = vlaneseq
  %v4808 = vshrl.u32 %v4807, 7
  %v4809 = vsub.s32 %v4806, %v4808
  %v4810 = vrot.slane %v4782, %v4809
  %v4811 = vcombine.high %v4789, %v4789
  %v4812 = vcombine.high %v4796, %v4796
  %v4813 = vcombine.high %v4803, %v4803
  %v4814 = vcombine.high %v4810, %v4810
  %v4815 = vlaneseq
  %v4816 = vshrl.u32 %v4815, 7
  %v4817 = vsub.s32 0, %v4816
  %v4818 = vrot.slane %v4789, %v4817
  %v4819 = vlaneseq
  %v4820 = vshrl.u32 %v4819, 7
  %v4821 = vsub.s32 0, %v4820
  %v4822 = vrot.slane %v4803, %v4821
  %v4823 = vlaneseq
  %v4824 = vshrl.u32 %v4823, 7
  %v4825 = vsub.s32 0, %v4824
  %v4826 = vrot.slane %v4811, %v4825
  %v4827 = vlaneseq
  %v4828 = vshrl.u32 %v4827, 7
  %v4829 = vsub.s32 0, %v4828
  %v4830 = vrot.slane %v4813, %v4829
  %v4831 = vlaneseq
  %v4832 = vshrl.u32 %v4831, 7
  %v4833 = vsub.s32 0, %v4832
  %v4834 = vrot.slane %v4796, %v4833
  %v4835 = vlaneseq
  %v4836 = vshrl.u32 %v4835, 7
  %v4837 = vsub.s32 0, %v4836
  %v4838 = vrot.slane %v4810, %v4837
  %v4839 = vlaneseq
  %v4840 = vshrl.u32 %v4839, 7
  %v4841 = vsub.s32 0, %v4840
  %v4842 = vrot.slane %v4812, %v4841
  %v4843 = vlaneseq
  %v4844 = vshrl.u32 %v4843, 7
  %v4845 = vsub.s32 0, %v4844
  %v4846 = vrot.slane %v4814, %v4845
  %v4855 = vadd.f32 %v4818, %v45
  %v4856 = vadd.f32 %v4822, %v46
  %v4857 = vadd.f32 %v4826, %v47
  %v4858 = vadd.f32 %v4830, %v48
  %v4859 = vadd.f32 %v4834, %v49
  %v4860 = vadd.f32 %v4838, %v50
  %v4861 = vadd.f32 %v4842, %v51
  %v4862 = vadd.f32 %v4846, %v52
  %v4863 = vtanh.pop %v4855
  %v4864 = vtanh.pop %v4856
  %v4865 = vtanh.pop %v4857
  %v4866 = vtanh.pop %v4858
  %v4867 = vtanh.pop %v4859
  %v4868 = vtanh.pop %v4860
  %v4869 = vtanh.pop %v4861
  %v4870 = vtanh.pop %v4862
  %v4871 = vmul.f32 %v4863, %v370
  %v4872 = vmul.f32 %v4864, %v370
  %v4873 = vmul.f32 %v4865, %v370
  %v4874 = vmul.f32 %v4866, %v370
  %v4875 = vmul.f32 %v4867, %v370
  %v4876 = vmul.f32 %v4868, %v370
  %v4877 = vmul.f32 %v4869, %v370
  %v4878 = vmul.f32 %v4870, %v370
  %4879 = vadd.xlane.f32.xlu0 %v4871
  %v4880 = vpop.xlane.xlu0 %4879
  %4881 = vadd.xlane.f32.xlu0 %v4872
  %v4882 = vpop.xlane.xlu0 %4881
  %4883 = vadd.xlane.f32.xlu0 %v4873
  %v4884 = vpop.xlane.xlu0 %4883
  %4885 = vadd.xlane.f32.xlu0 %v4874
  %v4886 = vpop.xlane.xlu0 %4885
  %4887 = vadd.xlane.f32.xlu0 %v4875
  %v4888 = vpop.xlane.xlu0 %4887
  %4889 = vadd.xlane.f32.xlu0 %v4876
  %v4890 = vpop.xlane.xlu0 %4889
  %4891 = vadd.xlane.f32.xlu0 %v4877
  %v4892 = vpop.xlane.xlu0 %4891
  %4893 = vadd.xlane.f32.xlu0 %v4878
  %v4894 = vpop.xlane.xlu0 %4893
  %v4903 = vlaneseq
  %v4904 = vshrl.u32 %v4903, 7
  %v4905 = vsub.s32 %v405, %v4904
  %v4906 = vrot.slane %v4880, %v4905
  %v4907 = vlaneseq
  %v4908 = vshrl.u32 %v4907, 7
  %v4909 = vsub.s32 %v405, %v4908
  %v4910 = vrot.slane %v4882, %v4909
  %v4911 = vlaneseq
  %v4912 = vshrl.u32 %v4911, 7
  %v4913 = vsub.s32 %v405, %v4912
  %v4914 = vrot.slane %v4884, %v4913
  %v4915 = vlaneseq
  %v4916 = vshrl.u32 %v4915, 7
  %v4917 = vsub.s32 %v405, %v4916
  %v4918 = vrot.slane %v4886, %v4917
  %v4919 = vlaneseq
  %v4920 = vshrl.u32 %v4919, 7
  %v4921 = vsub.s32 %v405, %v4920
  %v4922 = vrot.slane %v4888, %v4921
  %v4923 = vlaneseq
  %v4924 = vshrl.u32 %v4923, 7
  %v4925 = vsub.s32 %v405, %v4924
  %v4926 = vrot.slane %v4890, %v4925
  %v4927 = vlaneseq
  %v4928 = vshrl.u32 %v4927, 7
  %v4929 = vsub.s32 %v405, %v4928
  %v4930 = vrot.slane %v4892, %v4929
  %v4931 = vlaneseq
  %v4932 = vshrl.u32 %v4931, 7
  %v4933 = vsub.s32 %v405, %v4932
  %v4934 = vrot.slane %v4894, %v4933
  %v4935 = vsel %vm438, %v4910, %v4906
  %v4936 = vsel %vm440, %v4914, %v4935
  %v4937 = vsel %vm442, %v4918, %v4936
  %v4938 = vsel %vm444, %v4922, %v4937
  %v4939 = vsel %vm446, %v4926, %v4938
  %v4940 = vsel %vm448, %v4930, %v4939
  %v4941 = vsel %vm450, %v4934, %v4940
  %v4943 = vsel %vm453, %v4941, -inf
  %4944 = vmax.xlane.f32.xlu0 %v4943
  %v4945 = vpop.xlane.xlu0 %4944
  %v4947 = vlaneseq
  %v4948 = vshrl.u32 %v4947, 7
  %v4949 = vsub.s32 0, %v4948
  %v4950 = vrot.slane %v4945, %v4949
  %v4951 = vlaneseq
  %v4952 = vshrl.u32 %v4951, 7
  %v4953 = vsub.s32 1, %v4952
  %v4954 = vrot.slane %v4945, %v4953
  %v4955 = vlaneseq
  %v4956 = vshrl.u32 %v4955, 7
  %v4957 = vsub.s32 2, %v4956
  %v4958 = vrot.slane %v4945, %v4957
  %v4959 = vlaneseq
  %v4960 = vshrl.u32 %v4959, 7
  %v4961 = vsub.s32 3, %v4960
  %v4962 = vrot.slane %v4945, %v4961
  %v4963 = vlaneseq
  %v4964 = vshrl.u32 %v4963, 7
  %v4965 = vsub.s32 4, %v4964
  %v4966 = vrot.slane %v4945, %v4965
  %v4967 = vlaneseq
  %v4968 = vshrl.u32 %v4967, 7
  %v4969 = vsub.s32 5, %v4968
  %v4970 = vrot.slane %v4945, %v4969
  %v4971 = vlaneseq
  %v4972 = vshrl.u32 %v4971, 7
  %v4973 = vsub.s32 6, %v4972
  %v4974 = vrot.slane %v4945, %v4973
  %v4975 = vlaneseq
  %v4976 = vshrl.u32 %v4975, 7
  %v4977 = vsub.s32 7, %v4976
  %v4978 = vrot.slane %v4945, %v4977
  %v4987 = vsub.f32 %v4880, %v4950
  %v4988 = vsub.f32 %v4882, %v4954
  %v4989 = vsub.f32 %v4884, %v4958
  %v4990 = vsub.f32 %v4886, %v4962
  %v4991 = vsub.f32 %v4888, %v4966
  %v4992 = vsub.f32 %v4890, %v4970
  %v4993 = vsub.f32 %v4892, %v4974
  %v4994 = vsub.f32 %v4894, %v4978
  %v4995 = vmul.f32 %v4987, 1.442695
  %v4996 = vpow.pop %v4995
  %v4997 = vmul.f32 %v4988, 1.442695
  %v4998 = vpow.pop %v4997
  %v4999 = vmul.f32 %v4989, 1.442695
  %v5000 = vpow.pop %v4999
  %v5001 = vmul.f32 %v4990, 1.442695
  %v5002 = vpow.pop %v5001
  %v5003 = vmul.f32 %v4991, 1.442695
  %v5004 = vpow.pop %v5003
  %v5005 = vmul.f32 %v4992, 1.442695
  %v5006 = vpow.pop %v5005
  %v5007 = vmul.f32 %v4993, 1.442695
  %v5008 = vpow.pop %v5007
  %v5009 = vmul.f32 %v4994, 1.442695
  %v5010 = vpow.pop %v5009
  %5019 = vset.pattern.permute.xlu0 0
  %5020 = vperm.xlu0 %5019, %v4996
  %v5021 = vpop.permute.xlu0 %5020
  %5022 = vset.pattern.permute.xlu0 0
  %5023 = vperm.xlu0 %5022, %v4998
  %v5024 = vpop.permute.xlu0 %5023
  %5025 = vset.pattern.permute.xlu0 0
  %5026 = vperm.xlu0 %5025, %v5000
  %v5027 = vpop.permute.xlu0 %5026
  %5028 = vset.pattern.permute.xlu0 0
  %5029 = vperm.xlu0 %5028, %v5002
  %v5030 = vpop.permute.xlu0 %5029
  %5031 = vset.pattern.permute.xlu0 0
  %5032 = vperm.xlu0 %5031, %v5004
  %v5033 = vpop.permute.xlu0 %5032
  %5034 = vset.pattern.permute.xlu0 0
  %5035 = vperm.xlu0 %5034, %v5006
  %v5036 = vpop.permute.xlu0 %5035
  %5037 = vset.pattern.permute.xlu0 0
  %5038 = vperm.xlu0 %5037, %v5008
  %v5039 = vpop.permute.xlu0 %5038
  %5040 = vset.pattern.permute.xlu0 0
  %5041 = vperm.xlu0 %5040, %v5010
  %v5042 = vpop.permute.xlu0 %5041
  %v5043 = vlaneseq
  %v5044 = vshrl.u32 %v5043, 7
  %v5045 = vsub.s32 %v405, %v5044
  %v5046 = vrot.slane %v5021, %v5045
  %v5047 = vlaneseq
  %v5048 = vshrl.u32 %v5047, 7
  %v5049 = vsub.s32 %v405, %v5048
  %v5050 = vrot.slane %v5024, %v5049
  %v5051 = vlaneseq
  %v5052 = vshrl.u32 %v5051, 7
  %v5053 = vsub.s32 %v405, %v5052
  %v5054 = vrot.slane %v5027, %v5053
  %v5055 = vlaneseq
  %v5056 = vshrl.u32 %v5055, 7
  %v5057 = vsub.s32 %v405, %v5056
  %v5058 = vrot.slane %v5030, %v5057
  %v5059 = vlaneseq
  %v5060 = vshrl.u32 %v5059, 7
  %v5061 = vsub.s32 %v405, %v5060
  %v5062 = vrot.slane %v5033, %v5061
  %v5063 = vlaneseq
  %v5064 = vshrl.u32 %v5063, 7
  %v5065 = vsub.s32 %v405, %v5064
  %v5066 = vrot.slane %v5036, %v5065
  %v5067 = vlaneseq
  %v5068 = vshrl.u32 %v5067, 7
  %v5069 = vsub.s32 %v405, %v5068
  %v5070 = vrot.slane %v5039, %v5069
  %v5071 = vlaneseq
  %v5072 = vshrl.u32 %v5071, 7
  %v5073 = vsub.s32 %v405, %v5072
  %v5074 = vrot.slane %v5042, %v5073
  %v5075 = vsel %vm438, %v5050, %v5046
  %v5076 = vsel %vm440, %v5054, %v5075
  %v5077 = vsel %vm442, %v5058, %v5076
  %v5078 = vsel %vm444, %v5062, %v5077
  %v5079 = vsel %vm446, %v5066, %v5078
  %v5080 = vsel %vm448, %v5070, %v5079
  %v5081 = vsel %vm450, %v5074, %v5080
  %v5083 = vsel %vm453, %v5081, 0.0
  %5084 = vadd.xlane.f32.xlu0 %v5083
  %v5085 = vpop.xlane.xlu0 %5084
  %v5087 = vlaneseq
  %v5088 = vshrl.u32 %v5087, 7
  %v5089 = vsub.s32 0, %v5088
  %v5090 = vrot.slane %v5085, %v5089
  %v5091 = vlaneseq
  %v5092 = vshrl.u32 %v5091, 7
  %v5093 = vsub.s32 1, %v5092
  %v5094 = vrot.slane %v5085, %v5093
  %v5095 = vlaneseq
  %v5096 = vshrl.u32 %v5095, 7
  %v5097 = vsub.s32 2, %v5096
  %v5098 = vrot.slane %v5085, %v5097
  %v5099 = vlaneseq
  %v5100 = vshrl.u32 %v5099, 7
  %v5101 = vsub.s32 3, %v5100
  %v5102 = vrot.slane %v5085, %v5101
  %v5103 = vlaneseq
  %v5104 = vshrl.u32 %v5103, 7
  %v5105 = vsub.s32 4, %v5104
  %v5106 = vrot.slane %v5085, %v5105
  %v5107 = vlaneseq
  %v5108 = vshrl.u32 %v5107, 7
  %v5109 = vsub.s32 5, %v5108
  %v5110 = vrot.slane %v5085, %v5109
  %v5111 = vlaneseq
  %v5112 = vshrl.u32 %v5111, 7
  %v5113 = vsub.s32 6, %v5112
  %v5114 = vrot.slane %v5085, %v5113
  %v5115 = vlaneseq
  %v5116 = vshrl.u32 %v5115, 7
  %v5117 = vsub.s32 7, %v5116
  %v5118 = vrot.slane %v5085, %v5117
  %v5127 = vrcp.pop %v5090
  %v5128 = vmul.f32 %v4996, %v5127
  %v5129 = vrcp.pop %v5094
  %v5130 = vmul.f32 %v4998, %v5129
  %v5131 = vrcp.pop %v5098
  %v5132 = vmul.f32 %v5000, %v5131
  %v5133 = vrcp.pop %v5102
  %v5134 = vmul.f32 %v5002, %v5133
  %v5135 = vrcp.pop %v5106
  %v5136 = vmul.f32 %v5004, %v5135
  %v5137 = vrcp.pop %v5110
  %v5138 = vmul.f32 %v5006, %v5137
  %v5139 = vrcp.pop %v5114
  %v5140 = vmul.f32 %v5008, %v5139
  %v5141 = vrcp.pop %v5118
  %v5142 = vmul.f32 %v5010, %v5141
  %5144 = vset.pattern.permute.xlu0 0
  %5145 = vperm.xlu0 %5144, %v5128
  %v5146 = vpop.permute.xlu0 %5145
  %5149 = vset.pattern.permute.xlu0 0
  %5150 = vperm.xlu0 %5149, %v5130
  %v5151 = vpop.permute.xlu0 %5150
  %5154 = vset.pattern.permute.xlu0 0
  %5155 = vperm.xlu0 %5154, %v5132
  %v5156 = vpop.permute.xlu0 %5155
  %5159 = vset.pattern.permute.xlu0 0
  %5160 = vperm.xlu0 %5159, %v5134
  %v5161 = vpop.permute.xlu0 %5160
  %5164 = vset.pattern.permute.xlu0 0
  %5165 = vperm.xlu0 %5164, %v5136
  %v5166 = vpop.permute.xlu0 %5165
  %5169 = vset.pattern.permute.xlu0 0
  %5170 = vperm.xlu0 %5169, %v5138
  %v5171 = vpop.permute.xlu0 %5170
  %5174 = vset.pattern.permute.xlu0 0
  %5175 = vperm.xlu0 %5174, %v5140
  %v5176 = vpop.permute.xlu0 %5175
  %5179 = vset.pattern.permute.xlu0 0
  %5180 = vperm.xlu0 %5179, %v5142
  %v5181 = vpop.permute.xlu0 %5180
  %v5183 = vmul.f32 %v5146, %v53
  %v5184 = vmul.f32 %v5151, %v54
  %v5185 = vmul.f32 %v5156, %v55
  %v5186 = vmul.f32 %v5161, %v56
  %v5187 = vmul.f32 %v5166, %v57
  %v5188 = vmul.f32 %v5171, %v58
  %v5189 = vmul.f32 %v5176, %v59
  %v5190 = vmul.f32 %v5181, %v60
  %v5191 = vrot.slane %v5183, 4
  %v5192 = vadd.f32 %v5183, %v5191
  %v5193 = vrot.slane %v5192, 2
  %v5194 = vadd.f32 %v5192, %v5193
  %v5195 = vrot.slane %v5194, 1
  %v5196 = vadd.f32 %v5194, %v5195
  %v5197 = vrot.slane %v5184, 4
  %v5198 = vadd.f32 %v5184, %v5197
  %v5199 = vrot.slane %v5198, 2
  %v5200 = vadd.f32 %v5198, %v5199
  %v5201 = vrot.slane %v5200, 1
  %v5202 = vadd.f32 %v5200, %v5201
  %v5203 = vrot.slane %v5185, 4
  %v5204 = vadd.f32 %v5185, %v5203
  %v5205 = vrot.slane %v5204, 2
  %v5206 = vadd.f32 %v5204, %v5205
  %v5207 = vrot.slane %v5206, 1
  %v5208 = vadd.f32 %v5206, %v5207
  %v5209 = vrot.slane %v5186, 4
  %v5210 = vadd.f32 %v5186, %v5209
  %v5211 = vrot.slane %v5210, 2
  %v5212 = vadd.f32 %v5210, %v5211
  %v5213 = vrot.slane %v5212, 1
  %v5214 = vadd.f32 %v5212, %v5213
  %v5215 = vrot.slane %v5187, 4
  %v5216 = vadd.f32 %v5187, %v5215
  %v5217 = vrot.slane %v5216, 2
  %v5218 = vadd.f32 %v5216, %v5217
  %v5219 = vrot.slane %v5218, 1
  %v5220 = vadd.f32 %v5218, %v5219
  %v5221 = vrot.slane %v5188, 4
  %v5222 = vadd.f32 %v5188, %v5221
  %v5223 = vrot.slane %v5222, 2
  %v5224 = vadd.f32 %v5222, %v5223
  %v5225 = vrot.slane %v5224, 1
  %v5226 = vadd.f32 %v5224, %v5225
  %v5227 = vrot.slane %v5189, 4
  %v5228 = vadd.f32 %v5189, %v5227
  %v5229 = vrot.slane %v5228, 2
  %v5230 = vadd.f32 %v5228, %v5229
  %v5231 = vrot.slane %v5230, 1
  %v5232 = vadd.f32 %v5230, %v5231
  %v5233 = vrot.slane %v5190, 4
  %v5234 = vadd.f32 %v5190, %v5233
  %v5235 = vrot.slane %v5234, 2
  %v5236 = vadd.f32 %v5234, %v5235
  %v5237 = vrot.slane %v5236, 1
  %v5238 = vadd.f32 %v5236, %v5237
  %v5239 = vpack.c.bf16 %v5196, %v5196
  %v5240 = vpack.c.bf16 %v5202, %v5202
  %v5241 = vpack.c.bf16 %v5208, %v5208
  %v5242 = vpack.c.bf16 %v5214, %v5214
  %v5243 = vpack.c.bf16 %v5220, %v5220
  %v5244 = vpack.c.bf16 %v5226, %v5226
  %v5245 = vpack.c.bf16 %v5232, %v5232
  %v5246 = vpack.c.bf16 %v5238, %v5238
  %v5255 = vunpack.c.l.b16 %v5239
  %v5256 = vunpack.c.l.b16 %v5240
  %v5257 = vunpack.c.l.b16 %v5241
  %v5258 = vunpack.c.l.b16 %v5242
  %v5259 = vunpack.c.l.b16 %v5243
  %v5260 = vunpack.c.l.b16 %v5244
  %v5261 = vunpack.c.l.b16 %v5245
  %v5262 = vunpack.c.l.b16 %v5246
  %v5263 = vsel %vm438, %v5256, %v5255
  %v5264 = vsel %vm440, %v5257, %v5263
  %v5265 = vsel %vm442, %v5258, %v5264
  %v5266 = vsel %vm444, %v5259, %v5265
  %v5267 = vsel %vm446, %v5260, %v5266
  %v5268 = vsel %vm448, %v5261, %v5267
  %v5269 = vsel %vm450, %v5262, %v5268
  %v5270 = vpack.c.b16 %v5269, %v5269
  %5272 = vmatprep.subr.bf16.mxu0 %v885
  %5273 = vmatpush1.bf16.msra.mxu0 %v884
  %5274 = vmatprep.subr.bf16.mxu0 %v882
  %5275 = vmatpush1.bf16.msra.mxu0 %v881
  %5276 = vmatprep.subr.bf16.mxu0 %v879
  %5277 = vmatpush1.bf16.msra.mxu0 %v878
  %5278 = vmatprep.subr.bf16.mxu0 %v876
  %5279 = vmatpush1.bf16.msra.mxu0 %v875
  %5280 = vmatprep.subr.bf16.mxu0 %v873
  %5281 = vmatpush1.bf16.msra.mxu0 %v872
  %5282 = vmatprep.subr.bf16.mxu0 %v870
  %5283 = vmatpush1.bf16.msra.mxu0 %v869
  %5284 = vmatprep.subr.bf16.mxu0 %v867
  %5285 = vmatpush1.bf16.msra.mxu0 %v866
  %5286 = vmatprep.subr.bf16.mxu0 %v864
  %5287 = vmatpush1.bf16.msra.mxu0 %v863
  %5288 = vmatprep.subr.bf16.mxu0 0
  %5289 = vmatpush2.bf16.msra.mxu0 0
  %5290 = vmatprep.subr.bf16.mxu0 0
  %5291 = vmatpush2.bf16.msra.mxu0 0
  %5292 = vmatprep.subr.bf16.mxu0 0
  %5293 = vmatpush2.bf16.msra.mxu0 0
  %5294 = vmatprep.subr.bf16.mxu0 0
  %5295 = vmatpush2.bf16.msra.mxu0 0
  %5296 = vmatprep.subr.bf16.mxu0 0
  %5297 = vmatpush2.bf16.msra.mxu0 0
  %5298 = vmatprep.subr.bf16.mxu0 0
  %5299 = vmatpush2.bf16.msra.mxu0 0
  %5300 = vmatprep.subr.bf16.mxu0 0
  %5301 = vmatpush2.bf16.msra.mxu0 0
  %5302 = vmatprep.subr.bf16.mxu0 0
  %5303 = vmatpush2.bf16.msra.mxu0 0
  %5304 = vmatprep.mubr.bf16.mxu0 0
  %5305 = vmatmul.mubr.bf16.gmra.mxu0 %v5270
  %v5306 = vpop.f32.mrf.mxu0
  %v5307 = vadd.f32 0.0, %v5306
  %v5308 = vpop.f32.mrf.mxu0
  %v5309 = vadd.f32 0.0, %v5308
  %v5310 = vpop.f32.mrf.mxu0
  %v5311 = vpop.f32.mrf.mxu0
  %5312 = vdwg.mxu0
  %5313 = vmatprep.subr.bf16.mxu0 0
  %5314 = vmatpush1.bf16.msra.mxu0 %v886
  %5315 = vmatprep.subr.bf16.mxu0 0
  %5316 = vmatpush1.bf16.msra.mxu0 %v883
  %5317 = vmatprep.subr.bf16.mxu0 0
  %5318 = vmatpush1.bf16.msra.mxu0 %v880
  %5319 = vmatprep.subr.bf16.mxu0 0
  %5320 = vmatpush1.bf16.msra.mxu0 %v877
  %5321 = vmatprep.subr.bf16.mxu0 0
  %5322 = vmatpush1.bf16.msra.mxu0 %v874
  %5323 = vmatprep.subr.bf16.mxu0 0
  %5324 = vmatpush1.bf16.msra.mxu0 %v871
  %5325 = vmatprep.subr.bf16.mxu0 0
  %5326 = vmatpush1.bf16.msra.mxu0 %v868
  %5327 = vmatprep.subr.bf16.mxu0 0
  %5328 = vmatpush1.bf16.msra.mxu0 %v865
  %5329 = vmatprep.subr.bf16.mxu0 0
  %5330 = vmatpush2.bf16.msra.mxu0 0
  %5331 = vmatprep.subr.bf16.mxu0 0
  %5332 = vmatpush2.bf16.msra.mxu0 0
  %5333 = vmatprep.subr.bf16.mxu0 0
  %5334 = vmatpush2.bf16.msra.mxu0 0
  %5335 = vmatprep.subr.bf16.mxu0 0
  %5336 = vmatpush2.bf16.msra.mxu0 0
  %5337 = vmatprep.subr.bf16.mxu0 0
  %5338 = vmatpush2.bf16.msra.mxu0 0
  %5339 = vmatprep.subr.bf16.mxu0 0
  %5340 = vmatpush2.bf16.msra.mxu0 0
  %5341 = vmatprep.subr.bf16.mxu0 0
  %5342 = vmatpush2.bf16.msra.mxu0 0
  %5343 = vmatprep.subr.bf16.mxu0 0
  %5344 = vmatpush2.bf16.msra.mxu0 0
  %5345 = vmatprep.mubr.bf16.mxu0 0
  %5346 = vmatmul.mubr.bf16.gmra.mxu0 %v5270
  %v5347 = vpop.f32.mrf.mxu0
  %v5348 = vadd.f32 0.0, %v5347
  %v5349 = vpop.f32.mrf.mxu0
  %v5350 = vpop.f32.mrf.mxu0
  %v5351 = vpop.f32.mrf.mxu0
  %5352 = vdwg.mxu0
  %v5353 = vadd.f32 %v4722, %v5307
  %v5354 = vadd.f32 %v4723, %v5309
  %v5355 = vadd.f32 %v4724, %v5348
  %5356 = vmatprep.subr.bf16.mxu0 %v1113
  %5357 = vmatpush1.bf16.msra.mxu0 %v1112
  %5358 = vmatprep.subr.bf16.mxu0 %v1110
  %5359 = vmatpush1.bf16.msra.mxu0 %v1109
  %5360 = vmatprep.subr.bf16.mxu0 %v1107
  %5361 = vmatpush1.bf16.msra.mxu0 %v1106
  %5362 = vmatprep.subr.bf16.mxu0 %v1104
  %5363 = vmatpush1.bf16.msra.mxu0 %v1103
  %5364 = vmatprep.subr.bf16.mxu0 %v1101
  %5365 = vmatpush1.bf16.msra.mxu0 %v1100
  %5366 = vmatprep.subr.bf16.mxu0 %v1098
  %5367 = vmatpush1.bf16.msra.mxu0 %v1097
  %5368 = vmatprep.subr.bf16.mxu0 %v1095
  %5369 = vmatpush1.bf16.msra.mxu0 %v1094
  %5370 = vmatprep.subr.bf16.mxu0 %v1092
  %5371 = vmatpush1.bf16.msra.mxu0 %v1091
  %5372 = vmatprep.subr.bf16.mxu0 0
  %5373 = vmatpush2.bf16.msra.mxu0 0
  %5374 = vmatprep.subr.bf16.mxu0 0
  %5375 = vmatpush2.bf16.msra.mxu0 0
  %5376 = vmatprep.subr.bf16.mxu0 0
  %5377 = vmatpush2.bf16.msra.mxu0 0
  %5378 = vmatprep.subr.bf16.mxu0 0
  %5379 = vmatpush2.bf16.msra.mxu0 0
  %5380 = vmatprep.subr.bf16.mxu0 0
  %5381 = vmatpush2.bf16.msra.mxu0 0
  %5382 = vmatprep.subr.bf16.mxu0 0
  %5383 = vmatpush2.bf16.msra.mxu0 0
  %5384 = vmatprep.subr.bf16.mxu0 0
  %5385 = vmatpush2.bf16.msra.mxu0 0
  %5386 = vmatprep.subr.bf16.mxu0 0
  %5387 = vmatpush2.bf16.msra.mxu0 0
  %5388 = vmatprep.mubr.bf16.mxu0 0
  %5389 = vmatmul.mubr.bf16.gmra.mxu0 %v4625
  %v5390 = vpop.f32.mrf.mxu0
  %v5391 = vadd.f32 %v999, %v5390
  %v5392 = vpop.f32.mrf.mxu0
  %v5393 = vadd.f32 %v1003, %v5392
  %v5394 = vpop.f32.mrf.mxu0
  %v5395 = vpop.f32.mrf.mxu0
  %5396 = vdwg.mxu0
  %5397 = vmatprep.subr.bf16.mxu0 0
  %5398 = vmatpush1.bf16.msra.mxu0 %v1114
  %5399 = vmatprep.subr.bf16.mxu0 0
  %5400 = vmatpush1.bf16.msra.mxu0 %v1111
  %5401 = vmatprep.subr.bf16.mxu0 0
  %5402 = vmatpush1.bf16.msra.mxu0 %v1108
  %5403 = vmatprep.subr.bf16.mxu0 0
  %5404 = vmatpush1.bf16.msra.mxu0 %v1105
  %5405 = vmatprep.subr.bf16.mxu0 0
  %5406 = vmatpush1.bf16.msra.mxu0 %v1102
  %5407 = vmatprep.subr.bf16.mxu0 0
  %5408 = vmatpush1.bf16.msra.mxu0 %v1099
  %5409 = vmatprep.subr.bf16.mxu0 0
  %5410 = vmatpush1.bf16.msra.mxu0 %v1096
  %5411 = vmatprep.subr.bf16.mxu0 0
  %5412 = vmatpush1.bf16.msra.mxu0 %v1093
  %5413 = vmatprep.subr.bf16.mxu0 0
  %5414 = vmatpush2.bf16.msra.mxu0 0
  %5415 = vmatprep.subr.bf16.mxu0 0
  %5416 = vmatpush2.bf16.msra.mxu0 0
  %5417 = vmatprep.subr.bf16.mxu0 0
  %5418 = vmatpush2.bf16.msra.mxu0 0
  %5419 = vmatprep.subr.bf16.mxu0 0
  %5420 = vmatpush2.bf16.msra.mxu0 0
  %5421 = vmatprep.subr.bf16.mxu0 0
  %5422 = vmatpush2.bf16.msra.mxu0 0
  %5423 = vmatprep.subr.bf16.mxu0 0
  %5424 = vmatpush2.bf16.msra.mxu0 0
  %5425 = vmatprep.subr.bf16.mxu0 0
  %5426 = vmatpush2.bf16.msra.mxu0 0
  %5427 = vmatprep.subr.bf16.mxu0 0
  %5428 = vmatpush2.bf16.msra.mxu0 0
  %5429 = vmatprep.mubr.bf16.mxu0 0
  %5430 = vmatmul.mubr.bf16.gmra.mxu0 %v4625
  %v5431 = vpop.f32.mrf.mxu0
  %v5432 = vadd.f32 %v1007, %v5431
  %v5433 = vpop.f32.mrf.mxu0
  %v5434 = vpop.f32.mrf.mxu0
  %v5435 = vpop.f32.mrf.mxu0
  %5436 = vdwg.mxu0
  %v5437 = vadd.f32 %v5353, %v5391
  %v5438 = vxor.u32 %v5437, 2147483648
  %v5439 = vmul.f32 %v5438, 1.442695
  %v5440 = vpow.pop %v5439
  %v5441 = vadd.f32 %v5440, 1.0
  %v5442 = vrcp.pop %v5441
  %v5443 = vmul.f32 1.0, %v5442
  %v5444 = vadd.f32 %v5354, %v5393
  %v5445 = vxor.u32 %v5444, 2147483648
  %v5446 = vmul.f32 %v5445, 1.442695
  %v5447 = vpow.pop %v5446
  %v5448 = vadd.f32 %v5447, 1.0
  %v5449 = vrcp.pop %v5448
  %v5450 = vmul.f32 1.0, %v5449
  %v5451 = vmul.f32 %v5443, %v5432
  %v5452 = vadd.f32 %v5355, %v5451
  %v5453 = vtanh.pop %v5452
  %v5454 = vsub.f32 1.0, %v5450
  %v5455 = vmul.f32 %v5454, %v5453
  %v5456 = vmul.f32 %v5450, %v4624
  %v5457 = vadd.f32 %v5455, %v5456
  %v5458 = vpack.c.bf16 %v5457, %v5457
  %5459 = vmatprep.subr.bf16.mxu0 0
  %5460 = vmatpush1.bf16.msra.mxu0 %v1287
  %5461 = vmatprep.subr.bf16.mxu0 0
  %5462 = vmatpush1.bf16.msra.mxu0 %v1286
  %5463 = vmatprep.subr.bf16.mxu0 0
  %5464 = vmatpush1.bf16.msra.mxu0 %v1285
  %5465 = vmatprep.subr.bf16.mxu0 0
  %5466 = vmatpush1.bf16.msra.mxu0 %v1284
  %5467 = vmatprep.subr.bf16.mxu0 0
  %5468 = vmatpush1.bf16.msra.mxu0 %v1283
  %5469 = vmatprep.subr.bf16.mxu0 0
  %5470 = vmatpush1.bf16.msra.mxu0 %v1282
  %5471 = vmatprep.subr.bf16.mxu0 0
  %5472 = vmatpush1.bf16.msra.mxu0 %v1281
  %5473 = vmatprep.subr.bf16.mxu0 0
  %5474 = vmatpush1.bf16.msra.mxu0 %v1280
  %5475 = vmatprep.subr.bf16.mxu0 0
  %5476 = vmatpush2.bf16.msra.mxu0 0
  %5477 = vmatprep.subr.bf16.mxu0 0
  %5478 = vmatpush2.bf16.msra.mxu0 0
  %5479 = vmatprep.subr.bf16.mxu0 0
  %5480 = vmatpush2.bf16.msra.mxu0 0
  %5481 = vmatprep.subr.bf16.mxu0 0
  %5482 = vmatpush2.bf16.msra.mxu0 0
  %5483 = vmatprep.subr.bf16.mxu0 0
  %5484 = vmatpush2.bf16.msra.mxu0 0
  %5485 = vmatprep.subr.bf16.mxu0 0
  %5486 = vmatpush2.bf16.msra.mxu0 0
  %5487 = vmatprep.subr.bf16.mxu0 0
  %5488 = vmatpush2.bf16.msra.mxu0 0
  %5489 = vmatprep.subr.bf16.mxu0 0
  %5490 = vmatpush2.bf16.msra.mxu0 0
  %5491 = vmatprep.mubr.bf16.mxu0 0
  %5492 = vmatmul.mubr.bf16.gmra.mxu0 %v5458
  %v5493 = vpop.f32.mrf.mxu0
  %v5494 = vadd.f32 %v1246, %v5493
  %v5495 = vpop.f32.mrf.mxu0
  %v5496 = vpop.f32.mrf.mxu0
  %v5497 = vpop.f32.mrf.mxu0
  %5498 = vdwg.mxu0
  %5499 = vmax.xlane.f32.xlu0 %v5494
  %v5500 = vpop.xlane.xlu0 %5499
  %v5501 = vsub.f32 %v5494, %v5500
  %v5502 = vmul.f32 %v5501, 1.442695
  %v5503 = vpow.pop %v5502
  %5504 = vadd.xlane.f32.xlu0 %v5503
  %v5505 = vpop.xlane.xlu0 %5504
  %v5506 = vlog2.pop %v5505
  %v5507 = vmul.f32 %v5506, 0.6931472
  %v5508 = vadd.f32 %v5507, %v5500
  %v5509 = vsub.f32 %v5494, %v5508
  %s5510 = scalar_lea.vmem %s12, 40
  %5511 = vst [vmem:[%s5510] sm:$0xff] %v5509
  %v5512 = vlaneseq
  %v5513 = vshrl.u32 %v5512, 7
  %v5514 = vsub.s32 %v405, %v5513
  %v5515 = vrot.slane %v5146, %v5514
  %v5516 = vlaneseq
  %v5517 = vshrl.u32 %v5516, 7
  %v5518 = vsub.s32 %v405, %v5517
  %v5519 = vrot.slane %v5151, %v5518
  %v5520 = vlaneseq
  %v5521 = vshrl.u32 %v5520, 7
  %v5522 = vsub.s32 %v405, %v5521
  %v5523 = vrot.slane %v5156, %v5522
  %v5524 = vlaneseq
  %v5525 = vshrl.u32 %v5524, 7
  %v5526 = vsub.s32 %v405, %v5525
  %v5527 = vrot.slane %v5161, %v5526
  %v5528 = vlaneseq
  %v5529 = vshrl.u32 %v5528, 7
  %v5530 = vsub.s32 %v405, %v5529
  %v5531 = vrot.slane %v5166, %v5530
  %v5532 = vlaneseq
  %v5533 = vshrl.u32 %v5532, 7
  %v5534 = vsub.s32 %v405, %v5533
  %v5535 = vrot.slane %v5171, %v5534
  %v5536 = vlaneseq
  %v5537 = vshrl.u32 %v5536, 7
  %v5538 = vsub.s32 %v405, %v5537
  %v5539 = vrot.slane %v5176, %v5538
  %v5540 = vlaneseq
  %v5541 = vshrl.u32 %v5540, 7
  %v5542 = vsub.s32 %v405, %v5541
  %v5543 = vrot.slane %v5181, %v5542
  %v5544 = vsel %vm438, %v5519, %v5515
  %v5545 = vsel %vm440, %v5523, %v5544
  %v5546 = vsel %vm442, %v5527, %v5545
  %v5547 = vsel %vm444, %v5531, %v5546
  %v5548 = vsel %vm446, %v5535, %v5547
  %v5549 = vsel %vm448, %v5539, %v5548
  %v5550 = vsel %vm450, %v5543, %v5549
  %s5552 = scalar_lea.vmem %s13, 40
  %5553 = vst.msk [vmem:[%s5552] sm:$0xff] %vm453, %v5550
  %s5554 = scalar_lea.vmem %s0, 144
  %v5555 = vld [vmem:[%s5554] sm:$0xff]
  %v5556 = vld [vmem:[%s5554 + $0x8] sm:$0xff]
  %v5557 = vld [vmem:[%s5554 + $0x10] sm:$0xff]
  %5558 = vmatprep.subr.bf16.mxu0 0
  %5559 = vmatpush1.bf16.msra.mxu0 %v211
  %5560 = vmatprep.subr.bf16.mxu0 0
  %5561 = vmatpush1.bf16.msra.mxu0 %v210
  %5562 = vmatprep.subr.bf16.mxu0 0
  %5563 = vmatpush1.bf16.msra.mxu0 %v209
  %5564 = vmatprep.subr.bf16.mxu0 0
  %5565 = vmatpush1.bf16.msra.mxu0 %v208
  %5566 = vmatprep.subr.bf16.mxu0 0
  %5567 = vmatpush1.bf16.msra.mxu0 %v207
  %5568 = vmatprep.subr.bf16.mxu0 0
  %5569 = vmatpush1.bf16.msra.mxu0 %v206
  %5570 = vmatprep.subr.bf16.mxu0 0
  %5571 = vmatpush1.bf16.msra.mxu0 %v205
  %5572 = vmatprep.subr.bf16.mxu0 0
  %5573 = vmatpush1.bf16.msra.mxu0 %v204
  %5574 = vmatprep.subr.bf16.mxu0 0
  %5575 = vmatpush2.bf16.msra.mxu0 0
  %5576 = vmatprep.subr.bf16.mxu0 0
  %5577 = vmatpush2.bf16.msra.mxu0 0
  %5578 = vmatprep.subr.bf16.mxu0 0
  %5579 = vmatpush2.bf16.msra.mxu0 0
  %5580 = vmatprep.subr.bf16.mxu0 0
  %5581 = vmatpush2.bf16.msra.mxu0 0
  %5582 = vmatprep.subr.bf16.mxu0 0
  %5583 = vmatpush2.bf16.msra.mxu0 0
  %5584 = vmatprep.subr.bf16.mxu0 0
  %5585 = vmatpush2.bf16.msra.mxu0 0
  %5586 = vmatprep.subr.bf16.mxu0 0
  %5587 = vmatpush2.bf16.msra.mxu0 0
  %5588 = vmatprep.subr.bf16.mxu0 0
  %5589 = vmatpush2.bf16.msra.mxu0 0
  %5590 = vmatprep.mubr.bf16.mxu0 0
  %5591 = vmatmul.mubr.bf16.gmra.mxu0 %v5458
  %v5592 = vpop.f32.mrf.mxu0
  %v5593 = vadd.f32 %v170, %v5592
  %v5594 = vpop.f32.mrf.mxu0
  %v5595 = vpop.f32.mrf.mxu0
  %v5596 = vpop.f32.mrf.mxu0
  %5597 = vdwg.mxu0
  %v5599 = vcombine.high %v5593, %v5593
  %v5601 = vunpack.c.l.s4 1966171168
  %v5602 = vunpack.c.0.s8 %v5601
  %v5603 = vlaneseq
  %v5604 = vshrl.u32 %v5603, 7
  %v5605 = vsub.s32 %v5602, %v5604
  %v5606 = vrot.slane %v5593, %v5605
  %v5608 = vunpack.c.l.s4 1966171168
  %v5609 = vunpack.c.0.s8 %v5608
  %v5610 = vlaneseq
  %v5611 = vshrl.u32 %v5610, 7
  %v5612 = vsub.s32 %v5609, %v5611
  %v5613 = vrot.slane %v5599, %v5612
  %v5614 = vcombine.high %v5606, %v5606
  %v5615 = vcombine.high %v5613, %v5613
  %v5617 = vunpack.c.l.s4 1966171168
  %v5618 = vunpack.c.0.s8 %v5617
  %v5619 = vlaneseq
  %v5620 = vshrl.u32 %v5619, 7
  %v5621 = vsub.s32 %v5618, %v5620
  %v5622 = vrot.slane %v5606, %v5621
  %v5624 = vunpack.c.l.s4 1966171168
  %v5625 = vunpack.c.0.s8 %v5624
  %v5626 = vlaneseq
  %v5627 = vshrl.u32 %v5626, 7
  %v5628 = vsub.s32 %v5625, %v5627
  %v5629 = vrot.slane %v5613, %v5628
  %v5631 = vunpack.c.l.s4 1966171168
  %v5632 = vunpack.c.0.s8 %v5631
  %v5633 = vlaneseq
  %v5634 = vshrl.u32 %v5633, 7
  %v5635 = vsub.s32 %v5632, %v5634
  %v5636 = vrot.slane %v5614, %v5635
  %v5638 = vunpack.c.l.s4 1966171168
  %v5639 = vunpack.c.0.s8 %v5638
  %v5640 = vlaneseq
  %v5641 = vshrl.u32 %v5640, 7
  %v5642 = vsub.s32 %v5639, %v5641
  %v5643 = vrot.slane %v5615, %v5642
  %v5644 = vcombine.high %v5622, %v5622
  %v5645 = vcombine.high %v5629, %v5629
  %v5646 = vcombine.high %v5636, %v5636
  %v5647 = vcombine.high %v5643, %v5643
  %v5648 = vlaneseq
  %v5649 = vshrl.u32 %v5648, 7
  %v5650 = vsub.s32 0, %v5649
  %v5651 = vrot.slane %v5622, %v5650
  %v5652 = vlaneseq
  %v5653 = vshrl.u32 %v5652, 7
  %v5654 = vsub.s32 0, %v5653
  %v5655 = vrot.slane %v5636, %v5654
  %v5656 = vlaneseq
  %v5657 = vshrl.u32 %v5656, 7
  %v5658 = vsub.s32 0, %v5657
  %v5659 = vrot.slane %v5644, %v5658
  %v5660 = vlaneseq
  %v5661 = vshrl.u32 %v5660, 7
  %v5662 = vsub.s32 0, %v5661
  %v5663 = vrot.slane %v5646, %v5662
  %v5664 = vlaneseq
  %v5665 = vshrl.u32 %v5664, 7
  %v5666 = vsub.s32 0, %v5665
  %v5667 = vrot.slane %v5629, %v5666
  %v5668 = vlaneseq
  %v5669 = vshrl.u32 %v5668, 7
  %v5670 = vsub.s32 0, %v5669
  %v5671 = vrot.slane %v5643, %v5670
  %v5672 = vlaneseq
  %v5673 = vshrl.u32 %v5672, 7
  %v5674 = vsub.s32 0, %v5673
  %v5675 = vrot.slane %v5645, %v5674
  %v5676 = vlaneseq
  %v5677 = vshrl.u32 %v5676, 7
  %v5678 = vsub.s32 0, %v5677
  %v5679 = vrot.slane %v5647, %v5678
  %v5688 = vadd.f32 %v5651, %v45
  %v5689 = vadd.f32 %v5655, %v46
  %v5690 = vadd.f32 %v5659, %v47
  %v5691 = vadd.f32 %v5663, %v48
  %v5692 = vadd.f32 %v5667, %v49
  %v5693 = vadd.f32 %v5671, %v50
  %v5694 = vadd.f32 %v5675, %v51
  %v5695 = vadd.f32 %v5679, %v52
  %v5696 = vtanh.pop %v5688
  %v5697 = vtanh.pop %v5689
  %v5698 = vtanh.pop %v5690
  %v5699 = vtanh.pop %v5691
  %v5700 = vtanh.pop %v5692
  %v5701 = vtanh.pop %v5693
  %v5702 = vtanh.pop %v5694
  %v5703 = vtanh.pop %v5695
  %v5704 = vmul.f32 %v5696, %v370
  %v5705 = vmul.f32 %v5697, %v370
  %v5706 = vmul.f32 %v5698, %v370
  %v5707 = vmul.f32 %v5699, %v370
  %v5708 = vmul.f32 %v5700, %v370
  %v5709 = vmul.f32 %v5701, %v370
  %v5710 = vmul.f32 %v5702, %v370
  %v5711 = vmul.f32 %v5703, %v370
  %5712 = vadd.xlane.f32.xlu0 %v5704
  %v5713 = vpop.xlane.xlu0 %5712
  %5714 = vadd.xlane.f32.xlu0 %v5705
  %v5715 = vpop.xlane.xlu0 %5714
  %5716 = vadd.xlane.f32.xlu0 %v5706
  %v5717 = vpop.xlane.xlu0 %5716
  %5718 = vadd.xlane.f32.xlu0 %v5707
  %v5719 = vpop.xlane.xlu0 %5718
  %5720 = vadd.xlane.f32.xlu0 %v5708
  %v5721 = vpop.xlane.xlu0 %5720
  %5722 = vadd.xlane.f32.xlu0 %v5709
  %v5723 = vpop.xlane.xlu0 %5722
  %5724 = vadd.xlane.f32.xlu0 %v5710
  %v5725 = vpop.xlane.xlu0 %5724
  %5726 = vadd.xlane.f32.xlu0 %v5711
  %v5727 = vpop.xlane.xlu0 %5726
  %v5736 = vlaneseq
  %v5737 = vshrl.u32 %v5736, 7
  %v5738 = vsub.s32 %v405, %v5737
  %v5739 = vrot.slane %v5713, %v5738
  %v5740 = vlaneseq
  %v5741 = vshrl.u32 %v5740, 7
  %v5742 = vsub.s32 %v405, %v5741
  %v5743 = vrot.slane %v5715, %v5742
  %v5744 = vlaneseq
  %v5745 = vshrl.u32 %v5744, 7
  %v5746 = vsub.s32 %v405, %v5745
  %v5747 = vrot.slane %v5717, %v5746
  %v5748 = vlaneseq
  %v5749 = vshrl.u32 %v5748, 7
  %v5750 = vsub.s32 %v405, %v5749
  %v5751 = vrot.slane %v5719, %v5750
  %v5752 = vlaneseq
  %v5753 = vshrl.u32 %v5752, 7
  %v5754 = vsub.s32 %v405, %v5753
  %v5755 = vrot.slane %v5721, %v5754
  %v5756 = vlaneseq
  %v5757 = vshrl.u32 %v5756, 7
  %v5758 = vsub.s32 %v405, %v5757
  %v5759 = vrot.slane %v5723, %v5758
  %v5760 = vlaneseq
  %v5761 = vshrl.u32 %v5760, 7
  %v5762 = vsub.s32 %v405, %v5761
  %v5763 = vrot.slane %v5725, %v5762
  %v5764 = vlaneseq
  %v5765 = vshrl.u32 %v5764, 7
  %v5766 = vsub.s32 %v405, %v5765
  %v5767 = vrot.slane %v5727, %v5766
  %v5768 = vsel %vm438, %v5743, %v5739
  %v5769 = vsel %vm440, %v5747, %v5768
  %v5770 = vsel %vm442, %v5751, %v5769
  %v5771 = vsel %vm444, %v5755, %v5770
  %v5772 = vsel %vm446, %v5759, %v5771
  %v5773 = vsel %vm448, %v5763, %v5772
  %v5774 = vsel %vm450, %v5767, %v5773
  %v5776 = vsel %vm453, %v5774, -inf
  %5777 = vmax.xlane.f32.xlu0 %v5776
  %v5778 = vpop.xlane.xlu0 %5777
  %v5780 = vlaneseq
  %v5781 = vshrl.u32 %v5780, 7
  %v5782 = vsub.s32 0, %v5781
  %v5783 = vrot.slane %v5778, %v5782
  %v5784 = vlaneseq
  %v5785 = vshrl.u32 %v5784, 7
  %v5786 = vsub.s32 1, %v5785
  %v5787 = vrot.slane %v5778, %v5786
  %v5788 = vlaneseq
  %v5789 = vshrl.u32 %v5788, 7
  %v5790 = vsub.s32 2, %v5789
  %v5791 = vrot.slane %v5778, %v5790
  %v5792 = vlaneseq
  %v5793 = vshrl.u32 %v5792, 7
  %v5794 = vsub.s32 3, %v5793
  %v5795 = vrot.slane %v5778, %v5794
  %v5796 = vlaneseq
  %v5797 = vshrl.u32 %v5796, 7
  %v5798 = vsub.s32 4, %v5797
  %v5799 = vrot.slane %v5778, %v5798
  %v5800 = vlaneseq
  %v5801 = vshrl.u32 %v5800, 7
  %v5802 = vsub.s32 5, %v5801
  %v5803 = vrot.slane %v5778, %v5802
  %v5804 = vlaneseq
  %v5805 = vshrl.u32 %v5804, 7
  %v5806 = vsub.s32 6, %v5805
  %v5807 = vrot.slane %v5778, %v5806
  %v5808 = vlaneseq
  %v5809 = vshrl.u32 %v5808, 7
  %v5810 = vsub.s32 7, %v5809
  %v5811 = vrot.slane %v5778, %v5810
  %v5820 = vsub.f32 %v5713, %v5783
  %v5821 = vsub.f32 %v5715, %v5787
  %v5822 = vsub.f32 %v5717, %v5791
  %v5823 = vsub.f32 %v5719, %v5795
  %v5824 = vsub.f32 %v5721, %v5799
  %v5825 = vsub.f32 %v5723, %v5803
  %v5826 = vsub.f32 %v5725, %v5807
  %v5827 = vsub.f32 %v5727, %v5811
  %v5828 = vmul.f32 %v5820, 1.442695
  %v5829 = vpow.pop %v5828
  %v5830 = vmul.f32 %v5821, 1.442695
  %v5831 = vpow.pop %v5830
  %v5832 = vmul.f32 %v5822, 1.442695
  %v5833 = vpow.pop %v5832
  %v5834 = vmul.f32 %v5823, 1.442695
  %v5835 = vpow.pop %v5834
  %v5836 = vmul.f32 %v5824, 1.442695
  %v5837 = vpow.pop %v5836
  %v5838 = vmul.f32 %v5825, 1.442695
  %v5839 = vpow.pop %v5838
  %v5840 = vmul.f32 %v5826, 1.442695
  %v5841 = vpow.pop %v5840
  %v5842 = vmul.f32 %v5827, 1.442695
  %v5843 = vpow.pop %v5842
  %5852 = vset.pattern.permute.xlu0 0
  %5853 = vperm.xlu0 %5852, %v5829
  %v5854 = vpop.permute.xlu0 %5853
  %5855 = vset.pattern.permute.xlu0 0
  %5856 = vperm.xlu0 %5855, %v5831
  %v5857 = vpop.permute.xlu0 %5856
  %5858 = vset.pattern.permute.xlu0 0
  %5859 = vperm.xlu0 %5858, %v5833
  %v5860 = vpop.permute.xlu0 %5859
  %5861 = vset.pattern.permute.xlu0 0
  %5862 = vperm.xlu0 %5861, %v5835
  %v5863 = vpop.permute.xlu0 %5862
  %5864 = vset.pattern.permute.xlu0 0
  %5865 = vperm.xlu0 %5864, %v5837
  %v5866 = vpop.permute.xlu0 %5865
  %5867 = vset.pattern.permute.xlu0 0
  %5868 = vperm.xlu0 %5867, %v5839
  %v5869 = vpop.permute.xlu0 %5868
  %5870 = vset.pattern.permute.xlu0 0
  %5871 = vperm.xlu0 %5870, %v5841
  %v5872 = vpop.permute.xlu0 %5871
  %5873 = vset.pattern.permute.xlu0 0
  %5874 = vperm.xlu0 %5873, %v5843
  %v5875 = vpop.permute.xlu0 %5874
  %v5876 = vlaneseq
  %v5877 = vshrl.u32 %v5876, 7
  %v5878 = vsub.s32 %v405, %v5877
  %v5879 = vrot.slane %v5854, %v5878
  %v5880 = vlaneseq
  %v5881 = vshrl.u32 %v5880, 7
  %v5882 = vsub.s32 %v405, %v5881
  %v5883 = vrot.slane %v5857, %v5882
  %v5884 = vlaneseq
  %v5885 = vshrl.u32 %v5884, 7
  %v5886 = vsub.s32 %v405, %v5885
  %v5887 = vrot.slane %v5860, %v5886
  %v5888 = vlaneseq
  %v5889 = vshrl.u32 %v5888, 7
  %v5890 = vsub.s32 %v405, %v5889
  %v5891 = vrot.slane %v5863, %v5890
  %v5892 = vlaneseq
  %v5893 = vshrl.u32 %v5892, 7
  %v5894 = vsub.s32 %v405, %v5893
  %v5895 = vrot.slane %v5866, %v5894
  %v5896 = vlaneseq
  %v5897 = vshrl.u32 %v5896, 7
  %v5898 = vsub.s32 %v405, %v5897
  %v5899 = vrot.slane %v5869, %v5898
  %v5900 = vlaneseq
  %v5901 = vshrl.u32 %v5900, 7
  %v5902 = vsub.s32 %v405, %v5901
  %v5903 = vrot.slane %v5872, %v5902
  %v5904 = vlaneseq
  %v5905 = vshrl.u32 %v5904, 7
  %v5906 = vsub.s32 %v405, %v5905
  %v5907 = vrot.slane %v5875, %v5906
  %v5908 = vsel %vm438, %v5883, %v5879
  %v5909 = vsel %vm440, %v5887, %v5908
  %v5910 = vsel %vm442, %v5891, %v5909
  %v5911 = vsel %vm444, %v5895, %v5910
  %v5912 = vsel %vm446, %v5899, %v5911
  %v5913 = vsel %vm448, %v5903, %v5912
  %v5914 = vsel %vm450, %v5907, %v5913
  %v5916 = vsel %vm453, %v5914, 0.0
  %5917 = vadd.xlane.f32.xlu0 %v5916
  %v5918 = vpop.xlane.xlu0 %5917
  %v5920 = vlaneseq
  %v5921 = vshrl.u32 %v5920, 7
  %v5922 = vsub.s32 0, %v5921
  %v5923 = vrot.slane %v5918, %v5922
  %v5924 = vlaneseq
  %v5925 = vshrl.u32 %v5924, 7
  %v5926 = vsub.s32 1, %v5925
  %v5927 = vrot.slane %v5918, %v5926
  %v5928 = vlaneseq
  %v5929 = vshrl.u32 %v5928, 7
  %v5930 = vsub.s32 2, %v5929
  %v5931 = vrot.slane %v5918, %v5930
  %v5932 = vlaneseq
  %v5933 = vshrl.u32 %v5932, 7
  %v5934 = vsub.s32 3, %v5933
  %v5935 = vrot.slane %v5918, %v5934
  %v5936 = vlaneseq
  %v5937 = vshrl.u32 %v5936, 7
  %v5938 = vsub.s32 4, %v5937
  %v5939 = vrot.slane %v5918, %v5938
  %v5940 = vlaneseq
  %v5941 = vshrl.u32 %v5940, 7
  %v5942 = vsub.s32 5, %v5941
  %v5943 = vrot.slane %v5918, %v5942
  %v5944 = vlaneseq
  %v5945 = vshrl.u32 %v5944, 7
  %v5946 = vsub.s32 6, %v5945
  %v5947 = vrot.slane %v5918, %v5946
  %v5948 = vlaneseq
  %v5949 = vshrl.u32 %v5948, 7
  %v5950 = vsub.s32 7, %v5949
  %v5951 = vrot.slane %v5918, %v5950
  %v5960 = vrcp.pop %v5923
  %v5961 = vmul.f32 %v5829, %v5960
  %v5962 = vrcp.pop %v5927
  %v5963 = vmul.f32 %v5831, %v5962
  %v5964 = vrcp.pop %v5931
  %v5965 = vmul.f32 %v5833, %v5964
  %v5966 = vrcp.pop %v5935
  %v5967 = vmul.f32 %v5835, %v5966
  %v5968 = vrcp.pop %v5939
  %v5969 = vmul.f32 %v5837, %v5968
  %v5970 = vrcp.pop %v5943
  %v5971 = vmul.f32 %v5839, %v5970
  %v5972 = vrcp.pop %v5947
  %v5973 = vmul.f32 %v5841, %v5972
  %v5974 = vrcp.pop %v5951
  %v5975 = vmul.f32 %v5843, %v5974
  %5977 = vset.pattern.permute.xlu0 0
  %5978 = vperm.xlu0 %5977, %v5961
  %v5979 = vpop.permute.xlu0 %5978
  %5982 = vset.pattern.permute.xlu0 0
  %5983 = vperm.xlu0 %5982, %v5963
  %v5984 = vpop.permute.xlu0 %5983
  %5987 = vset.pattern.permute.xlu0 0
  %5988 = vperm.xlu0 %5987, %v5965
  %v5989 = vpop.permute.xlu0 %5988
  %5992 = vset.pattern.permute.xlu0 0
  %5993 = vperm.xlu0 %5992, %v5967
  %v5994 = vpop.permute.xlu0 %5993
  %5997 = vset.pattern.permute.xlu0 0
  %5998 = vperm.xlu0 %5997, %v5969
  %v5999 = vpop.permute.xlu0 %5998
  %6002 = vset.pattern.permute.xlu0 0
  %6003 = vperm.xlu0 %6002, %v5971
  %v6004 = vpop.permute.xlu0 %6003
  %6007 = vset.pattern.permute.xlu0 0
  %6008 = vperm.xlu0 %6007, %v5973
  %v6009 = vpop.permute.xlu0 %6008
  %6012 = vset.pattern.permute.xlu0 0
  %6013 = vperm.xlu0 %6012, %v5975
  %v6014 = vpop.permute.xlu0 %6013
  %v6016 = vmul.f32 %v5979, %v53
  %v6017 = vmul.f32 %v5984, %v54
  %v6018 = vmul.f32 %v5989, %v55
  %v6019 = vmul.f32 %v5994, %v56
  %v6020 = vmul.f32 %v5999, %v57
  %v6021 = vmul.f32 %v6004, %v58
  %v6022 = vmul.f32 %v6009, %v59
  %v6023 = vmul.f32 %v6014, %v60
  %v6024 = vrot.slane %v6016, 4
  %v6025 = vadd.f32 %v6016, %v6024
  %v6026 = vrot.slane %v6025, 2
  %v6027 = vadd.f32 %v6025, %v6026
  %v6028 = vrot.slane %v6027, 1
  %v6029 = vadd.f32 %v6027, %v6028
  %v6030 = vrot.slane %v6017, 4
  %v6031 = vadd.f32 %v6017, %v6030
  %v6032 = vrot.slane %v6031, 2
  %v6033 = vadd.f32 %v6031, %v6032
  %v6034 = vrot.slane %v6033, 1
  %v6035 = vadd.f32 %v6033, %v6034
  %v6036 = vrot.slane %v6018, 4
  %v6037 = vadd.f32 %v6018, %v6036
  %v6038 = vrot.slane %v6037, 2
  %v6039 = vadd.f32 %v6037, %v6038
  %v6040 = vrot.slane %v6039, 1
  %v6041 = vadd.f32 %v6039, %v6040
  %v6042 = vrot.slane %v6019, 4
  %v6043 = vadd.f32 %v6019, %v6042
  %v6044 = vrot.slane %v6043, 2
  %v6045 = vadd.f32 %v6043, %v6044
  %v6046 = vrot.slane %v6045, 1
  %v6047 = vadd.f32 %v6045, %v6046
  %v6048 = vrot.slane %v6020, 4
  %v6049 = vadd.f32 %v6020, %v6048
  %v6050 = vrot.slane %v6049, 2
  %v6051 = vadd.f32 %v6049, %v6050
  %v6052 = vrot.slane %v6051, 1
  %v6053 = vadd.f32 %v6051, %v6052
  %v6054 = vrot.slane %v6021, 4
  %v6055 = vadd.f32 %v6021, %v6054
  %v6056 = vrot.slane %v6055, 2
  %v6057 = vadd.f32 %v6055, %v6056
  %v6058 = vrot.slane %v6057, 1
  %v6059 = vadd.f32 %v6057, %v6058
  %v6060 = vrot.slane %v6022, 4
  %v6061 = vadd.f32 %v6022, %v6060
  %v6062 = vrot.slane %v6061, 2
  %v6063 = vadd.f32 %v6061, %v6062
  %v6064 = vrot.slane %v6063, 1
  %v6065 = vadd.f32 %v6063, %v6064
  %v6066 = vrot.slane %v6023, 4
  %v6067 = vadd.f32 %v6023, %v6066
  %v6068 = vrot.slane %v6067, 2
  %v6069 = vadd.f32 %v6067, %v6068
  %v6070 = vrot.slane %v6069, 1
  %v6071 = vadd.f32 %v6069, %v6070
  %v6072 = vpack.c.bf16 %v6029, %v6029
  %v6073 = vpack.c.bf16 %v6035, %v6035
  %v6074 = vpack.c.bf16 %v6041, %v6041
  %v6075 = vpack.c.bf16 %v6047, %v6047
  %v6076 = vpack.c.bf16 %v6053, %v6053
  %v6077 = vpack.c.bf16 %v6059, %v6059
  %v6078 = vpack.c.bf16 %v6065, %v6065
  %v6079 = vpack.c.bf16 %v6071, %v6071
  %v6088 = vunpack.c.l.b16 %v6072
  %v6089 = vunpack.c.l.b16 %v6073
  %v6090 = vunpack.c.l.b16 %v6074
  %v6091 = vunpack.c.l.b16 %v6075
  %v6092 = vunpack.c.l.b16 %v6076
  %v6093 = vunpack.c.l.b16 %v6077
  %v6094 = vunpack.c.l.b16 %v6078
  %v6095 = vunpack.c.l.b16 %v6079
  %v6096 = vsel %vm438, %v6089, %v6088
  %v6097 = vsel %vm440, %v6090, %v6096
  %v6098 = vsel %vm442, %v6091, %v6097
  %v6099 = vsel %vm444, %v6092, %v6098
  %v6100 = vsel %vm446, %v6093, %v6099
  %v6101 = vsel %vm448, %v6094, %v6100
  %v6102 = vsel %vm450, %v6095, %v6101
  %v6103 = vpack.c.b16 %v6102, %v6102
  %6105 = vmatprep.subr.bf16.mxu0 %v885
  %6106 = vmatpush1.bf16.msra.mxu0 %v884
  %6107 = vmatprep.subr.bf16.mxu0 %v882
  %6108 = vmatpush1.bf16.msra.mxu0 %v881
  %6109 = vmatprep.subr.bf16.mxu0 %v879
  %6110 = vmatpush1.bf16.msra.mxu0 %v878
  %6111 = vmatprep.subr.bf16.mxu0 %v876
  %6112 = vmatpush1.bf16.msra.mxu0 %v875
  %6113 = vmatprep.subr.bf16.mxu0 %v873
  %6114 = vmatpush1.bf16.msra.mxu0 %v872
  %6115 = vmatprep.subr.bf16.mxu0 %v870
  %6116 = vmatpush1.bf16.msra.mxu0 %v869
  %6117 = vmatprep.subr.bf16.mxu0 %v867
  %6118 = vmatpush1.bf16.msra.mxu0 %v866
  %6119 = vmatprep.subr.bf16.mxu0 %v864
  %6120 = vmatpush1.bf16.msra.mxu0 %v863
  %6121 = vmatprep.subr.bf16.mxu0 0
  %6122 = vmatpush2.bf16.msra.mxu0 0
  %6123 = vmatprep.subr.bf16.mxu0 0
  %6124 = vmatpush2.bf16.msra.mxu0 0
  %6125 = vmatprep.subr.bf16.mxu0 0
  %6126 = vmatpush2.bf16.msra.mxu0 0
  %6127 = vmatprep.subr.bf16.mxu0 0
  %6128 = vmatpush2.bf16.msra.mxu0 0
  %6129 = vmatprep.subr.bf16.mxu0 0
  %6130 = vmatpush2.bf16.msra.mxu0 0
  %6131 = vmatprep.subr.bf16.mxu0 0
  %6132 = vmatpush2.bf16.msra.mxu0 0
  %6133 = vmatprep.subr.bf16.mxu0 0
  %6134 = vmatpush2.bf16.msra.mxu0 0
  %6135 = vmatprep.subr.bf16.mxu0 0
  %6136 = vmatpush2.bf16.msra.mxu0 0
  %6137 = vmatprep.mubr.bf16.mxu0 0
  %6138 = vmatmul.mubr.bf16.gmra.mxu0 %v6103
  %v6139 = vpop.f32.mrf.mxu0
  %v6140 = vadd.f32 0.0, %v6139
  %v6141 = vpop.f32.mrf.mxu0
  %v6142 = vadd.f32 0.0, %v6141
  %v6143 = vpop.f32.mrf.mxu0
  %v6144 = vpop.f32.mrf.mxu0
  %6145 = vdwg.mxu0
  %6146 = vmatprep.subr.bf16.mxu0 0
  %6147 = vmatpush1.bf16.msra.mxu0 %v886
  %6148 = vmatprep.subr.bf16.mxu0 0
  %6149 = vmatpush1.bf16.msra.mxu0 %v883
  %6150 = vmatprep.subr.bf16.mxu0 0
  %6151 = vmatpush1.bf16.msra.mxu0 %v880
  %6152 = vmatprep.subr.bf16.mxu0 0
  %6153 = vmatpush1.bf16.msra.mxu0 %v877
  %6154 = vmatprep.subr.bf16.mxu0 0
  %6155 = vmatpush1.bf16.msra.mxu0 %v874
  %6156 = vmatprep.subr.bf16.mxu0 0
  %6157 = vmatpush1.bf16.msra.mxu0 %v871
  %6158 = vmatprep.subr.bf16.mxu0 0
  %6159 = vmatpush1.bf16.msra.mxu0 %v868
  %6160 = vmatprep.subr.bf16.mxu0 0
  %6161 = vmatpush1.bf16.msra.mxu0 %v865
  %6162 = vmatprep.subr.bf16.mxu0 0
  %6163 = vmatpush2.bf16.msra.mxu0 0
  %6164 = vmatprep.subr.bf16.mxu0 0
  %6165 = vmatpush2.bf16.msra.mxu0 0
  %6166 = vmatprep.subr.bf16.mxu0 0
  %6167 = vmatpush2.bf16.msra.mxu0 0
  %6168 = vmatprep.subr.bf16.mxu0 0
  %6169 = vmatpush2.bf16.msra.mxu0 0
  %6170 = vmatprep.subr.bf16.mxu0 0
  %6171 = vmatpush2.bf16.msra.mxu0 0
  %6172 = vmatprep.subr.bf16.mxu0 0
  %6173 = vmatpush2.bf16.msra.mxu0 0
  %6174 = vmatprep.subr.bf16.mxu0 0
  %6175 = vmatpush2.bf16.msra.mxu0 0
  %6176 = vmatprep.subr.bf16.mxu0 0
  %6177 = vmatpush2.bf16.msra.mxu0 0
  %6178 = vmatprep.mubr.bf16.mxu0 0
  %6179 = vmatmul.mubr.bf16.gmra.mxu0 %v6103
  %v6180 = vpop.f32.mrf.mxu0
  %v6181 = vadd.f32 0.0, %v6180
  %v6182 = vpop.f32.mrf.mxu0
  %v6183 = vpop.f32.mrf.mxu0
  %v6184 = vpop.f32.mrf.mxu0
  %6185 = vdwg.mxu0
  %v6186 = vadd.f32 %v5555, %v6140
  %v6187 = vadd.f32 %v5556, %v6142
  %v6188 = vadd.f32 %v5557, %v6181
  %6189 = vmatprep.subr.bf16.mxu0 %v1113
  %6190 = vmatpush1.bf16.msra.mxu0 %v1112
  %6191 = vmatprep.subr.bf16.mxu0 %v1110
  %6192 = vmatpush1.bf16.msra.mxu0 %v1109
  %6193 = vmatprep.subr.bf16.mxu0 %v1107
  %6194 = vmatpush1.bf16.msra.mxu0 %v1106
  %6195 = vmatprep.subr.bf16.mxu0 %v1104
  %6196 = vmatpush1.bf16.msra.mxu0 %v1103
  %6197 = vmatprep.subr.bf16.mxu0 %v1101
  %6198 = vmatpush1.bf16.msra.mxu0 %v1100
  %6199 = vmatprep.subr.bf16.mxu0 %v1098
  %6200 = vmatpush1.bf16.msra.mxu0 %v1097
  %6201 = vmatprep.subr.bf16.mxu0 %v1095
  %6202 = vmatpush1.bf16.msra.mxu0 %v1094
  %6203 = vmatprep.subr.bf16.mxu0 %v1092
  %6204 = vmatpush1.bf16.msra.mxu0 %v1091
  %6205 = vmatprep.subr.bf16.mxu0 0
  %6206 = vmatpush2.bf16.msra.mxu0 0
  %6207 = vmatprep.subr.bf16.mxu0 0
  %6208 = vmatpush2.bf16.msra.mxu0 0
  %6209 = vmatprep.subr.bf16.mxu0 0
  %6210 = vmatpush2.bf16.msra.mxu0 0
  %6211 = vmatprep.subr.bf16.mxu0 0
  %6212 = vmatpush2.bf16.msra.mxu0 0
  %6213 = vmatprep.subr.bf16.mxu0 0
  %6214 = vmatpush2.bf16.msra.mxu0 0
  %6215 = vmatprep.subr.bf16.mxu0 0
  %6216 = vmatpush2.bf16.msra.mxu0 0
  %6217 = vmatprep.subr.bf16.mxu0 0
  %6218 = vmatpush2.bf16.msra.mxu0 0
  %6219 = vmatprep.subr.bf16.mxu0 0
  %6220 = vmatpush2.bf16.msra.mxu0 0
  %6221 = vmatprep.mubr.bf16.mxu0 0
  %6222 = vmatmul.mubr.bf16.gmra.mxu0 %v5458
  %v6223 = vpop.f32.mrf.mxu0
  %v6224 = vadd.f32 %v999, %v6223
  %v6225 = vpop.f32.mrf.mxu0
  %v6226 = vadd.f32 %v1003, %v6225
  %v6227 = vpop.f32.mrf.mxu0
  %v6228 = vpop.f32.mrf.mxu0
  %6229 = vdwg.mxu0
  %6230 = vmatprep.subr.bf16.mxu0 0
  %6231 = vmatpush1.bf16.msra.mxu0 %v1114
  %6232 = vmatprep.subr.bf16.mxu0 0
  %6233 = vmatpush1.bf16.msra.mxu0 %v1111
  %6234 = vmatprep.subr.bf16.mxu0 0
  %6235 = vmatpush1.bf16.msra.mxu0 %v1108
  %6236 = vmatprep.subr.bf16.mxu0 0
  %6237 = vmatpush1.bf16.msra.mxu0 %v1105
  %6238 = vmatprep.subr.bf16.mxu0 0
  %6239 = vmatpush1.bf16.msra.mxu0 %v1102
  %6240 = vmatprep.subr.bf16.mxu0 0
  %6241 = vmatpush1.bf16.msra.mxu0 %v1099
  %6242 = vmatprep.subr.bf16.mxu0 0
  %6243 = vmatpush1.bf16.msra.mxu0 %v1096
  %6244 = vmatprep.subr.bf16.mxu0 0
  %6245 = vmatpush1.bf16.msra.mxu0 %v1093
  %6246 = vmatprep.subr.bf16.mxu0 0
  %6247 = vmatpush2.bf16.msra.mxu0 0
  %6248 = vmatprep.subr.bf16.mxu0 0
  %6249 = vmatpush2.bf16.msra.mxu0 0
  %6250 = vmatprep.subr.bf16.mxu0 0
  %6251 = vmatpush2.bf16.msra.mxu0 0
  %6252 = vmatprep.subr.bf16.mxu0 0
  %6253 = vmatpush2.bf16.msra.mxu0 0
  %6254 = vmatprep.subr.bf16.mxu0 0
  %6255 = vmatpush2.bf16.msra.mxu0 0
  %6256 = vmatprep.subr.bf16.mxu0 0
  %6257 = vmatpush2.bf16.msra.mxu0 0
  %6258 = vmatprep.subr.bf16.mxu0 0
  %6259 = vmatpush2.bf16.msra.mxu0 0
  %6260 = vmatprep.subr.bf16.mxu0 0
  %6261 = vmatpush2.bf16.msra.mxu0 0
  %6262 = vmatprep.mubr.bf16.mxu0 0
  %6263 = vmatmul.mubr.bf16.gmra.mxu0 %v5458
  %v6264 = vpop.f32.mrf.mxu0
  %v6265 = vadd.f32 %v1007, %v6264
  %v6266 = vpop.f32.mrf.mxu0
  %v6267 = vpop.f32.mrf.mxu0
  %v6268 = vpop.f32.mrf.mxu0
  %6269 = vdwg.mxu0
  %v6270 = vadd.f32 %v6186, %v6224
  %v6271 = vxor.u32 %v6270, 2147483648
  %v6272 = vmul.f32 %v6271, 1.442695
  %v6273 = vpow.pop %v6272
  %v6274 = vadd.f32 %v6273, 1.0
  %v6275 = vrcp.pop %v6274
  %v6276 = vmul.f32 1.0, %v6275
  %v6277 = vadd.f32 %v6187, %v6226
  %v6278 = vxor.u32 %v6277, 2147483648
  %v6279 = vmul.f32 %v6278, 1.442695
  %v6280 = vpow.pop %v6279
  %v6281 = vadd.f32 %v6280, 1.0
  %v6282 = vrcp.pop %v6281
  %v6283 = vmul.f32 1.0, %v6282
  %v6284 = vmul.f32 %v6276, %v6265
  %v6285 = vadd.f32 %v6188, %v6284
  %v6286 = vtanh.pop %v6285
  %v6287 = vsub.f32 1.0, %v6283
  %v6288 = vmul.f32 %v6287, %v6286
  %v6289 = vmul.f32 %v6283, %v5457
  %v6290 = vadd.f32 %v6288, %v6289
  %v6291 = vpack.c.bf16 %v6290, %v6290
  %6292 = vmatprep.subr.bf16.mxu0 0
  %6293 = vmatpush1.bf16.msra.mxu0 %v1287
  %6294 = vmatprep.subr.bf16.mxu0 0
  %6295 = vmatpush1.bf16.msra.mxu0 %v1286
  %6296 = vmatprep.subr.bf16.mxu0 0
  %6297 = vmatpush1.bf16.msra.mxu0 %v1285
  %6298 = vmatprep.subr.bf16.mxu0 0
  %6299 = vmatpush1.bf16.msra.mxu0 %v1284
  %6300 = vmatprep.subr.bf16.mxu0 0
  %6301 = vmatpush1.bf16.msra.mxu0 %v1283
  %6302 = vmatprep.subr.bf16.mxu0 0
  %6303 = vmatpush1.bf16.msra.mxu0 %v1282
  %6304 = vmatprep.subr.bf16.mxu0 0
  %6305 = vmatpush1.bf16.msra.mxu0 %v1281
  %6306 = vmatprep.subr.bf16.mxu0 0
  %6307 = vmatpush1.bf16.msra.mxu0 %v1280
  %6308 = vmatprep.subr.bf16.mxu0 0
  %6309 = vmatpush2.bf16.msra.mxu0 0
  %6310 = vmatprep.subr.bf16.mxu0 0
  %6311 = vmatpush2.bf16.msra.mxu0 0
  %6312 = vmatprep.subr.bf16.mxu0 0
  %6313 = vmatpush2.bf16.msra.mxu0 0
  %6314 = vmatprep.subr.bf16.mxu0 0
  %6315 = vmatpush2.bf16.msra.mxu0 0
  %6316 = vmatprep.subr.bf16.mxu0 0
  %6317 = vmatpush2.bf16.msra.mxu0 0
  %6318 = vmatprep.subr.bf16.mxu0 0
  %6319 = vmatpush2.bf16.msra.mxu0 0
  %6320 = vmatprep.subr.bf16.mxu0 0
  %6321 = vmatpush2.bf16.msra.mxu0 0
  %6322 = vmatprep.subr.bf16.mxu0 0
  %6323 = vmatpush2.bf16.msra.mxu0 0
  %6324 = vmatprep.mubr.bf16.mxu0 0
  %6325 = vmatmul.mubr.bf16.gmra.mxu0 %v6291
  %v6326 = vpop.f32.mrf.mxu0
  %v6327 = vadd.f32 %v1246, %v6326
  %v6328 = vpop.f32.mrf.mxu0
  %v6329 = vpop.f32.mrf.mxu0
  %v6330 = vpop.f32.mrf.mxu0
  %6331 = vdwg.mxu0
  %6332 = vmax.xlane.f32.xlu0 %v6327
  %v6333 = vpop.xlane.xlu0 %6332
  %v6334 = vsub.f32 %v6327, %v6333
  %v6335 = vmul.f32 %v6334, 1.442695
  %v6336 = vpow.pop %v6335
  %6337 = vadd.xlane.f32.xlu0 %v6336
  %v6338 = vpop.xlane.xlu0 %6337
  %v6339 = vlog2.pop %v6338
  %v6340 = vmul.f32 %v6339, 0.6931472
  %v6341 = vadd.f32 %v6340, %v6333
  %v6342 = vsub.f32 %v6327, %v6341
  %s6343 = scalar_lea.vmem %s12, 48
  %6344 = vst [vmem:[%s6343] sm:$0xff] %v6342
  %v6345 = vlaneseq
  %v6346 = vshrl.u32 %v6345, 7
  %v6347 = vsub.s32 %v405, %v6346
  %v6348 = vrot.slane %v5979, %v6347
  %v6349 = vlaneseq
  %v6350 = vshrl.u32 %v6349, 7
  %v6351 = vsub.s32 %v405, %v6350
  %v6352 = vrot.slane %v5984, %v6351
  %v6353 = vlaneseq
  %v6354 = vshrl.u32 %v6353, 7
  %v6355 = vsub.s32 %v405, %v6354
  %v6356 = vrot.slane %v5989, %v6355
  %v6357 = vlaneseq
  %v6358 = vshrl.u32 %v6357, 7
  %v6359 = vsub.s32 %v405, %v6358
  %v6360 = vrot.slane %v5994, %v6359
  %v6361 = vlaneseq
  %v6362 = vshrl.u32 %v6361, 7
  %v6363 = vsub.s32 %v405, %v6362
  %v6364 = vrot.slane %v5999, %v6363
  %v6365 = vlaneseq
  %v6366 = vshrl.u32 %v6365, 7
  %v6367 = vsub.s32 %v405, %v6366
  %v6368 = vrot.slane %v6004, %v6367
  %v6369 = vlaneseq
  %v6370 = vshrl.u32 %v6369, 7
  %v6371 = vsub.s32 %v405, %v6370
  %v6372 = vrot.slane %v6009, %v6371
  %v6373 = vlaneseq
  %v6374 = vshrl.u32 %v6373, 7
  %v6375 = vsub.s32 %v405, %v6374
  %v6376 = vrot.slane %v6014, %v6375
  %v6377 = vsel %vm438, %v6352, %v6348
  %v6378 = vsel %vm440, %v6356, %v6377
  %v6379 = vsel %vm442, %v6360, %v6378
  %v6380 = vsel %vm444, %v6364, %v6379
  %v6381 = vsel %vm446, %v6368, %v6380
  %v6382 = vsel %vm448, %v6372, %v6381
  %v6383 = vsel %vm450, %v6376, %v6382
  %s6385 = scalar_lea.vmem %s13, 48
  %6386 = vst.msk [vmem:[%s6385] sm:$0xff] %vm453, %v6383
  %6387 = vst [vmem:[%s14] sm:$0xff] %v6290
  // Predicated region
  $region50: #{attn_decoder_forward.1} parent=0 // pred_check
    _
  $region51: #{attn_decoder_forward.1} parent=0 // pred_check_branch
    %6389 = sbr.rel (0) target = $region53
  $region52: #{attn_decoder_forward.1} parent=0 // pred_region
    _
  $region53: #{attn_decoder_forward.1} parent=0 // pred_fallthru
    _
  // Predicated region
  $region54: #{attn_decoder_forward.1} parent=0 // pred_check
    _
  $region55: #{attn_decoder_forward.1} parent=0 // pred_check_branch
    %6391 = sbr.rel (0) target = $region57
  $region56: #{attn_decoder_forward.1} parent=0 // pred_region
    _
  $region57: #{attn_decoder_forward.1} parent=0 // pred_fallthru
    _
  // Predicated region
  $region58: #{attn_decoder_forward.1} parent=0 // pred_check
    _
  $region59: #{attn_decoder_forward.1} parent=0 // pred_check_branch
    %6393 = sbr.rel (0) target = $region61
  $region60: #{attn_decoder_forward.1} parent=0 // pred_region
    _
  $region61: #{attn_decoder_forward.1} parent=0 // pred_fallthru
    _
  // Predicated region
  $region62: #{attn_decoder_forward.1} parent=0 // pred_check
    _
  $region63: #{attn_decoder_forward.1} parent=0 // pred_check_branch
    %6395 = sbr.rel (0) target = $region65
  $region64: #{attn_decoder_forward.1} parent=0 // pred_region
    _
  $region65: #{attn_decoder_forward.1} parent=0 // pred_fallthru
    _
  // Predicated region
  $region66: #{attn_decoder_forward.1} parent=0 // pred_check
    _
  $region67: #{attn_decoder_forward.1} parent=0 // pred_check_branch
    %6397 = sbr.rel (0) target = $region69
  $region68: #{attn_decoder_forward.1} parent=0 // pred_region
    _
  $region69: #{attn_decoder_forward.1} parent=0 // pred_fallthru
    _
  // Predicated region
  $region70: #{attn_decoder_forward.1} parent=0 // pred_check
    _
  $region71: #{attn_decoder_forward.1} parent=0 // pred_check_branch
    %6399 = sbr.rel (0) target = $region73
  $region72: #{attn_decoder_forward.1} parent=0 // pred_region
    _
  $region73: #{attn_decoder_forward.1} parent=0 // pred_fallthru
    _

</llo_original>
